<compile_context>
chip_gen: v6e
topology: v6e:2x2x1
jax: 0.10.0
libtpu: 0.0.40
codegen_flags: <defaults>
</compile_context>

<pallas_src>
import math

import jax
import jax.numpy as jnp
from jax.experimental import pallas as pl
from jax.experimental.pallas import tpu as pltpu

# Layer widths: 8*4*4=128, 8*3*4*4=384, 8*2*8*4=512, 8*4*4*4=512, 8*4*4=128
DIMS = [128, 384, 384, 512, 512, 512, 128]
NUM_LAYERS = len(DIMS) - 1


def mlp_kernel(x_ref, *refs):
    """Args: x_ref, w1..w6 (HBM), b1..b6 (VMEM), o_ref, wbuf1..wbuf6, sem."""
    w_hbm = refs[0:NUM_LAYERS]
    b_refs = refs[NUM_LAYERS:2 * NUM_LAYERS]
    o_ref = refs[2 * NUM_LAYERS]
    w_vmem = refs[2 * NUM_LAYERS + 1:3 * NUM_LAYERS + 1]
    sem = refs[3 * NUM_LAYERS + 1]

    # Kick off all six weight DMAs now; layer-k's copy overlaps the matmul/tanh
    # work of layers < k, hiding the weight-fetch latency (biggest relative win
    # on v5e/v6e HBM bandwidth).
    copies = []
    for li in range(NUM_LAYERS):
        cp = pltpu.make_async_copy(w_hbm[li], w_vmem[li], sem.at[li])
        cp.start()
        copies.append(cp)

    # Split the batch tile into two independent row-chunks so that chunk-B's
    # MXU matmul can be scheduled under chunk-A's EUP tanh (and vice versa).
    bm = x_ref.shape[0]
    half = bm // 2
    bounds = [(0, half), (half, bm - half)] if half > 0 else [(0, bm)]
    h = [x_ref[pl.ds(off, sz), :] for (off, sz) in bounds]  # bf16 chunks

    for li in range(NUM_LAYERS):  # keep unrolled: 6 fixed layers, LLO-visible
        copies[li].wait()                 # weight li is now resident in VMEM
        w = w_vmem[li][...]               # bf16 [din, dout]
        b = b_refs[li][...]               # f32  [1,  dout]
        last = li == NUM_LAYERS - 1
        nxt = []
        for c in range(len(h)):
            y = jnp.dot(h[c], w, preferred_element_type=jnp.float32) + b
            # sigmoid(y) = 0.5*tanh(0.5*y) + 0.5 : single EUP transcendental.
            s = 0.5 * jnp.tanh(0.5 * y) + 0.5
            nxt.append(s if last else s.astype(jnp.bfloat16))
        h = nxt

    for (off, sz), hc in zip(bounds, h):
        o_ref[pl.ds(off, sz), :] = hc.astype(o_ref.dtype)


def init_params(key, dtype=jnp.float32):
    """Synthetic params matching torch.nn.Linear shapes/init (W stored as W.T)."""
    params = []
    for li in range(NUM_LAYERS):
        din, dout = DIMS[li], DIMS[li + 1]
        key, kw, kb = jax.random.split(key, 3)
        bound = 1.0 / math.sqrt(din)  # PyTorch Linear init: U(-1/sqrt(din), .)
        w = jax.random.uniform(kw, (din, dout), dtype, -bound, bound)
        b = jax.random.uniform(kb, (1, dout), dtype, -bound, bound)
        params.append((w, b))
    return params


def _cost_estimate(batch, grid_steps, out_dtype):
    flops = 2 * batch * sum(DIMS[i] * DIMS[i + 1] for i in range(NUM_LAYERS))
    transcendentals = batch * sum(DIMS[i + 1] for i in range(NUM_LAYERS))
    # bf16 weights are re-fetched once per grid step (manual streaming).
    weight_bytes = grid_steps * sum(
        DIMS[i] * DIMS[i + 1] * 2 for i in range(NUM_LAYERS))
    bias_bytes = sum(DIMS[i + 1] * 4 for i in range(NUM_LAYERS))
    io_bytes = batch * (DIMS[0] * 2 + DIMS[-1] * jnp.dtype(out_dtype).itemsize)
    return pl.CostEstimate(flops=flops, transcendentals=transcendentals,
                           bytes_accessed=weight_bytes + bias_bytes + io_bytes)


def mix_columns4_pallas(x, params, *, bm=256):
    """params: list of (W_T [din, dout], b [1, dout]); any float dtype.

    bm: batch-tile rows. Default 256 keeps >=2 grid steps on batch>=512 so the
    "parallel" axis shards across both v7x TensorCores; on single-TC chips
    (v5e/v6e) pass bm=x.shape[0] to run a single grid step.
    """
    B, din = x.shape
    assert din == DIMS[0], (din, DIMS[0])
    dout = DIMS[-1]
    out_dtype = x.dtype

    bm = min(bm, B)
    if B % bm != 0:
        bm = B  # ragged batch: fall back to one full-batch tile (always legal)
    grid_steps = B // bm

    # Cast once at the XLA level: bf16 input + weights (MXU-native), f32 biases.
    x_bf = x.astype(jnp.bfloat16)
    ws = [w.astype(jnp.bfloat16) for (w, _) in params]
    bs = [b.astype(jnp.float32).reshape(1, -1) for (_, b) in params]

    in_specs = (
        [pl.BlockSpec((bm, din), lambda i: (i, 0))]
        + [pl.BlockSpec(memory_space=pl.ANY)] * NUM_LAYERS      # weights in HBM
        + [pl.BlockSpec(b.shape, lambda i: (0, 0)) for b in bs]  # tiny biases
    )
    out_specs = pl.BlockSpec((bm, dout), lambda i: (i, 0))
    scratch_shapes = (
        [pltpu.VMEM((DIMS[i], DIMS[i + 1]), jnp.bfloat16)
         for i in range(NUM_LAYERS)]
        + [pltpu.SemaphoreType.DMA((NUM_LAYERS,))]
    )

    return pl.pallas_call(
        mlp_kernel,
        out_shape=jax.ShapeDtypeStruct((B, dout), out_dtype),
        grid=(grid_steps,),
        in_specs=in_specs,
        out_specs=out_specs,
        scratch_shapes=scratch_shapes,
        compiler_params=pltpu.CompilerParams(
            dimension_semantics=("parallel",),
        ),
        cost_estimate=_cost_estimate(B, grid_steps, out_dtype),
    )(x_bf, *ws, *bs)


def mix_columns4_ref(x, params):
    """Pure-JAX reference mirroring the kernel numerics exactly
    (bf16 input/weights/inter-layer activations, f32 accumulation, tanh-sigmoid).
    """
    h = x.astype(jnp.bfloat16)
    for li, (w, b) in enumerate(params):
        y = jnp.dot(h, w.astype(jnp.bfloat16),
                    preferred_element_type=jnp.float32)
        y = y + b.astype(jnp.float32).reshape(1, -1)
        s = 0.5 * jnp.tanh(0.5 * y) + 0.5
        h = s if li == NUM_LAYERS - 1 else s.astype(jnp.bfloat16)
    return h.astype(x.dtype)


if __name__ == "__main__":
    key = jax.random.PRNGKey(0)
    k_params, k_x = jax.random.split(key)

    params = init_params(k_params)

    # batch=512 with bm=256 -> grid of 2 "parallel" steps: each step feeds 256
    # rows (2 interleaved 128-row chunks) into the MXU, and on v7x the two
    # steps land on the two TensorCores. On v5e/v6e, bm=512 would also be fine.
    batch = 512
    x = jax.random.uniform(k_x, (batch, DIMS[0]), jnp.float32)

    out = jax.block_until_ready(mix_columns4_pallas(x, params, bm=256))
    ref = jax.block_until_ready(mix_columns4_ref(x, params))

    assert out.shape == (batch, DIMS[-1]), out.shape
    max_err = float(jnp.max(jnp.abs(out - ref)))
    assert max_err < 1e-2, max_err
    print("KERNEL_OK")
</pallas_src>

<mosaic_0001>
module attributes {stable_mosaic.version = 11 : i64} {
  func.func @mlp_kernel(%arg0: i32, %arg1: memref<256x128xbf16, #tpu.memory_space<vmem>>, %arg2: memref<128x384xbf16, #tpu.memory_space<any>>, %arg3: memref<384x384xbf16, #tpu.memory_space<any>>, %arg4: memref<384x512xbf16, #tpu.memory_space<any>>, %arg5: memref<512x512xbf16, #tpu.memory_space<any>>, %arg6: memref<512x512xbf16, #tpu.memory_space<any>>, %arg7: memref<512x128xbf16, #tpu.memory_space<any>>, %arg8: memref<1x384xf32, #tpu.memory_space<vmem>>, %arg9: memref<1x384xf32, #tpu.memory_space<vmem>>, %arg10: memref<1x512xf32, #tpu.memory_space<vmem>>, %arg11: memref<1x512xf32, #tpu.memory_space<vmem>>, %arg12: memref<1x512xf32, #tpu.memory_space<vmem>>, %arg13: memref<1x128xf32, #tpu.memory_space<vmem>>, %arg14: memref<256x128xf32, #tpu.memory_space<vmem>>, %arg15: memref<128x384xbf16, #tpu.memory_space<vmem>>, %arg16: memref<384x384xbf16, #tpu.memory_space<vmem>>, %arg17: memref<384x512xbf16, #tpu.memory_space<vmem>>, %arg18: memref<512x512xbf16, #tpu.memory_space<vmem>>, %arg19: memref<512x512xbf16, #tpu.memory_space<vmem>>, %arg20: memref<512x128xbf16, #tpu.memory_space<vmem>>, %arg21: memref<6x!tpu.dma_semaphore, #tpu.memory_space<semaphore_mem>>) attributes {dimension_semantics = [#tpu.dimension_semantics<parallel>], iteration_bounds = array<i64: 2>, scalar_prefetch = 0 : i64, scratch_operands = 7 : i64, tpu.core_type = #tpu.core_type<tc>, window_params = [{transform_indices = @transform_0, window_bounds = array<i64: 256, 128>}, {}, {}, {}, {}, {}, {}, {pipeline_mode = #tpu.pipeline_mode<synchronous>, transform_indices = @transform_7, window_bounds = array<i64: 1, 384>}, {pipeline_mode = #tpu.pipeline_mode<synchronous>, transform_indices = @transform_8, window_bounds = array<i64: 1, 384>}, {pipeline_mode = #tpu.pipeline_mode<synchronous>, transform_indices = @transform_9, window_bounds = array<i64: 1, 512>}, {pipeline_mode = #tpu.pipeline_mode<synchronous>, transform_indices = @transform_10, window_bounds = array<i64: 1, 512>}, {pipeline_mode = #tpu.pipeline_mode<synchronous>, transform_indices = @transform_11, window_bounds = array<i64: 1, 512>}, {pipeline_mode = #tpu.pipeline_mode<synchronous>, transform_indices = @transform_12, window_bounds = array<i64: 1, 128>}, {transform_indices = @transform_13, window_bounds = array<i64: 256, 128>}]} {
    %c0_i32 = arith.constant 0 : i32
    %0 = tpu.memref_slice %arg21[%c0_i32] : memref<6x!tpu.dma_semaphore, #tpu.memory_space<semaphore_mem>> -> memref<1x!tpu.dma_semaphore, #tpu.memory_space<semaphore_mem>>
    %1 = tpu.memref_squeeze %0 : memref<1x!tpu.dma_semaphore, #tpu.memory_space<semaphore_mem>> -> memref<!tpu.dma_semaphore, #tpu.memory_space<semaphore_mem>>
    tpu.enqueue_dma source(%arg2 : memref<128x384xbf16, #tpu.memory_space<any>>) target(%arg15 : memref<128x384xbf16, #tpu.memory_space<vmem>>) target_semaphore(%1 : memref<!tpu.dma_semaphore, #tpu.memory_space<semaphore_mem>>)
    %c1_i32 = arith.constant 1 : i32
    %2 = tpu.memref_slice %arg21[%c1_i32] : memref<6x!tpu.dma_semaphore, #tpu.memory_space<semaphore_mem>> -> memref<1x!tpu.dma_semaphore, #tpu.memory_space<semaphore_mem>>
    %3 = tpu.memref_squeeze %2 : memref<1x!tpu.dma_semaphore, #tpu.memory_space<semaphore_mem>> -> memref<!tpu.dma_semaphore, #tpu.memory_space<semaphore_mem>>
    tpu.enqueue_dma source(%arg3 : memref<384x384xbf16, #tpu.memory_space<any>>) target(%arg16 : memref<384x384xbf16, #tpu.memory_space<vmem>>) target_semaphore(%3 : memref<!tpu.dma_semaphore, #tpu.memory_space<semaphore_mem>>)
    %c2_i32 = arith.constant 2 : i32
    %4 = tpu.memref_slice %arg21[%c2_i32] : memref<6x!tpu.dma_semaphore, #tpu.memory_space<semaphore_mem>> -> memref<1x!tpu.dma_semaphore, #tpu.memory_space<semaphore_mem>>
    %5 = tpu.memref_squeeze %4 : memref<1x!tpu.dma_semaphore, #tpu.memory_space<semaphore_mem>> -> memref<!tpu.dma_semaphore, #tpu.memory_space<semaphore_mem>>
    tpu.enqueue_dma source(%arg4 : memref<384x512xbf16, #tpu.memory_space<any>>) target(%arg17 : memref<384x512xbf16, #tpu.memory_space<vmem>>) target_semaphore(%5 : memref<!tpu.dma_semaphore, #tpu.memory_space<semaphore_mem>>)
    %c3_i32 = arith.constant 3 : i32
    %6 = tpu.memref_slice %arg21[%c3_i32] : memref<6x!tpu.dma_semaphore, #tpu.memory_space<semaphore_mem>> -> memref<1x!tpu.dma_semaphore, #tpu.memory_space<semaphore_mem>>
    %7 = tpu.memref_squeeze %6 : memref<1x!tpu.dma_semaphore, #tpu.memory_space<semaphore_mem>> -> memref<!tpu.dma_semaphore, #tpu.memory_space<semaphore_mem>>
    tpu.enqueue_dma source(%arg5 : memref<512x512xbf16, #tpu.memory_space<any>>) target(%arg18 : memref<512x512xbf16, #tpu.memory_space<vmem>>) target_semaphore(%7 : memref<!tpu.dma_semaphore, #tpu.memory_space<semaphore_mem>>)
    %c4_i32 = arith.constant 4 : i32
    %8 = tpu.memref_slice %arg21[%c4_i32] : memref<6x!tpu.dma_semaphore, #tpu.memory_space<semaphore_mem>> -> memref<1x!tpu.dma_semaphore, #tpu.memory_space<semaphore_mem>>
    %9 = tpu.memref_squeeze %8 : memref<1x!tpu.dma_semaphore, #tpu.memory_space<semaphore_mem>> -> memref<!tpu.dma_semaphore, #tpu.memory_space<semaphore_mem>>
    tpu.enqueue_dma source(%arg6 : memref<512x512xbf16, #tpu.memory_space<any>>) target(%arg19 : memref<512x512xbf16, #tpu.memory_space<vmem>>) target_semaphore(%9 : memref<!tpu.dma_semaphore, #tpu.memory_space<semaphore_mem>>)
    %c5_i32 = arith.constant 5 : i32
    %10 = tpu.memref_slice %arg21[%c5_i32] : memref<6x!tpu.dma_semaphore, #tpu.memory_space<semaphore_mem>> -> memref<1x!tpu.dma_semaphore, #tpu.memory_space<semaphore_mem>>
    %11 = tpu.memref_squeeze %10 : memref<1x!tpu.dma_semaphore, #tpu.memory_space<semaphore_mem>> -> memref<!tpu.dma_semaphore, #tpu.memory_space<semaphore_mem>>
    tpu.enqueue_dma source(%arg7 : memref<512x128xbf16, #tpu.memory_space<any>>) target(%arg20 : memref<512x128xbf16, #tpu.memory_space<vmem>>) target_semaphore(%11 : memref<!tpu.dma_semaphore, #tpu.memory_space<semaphore_mem>>)
    %c0 = arith.constant 0 : index
    %c0_0 = arith.constant 0 : index
    %12 = vector.load %arg1[%c0, %c0_0] : memref<256x128xbf16, #tpu.memory_space<vmem>>, vector<128x128xbf16>
    %c128 = arith.constant 128 : index
    %c0_1 = arith.constant 0 : index
    %13 = vector.load %arg1[%c128, %c0_1] : memref<256x128xbf16, #tpu.memory_space<vmem>>, vector<128x128xbf16>
    %c0_i32_2 = arith.constant 0 : i32
    %14 = tpu.memref_slice %arg21[%c0_i32_2] : memref<6x!tpu.dma_semaphore, #tpu.memory_space<semaphore_mem>> -> memref<1x!tpu.dma_semaphore, #tpu.memory_space<semaphore_mem>>
    %15 = tpu.memref_squeeze %14 : memref<1x!tpu.dma_semaphore, #tpu.memory_space<semaphore_mem>> -> memref<!tpu.dma_semaphore, #tpu.memory_space<semaphore_mem>>
    tpu.wait_dma2 semaphore(%15 : memref<!tpu.dma_semaphore, #tpu.memory_space<semaphore_mem>>) src(%arg2 : memref<128x384xbf16, #tpu.memory_space<any>>) dst(%arg15 : memref<128x384xbf16, #tpu.memory_space<vmem>>)
    %c0_3 = arith.constant 0 : index
    %c0_4 = arith.constant 0 : index
    %16 = vector.load %arg15[%c0_3, %c0_4] : memref<128x384xbf16, #tpu.memory_space<vmem>>, vector<128x384xbf16>
    %c0_5 = arith.constant 0 : index
    %c0_6 = arith.constant 0 : index
    %17 = vector.load %arg8[%c0_5, %c0_6] : memref<1x384xf32, #tpu.memory_space<vmem>>, vector<1x384xf32>
    %cst = arith.constant dense<0.000000e+00> : vector<128x384xf32>
    %18 = tpu.matmul %12, %16, %cst {dimension_numbers = #tpu.dot_dimension_numbers<[1], [0], [0], [1], [0, 0, 1, 1], [], []>} : vector<128x128xbf16>, vector<128x384xbf16>, vector<128x384xf32> -> vector<128x384xf32>
    %19 = vector.broadcast %17 : vector<1x384xf32> to vector<128x384xf32>
    %20 = arith.addf %18, %19 : vector<128x384xf32>
    %cst_7 = arith.constant 5.000000e-01 : f32
    %21 = vector.broadcast %cst_7 : f32 to vector<128x384xf32>
    %22 = arith.mulf %21, %20 : vector<128x384xf32>
    %23 = math.tanh %22 : vector<128x384xf32>
    %cst_8 = arith.constant 5.000000e-01 : f32
    %24 = vector.broadcast %cst_8 : f32 to vector<128x384xf32>
    %25 = arith.mulf %24, %23 : vector<128x384xf32>
    %cst_9 = arith.constant 5.000000e-01 : f32
    %26 = vector.broadcast %cst_9 : f32 to vector<128x384xf32>
    %27 = arith.addf %25, %26 : vector<128x384xf32>
    %28 = arith.truncf %27 : vector<128x384xf32> to vector<128x384xbf16>
    %cst_10 = arith.constant dense<0.000000e+00> : vector<128x384xf32>
    %29 = tpu.matmul %13, %16, %cst_10 {dimension_numbers = #tpu.dot_dimension_numbers<[1], [0], [0], [1], [0, 0, 1, 1], [], []>} : vector<128x128xbf16>, vector<128x384xbf16>, vector<128x384xf32> -> vector<128x384xf32>
    %30 = vector.broadcast %17 : vector<1x384xf32> to vector<128x384xf32>
    %31 = arith.addf %29, %30 : vector<128x384xf32>
    %cst_11 = arith.constant 5.000000e-01 : f32
    %32 = vector.broadcast %cst_11 : f32 to vector<128x384xf32>
    %33 = arith.mulf %32, %31 : vector<128x384xf32>
    %34 = math.tanh %33 : vector<128x384xf32>
    %cst_12 = arith.constant 5.000000e-01 : f32
    %35 = vector.broadcast %cst_12 : f32 to vector<128x384xf32>
    %36 = arith.mulf %35, %34 : vector<128x384xf32>
    %cst_13 = arith.constant 5.000000e-01 : f32
    %37 = vector.broadcast %cst_13 : f32 to vector<128x384xf32>
    %38 = arith.addf %36, %37 : vector<128x384xf32>
    %39 = arith.truncf %38 : vector<128x384xf32> to vector<128x384xbf16>
    %c1_i32_14 = arith.constant 1 : i32
    %40 = tpu.memref_slice %arg21[%c1_i32_14] : memref<6x!tpu.dma_semaphore, #tpu.memory_space<semaphore_mem>> -> memref<1x!tpu.dma_semaphore, #tpu.memory_space<semaphore_mem>>
    %41 = tpu.memref_squeeze %40 : memref<1x!tpu.dma_semaphore, #tpu.memory_space<semaphore_mem>> -> memref<!tpu.dma_semaphore, #tpu.memory_space<semaphore_mem>>
    tpu.wait_dma2 semaphore(%41 : memref<!tpu.dma_semaphore, #tpu.memory_space<semaphore_mem>>) src(%arg3 : memref<384x384xbf16, #tpu.memory_space<any>>) dst(%arg16 : memref<384x384xbf16, #tpu.memory_space<vmem>>)
    %c0_15 = arith.constant 0 : index
    %c0_16 = arith.constant 0 : index
    %42 = vector.load %arg16[%c0_15, %c0_16] : memref<384x384xbf16, #tpu.memory_space<vmem>>, vector<384x384xbf16>
    %c0_17 = arith.constant 0 : index
    %c0_18 = arith.constant 0 : index
    %43 = vector.load %arg9[%c0_17, %c0_18] : memref<1x384xf32, #tpu.memory_space<vmem>>, vector<1x384xf32>
    %cst_19 = arith.constant dense<0.000000e+00> : vector<128x384xf32>
    %44 = tpu.matmul %28, %42, %cst_19 {dimension_numbers = #tpu.dot_dimension_numbers<[1], [0], [0], [1], [0, 0, 1, 1], [], []>} : vector<128x384xbf16>, vector<384x384xbf16>, vector<128x384xf32> -> vector<128x384xf32>
    %45 = vector.broadcast %43 : vector<1x384xf32> to vector<128x384xf32>
    %46 = arith.addf %44, %45 : vector<128x384xf32>
    %cst_20 = arith.constant 5.000000e-01 : f32
    %47 = vector.broadcast %cst_20 : f32 to vector<128x384xf32>
    %48 = arith.mulf %47, %46 : vector<128x384xf32>
    %49 = math.tanh %48 : vector<128x384xf32>
    %cst_21 = arith.constant 5.000000e-01 : f32
    %50 = vector.broadcast %cst_21 : f32 to vector<128x384xf32>
    %51 = arith.mulf %50, %49 : vector<128x384xf32>
    %cst_22 = arith.constant 5.000000e-01 : f32
    %52 = vector.broadcast %cst_22 : f32 to vector<128x384xf32>
    %53 = arith.addf %51, %52 : vector<128x384xf32>
    %54 = arith.truncf %53 : vector<128x384xf32> to vector<128x384xbf16>
    %cst_23 = arith.constant dense<0.000000e+00> : vector<128x384xf32>
    %55 = tpu.matmul %39, %42, %cst_23 {dimension_numbers = #tpu.dot_dimension_numbers<[1], [0], [0], [1], [0, 0, 1, 1], [], []>} : vector<128x384xbf16>, vector<384x384xbf16>, vector<128x384xf32> -> vector<128x384xf32>
    %56 = vector.broadcast %43 : vector<1x384xf32> to vector<128x384xf32>
    %57 = arith.addf %55, %56 : vector<128x384xf32>
    %cst_24 = arith.constant 5.000000e-01 : f32
    %58 = vector.broadcast %cst_24 : f32 to vector<128x384xf32>
    %59 = arith.mulf %58, %57 : vector<128x384xf32>
    %60 = math.tanh %59 : vector<128x384xf32>
    %cst_25 = arith.constant 5.000000e-01 : f32
    %61 = vector.broadcast %cst_25 : f32 to vector<128x384xf32>
    %62 = arith.mulf %61, %60 : vector<128x384xf32>
    %cst_26 = arith.constant 5.000000e-01 : f32
    %63 = vector.broadcast %cst_26 : f32 to vector<128x384xf32>
    %64 = arith.addf %62, %63 : vector<128x384xf32>
    %65 = arith.truncf %64 : vector<128x384xf32> to vector<128x384xbf16>
    %c2_i32_27 = arith.constant 2 : i32
    %66 = tpu.memref_slice %arg21[%c2_i32_27] : memref<6x!tpu.dma_semaphore, #tpu.memory_space<semaphore_mem>> -> memref<1x!tpu.dma_semaphore, #tpu.memory_space<semaphore_mem>>
    %67 = tpu.memref_squeeze %66 : memref<1x!tpu.dma_semaphore, #tpu.memory_space<semaphore_mem>> -> memref<!tpu.dma_semaphore, #tpu.memory_space<semaphore_mem>>
    tpu.wait_dma2 semaphore(%67 : memref<!tpu.dma_semaphore, #tpu.memory_space<semaphore_mem>>) src(%arg4 : memref<384x512xbf16, #tpu.memory_space<any>>) dst(%arg17 : memref<384x512xbf16, #tpu.memory_space<vmem>>)
    %c0_28 = arith.constant 0 : index
    %c0_29 = arith.constant 0 : index
    %68 = vector.load %arg17[%c0_28, %c0_29] : memref<384x512xbf16, #tpu.memory_space<vmem>>, vector<384x512xbf16>
    %c0_30 = arith.constant 0 : index
    %c0_31 = arith.constant 0 : index
    %69 = vector.load %arg10[%c0_30, %c0_31] : memref<1x512xf32, #tpu.memory_space<vmem>>, vector<1x512xf32>
    %cst_32 = arith.constant dense<0.000000e+00> : vector<128x512xf32>
    %70 = tpu.matmul %54, %68, %cst_32 {dimension_numbers = #tpu.dot_dimension_numbers<[1], [0], [0], [1], [0, 0, 1, 1], [], []>} : vector<128x384xbf16>, vector<384x512xbf16>, vector<128x512xf32> -> vector<128x512xf32>
    %71 = vector.broadcast %69 : vector<1x512xf32> to vector<128x512xf32>
    %72 = arith.addf %70, %71 : vector<128x512xf32>
    %cst_33 = arith.constant 5.000000e-01 : f32
    %73 = vector.broadcast %cst_33 : f32 to vector<128x512xf32>
    %74 = arith.mulf %73, %72 : vector<128x512xf32>
    %75 = math.tanh %74 : vector<128x512xf32>
    %cst_34 = arith.constant 5.000000e-01 : f32
    %76 = vector.broadcast %cst_34 : f32 to vector<128x512xf32>
    %77 = arith.mulf %76, %75 : vector<128x512xf32>
    %cst_35 = arith.constant 5.000000e-01 : f32
    %78 = vector.broadcast %cst_35 : f32 to vector<128x512xf32>
    %79 = arith.addf %77, %78 : vector<128x512xf32>
    %80 = arith.truncf %79 : vector<128x512xf32> to vector<128x512xbf16>
    %cst_36 = arith.constant dense<0.000000e+00> : vector<128x512xf32>
    %81 = tpu.matmul %65, %68, %cst_36 {dimension_numbers = #tpu.dot_dimension_numbers<[1], [0], [0], [1], [0, 0, 1, 1], [], []>} : vector<128x384xbf16>, vector<384x512xbf16>, vector<128x512xf32> -> vector<128x512xf32>
    %82 = vector.broadcast %69 : vector<1x512xf32> to vector<128x512xf32>
    %83 = arith.addf %81, %82 : vector<128x512xf32>
    %cst_37 = arith.constant 5.000000e-01 : f32
    %84 = vector.broadcast %cst_37 : f32 to vector<128x512xf32>
    %85 = arith.mulf %84, %83 : vector<128x512xf32>
    %86 = math.tanh %85 : vector<128x512xf32>
    %cst_38 = arith.constant 5.000000e-01 : f32
    %87 = vector.broadcast %cst_38 : f32 to vector<128x512xf32>
    %88 = arith.mulf %87, %86 : vector<128x512xf32>
    %cst_39 = arith.constant 5.000000e-01 : f32
    %89 = vector.broadcast %cst_39 : f32 to vector<128x512xf32>
    %90 = arith.addf %88, %89 : vector<128x512xf32>
    %91 = arith.truncf %90 : vector<128x512xf32> to vector<128x512xbf16>
    %c3_i32_40 = arith.constant 3 : i32
    %92 = tpu.memref_slice %arg21[%c3_i32_40] : memref<6x!tpu.dma_semaphore, #tpu.memory_space<semaphore_mem>> -> memref<1x!tpu.dma_semaphore, #tpu.memory_space<semaphore_mem>>
    %93 = tpu.memref_squeeze %92 : memref<1x!tpu.dma_semaphore, #tpu.memory_space<semaphore_mem>> -> memref<!tpu.dma_semaphore, #tpu.memory_space<semaphore_mem>>
    tpu.wait_dma2 semaphore(%93 : memref<!tpu.dma_semaphore, #tpu.memory_space<semaphore_mem>>) src(%arg5 : memref<512x512xbf16, #tpu.memory_space<any>>) dst(%arg18 : memref<512x512xbf16, #tpu.memory_space<vmem>>)
    %c0_41 = arith.constant 0 : index
    %c0_42 = arith.constant 0 : index
    %94 = vector.load %arg18[%c0_41, %c0_42] : memref<512x512xbf16, #tpu.memory_space<vmem>>, vector<512x512xbf16>
    %c0_43 = arith.constant 0 : index
    %c0_44 = arith.constant 0 : index
    %95 = vector.load %arg11[%c0_43, %c0_44] : memref<1x512xf32, #tpu.memory_space<vmem>>, vector<1x512xf32>
    %cst_45 = arith.constant dense<0.000000e+00> : vector<128x512xf32>
    %96 = tpu.matmul %80, %94, %cst_45 {dimension_numbers = #tpu.dot_dimension_numbers<[1], [0], [0], [1], [0, 0, 1, 1], [], []>} : vector<128x512xbf16>, vector<512x512xbf16>, vector<128x512xf32> -> vector<128x512xf32>
    %97 = vector.broadcast %95 : vector<1x512xf32> to vector<128x512xf32>
    %98 = arith.addf %96, %97 : vector<128x512xf32>
    %cst_46 = arith.constant 5.000000e-01 : f32
    %99 = vector.broadcast %cst_46 : f32 to vector<128x512xf32>
    %100 = arith.mulf %99, %98 : vector<128x512xf32>
    %101 = math.tanh %100 : vector<128x512xf32>
    %cst_47 = arith.constant 5.000000e-01 : f32
    %102 = vector.broadcast %cst_47 : f32 to vector<128x512xf32>
    %103 = arith.mulf %102, %101 : vector<128x512xf32>
    %cst_48 = arith.constant 5.000000e-01 : f32
    %104 = vector.broadcast %cst_48 : f32 to vector<128x512xf32>
    %105 = arith.addf %103, %104 : vector<128x512xf32>
    %106 = arith.truncf %105 : vector<128x512xf32> to vector<128x512xbf16>
    %cst_49 = arith.constant dense<0.000000e+00> : vector<128x512xf32>
    %107 = tpu.matmul %91, %94, %cst_49 {dimension_numbers = #tpu.dot_dimension_numbers<[1], [0], [0], [1], [0, 0, 1, 1], [], []>} : vector<128x512xbf16>, vector<512x512xbf16>, vector<128x512xf32> -> vector<128x512xf32>
    %108 = vector.broadcast %95 : vector<1x512xf32> to vector<128x512xf32>
    %109 = arith.addf %107, %108 : vector<128x512xf32>
    %cst_50 = arith.constant 5.000000e-01 : f32
    %110 = vector.broadcast %cst_50 : f32 to vector<128x512xf32>
    %111 = arith.mulf %110, %109 : vector<128x512xf32>
    %112 = math.tanh %111 : vector<128x512xf32>
    %cst_51 = arith.constant 5.000000e-01 : f32
    %113 = vector.broadcast %cst_51 : f32 to vector<128x512xf32>
    %114 = arith.mulf %113, %112 : vector<128x512xf32>
    %cst_52 = arith.constant 5.000000e-01 : f32
    %115 = vector.broadcast %cst_52 : f32 to vector<128x512xf32>
    %116 = arith.addf %114, %115 : vector<128x512xf32>
    %117 = arith.truncf %116 : vector<128x512xf32> to vector<128x512xbf16>
    %c4_i32_53 = arith.constant 4 : i32
    %118 = tpu.memref_slice %arg21[%c4_i32_53] : memref<6x!tpu.dma_semaphore, #tpu.memory_space<semaphore_mem>> -> memref<1x!tpu.dma_semaphore, #tpu.memory_space<semaphore_mem>>
    %119 = tpu.memref_squeeze %118 : memref<1x!tpu.dma_semaphore, #tpu.memory_space<semaphore_mem>> -> memref<!tpu.dma_semaphore, #tpu.memory_space<semaphore_mem>>
    tpu.wait_dma2 semaphore(%119 : memref<!tpu.dma_semaphore, #tpu.memory_space<semaphore_mem>>) src(%arg6 : memref<512x512xbf16, #tpu.memory_space<any>>) dst(%arg19 : memref<512x512xbf16, #tpu.memory_space<vmem>>)
    %c0_54 = arith.constant 0 : index
    %c0_55 = arith.constant 0 : index
    %120 = vector.load %arg19[%c0_54, %c0_55] : memref<512x512xbf16, #tpu.memory_space<vmem>>, vector<512x512xbf16>
    %c0_56 = arith.constant 0 : index
    %c0_57 = arith.constant 0 : index
    %121 = vector.load %arg12[%c0_56, %c0_57] : memref<1x512xf32, #tpu.memory_space<vmem>>, vector<1x512xf32>
    %cst_58 = arith.constant dense<0.000000e+00> : vector<128x512xf32>
    %122 = tpu.matmul %106, %120, %cst_58 {dimension_numbers = #tpu.dot_dimension_numbers<[1], [0], [0], [1], [0, 0, 1, 1], [], []>} : vector<128x512xbf16>, vector<512x512xbf16>, vector<128x512xf32> -> vector<128x512xf32>
    %123 = vector.broadcast %121 : vector<1x512xf32> to vector<128x512xf32>
    %124 = arith.addf %122, %123 : vector<128x512xf32>
    %cst_59 = arith.constant 5.000000e-01 : f32
    %125 = vector.broadcast %cst_59 : f32 to vector<128x512xf32>
    %126 = arith.mulf %125, %124 : vector<128x512xf32>
    %127 = math.tanh %126 : vector<128x512xf32>
    %cst_60 = arith.constant 5.000000e-01 : f32
    %128 = vector.broadcast %cst_60 : f32 to vector<128x512xf32>
    %129 = arith.mulf %128, %127 : vector<128x512xf32>
    %cst_61 = arith.constant 5.000000e-01 : f32
    %130 = vector.broadcast %cst_61 : f32 to vector<128x512xf32>
    %131 = arith.addf %129, %130 : vector<128x512xf32>
    %132 = arith.truncf %131 : vector<128x512xf32> to vector<128x512xbf16>
    %cst_62 = arith.constant dense<0.000000e+00> : vector<128x512xf32>
    %133 = tpu.matmul %117, %120, %cst_62 {dimension_numbers = #tpu.dot_dimension_numbers<[1], [0], [0], [1], [0, 0, 1, 1], [], []>} : vector<128x512xbf16>, vector<512x512xbf16>, vector<128x512xf32> -> vector<128x512xf32>
    %134 = vector.broadcast %121 : vector<1x512xf32> to vector<128x512xf32>
    %135 = arith.addf %133, %134 : vector<128x512xf32>
    %cst_63 = arith.constant 5.000000e-01 : f32
    %136 = vector.broadcast %cst_63 : f32 to vector<128x512xf32>
    %137 = arith.mulf %136, %135 : vector<128x512xf32>
    %138 = math.tanh %137 : vector<128x512xf32>
    %cst_64 = arith.constant 5.000000e-01 : f32
    %139 = vector.broadcast %cst_64 : f32 to vector<128x512xf32>
    %140 = arith.mulf %139, %138 : vector<128x512xf32>
    %cst_65 = arith.constant 5.000000e-01 : f32
    %141 = vector.broadcast %cst_65 : f32 to vector<128x512xf32>
    %142 = arith.addf %140, %141 : vector<128x512xf32>
    %143 = arith.truncf %142 : vector<128x512xf32> to vector<128x512xbf16>
    %c5_i32_66 = arith.constant 5 : i32
    %144 = tpu.memref_slice %arg21[%c5_i32_66] : memref<6x!tpu.dma_semaphore, #tpu.memory_space<semaphore_mem>> -> memref<1x!tpu.dma_semaphore, #tpu.memory_space<semaphore_mem>>
    %145 = tpu.memref_squeeze %144 : memref<1x!tpu.dma_semaphore, #tpu.memory_space<semaphore_mem>> -> memref<!tpu.dma_semaphore, #tpu.memory_space<semaphore_mem>>
    tpu.wait_dma2 semaphore(%145 : memref<!tpu.dma_semaphore, #tpu.memory_space<semaphore_mem>>) src(%arg7 : memref<512x128xbf16, #tpu.memory_space<any>>) dst(%arg20 : memref<512x128xbf16, #tpu.memory_space<vmem>>)
    %c0_67 = arith.constant 0 : index
    %c0_68 = arith.constant 0 : index
    %146 = vector.load %arg20[%c0_67, %c0_68] : memref<512x128xbf16, #tpu.memory_space<vmem>>, vector<512x128xbf16>
    %c0_69 = arith.constant 0 : index
    %c0_70 = arith.constant 0 : index
    %147 = vector.load %arg13[%c0_69, %c0_70] : memref<1x128xf32, #tpu.memory_space<vmem>>, vector<1x128xf32>
    %cst_71 = arith.constant dense<0.000000e+00> : vector<128x128xf32>
    %148 = tpu.matmul %132, %146, %cst_71 {dimension_numbers = #tpu.dot_dimension_numbers<[1], [0], [0], [1], [0, 0, 1, 1], [], []>} : vector<128x512xbf16>, vector<512x128xbf16>, vector<128x128xf32> -> vector<128x128xf32>
    %149 = vector.broadcast %147 : vector<1x128xf32> to vector<128x128xf32>
    %150 = arith.addf %148, %149 : vector<128x128xf32>
    %cst_72 = arith.constant 5.000000e-01 : f32
    %151 = vector.broadcast %cst_72 : f32 to vector<128x128xf32>
    %152 = arith.mulf %151, %150 : vector<128x128xf32>
    %153 = math.tanh %152 : vector<128x128xf32>
    %cst_73 = arith.constant 5.000000e-01 : f32
    %154 = vector.broadcast %cst_73 : f32 to vector<128x128xf32>
    %155 = arith.mulf %154, %153 : vector<128x128xf32>
    %cst_74 = arith.constant 5.000000e-01 : f32
    %156 = vector.broadcast %cst_74 : f32 to vector<128x128xf32>
    %157 = arith.addf %155, %156 : vector<128x128xf32>
    %cst_75 = arith.constant dense<0.000000e+00> : vector<128x128xf32>
    %158 = tpu.matmul %143, %146, %cst_75 {dimension_numbers = #tpu.dot_dimension_numbers<[1], [0], [0], [1], [0, 0, 1, 1], [], []>} : vector<128x512xbf16>, vector<512x128xbf16>, vector<128x128xf32> -> vector<128x128xf32>
    %159 = vector.broadcast %147 : vector<1x128xf32> to vector<128x128xf32>
    %160 = arith.addf %158, %159 : vector<128x128xf32>
    %cst_76 = arith.constant 5.000000e-01 : f32
    %161 = vector.broadcast %cst_76 : f32 to vector<128x128xf32>
    %162 = arith.mulf %161, %160 : vector<128x128xf32>
    %163 = math.tanh %162 : vector<128x128xf32>
    %cst_77 = arith.constant 5.000000e-01 : f32
    %164 = vector.broadcast %cst_77 : f32 to vector<128x128xf32>
    %165 = arith.mulf %164, %163 : vector<128x128xf32>
    %cst_78 = arith.constant 5.000000e-01 : f32
    %166 = vector.broadcast %cst_78 : f32 to vector<128x128xf32>
    %167 = arith.addf %165, %166 : vector<128x128xf32>
    %c0_79 = arith.constant 0 : index
    %c0_80 = arith.constant 0 : index
    %168 = vector.load %arg14[%c0_79, %c0_80] : memref<256x128xf32, #tpu.memory_space<vmem>>, vector<128x128xf32>
    tpu.vector_store %arg14[%c0_79, %c0_80], %157 {strides = array<i32>} : memref<256x128xf32, #tpu.memory_space<vmem>>, vector<128x128xf32>,
    %c128_81 = arith.constant 128 : index
    %c0_82 = arith.constant 0 : index
    %169 = vector.load %arg14[%c128_81, %c0_82] : memref<256x128xf32, #tpu.memory_space<vmem>>, vector<128x128xf32>
    tpu.vector_store %arg14[%c128_81, %c0_82], %167 {strides = array<i32>} : memref<256x128xf32, #tpu.memory_space<vmem>>, vector<128x128xf32>,
    return
  }
  func.func @transform_0(%arg0: i32) -> (i32, i32) {
    %c0_i32 = arith.constant 0 : i32
    %c0_i32_0 = arith.constant 0 : i32
    return %arg0, %c0_i32 : i32, i32
  }
  func.func @transform_7(%arg0: i32) -> (i32, i32) {
    %c0_i32 = arith.constant 0 : i32
    %c0_i32_0 = arith.constant 0 : i32
    %c0_i32_1 = arith.constant 0 : i32
    return %c0_i32, %c0_i32_0 : i32, i32
  }
  func.func @transform_8(%arg0: i32) -> (i32, i32) {
    %c0_i32 = arith.constant 0 : i32
    %c0_i32_0 = arith.constant 0 : i32
    %c0_i32_1 = arith.constant 0 : i32
    return %c0_i32, %c0_i32_0 : i32, i32
  }
  func.func @transform_9(%arg0: i32) -> (i32, i32) {
    %c0_i32 = arith.constant 0 : i32
    %c0_i32_0 = arith.constant 0 : i32
    %c0_i32_1 = arith.constant 0 : i32
    return %c0_i32, %c0_i32_0 : i32, i32
  }
  func.func @transform_10(%arg0: i32) -> (i32, i32) {
    %c0_i32 = arith.constant 0 : i32
    %c0_i32_0 = arith.constant 0 : i32
    %c0_i32_1 = arith.constant 0 : i32
    return %c0_i32, %c0_i32_0 : i32, i32
  }
  func.func @transform_11(%arg0: i32) -> (i32, i32) {
    %c0_i32 = arith.constant 0 : i32
    %c0_i32_0 = arith.constant 0 : i32
    %c0_i32_1 = arith.constant 0 : i32
    return %c0_i32, %c0_i32_0 : i32, i32
  }
  func.func @transform_12(%arg0: i32) -> (i32, i32) {
    %c0_i32 = arith.constant 0 : i32
    %c0_i32_0 = arith.constant 0 : i32
    %c0_i32_1 = arith.constant 0 : i32
    return %c0_i32, %c0_i32_0 : i32, i32
  }
  func.func @transform_13(%arg0: i32) -> (i32, i32) {
    %c0_i32 = arith.constant 0 : i32
    %c0_i32_0 = arith.constant 0 : i32
    return %arg0, %c0_i32 : i32, i32
  }
}

</mosaic_0001>

<llo_original>
// kernel: tpu_custom_call.1
$region0: #{tpu_custom_call.1}
  #allocation0 [shape = 'u32[]', space=smem, size = 0x4, offset = 0x4, fixed_abs, tag = 'smem constant byte address 0x4 - core index']
  #allocation1 [shape = 'u32[144,128]{1,0:T(1,128)}', space=vmem, size = 0x12000, scoped, tag = 'internal scratch']
  #allocation2 [shape = 'bf16[128,384]{1,0:T(8,128)(2,1)}', space=vmem, size = 0x18000, scoped, tag = 'scratch operand']
  #allocation3 [shape = 'bf16[384,384]{1,0:T(8,128)(2,1)}', space=vmem, size = 0x48000, scoped, tag = 'scratch operand']
  #allocation4 [shape = 'bf16[384,512]{1,0:T(8,128)(2,1)}', space=vmem, size = 0x60000, scoped, tag = 'scratch operand']
  #allocation5 [shape = 'bf16[512,512]{1,0:T(8,128)(2,1)}', space=vmem, size = 0x80000, scoped, tag = 'scratch operand']
  #allocation6 [shape = 'bf16[512,512]{1,0:T(8,128)(2,1)}', space=vmem, size = 0x80000, scoped, tag = 'scratch operand']
  #allocation7 [shape = 'bf16[512,128]{1,0:T(8,128)(2,1)}', space=vmem, size = 0x20000, scoped, tag = 'scratch operand']
  #allocation8 [shape = 's32[6]{0}', space=sflag, size = 0x18, scoped, tag = 'scratch operand']
  #allocation16 [shape = 's32[]', space=sflag, size = 0x4, offset = 0, fixed_abs, tag = 'sflag constant byte address 0x0 - dummy sync flag']
  #allocation17 [shape = 's32[]', space=sflag, size = 0x4, offset = 0, fixed_abs, tag = 'sflag constant byte address 0x0 - dummy sync flag']
  #allocation18 [shape = 'u32[]', space=smem, size = 0x4, offset = 0x44, fixed_abs, tag = 'smem constant byte address 0x44 - assertion arg 0']
  #allocation19 [shape = 'u32[]', space=smem, size = 0x4, offset = 0x48, fixed_abs, tag = 'smem constant byte address 0x48 - assertion arg 1']
  #allocation20 [shape = 's32[]', space=sflag, size = 0x4, offset = 0, fixed_abs, tag = 'sflag constant byte address 0x0 - dummy sync flag']
  #allocation21 [shape = 's32[]', space=sflag, size = 0x4, offset = 0, fixed_abs, tag = 'sflag constant byte address 0x0 - dummy sync flag']
  #allocation22 [shape = 's32[]', space=sflag, size = 0x4, offset = 0, fixed_abs, tag = 'sflag constant byte address 0x0 - dummy sync flag']
  #allocation23 [shape = 's32[]', space=sflag, size = 0x4, offset = 0, fixed_abs, tag = 'sflag constant byte address 0x0 - dummy sync flag']
  #allocation24 [shape = 's32[]', space=sflag, size = 0x4, offset = 0, fixed_abs, tag = 'sflag constant byte address 0x0 - dummy sync flag']
  #allocation25 [shape = 's32[]', space=sflag, size = 0x4, offset = 0, fixed_abs, tag = 'sflag constant byte address 0x0 - dummy sync flag']
  #allocation26 [shape = 's32[]', space=sflag, size = 0x4, offset = 0, fixed_abs, tag = 'sflag constant byte address 0x0 - dummy sync flag']
  #allocation27 [shape = 's32[]', space=sflag, size = 0x4, offset = 0, fixed_abs, tag = 'sflag constant byte address 0x0 - dummy sync flag']
  #allocation28 [shape = 's32[]', space=sflag, size = 0x4, offset = 0, fixed_abs, tag = 'sflag constant byte address 0x0 - dummy sync flag']
  #allocation29 [shape = 's32[]', space=sflag, size = 0x4, offset = 0, fixed_abs, tag = 'sflag constant byte address 0x0 - dummy sync flag']
  %s0 = inlined_call_operand.hbm [shape: bf16[512,128], index: 0, kind: input, shape index: {}]
  %s1 = inlined_call_operand.hbm [shape: bf16[128,384], index: 1, kind: input, shape index: {}]
  %s2 = inlined_call_operand.hbm [shape: bf16[384,384], index: 2, kind: input, shape index: {}]
  %s3 = inlined_call_operand.hbm [shape: bf16[384,512], index: 3, kind: input, shape index: {}]
  %s4 = inlined_call_operand.hbm [shape: bf16[512,512], index: 4, kind: input, shape index: {}]
  %s5 = inlined_call_operand.hbm [shape: bf16[512,512], index: 5, kind: input, shape index: {}]
  %s6 = inlined_call_operand.hbm [shape: bf16[512,128], index: 6, kind: input, shape index: {}]
  %s7 = inlined_call_operand.hbm [shape: f32[1,384], index: 7, kind: input, shape index: {}]
  %s8 = inlined_call_operand.hbm [shape: f32[1,384], index: 8, kind: input, shape index: {}]
  %s9 = inlined_call_operand.vmem [shape: f32[1,512], index: 9, kind: input, shape index: {}]
  %s10 = inlined_call_operand.vmem [shape: f32[1,512], index: 10, kind: input, shape index: {}]
  %s11 = inlined_call_operand.vmem [shape: f32[1,512], index: 11, kind: input, shape index: {}]
  %s12 = inlined_call_operand.vmem [shape: f32[1,128], index: 12, kind: input, shape index: {}]
  %s13 = inlined_call_operand.hbm [shape: f32[512,128], index: 13, kind: output, shape index: {}]
  %s14 = sld [smem:[#allocation0]]
  $region97: #{tpu_custom_call.1} parent=0
    _
  %s16 = ssub.s32 1, %s14
  %s17 = scalar_select 0, %s16, %s14
  $region1: #{tpu_custom_call.1} parent=0
    #allocation9 [shape = 'u8[131072]{0}', space=vmem, size = 0x20000, scoped, tag = 'input window, operand 0']
    #allocation10 [shape = 's32[2]{0}', space=sflag, size = 0x8, scoped, tag = 'scoped memory for tpu_custom_call.1']
    #allocation11 [shape = 's32[2]{0}', space=sflag, size = 0x8, scoped, tag = 'scoped memory for tpu_custom_call.1']
    #allocation12 [shape = 'u8[1536]{0}', space=vmem, size = 0x800, scoped, tag = 'input window, operand 7, single buffered']
    #allocation13 [shape = 's32[1]{0}', space=sflag, size = 0x4, scoped, tag = 'scoped memory for tpu_custom_call.1']
    #allocation14 [shape = 'u8[1536]{0}', space=vmem, size = 0x800, scoped, tag = 'input window, operand 8, single buffered']
    #allocation15 [shape = 'u8[262144]{0}', space=vmem, size = 0x40000, scoped, tag = 'output window, operand 0']
    %18 = vsyncpa [#allocation10], 0
    %s19 = scalar_lea.sflag [#allocation10], 1
    %20 = vsyncpa %s19, 0
    %21 = vsyncpa [#allocation13], 0
    %22 = vsyncpa [#allocation11], 0
    %s23 = scalar_lea.sflag [#allocation11], 1
    %24 = vsyncpa %s23, 0
    loop: start=0, step=1, limit=4
    $region2: #{tpu_custom_call.1} parent=1 // loop_pre_header
      _
    $region3: #{tpu_custom_call.1} parent=1 // loop_header
      %s26 = sphi 0, %s30
      %p27 = scmp.ge.s32.totalorder %s26, 4
      %s36 = sphi 0, %s38
      %s39 = sphi 0, %s36
      %s40 = sphi 0, %s39
      %s56 = sphi 0, %s40
      %s60 = sphi 0, %s60
      %s62 = sphi 0, %s60
      %s63 = sphi 0, %s62
      %s77 = sphi 0, %s63
      %s81 = sphi 0, %s81
      %s83 = sphi 0, %s81
      %s84 = sphi 0, %s83
      %s98 = sphi 0, %s84
      %s102 = sphi 0, %s102
      %s104 = sphi 0, %s102
      %s105 = sphi 0, %s104
      %s119 = sphi 0, %s105
      %s123 = sphi 0, %s123
      %s125 = sphi 0, %s123
      %s126 = sphi 0, %s125
      %s140 = sphi 0, %s126
      %s144 = sphi 0, %s144
      %s146 = sphi 0, %s144
      %s147 = sphi 0, %s146
      %s161 = sphi 0, %s147
      %s165 = sphi 0, %s165
      %s167 = sphi 0, %s165
      %s168 = sphi 0, %s167
      %s182 = sphi 0, %s168
      %s188 = sphi 0, %s190
      %s191 = sphi 0, %s188
      %s192 = sphi 0, %s191
      %s208 = sphi 0, %s192
    $region4: #{tpu_custom_call.1} parent=1 // loop_header_branch
      %29 = sbr.rel (%p27) target = $region8
    $region5: #{tpu_custom_call.1} parent=1 // loop_body
      %s31 = ssub.s32 %s26, 1
      %s32 = ssub.s32 %s26, 2
      %s33 = sadd.s32 %s26, 1
      %s34 = ssub.s32 %s26, %s33
      %p35 = scmp.eq.s32.totalorder %s34, 0
      %s37 = sadd.s32 %s36, 1
      %s38 = scalar_select %p35, %s36, %s37
      %p41 = pneg %p35
      %p42 = scmp.eq.s32.totalorder %s26, 1
      %p43 = por %p41, %p42
      %p44 = scmp.ne.s32.totalorder %s36, %s39
      %p45 = scmp.eq.s32.totalorder %s26, 0
      %p46 = por %p44, %p45
      %p47 = scmp.ne.s32.totalorder %s36, %s39
      %p48 = scmp.eq.s32.totalorder %s31, 1
      %p49 = por %p47, %p48
      %p50 = scmp.ne.s32.totalorder %s39, %s40
      %p51 = scmp.eq.s32.totalorder %s31, 0
      %p52 = por %p50, %p51
      %p53 = scmp.ne.s32.totalorder %s39, %s40
      %p54 = scmp.eq.s32.totalorder %s32, 1
      %p55 = por %p53, %p54
      %p57 = scmp.ne.s32.totalorder %s40, %s56
      %p58 = scmp.eq.s32.totalorder %s32, 0
      %p59 = por %p57, %p58
      %s61 = sadd.s32 %s60, 1
      %p64 = scmp.eq.s32.totalorder %s26, 1
      %p65 = scmp.ne.s32.totalorder %s60, %s62
      %p66 = scmp.eq.s32.totalorder %s26, 0
      %p67 = por %p65, %p66
      %p68 = scmp.ne.s32.totalorder %s60, %s62
      %p69 = scmp.eq.s32.totalorder %s31, 1
      %p70 = por %p68, %p69
      %p71 = scmp.ne.s32.totalorder %s62, %s63
      %p72 = scmp.eq.s32.totalorder %s31, 0
      %p73 = por %p71, %p72
      %p74 = scmp.ne.s32.totalorder %s62, %s63
      %p75 = scmp.eq.s32.totalorder %s32, 1
      %p76 = por %p74, %p75
      %p78 = scmp.ne.s32.totalorder %s63, %s77
      %p79 = scmp.eq.s32.totalorder %s32, 0
      %p80 = por %p78, %p79
      %s82 = sadd.s32 %s81, 1
      %p85 = scmp.eq.s32.totalorder %s26, 1
      %p86 = scmp.ne.s32.totalorder %s81, %s83
      %p87 = scmp.eq.s32.totalorder %s26, 0
      %p88 = por %p86, %p87
      %p89 = scmp.ne.s32.totalorder %s81, %s83
      %p90 = scmp.eq.s32.totalorder %s31, 1
      %p91 = por %p89, %p90
      %p92 = scmp.ne.s32.totalorder %s83, %s84
      %p93 = scmp.eq.s32.totalorder %s31, 0
      %p94 = por %p92, %p93
      %p95 = scmp.ne.s32.totalorder %s83, %s84
      %p96 = scmp.eq.s32.totalorder %s32, 1
      %p97 = por %p95, %p96
      %p99 = scmp.ne.s32.totalorder %s84, %s98
      %p100 = scmp.eq.s32.totalorder %s32, 0
      %p101 = por %p99, %p100
      %s103 = sadd.s32 %s102, 1
      %p106 = scmp.eq.s32.totalorder %s26, 1
      %p107 = scmp.ne.s32.totalorder %s102, %s104
      %p108 = scmp.eq.s32.totalorder %s26, 0
      %p109 = por %p107, %p108
      %p110 = scmp.ne.s32.totalorder %s102, %s104
      %p111 = scmp.eq.s32.totalorder %s31, 1
      %p112 = por %p110, %p111
      %p113 = scmp.ne.s32.totalorder %s104, %s105
      %p114 = scmp.eq.s32.totalorder %s31, 0
      %p115 = por %p113, %p114
      %p116 = scmp.ne.s32.totalorder %s104, %s105
      %p117 = scmp.eq.s32.totalorder %s32, 1
      %p118 = por %p116, %p117
      %p120 = scmp.ne.s32.totalorder %s105, %s119
      %p121 = scmp.eq.s32.totalorder %s32, 0
      %p122 = por %p120, %p121
      %s124 = sadd.s32 %s123, 1
      %p127 = scmp.eq.s32.totalorder %s26, 1
      %p128 = scmp.ne.s32.totalorder %s123, %s125
      %p129 = scmp.eq.s32.totalorder %s26, 0
      %p130 = por %p128, %p129
      %p131 = scmp.ne.s32.totalorder %s123, %s125
      %p132 = scmp.eq.s32.totalorder %s31, 1
      %p133 = por %p131, %p132
      %p134 = scmp.ne.s32.totalorder %s125, %s126
      %p135 = scmp.eq.s32.totalorder %s31, 0
      %p136 = por %p134, %p135
      %p137 = scmp.ne.s32.totalorder %s125, %s126
      %p138 = scmp.eq.s32.totalorder %s32, 1
      %p139 = por %p137, %p138
      %p141 = scmp.ne.s32.totalorder %s126, %s140
      %p142 = scmp.eq.s32.totalorder %s32, 0
      %p143 = por %p141, %p142
      %s145 = sadd.s32 %s144, 1
      %p148 = scmp.eq.s32.totalorder %s26, 1
      %p149 = scmp.ne.s32.totalorder %s144, %s146
      %p150 = scmp.eq.s32.totalorder %s26, 0
      %p151 = por %p149, %p150
      %p152 = scmp.ne.s32.totalorder %s144, %s146
      %p153 = scmp.eq.s32.totalorder %s31, 1
      %p154 = por %p152, %p153
      %p155 = scmp.ne.s32.totalorder %s146, %s147
      %p156 = scmp.eq.s32.totalorder %s31, 0
      %p157 = por %p155, %p156
      %p158 = scmp.ne.s32.totalorder %s146, %s147
      %p159 = scmp.eq.s32.totalorder %s32, 1
      %p160 = por %p158, %p159
      %p162 = scmp.ne.s32.totalorder %s147, %s161
      %p163 = scmp.eq.s32.totalorder %s32, 0
      %p164 = por %p162, %p163
      %s166 = sadd.s32 %s165, 1
      %p169 = scmp.eq.s32.totalorder %s26, 1
      %p170 = scmp.ne.s32.totalorder %s165, %s167
      %p171 = scmp.eq.s32.totalorder %s26, 0
      %p172 = por %p170, %p171
      %p173 = scmp.ne.s32.totalorder %s165, %s167
      %p174 = scmp.eq.s32.totalorder %s31, 1
      %p175 = por %p173, %p174
      %p176 = scmp.ne.s32.totalorder %s167, %s168
      %p177 = scmp.eq.s32.totalorder %s31, 0
      %p178 = por %p176, %p177
      %p179 = scmp.ne.s32.totalorder %s167, %s168
      %p180 = scmp.eq.s32.totalorder %s32, 1
      %p181 = por %p179, %p180
      %p183 = scmp.ne.s32.totalorder %s168, %s182
      %p184 = scmp.eq.s32.totalorder %s32, 0
      %p185 = por %p183, %p184
      %s186 = ssub.s32 %s26, %s33
      %p187 = scmp.eq.s32.totalorder %s186, 0
      %s189 = sadd.s32 %s188, 1
      %s190 = scalar_select %p187, %s188, %s189
      %p193 = pneg %p187
      %p194 = scmp.eq.s32.totalorder %s26, 1
      %p195 = por %p193, %p194
      %p196 = scmp.ne.s32.totalorder %s188, %s191
      %p197 = scmp.eq.s32.totalorder %s26, 0
      %p198 = por %p196, %p197
      %p199 = scmp.ne.s32.totalorder %s188, %s191
      %p200 = scmp.eq.s32.totalorder %s31, 1
      %p201 = por %p199, %p200
      %p202 = scmp.ne.s32.totalorder %s191, %s192
      %p203 = scmp.eq.s32.totalorder %s31, 0
      %p204 = por %p202, %p203
      %p205 = scmp.ne.s32.totalorder %s191, %s192
      %p206 = scmp.eq.s32.totalorder %s32, 1
      %p207 = por %p205, %p206
      %p209 = scmp.ne.s32.totalorder %s192, %s208
      %p210 = scmp.eq.s32.totalorder %s32, 0
      %p211 = por %p209, %p210
      %p212 = scmp.le.s32.totalorder 1, %s26
      %p213 = scmp.lt.s32.totalorder %s26, 3
      %p214 = pnand %p212, %p213
      %p215 = pneg %p214
      // Predicated region
      $region9: #{tpu_custom_call.1} parent=5 // pred_check
        _
      $region10: #{tpu_custom_call.1} parent=5 // pred_check_branch
        %217 = sbr.rel (%p214) target = $region12
      $region11: #{tpu_custom_call.1} parent=5 // pred_region
        %s218 = ssub.s32 %s26, 1
        // Predicated region
        $region13: #{tpu_custom_call.1} parent=11 // pred_check
          %p219 = pneg %p73
        $region14: #{tpu_custom_call.1} parent=11 // pred_check_branch
          %221 = sbr.rel (%p219) target = $region16
        $region15: #{tpu_custom_call.1} parent=11 // pred_region
          %s223 = ssub.s32 48, 48
          %224 = vsyncadd [#allocation13], %s223
          %s226 = sshll.u32 [#allocation12], 4
          %s227 = int_to_ptr.vmem [resolvable:$true] %s226
          %229 = dma.hbm_to_vmem [thread:$0]  %s7, 48, %s227, [#allocation13]
        $region16: #{tpu_custom_call.1} parent=11 // pred_fallthru
          _
        // Predicated region
        $region17: #{tpu_custom_call.1} parent=11 // pred_check
          %p230 = pneg %p94
        $region18: #{tpu_custom_call.1} parent=11 // pred_check_branch
          %232 = sbr.rel (%p230) target = $region20
        $region19: #{tpu_custom_call.1} parent=11 // pred_region
          %s234 = ssub.s32 48, 48
          %235 = vsyncadd [#allocation13], %s234
          %s237 = sshll.u32 [#allocation14], 4
          %s238 = int_to_ptr.vmem [resolvable:$true] %s237
          %240 = dma.hbm_to_vmem [thread:$0]  %s8, 48, %s238, [#allocation13]
        $region20: #{tpu_custom_call.1} parent=11 // pred_fallthru
          _
        // Predicated region
        $region21: #{tpu_custom_call.1} parent=11 // pred_check
          %p241 = pneg %p115
        $region22: #{tpu_custom_call.1} parent=11 // pred_check_branch
          %243 = sbr.rel (%p241) target = $region24
        $region23: #{tpu_custom_call.1} parent=11 // pred_region
          _
        $region24: #{tpu_custom_call.1} parent=11 // pred_fallthru
          _
        // Predicated region
        $region25: #{tpu_custom_call.1} parent=11 // pred_check
          %p244 = pneg %p136
        $region26: #{tpu_custom_call.1} parent=11 // pred_check_branch
          %246 = sbr.rel (%p244) target = $region28
        $region27: #{tpu_custom_call.1} parent=11 // pred_region
          _
        $region28: #{tpu_custom_call.1} parent=11 // pred_fallthru
          _
        // Predicated region
        $region29: #{tpu_custom_call.1} parent=11 // pred_check
          %p247 = pneg %p157
        $region30: #{tpu_custom_call.1} parent=11 // pred_check_branch
          %249 = sbr.rel (%p247) target = $region32
        $region31: #{tpu_custom_call.1} parent=11 // pred_region
          _
        $region32: #{tpu_custom_call.1} parent=11 // pred_fallthru
          _
        // Predicated region
        $region33: #{tpu_custom_call.1} parent=11 // pred_check
          %p250 = pneg %p178
        $region34: #{tpu_custom_call.1} parent=11 // pred_check_branch
          %252 = sbr.rel (%p250) target = $region36
        $region35: #{tpu_custom_call.1} parent=11 // pred_region
          _
        $region36: #{tpu_custom_call.1} parent=11 // pred_fallthru
          _
      $region12: #{tpu_custom_call.1} parent=5 // pred_fallthru
        _
      %p253 = scmp.lt.s32.totalorder %s26, 2
      // Predicated region
      $region37: #{tpu_custom_call.1} parent=5 // pred_check
        %p254 = pneg %p253
      $region38: #{tpu_custom_call.1} parent=5 // pred_check_branch
        %256 = sbr.rel (%p254) target = $region40
      $region39: #{tpu_custom_call.1} parent=5 // pred_region
        // Predicated region
        $region41: #{tpu_custom_call.1} parent=39 // pred_check
          %p257 = pneg %p46
        $region42: #{tpu_custom_call.1} parent=39 // pred_check_branch
          %259 = sbr.rel (%p257) target = $region44
        $region43: #{tpu_custom_call.1} parent=39 // pred_region
          %s260 = sand.u32 %s36, 1
          %s261 = scalar_lea.sflag [#allocation10], %s260
          %s262 = sand.u32 %s36, 1
          %s263 = smul.addr %s262, 128
          %s264 = scalar_lea.vmem [#allocation9], %s263
          %s265 = smul.u32 32, %s26
          %s267 = ssub.s32 2048, 2048
          %268 = vsyncadd %s261, %s267
          %s269 = smul.addr %s265, 64
          %s270 = scalar_lea.hbm %s0, %s269
          %s271 = sshll.u32 %s264, 4
          %s272 = int_to_ptr.vmem [resolvable:$true] %s271
          %277 = dma.hbm_to_vmem [thread:$0]  %s270, 2048, %s272, %s261, 64, 64, 4
        $region44: #{tpu_custom_call.1} parent=39 // pred_fallthru
          _
      $region40: #{tpu_custom_call.1} parent=5 // pred_fallthru
        _
      %p278 = scmp.le.s32.totalorder 1, %s26
      %p279 = scmp.lt.s32.totalorder %s26, 3
      %p280 = pnand %p278, %p279
      %p281 = pneg %p280
      // Predicated region
      $region45: #{tpu_custom_call.1} parent=5 // pred_check
        _
      $region46: #{tpu_custom_call.1} parent=5 // pred_check_branch
        %283 = sbr.rel (%p280) target = $region48
      $region47: #{tpu_custom_call.1} parent=5 // pred_region
        %s284 = ssub.s32 %s26, 1
        %s285 = sand.u32 %s39, 1
        %s286 = scalar_lea.sflag [#allocation10], %s285
        %s287 = sand.u32 %s39, 1
        %s288 = smul.addr %s287, 128
        %s289 = scalar_lea.vmem [#allocation9], %s288
        // Predicated region
        $region49: #{tpu_custom_call.1} parent=47 // pred_check
          %p290 = pneg %p52
        $region50: #{tpu_custom_call.1} parent=47 // pred_check_branch
          %292 = sbr.rel (%p290) target = $region52
        $region51: #{tpu_custom_call.1} parent=47 // pred_region
          %293 = dma.done %s286, 2048
        $region52: #{tpu_custom_call.1} parent=47 // pred_fallthru
          _
        // Predicated region
        $region53: #{tpu_custom_call.1} parent=47 // pred_check
          %p294 = pneg %p73
        $region54: #{tpu_custom_call.1} parent=47 // pred_check_branch
          %296 = sbr.rel (%p294) target = $region56
        $region55: #{tpu_custom_call.1} parent=47 // pred_region
          %297 = dma.done [#allocation13], 48
        $region56: #{tpu_custom_call.1} parent=47 // pred_fallthru
          _
        // Predicated region
        $region57: #{tpu_custom_call.1} parent=47 // pred_check
          %p298 = pneg %p94
        $region58: #{tpu_custom_call.1} parent=47 // pred_check_branch
          %300 = sbr.rel (%p298) target = $region60
        $region59: #{tpu_custom_call.1} parent=47 // pred_region
          %301 = dma.done [#allocation13], 48
        $region60: #{tpu_custom_call.1} parent=47 // pred_fallthru
          _
        %s302 = sand.u32 %s39, 1
        %s303 = scalar_lea.sflag [#allocation10], %s302
        %s304 = sand.u32 %s39, 1
        %s305 = smul.addr %s304, 128
        %s306 = scalar_lea.vmem [#allocation9], %s305
        %p307 = pneg %p52
        %p308 = pneg %p49
        %p309 = pneg %p73
        %p310 = pneg %p70
        %p311 = pneg %p94
        %p312 = pneg %p91
        %p313 = pneg %p115
        %p314 = pneg %p112
        %p315 = pneg %p136
        %p316 = pneg %p133
        %p317 = pneg %p157
        %p318 = pneg %p154
        %p319 = pneg %p178
        %p320 = pneg %p175
        %p321 = pneg %p204
        %p322 = pneg %p201
        %s323 = sand.u32 %s191, 1
        %s324 = scalar_lea.sflag [#allocation11], %s323
        %s325 = sand.u32 %s191, 1
        %s326 = smul.addr %s325, 256
        %s327 = scalar_lea.vmem [#allocation15], %s326
        %s328 = smul.u32 32, %s31
        %s329 = smul.u32 32, %s31
        // Predicated region
        $region61: #{tpu_custom_call.1} parent=47 // pred_check
          _
        $region62: #{tpu_custom_call.1} parent=47 // pred_check_branch
          %332 = sbr.rel target = $region64
        $region63: #{tpu_custom_call.1} parent=47 // pred_region
          %333 = sst [smem:[#allocation18]] [#allocation17]
          %334 = sst [smem:[#allocation19]] [#allocation16]
        $region64: #{tpu_custom_call.1} parent=47 // pred_fallthru
          _
        %336 = shalt.err (0)
        %s338 = sshll.u32 [#allocation2], 4
        %s339 = int_to_ptr.vmem [resolvable:$true] %s338
        %341 = dma.hbm_to_vmem [thread:$0]  %s1, 3072, %s339, [#allocation8]
        %s342 = scalar_lea.sflag [#allocation8], 1
        // Predicated region
        $region65: #{tpu_custom_call.1} parent=47 // pred_check
          _
        $region66: #{tpu_custom_call.1} parent=47 // pred_check_branch
          %344 = sbr.rel target = $region68
        $region67: #{tpu_custom_call.1} parent=47 // pred_region
          %345 = sst [smem:[#allocation18]] [#allocation21]
          %346 = sst [smem:[#allocation19]] [#allocation20]
        $region68: #{tpu_custom_call.1} parent=47 // pred_fallthru
          _
        %348 = shalt.err (0)
        %s350 = sshll.u32 [#allocation3], 4
        %s351 = int_to_ptr.vmem [resolvable:$true] %s350
        %353 = dma.hbm_to_vmem [thread:$0]  %s2, 9216, %s351, %s342
        %s354 = scalar_lea.sflag [#allocation8], 2
        // Predicated region
        $region69: #{tpu_custom_call.1} parent=47 // pred_check
          _
        $region70: #{tpu_custom_call.1} parent=47 // pred_check_branch
          %356 = sbr.rel target = $region72
        $region71: #{tpu_custom_call.1} parent=47 // pred_region
          %357 = sst [smem:[#allocation18]] [#allocation23]
          %358 = sst [smem:[#allocation19]] [#allocation22]
        $region72: #{tpu_custom_call.1} parent=47 // pred_fallthru
          _
        %360 = shalt.err (0)
        %s362 = sshll.u32 [#allocation4], 4
        %s363 = int_to_ptr.vmem [resolvable:$true] %s362
        %365 = dma.hbm_to_vmem [thread:$0]  %s3, 12288, %s363, %s354
        %s366 = scalar_lea.sflag [#allocation8], 3
        // Predicated region
        $region73: #{tpu_custom_call.1} parent=47 // pred_check
          _
        $region74: #{tpu_custom_call.1} parent=47 // pred_check_branch
          %368 = sbr.rel target = $region76
        $region75: #{tpu_custom_call.1} parent=47 // pred_region
          %369 = sst [smem:[#allocation18]] [#allocation25]
          %370 = sst [smem:[#allocation19]] [#allocation24]
        $region76: #{tpu_custom_call.1} parent=47 // pred_fallthru
          _
        %372 = shalt.err (0)
        %s374 = sshll.u32 [#allocation5], 4
        %s375 = int_to_ptr.vmem [resolvable:$true] %s374
        %377 = dma.hbm_to_vmem [thread:$0]  %s4, 16384, %s375, %s366
        %s378 = scalar_lea.sflag [#allocation8], 4
        // Predicated region
        $region77: #{tpu_custom_call.1} parent=47 // pred_check
          _
        $region78: #{tpu_custom_call.1} parent=47 // pred_check_branch
          %380 = sbr.rel target = $region80
        $region79: #{tpu_custom_call.1} parent=47 // pred_region
          %381 = sst [smem:[#allocation18]] [#allocation27]
          %382 = sst [smem:[#allocation19]] [#allocation26]
        $region80: #{tpu_custom_call.1} parent=47 // pred_fallthru
          _
        %384 = shalt.err (0)
        %s386 = sshll.u32 [#allocation6], 4
        %s387 = int_to_ptr.vmem [resolvable:$true] %s386
        %389 = dma.hbm_to_vmem [thread:$0]  %s5, 16384, %s387, %s378
        %s390 = scalar_lea.sflag [#allocation8], 5
        // Predicated region
        $region81: #{tpu_custom_call.1} parent=47 // pred_check
          _
        $region82: #{tpu_custom_call.1} parent=47 // pred_check_branch
          %392 = sbr.rel target = $region84
        $region83: #{tpu_custom_call.1} parent=47 // pred_region
          %393 = sst [smem:[#allocation18]] [#allocation29]
          %394 = sst [smem:[#allocation19]] [#allocation28]
        $region84: #{tpu_custom_call.1} parent=47 // pred_fallthru
          _
        %396 = shalt.err (0)
        %s398 = sshll.u32 [#allocation7], 4
        %s399 = int_to_ptr.vmem [resolvable:$true] %s398
        %401 = dma.hbm_to_vmem [thread:$0]  %s6, 4096, %s399, %s390
        %v402 = vld [vmem:[%s289] sm:$0xf]
        %v403 = vld [vmem:[%s289 + $0x4] sm:$0xf]
        %v404 = vld [vmem:[%s289 + $0x8] sm:$0xf]
        %v405 = vld [vmem:[%s289 + $0xc] sm:$0xf]
        %v406 = vld [vmem:[%s289 + $0x10] sm:$0xf]
        %v407 = vld [vmem:[%s289 + $0x14] sm:$0xf]
        %v408 = vld [vmem:[%s289 + $0x18] sm:$0xf]
        %v409 = vld [vmem:[%s289 + $0x1c] sm:$0xf]
        %v410 = vld [vmem:[%s289 + $0x20] sm:$0xf]
        %v411 = vld [vmem:[%s289 + $0x24] sm:$0xf]
        %v412 = vld [vmem:[%s289 + $0x28] sm:$0xf]
        %v413 = vld [vmem:[%s289 + $0x2c] sm:$0xf]
        %v414 = vld [vmem:[%s289 + $0x30] sm:$0xf]
        %v415 = vld [vmem:[%s289 + $0x34] sm:$0xf]
        %v416 = vld [vmem:[%s289 + $0x38] sm:$0xf]
        %v417 = vld [vmem:[%s289 + $0x3c] sm:$0xf]
        %v418 = vld [vmem:[%s289 + $0x40] sm:$0xf]
        %v419 = vld [vmem:[%s289 + $0x44] sm:$0xf]
        %v420 = vld [vmem:[%s289 + $0x48] sm:$0xf]
        %v421 = vld [vmem:[%s289 + $0x4c] sm:$0xf]
        %v422 = vld [vmem:[%s289 + $0x50] sm:$0xf]
        %v423 = vld [vmem:[%s289 + $0x54] sm:$0xf]
        %v424 = vld [vmem:[%s289 + $0x58] sm:$0xf]
        %v425 = vld [vmem:[%s289 + $0x5c] sm:$0xf]
        %v426 = vld [vmem:[%s289 + $0x60] sm:$0xf]
        %v427 = vld [vmem:[%s289 + $0x64] sm:$0xf]
        %v428 = vld [vmem:[%s289 + $0x68] sm:$0xf]
        %v429 = vld [vmem:[%s289 + $0x6c] sm:$0xf]
        %v430 = vld [vmem:[%s289 + $0x70] sm:$0xf]
        %v431 = vld [vmem:[%s289 + $0x74] sm:$0xf]
        %v432 = vld [vmem:[%s289 + $0x78] sm:$0xf]
        %v433 = vld [vmem:[%s289 + $0x7c] sm:$0xf]
        %s434 = smul.u32 4, 16
        %s435 = smul.u32 %s434, 3
        %s436 = sshll.u32 %s435, 4
        %437 = dma.done [#allocation8], %s436
        %v438 = vld [vmem:[#allocation2] sm:$0xff]
        %v439 = vld [vmem:[#allocation2 + $0x8] sm:$0xf]
        %v440 = vld [vmem:[#allocation2 + $0xc] sm:$0xff]
        %v441 = vld [vmem:[#allocation2 + $0x14] sm:$0xf]
        %v442 = vld [vmem:[#allocation2 + $0x18] sm:$0xff]
        %v443 = vld [vmem:[#allocation2 + $0x20] sm:$0xf]
        %v444 = vld [vmem:[#allocation2 + $0x24] sm:$0xff]
        %v445 = vld [vmem:[#allocation2 + $0x2c] sm:$0xf]
        %v446 = vld [vmem:[#allocation2 + $0x30] sm:$0xff]
        %v447 = vld [vmem:[#allocation2 + $0x38] sm:$0xf]
        %v448 = vld [vmem:[#allocation2 + $0x3c] sm:$0xff]
        %v449 = vld [vmem:[#allocation2 + $0x44] sm:$0xf]
        %v450 = vld [vmem:[#allocation2 + $0x48] sm:$0xff]
        %v451 = vld [vmem:[#allocation2 + $0x50] sm:$0xf]
        %v452 = vld [vmem:[#allocation2 + $0x54] sm:$0xff]
        %v453 = vld [vmem:[#allocation2 + $0x5c] sm:$0xf]
        %v454 = vld [vmem:[#allocation2 + $0x60] sm:$0xff]
        %v455 = vld [vmem:[#allocation2 + $0x68] sm:$0xf]
        %v456 = vld [vmem:[#allocation2 + $0x6c] sm:$0xff]
        %v457 = vld [vmem:[#allocation2 + $0x74] sm:$0xf]
        %v458 = vld [vmem:[#allocation2 + $0x78] sm:$0xff]
        %v459 = vld [vmem:[#allocation2 + $0x80] sm:$0xf]
        %v460 = vld [vmem:[#allocation2 + $0x84] sm:$0xff]
        %v461 = vld [vmem:[#allocation2 + $0x8c] sm:$0xf]
        %v462 = vld [vmem:[#allocation2 + $0x90] sm:$0xff]
        %v463 = vld [vmem:[#allocation2 + $0x98] sm:$0xf]
        %v464 = vld [vmem:[#allocation2 + $0x9c] sm:$0xff]
        %v465 = vld [vmem:[#allocation2 + $0xa4] sm:$0xf]
        %v466 = vld [vmem:[#allocation2 + $0xa8] sm:$0xff]
        %v467 = vld [vmem:[#allocation2 + $0xb0] sm:$0xf]
        %v468 = vld [vmem:[#allocation2 + $0xb4] sm:$0xff]
        %v469 = vld [vmem:[#allocation2 + $0xbc] sm:$0xf]
        %v470 = vld [vmem:[#allocation12] sm:$0x7]
        %v472 = vlaneseq
        %v473 = vshrl.u32 %v472, 7
        %v474 = vsub.s32 0, %v473
        %v475 = vrot.slane %v470, %v474
        %v476 = vlaneseq
        %v477 = vshrl.u32 %v476, 7
        %v478 = vsub.s32 1, %v477
        %v479 = vrot.slane %v470, %v478
        %v480 = vlaneseq
        %v481 = vshrl.u32 %v480, 7
        %v482 = vsub.s32 2, %v481
        %v483 = vrot.slane %v470, %v482
        %v503 = vunpack.c.l.b16 %v402
        %v504 = vunpack.c.l.b16 %v403
        %v505 = vunpack.c.l.b16 %v404
        %v506 = vunpack.c.l.b16 %v405
        %v507 = vunpack.c.l.b16 %v406
        %v508 = vunpack.c.l.b16 %v407
        %v509 = vunpack.c.l.b16 %v408
        %v510 = vunpack.c.l.b16 %v409
        %v511 = vunpack.c.l.b16 %v410
        %v512 = vunpack.c.l.b16 %v411
        %v513 = vunpack.c.l.b16 %v412
        %v514 = vunpack.c.l.b16 %v413
        %v515 = vunpack.c.l.b16 %v414
        %v516 = vunpack.c.l.b16 %v415
        %v517 = vunpack.c.l.b16 %v416
        %v518 = vunpack.c.l.b16 %v417
        %v519 = vpack.c.b16 %v504, %v503
        %v520 = vpack.c.b16 %v506, %v505
        %v521 = vpack.c.b16 %v508, %v507
        %v522 = vpack.c.b16 %v510, %v509
        %v523 = vpack.c.b16 %v512, %v511
        %v524 = vpack.c.b16 %v514, %v513
        %v525 = vpack.c.b16 %v516, %v515
        %v526 = vpack.c.b16 %v518, %v517
        %v567 = vunpack.c.l.b16 %v438
        %v568 = vunpack.c.h.b16 %v438
        %v569 = vunpack.c.l.b16 %v439
        %v570 = vunpack.c.l.b16 %v440
        %v571 = vunpack.c.h.b16 %v440
        %v572 = vunpack.c.l.b16 %v441
        %v573 = vunpack.c.l.b16 %v442
        %v574 = vunpack.c.h.b16 %v442
        %v575 = vunpack.c.l.b16 %v443
        %v576 = vunpack.c.l.b16 %v444
        %v577 = vunpack.c.h.b16 %v444
        %v578 = vunpack.c.l.b16 %v445
        %v579 = vunpack.c.l.b16 %v446
        %v580 = vunpack.c.h.b16 %v446
        %v581 = vunpack.c.l.b16 %v447
        %v582 = vunpack.c.l.b16 %v448
        %v583 = vunpack.c.h.b16 %v448
        %v584 = vunpack.c.l.b16 %v449
        %v585 = vunpack.c.l.b16 %v450
        %v586 = vunpack.c.h.b16 %v450
        %v587 = vunpack.c.l.b16 %v451
        %v588 = vunpack.c.l.b16 %v452
        %v589 = vunpack.c.h.b16 %v452
        %v590 = vunpack.c.l.b16 %v453
        %v591 = vunpack.c.l.b16 %v454
        %v592 = vunpack.c.h.b16 %v454
        %v593 = vunpack.c.l.b16 %v455
        %v594 = vunpack.c.l.b16 %v456
        %v595 = vunpack.c.h.b16 %v456
        %v596 = vunpack.c.l.b16 %v457
        %v597 = vunpack.c.l.b16 %v458
        %v598 = vunpack.c.h.b16 %v458
        %v599 = vunpack.c.l.b16 %v459
        %v600 = vunpack.c.l.b16 %v460
        %v601 = vunpack.c.h.b16 %v460
        %v602 = vunpack.c.l.b16 %v461
        %v603 = vunpack.c.l.b16 %v462
        %v604 = vunpack.c.h.b16 %v462
        %v605 = vunpack.c.l.b16 %v463
        %v606 = vunpack.c.l.b16 %v464
        %v607 = vunpack.c.h.b16 %v464
        %v608 = vunpack.c.l.b16 %v465
        %v609 = vunpack.c.l.b16 %v466
        %v610 = vunpack.c.h.b16 %v466
        %v611 = vunpack.c.l.b16 %v467
        %v612 = vunpack.c.l.b16 %v468
        %v613 = vunpack.c.h.b16 %v468
        %v614 = vunpack.c.l.b16 %v469
        %v615 = vpack.c.b16 %v570, %v567
        %v616 = vpack.c.b16 %v571, %v568
        %v617 = vpack.c.b16 %v572, %v569
        %v618 = vpack.c.b16 %v576, %v573
        %v619 = vpack.c.b16 %v577, %v574
        %v620 = vpack.c.b16 %v578, %v575
        %v621 = vpack.c.b16 %v582, %v579
        %v622 = vpack.c.b16 %v583, %v580
        %v623 = vpack.c.b16 %v584, %v581
        %v624 = vpack.c.b16 %v588, %v585
        %v625 = vpack.c.b16 %v589, %v586
        %v626 = vpack.c.b16 %v590, %v587
        %v627 = vpack.c.b16 %v594, %v591
        %v628 = vpack.c.b16 %v595, %v592
        %v629 = vpack.c.b16 %v596, %v593
        %v630 = vpack.c.b16 %v600, %v597
        %v631 = vpack.c.b16 %v601, %v598
        %v632 = vpack.c.b16 %v602, %v599
        %v633 = vpack.c.b16 %v606, %v603
        %v634 = vpack.c.b16 %v607, %v604
        %v635 = vpack.c.b16 %v608, %v605
        %v636 = vpack.c.b16 %v612, %v609
        %v637 = vpack.c.b16 %v613, %v610
        %v638 = vpack.c.b16 %v614, %v611
        %663 = vmatprep.subr.bf16.mxu0 %v637
        %664 = vmatpush1.bf16.msra.mxu0 %v636
        %665 = vmatprep.subr.bf16.mxu0 %v634
        %666 = vmatpush1.bf16.msra.mxu0 %v633
        %667 = vmatprep.subr.bf16.mxu0 %v631
        %668 = vmatpush1.bf16.msra.mxu0 %v630
        %669 = vmatprep.subr.bf16.mxu0 %v628
        %670 = vmatpush1.bf16.msra.mxu0 %v627
        %671 = vmatprep.subr.bf16.mxu0 %v625
        %672 = vmatpush1.bf16.msra.mxu0 %v624
        %673 = vmatprep.subr.bf16.mxu0 %v622
        %674 = vmatpush1.bf16.msra.mxu0 %v621
        %675 = vmatprep.subr.bf16.mxu0 %v619
        %676 = vmatpush1.bf16.msra.mxu0 %v618
        %677 = vmatprep.subr.bf16.mxu0 %v616
        %678 = vmatpush1.bf16.msra.mxu0 %v615
        %679 = vmatprep.subr.bf16.mxu0 0
        %680 = vmatpush2.bf16.msra.mxu0 0
        %681 = vmatprep.subr.bf16.mxu0 0
        %682 = vmatpush2.bf16.msra.mxu0 0
        %683 = vmatprep.subr.bf16.mxu0 0
        %684 = vmatpush2.bf16.msra.mxu0 0
        %685 = vmatprep.subr.bf16.mxu0 0
        %686 = vmatpush2.bf16.msra.mxu0 0
        %687 = vmatprep.subr.bf16.mxu0 0
        %688 = vmatpush2.bf16.msra.mxu0 0
        %689 = vmatprep.subr.bf16.mxu0 0
        %690 = vmatpush2.bf16.msra.mxu0 0
        %691 = vmatprep.subr.bf16.mxu0 0
        %692 = vmatpush2.bf16.msra.mxu0 0
        %693 = vmatprep.subr.bf16.mxu0 0
        %694 = vmatpush2.bf16.msra.mxu0 0
        %695 = vmatprep.mubr.bf16.mxu0 0
        %696 = vmatmul.mubr.bf16.gmra.mxu0 %v519
        %v697 = vpop.f32.mrf.mxu0
        %v698 = vadd.f32 %v475, %v697
        %v699 = vpop.f32.mrf.mxu0
        %v700 = vadd.f32 %v479, %v699
        %v701 = vpop.f32.mrf.mxu0
        %v702 = vadd.f32 %v475, %v701
        %v703 = vpop.f32.mrf.mxu0
        %v704 = vadd.f32 %v479, %v703
        %705 = vmatprep.mubr.bf16.mxu0 0
        %706 = vmatmul.mubr.bf16.gmra.mxu0 %v520
        %v707 = vpop.f32.mrf.mxu0
        %v708 = vadd.f32 %v475, %v707
        %v709 = vpop.f32.mrf.mxu0
        %v710 = vadd.f32 %v479, %v709
        %v711 = vpop.f32.mrf.mxu0
        %v712 = vadd.f32 %v475, %v711
        %v713 = vpop.f32.mrf.mxu0
        %v714 = vadd.f32 %v479, %v713
        %715 = vmatprep.mubr.bf16.mxu0 0
        %716 = vmatmul.mubr.bf16.gmra.mxu0 %v521
        %v717 = vpop.f32.mrf.mxu0
        %v718 = vadd.f32 %v475, %v717
        %v719 = vpop.f32.mrf.mxu0
        %v720 = vadd.f32 %v479, %v719
        %v721 = vpop.f32.mrf.mxu0
        %v722 = vadd.f32 %v475, %v721
        %v723 = vpop.f32.mrf.mxu0
        %v724 = vadd.f32 %v479, %v723
        %725 = vmatprep.mubr.bf16.mxu0 0
        %726 = vmatmul.mubr.bf16.gmra.mxu0 %v522
        %v727 = vpop.f32.mrf.mxu0
        %v728 = vadd.f32 %v475, %v727
        %v729 = vpop.f32.mrf.mxu0
        %v730 = vadd.f32 %v479, %v729
        %v731 = vpop.f32.mrf.mxu0
        %v732 = vadd.f32 %v475, %v731
        %v733 = vpop.f32.mrf.mxu0
        %v734 = vadd.f32 %v479, %v733
        %735 = vmatprep.mubr.bf16.mxu0 0
        %736 = vmatmul.mubr.bf16.gmra.mxu0 %v523
        %v737 = vpop.f32.mrf.mxu0
        %v738 = vadd.f32 %v475, %v737
        %v739 = vpop.f32.mrf.mxu0
        %v740 = vadd.f32 %v479, %v739
        %v741 = vpop.f32.mrf.mxu0
        %v742 = vadd.f32 %v475, %v741
        %v743 = vpop.f32.mrf.mxu0
        %v744 = vadd.f32 %v479, %v743
        %745 = vmatprep.mubr.bf16.mxu0 0
        %746 = vmatmul.mubr.bf16.gmra.mxu0 %v524
        %v747 = vpop.f32.mrf.mxu0
        %v748 = vadd.f32 %v475, %v747
        %v749 = vpop.f32.mrf.mxu0
        %v750 = vadd.f32 %v479, %v749
        %v751 = vpop.f32.mrf.mxu0
        %v752 = vadd.f32 %v475, %v751
        %v753 = vpop.f32.mrf.mxu0
        %v754 = vadd.f32 %v479, %v753
        %755 = vmatprep.mubr.bf16.mxu0 0
        %756 = vmatmul.mubr.bf16.gmra.mxu0 %v525
        %v757 = vpop.f32.mrf.mxu0
        %v758 = vadd.f32 %v475, %v757
        %v759 = vpop.f32.mrf.mxu0
        %v760 = vadd.f32 %v479, %v759
        %v761 = vpop.f32.mrf.mxu0
        %v762 = vadd.f32 %v475, %v761
        %v763 = vpop.f32.mrf.mxu0
        %v764 = vadd.f32 %v479, %v763
        %765 = vmatprep.mubr.bf16.mxu0 0
        %766 = vmatmul.mubr.bf16.gmra.mxu0 %v526
        %v767 = vpop.f32.mrf.mxu0
        %v768 = vadd.f32 %v475, %v767
        %v769 = vpop.f32.mrf.mxu0
        %v770 = vadd.f32 %v479, %v769
        %v771 = vpop.f32.mrf.mxu0
        %v772 = vadd.f32 %v475, %v771
        %v773 = vpop.f32.mrf.mxu0
        %v774 = vadd.f32 %v479, %v773
        %775 = vdwg.mxu0
        %776 = vmatprep.subr.bf16.mxu0 0
        %777 = vmatpush1.bf16.msra.mxu0 %v638
        %778 = vmatprep.subr.bf16.mxu0 0
        %779 = vmatpush1.bf16.msra.mxu0 %v635
        %780 = vmatprep.subr.bf16.mxu0 0
        %781 = vmatpush1.bf16.msra.mxu0 %v632
        %782 = vmatprep.subr.bf16.mxu0 0
        %783 = vmatpush1.bf16.msra.mxu0 %v629
        %784 = vmatprep.subr.bf16.mxu0 0
        %785 = vmatpush1.bf16.msra.mxu0 %v626
        %786 = vmatprep.subr.bf16.mxu0 0
        %787 = vmatpush1.bf16.msra.mxu0 %v623
        %788 = vmatprep.subr.bf16.mxu0 0
        %789 = vmatpush1.bf16.msra.mxu0 %v620
        %790 = vmatprep.subr.bf16.mxu0 0
        %791 = vmatpush1.bf16.msra.mxu0 %v617
        %792 = vmatprep.subr.bf16.mxu0 0
        %793 = vmatpush2.bf16.msra.mxu0 0
        %794 = vmatprep.subr.bf16.mxu0 0
        %795 = vmatpush2.bf16.msra.mxu0 0
        %796 = vmatprep.subr.bf16.mxu0 0
        %797 = vmatpush2.bf16.msra.mxu0 0
        %798 = vmatprep.subr.bf16.mxu0 0
        %799 = vmatpush2.bf16.msra.mxu0 0
        %800 = vmatprep.subr.bf16.mxu0 0
        %801 = vmatpush2.bf16.msra.mxu0 0
        %802 = vmatprep.subr.bf16.mxu0 0
        %803 = vmatpush2.bf16.msra.mxu0 0
        %804 = vmatprep.subr.bf16.mxu0 0
        %805 = vmatpush2.bf16.msra.mxu0 0
        %806 = vmatprep.subr.bf16.mxu0 0
        %807 = vmatpush2.bf16.msra.mxu0 0
        %808 = vmatprep.mubr.bf16.mxu0 0
        %809 = vmatmul.mubr.bf16.gmra.mxu0 %v519
        %v810 = vpop.f32.mrf.mxu0
        %v811 = vadd.f32 %v483, %v810
        %v812 = vpop.f32.mrf.mxu0
        %v813 = vpop.f32.mrf.mxu0
        %v814 = vadd.f32 %v483, %v813
        %v815 = vpop.f32.mrf.mxu0
        %816 = vmatprep.mubr.bf16.mxu0 0
        %817 = vmatmul.mubr.bf16.gmra.mxu0 %v520
        %v818 = vpop.f32.mrf.mxu0
        %v819 = vadd.f32 %v483, %v818
        %v820 = vpop.f32.mrf.mxu0
        %v821 = vpop.f32.mrf.mxu0
        %v822 = vadd.f32 %v483, %v821
        %v823 = vpop.f32.mrf.mxu0
        %824 = vmatprep.mubr.bf16.mxu0 0
        %825 = vmatmul.mubr.bf16.gmra.mxu0 %v521
        %v826 = vpop.f32.mrf.mxu0
        %v827 = vadd.f32 %v483, %v826
        %v828 = vpop.f32.mrf.mxu0
        %v829 = vpop.f32.mrf.mxu0
        %v830 = vadd.f32 %v483, %v829
        %v831 = vpop.f32.mrf.mxu0
        %832 = vmatprep.mubr.bf16.mxu0 0
        %833 = vmatmul.mubr.bf16.gmra.mxu0 %v522
        %v834 = vpop.f32.mrf.mxu0
        %v835 = vadd.f32 %v483, %v834
        %v836 = vpop.f32.mrf.mxu0
        %v837 = vpop.f32.mrf.mxu0
        %v838 = vadd.f32 %v483, %v837
        %v839 = vpop.f32.mrf.mxu0
        %840 = vmatprep.mubr.bf16.mxu0 0
        %841 = vmatmul.mubr.bf16.gmra.mxu0 %v523
        %v842 = vpop.f32.mrf.mxu0
        %v843 = vadd.f32 %v483, %v842
        %v844 = vpop.f32.mrf.mxu0
        %v845 = vpop.f32.mrf.mxu0
        %v846 = vadd.f32 %v483, %v845
        %v847 = vpop.f32.mrf.mxu0
        %848 = vmatprep.mubr.bf16.mxu0 0
        %849 = vmatmul.mubr.bf16.gmra.mxu0 %v524
        %v850 = vpop.f32.mrf.mxu0
        %v851 = vadd.f32 %v483, %v850
        %v852 = vpop.f32.mrf.mxu0
        %v853 = vpop.f32.mrf.mxu0
        %v854 = vadd.f32 %v483, %v853
        %v855 = vpop.f32.mrf.mxu0
        %856 = vmatprep.mubr.bf16.mxu0 0
        %857 = vmatmul.mubr.bf16.gmra.mxu0 %v525
        %v858 = vpop.f32.mrf.mxu0
        %v859 = vadd.f32 %v483, %v858
        %v860 = vpop.f32.mrf.mxu0
        %v861 = vpop.f32.mrf.mxu0
        %v862 = vadd.f32 %v483, %v861
        %v863 = vpop.f32.mrf.mxu0
        %864 = vmatprep.mubr.bf16.mxu0 0
        %865 = vmatmul.mubr.bf16.gmra.mxu0 %v526
        %v866 = vpop.f32.mrf.mxu0
        %v867 = vadd.f32 %v483, %v866
        %v868 = vpop.f32.mrf.mxu0
        %v869 = vpop.f32.mrf.mxu0
        %v870 = vadd.f32 %v483, %v869
        %v871 = vpop.f32.mrf.mxu0
        %872 = vdwg.mxu0
        %v873 = vmul.f32 %v698, 0.5
        %v874 = vmul.f32 %v700, 0.5
        %v875 = vmul.f32 %v811, 0.5
        %v876 = vmul.f32 %v702, 0.5
        %v877 = vmul.f32 %v704, 0.5
        %v878 = vmul.f32 %v814, 0.5
        %v879 = vmul.f32 %v708, 0.5
        %v880 = vmul.f32 %v710, 0.5
        %v881 = vmul.f32 %v819, 0.5
        %v882 = vmul.f32 %v712, 0.5
        %v883 = vmul.f32 %v714, 0.5
        %v884 = vmul.f32 %v822, 0.5
        %v885 = vmul.f32 %v718, 0.5
        %v886 = vmul.f32 %v720, 0.5
        %v887 = vmul.f32 %v827, 0.5
        %v888 = vmul.f32 %v722, 0.5
        %v889 = vmul.f32 %v724, 0.5
        %v890 = vmul.f32 %v830, 0.5
        %v891 = vmul.f32 %v728, 0.5
        %v892 = vmul.f32 %v730, 0.5
        %v893 = vmul.f32 %v835, 0.5
        %v894 = vmul.f32 %v732, 0.5
        %v895 = vmul.f32 %v734, 0.5
        %v896 = vmul.f32 %v838, 0.5
        %v897 = vmul.f32 %v738, 0.5
        %v898 = vmul.f32 %v740, 0.5
        %v899 = vmul.f32 %v843, 0.5
        %v900 = vmul.f32 %v742, 0.5
        %v901 = vmul.f32 %v744, 0.5
        %v902 = vmul.f32 %v846, 0.5
        %v903 = vmul.f32 %v748, 0.5
        %v904 = vmul.f32 %v750, 0.5
        %v905 = vmul.f32 %v851, 0.5
        %v906 = vmul.f32 %v752, 0.5
        %v907 = vmul.f32 %v754, 0.5
        %v908 = vmul.f32 %v854, 0.5
        %v909 = vmul.f32 %v758, 0.5
        %v910 = vmul.f32 %v760, 0.5
        %v911 = vmul.f32 %v859, 0.5
        %v912 = vmul.f32 %v762, 0.5
        %v913 = vmul.f32 %v764, 0.5
        %v914 = vmul.f32 %v862, 0.5
        %v915 = vmul.f32 %v768, 0.5
        %v916 = vmul.f32 %v770, 0.5
        %v917 = vmul.f32 %v867, 0.5
        %v918 = vmul.f32 %v772, 0.5
        %v919 = vmul.f32 %v774, 0.5
        %v920 = vmul.f32 %v870, 0.5
        %v921 = vtanh.pop %v873
        %v922 = vtanh.pop %v874
        %v923 = vtanh.pop %v875
        %v924 = vtanh.pop %v876
        %v925 = vtanh.pop %v877
        %v926 = vtanh.pop %v878
        %v927 = vtanh.pop %v879
        %v928 = vtanh.pop %v880
        %v929 = vtanh.pop %v881
        %v930 = vtanh.pop %v882
        %v931 = vtanh.pop %v883
        %v932 = vtanh.pop %v884
        %v933 = vtanh.pop %v885
        %v934 = vtanh.pop %v886
        %v935 = vtanh.pop %v887
        %v936 = vtanh.pop %v888
        %v937 = vtanh.pop %v889
        %v938 = vtanh.pop %v890
        %v939 = vtanh.pop %v891
        %v940 = vtanh.pop %v892
        %v941 = vtanh.pop %v893
        %v942 = vtanh.pop %v894
        %v943 = vtanh.pop %v895
        %v944 = vtanh.pop %v896
        %v945 = vtanh.pop %v897
        %v946 = vtanh.pop %v898
        %v947 = vtanh.pop %v899
        %v948 = vtanh.pop %v900
        %v949 = vtanh.pop %v901
        %v950 = vtanh.pop %v902
        %v951 = vtanh.pop %v903
        %v952 = vtanh.pop %v904
        %v953 = vtanh.pop %v905
        %v954 = vtanh.pop %v906
        %v955 = vtanh.pop %v907
        %v956 = vtanh.pop %v908
        %v957 = vtanh.pop %v909
        %v958 = vtanh.pop %v910
        %v959 = vtanh.pop %v911
        %v960 = vtanh.pop %v912
        %v961 = vtanh.pop %v913
        %v962 = vtanh.pop %v914
        %v963 = vtanh.pop %v915
        %v964 = vtanh.pop %v916
        %v965 = vtanh.pop %v917
        %v966 = vtanh.pop %v918
        %v967 = vtanh.pop %v919
        %v968 = vtanh.pop %v920
        %v969 = vmul.f32 %v921, 0.5
        %v970 = vmul.f32 %v922, 0.5
        %v971 = vmul.f32 %v923, 0.5
        %v972 = vmul.f32 %v924, 0.5
        %v973 = vmul.f32 %v925, 0.5
        %v974 = vmul.f32 %v926, 0.5
        %v975 = vmul.f32 %v927, 0.5
        %v976 = vmul.f32 %v928, 0.5
        %v977 = vmul.f32 %v929, 0.5
        %v978 = vmul.f32 %v930, 0.5
        %v979 = vmul.f32 %v931, 0.5
        %v980 = vmul.f32 %v932, 0.5
        %v981 = vmul.f32 %v933, 0.5
        %v982 = vmul.f32 %v934, 0.5
        %v983 = vmul.f32 %v935, 0.5
        %v984 = vmul.f32 %v936, 0.5
        %v985 = vmul.f32 %v937, 0.5
        %v986 = vmul.f32 %v938, 0.5
        %v987 = vmul.f32 %v939, 0.5
        %v988 = vmul.f32 %v940, 0.5
        %v989 = vmul.f32 %v941, 0.5
        %v990 = vmul.f32 %v942, 0.5
        %v991 = vmul.f32 %v943, 0.5
        %v992 = vmul.f32 %v944, 0.5
        %v993 = vmul.f32 %v945, 0.5
        %v994 = vmul.f32 %v946, 0.5
        %v995 = vmul.f32 %v947, 0.5
        %v996 = vmul.f32 %v948, 0.5
        %v997 = vmul.f32 %v949, 0.5
        %v998 = vmul.f32 %v950, 0.5
        %v999 = vmul.f32 %v951, 0.5
        %v1000 = vmul.f32 %v952, 0.5
        %v1001 = vmul.f32 %v953, 0.5
        %v1002 = vmul.f32 %v954, 0.5
        %v1003 = vmul.f32 %v955, 0.5
        %v1004 = vmul.f32 %v956, 0.5
        %v1005 = vmul.f32 %v957, 0.5
        %v1006 = vmul.f32 %v958, 0.5
        %v1007 = vmul.f32 %v959, 0.5
        %v1008 = vmul.f32 %v960, 0.5
        %v1009 = vmul.f32 %v961, 0.5
        %v1010 = vmul.f32 %v962, 0.5
        %v1011 = vmul.f32 %v963, 0.5
        %v1012 = vmul.f32 %v964, 0.5
        %v1013 = vmul.f32 %v965, 0.5
        %v1014 = vmul.f32 %v966, 0.5
        %v1015 = vmul.f32 %v967, 0.5
        %v1016 = vmul.f32 %v968, 0.5
        %v1017 = vadd.f32 %v969, 0.5
        %v1018 = vadd.f32 %v970, 0.5
        %v1019 = vadd.f32 %v971, 0.5
        %v1020 = vadd.f32 %v972, 0.5
        %v1021 = vadd.f32 %v973, 0.5
        %v1022 = vadd.f32 %v974, 0.5
        %v1023 = vadd.f32 %v975, 0.5
        %v1024 = vadd.f32 %v976, 0.5
        %v1025 = vadd.f32 %v977, 0.5
        %v1026 = vadd.f32 %v978, 0.5
        %v1027 = vadd.f32 %v979, 0.5
        %v1028 = vadd.f32 %v980, 0.5
        %v1029 = vadd.f32 %v981, 0.5
        %v1030 = vadd.f32 %v982, 0.5
        %v1031 = vadd.f32 %v983, 0.5
        %v1032 = vadd.f32 %v984, 0.5
        %v1033 = vadd.f32 %v985, 0.5
        %v1034 = vadd.f32 %v986, 0.5
        %v1035 = vadd.f32 %v987, 0.5
        %v1036 = vadd.f32 %v988, 0.5
        %v1037 = vadd.f32 %v989, 0.5
        %v1038 = vadd.f32 %v990, 0.5
        %v1039 = vadd.f32 %v991, 0.5
        %v1040 = vadd.f32 %v992, 0.5
        %v1041 = vadd.f32 %v993, 0.5
        %v1042 = vadd.f32 %v994, 0.5
        %v1043 = vadd.f32 %v995, 0.5
        %v1044 = vadd.f32 %v996, 0.5
        %v1045 = vadd.f32 %v997, 0.5
        %v1046 = vadd.f32 %v998, 0.5
        %v1047 = vadd.f32 %v999, 0.5
        %v1048 = vadd.f32 %v1000, 0.5
        %v1049 = vadd.f32 %v1001, 0.5
        %v1050 = vadd.f32 %v1002, 0.5
        %v1051 = vadd.f32 %v1003, 0.5
        %v1052 = vadd.f32 %v1004, 0.5
        %v1053 = vadd.f32 %v1005, 0.5
        %v1054 = vadd.f32 %v1006, 0.5
        %v1055 = vadd.f32 %v1007, 0.5
        %v1056 = vadd.f32 %v1008, 0.5
        %v1057 = vadd.f32 %v1009, 0.5
        %v1058 = vadd.f32 %v1010, 0.5
        %v1059 = vadd.f32 %v1011, 0.5
        %v1060 = vadd.f32 %v1012, 0.5
        %v1061 = vadd.f32 %v1013, 0.5
        %v1062 = vadd.f32 %v1014, 0.5
        %v1063 = vadd.f32 %v1015, 0.5
        %v1064 = vadd.f32 %v1016, 0.5
        %v1065 = vpack.c.bf16 %v1020, %v1017
        %v1066 = vpack.c.bf16 %v1021, %v1018
        %v1067 = vpack.c.bf16 %v1022, %v1019
        %v1068 = vpack.c.bf16 %v1026, %v1023
        %v1069 = vpack.c.bf16 %v1027, %v1024
        %v1070 = vpack.c.bf16 %v1028, %v1025
        %v1071 = vpack.c.bf16 %v1032, %v1029
        %v1072 = vpack.c.bf16 %v1033, %v1030
        %v1073 = vpack.c.bf16 %v1034, %v1031
        %v1074 = vpack.c.bf16 %v1038, %v1035
        %v1075 = vpack.c.bf16 %v1039, %v1036
        %v1076 = vpack.c.bf16 %v1040, %v1037
        %v1077 = vpack.c.bf16 %v1044, %v1041
        %v1078 = vpack.c.bf16 %v1045, %v1042
        %v1079 = vpack.c.bf16 %v1046, %v1043
        %v1080 = vpack.c.bf16 %v1050, %v1047
        %v1081 = vpack.c.bf16 %v1051, %v1048
        %v1082 = vpack.c.bf16 %v1052, %v1049
        %v1083 = vpack.c.bf16 %v1056, %v1053
        %v1084 = vpack.c.bf16 %v1057, %v1054
        %v1085 = vpack.c.bf16 %v1058, %v1055
        %v1086 = vpack.c.bf16 %v1062, %v1059
        %v1087 = vpack.c.bf16 %v1063, %v1060
        %v1088 = vpack.c.bf16 %v1064, %v1061
        %v1105 = vunpack.c.l.b16 %v418
        %v1106 = vunpack.c.l.b16 %v419
        %v1107 = vunpack.c.l.b16 %v420
        %v1108 = vunpack.c.l.b16 %v421
        %v1109 = vunpack.c.l.b16 %v422
        %v1110 = vunpack.c.l.b16 %v423
        %v1111 = vunpack.c.l.b16 %v424
        %v1112 = vunpack.c.l.b16 %v425
        %v1113 = vunpack.c.l.b16 %v426
        %v1114 = vunpack.c.l.b16 %v427
        %v1115 = vunpack.c.l.b16 %v428
        %v1116 = vunpack.c.l.b16 %v429
        %v1117 = vunpack.c.l.b16 %v430
        %v1118 = vunpack.c.l.b16 %v431
        %v1119 = vunpack.c.l.b16 %v432
        %v1120 = vunpack.c.l.b16 %v433
        %v1121 = vpack.c.b16 %v1106, %v1105
        %v1122 = vpack.c.b16 %v1108, %v1107
        %v1123 = vpack.c.b16 %v1110, %v1109
        %v1124 = vpack.c.b16 %v1112, %v1111
        %v1125 = vpack.c.b16 %v1114, %v1113
        %v1126 = vpack.c.b16 %v1116, %v1115
        %v1127 = vpack.c.b16 %v1118, %v1117
        %v1128 = vpack.c.b16 %v1120, %v1119
        %1137 = vmatprep.subr.bf16.mxu0 %v637
        %1138 = vmatpush1.bf16.msra.mxu0 %v636
        %1139 = vmatprep.subr.bf16.mxu0 %v634
        %1140 = vmatpush1.bf16.msra.mxu0 %v633
        %1141 = vmatprep.subr.bf16.mxu0 %v631
        %1142 = vmatpush1.bf16.msra.mxu0 %v630
        %1143 = vmatprep.subr.bf16.mxu0 %v628
        %1144 = vmatpush1.bf16.msra.mxu0 %v627
        %1145 = vmatprep.subr.bf16.mxu0 %v625
        %1146 = vmatpush1.bf16.msra.mxu0 %v624
        %1147 = vmatprep.subr.bf16.mxu0 %v622
        %1148 = vmatpush1.bf16.msra.mxu0 %v621
        %1149 = vmatprep.subr.bf16.mxu0 %v619
        %1150 = vmatpush1.bf16.msra.mxu0 %v618
        %1151 = vmatprep.subr.bf16.mxu0 %v616
        %1152 = vmatpush1.bf16.msra.mxu0 %v615
        %1153 = vmatprep.subr.bf16.mxu0 0
        %1154 = vmatpush2.bf16.msra.mxu0 0
        %1155 = vmatprep.subr.bf16.mxu0 0
        %1156 = vmatpush2.bf16.msra.mxu0 0
        %1157 = vmatprep.subr.bf16.mxu0 0
        %1158 = vmatpush2.bf16.msra.mxu0 0
        %1159 = vmatprep.subr.bf16.mxu0 0
        %1160 = vmatpush2.bf16.msra.mxu0 0
        %1161 = vmatprep.subr.bf16.mxu0 0
        %1162 = vmatpush2.bf16.msra.mxu0 0
        %1163 = vmatprep.subr.bf16.mxu0 0
        %1164 = vmatpush2.bf16.msra.mxu0 0
        %1165 = vmatprep.subr.bf16.mxu0 0
        %1166 = vmatpush2.bf16.msra.mxu0 0
        %1167 = vmatprep.subr.bf16.mxu0 0
        %1168 = vmatpush2.bf16.msra.mxu0 0
        %1169 = vmatprep.mubr.bf16.mxu0 0
        %1170 = vmatmul.mubr.bf16.gmra.mxu0 %v1121
        %v1171 = vpop.f32.mrf.mxu0
        %v1172 = vadd.f32 %v475, %v1171
        %v1173 = vpop.f32.mrf.mxu0
        %v1174 = vadd.f32 %v479, %v1173
        %v1175 = vpop.f32.mrf.mxu0
        %v1176 = vadd.f32 %v475, %v1175
        %v1177 = vpop.f32.mrf.mxu0
        %v1178 = vadd.f32 %v479, %v1177
        %1179 = vmatprep.mubr.bf16.mxu0 0
        %1180 = vmatmul.mubr.bf16.gmra.mxu0 %v1122
        %v1181 = vpop.f32.mrf.mxu0
        %v1182 = vadd.f32 %v475, %v1181
        %v1183 = vpop.f32.mrf.mxu0
        %v1184 = vadd.f32 %v479, %v1183
        %v1185 = vpop.f32.mrf.mxu0
        %v1186 = vadd.f32 %v475, %v1185
        %v1187 = vpop.f32.mrf.mxu0
        %v1188 = vadd.f32 %v479, %v1187
        %1189 = vmatprep.mubr.bf16.mxu0 0
        %1190 = vmatmul.mubr.bf16.gmra.mxu0 %v1123
        %v1191 = vpop.f32.mrf.mxu0
        %v1192 = vadd.f32 %v475, %v1191
        %v1193 = vpop.f32.mrf.mxu0
        %v1194 = vadd.f32 %v479, %v1193
        %v1195 = vpop.f32.mrf.mxu0
        %v1196 = vadd.f32 %v475, %v1195
        %v1197 = vpop.f32.mrf.mxu0
        %v1198 = vadd.f32 %v479, %v1197
        %1199 = vmatprep.mubr.bf16.mxu0 0
        %1200 = vmatmul.mubr.bf16.gmra.mxu0 %v1124
        %v1201 = vpop.f32.mrf.mxu0
        %v1202 = vadd.f32 %v475, %v1201
        %v1203 = vpop.f32.mrf.mxu0
        %v1204 = vadd.f32 %v479, %v1203
        %v1205 = vpop.f32.mrf.mxu0
        %v1206 = vadd.f32 %v475, %v1205
        %v1207 = vpop.f32.mrf.mxu0
        %v1208 = vadd.f32 %v479, %v1207
        %1209 = vmatprep.mubr.bf16.mxu0 0
        %1210 = vmatmul.mubr.bf16.gmra.mxu0 %v1125
        %v1211 = vpop.f32.mrf.mxu0
        %v1212 = vadd.f32 %v475, %v1211
        %v1213 = vpop.f32.mrf.mxu0
        %v1214 = vadd.f32 %v479, %v1213
        %v1215 = vpop.f32.mrf.mxu0
        %v1216 = vadd.f32 %v475, %v1215
        %v1217 = vpop.f32.mrf.mxu0
        %v1218 = vadd.f32 %v479, %v1217
        %1219 = vmatprep.mubr.bf16.mxu0 0
        %1220 = vmatmul.mubr.bf16.gmra.mxu0 %v1126
        %v1221 = vpop.f32.mrf.mxu0
        %v1222 = vadd.f32 %v475, %v1221
        %v1223 = vpop.f32.mrf.mxu0
        %v1224 = vadd.f32 %v479, %v1223
        %v1225 = vpop.f32.mrf.mxu0
        %v1226 = vadd.f32 %v475, %v1225
        %v1227 = vpop.f32.mrf.mxu0
        %v1228 = vadd.f32 %v479, %v1227
        %1229 = vmatprep.mubr.bf16.mxu0 0
        %1230 = vmatmul.mubr.bf16.gmra.mxu0 %v1127
        %v1231 = vpop.f32.mrf.mxu0
        %v1232 = vadd.f32 %v475, %v1231
        %v1233 = vpop.f32.mrf.mxu0
        %v1234 = vadd.f32 %v479, %v1233
        %v1235 = vpop.f32.mrf.mxu0
        %v1236 = vadd.f32 %v475, %v1235
        %v1237 = vpop.f32.mrf.mxu0
        %v1238 = vadd.f32 %v479, %v1237
        %1239 = vmatprep.mubr.bf16.mxu0 0
        %1240 = vmatmul.mubr.bf16.gmra.mxu0 %v1128
        %v1241 = vpop.f32.mrf.mxu0
        %v1242 = vadd.f32 %v475, %v1241
        %v1243 = vpop.f32.mrf.mxu0
        %v1244 = vadd.f32 %v479, %v1243
        %v1245 = vpop.f32.mrf.mxu0
        %v1246 = vadd.f32 %v475, %v1245
        %v1247 = vpop.f32.mrf.mxu0
        %v1248 = vadd.f32 %v479, %v1247
        %1249 = vdwg.mxu0
        %1250 = vmatprep.subr.bf16.mxu0 0
        %1251 = vmatpush1.bf16.msra.mxu0 %v638
        %1252 = vmatprep.subr.bf16.mxu0 0
        %1253 = vmatpush1.bf16.msra.mxu0 %v635
        %1254 = vmatprep.subr.bf16.mxu0 0
        %1255 = vmatpush1.bf16.msra.mxu0 %v632
        %1256 = vmatprep.subr.bf16.mxu0 0
        %1257 = vmatpush1.bf16.msra.mxu0 %v629
        %1258 = vmatprep.subr.bf16.mxu0 0
        %1259 = vmatpush1.bf16.msra.mxu0 %v626
        %1260 = vmatprep.subr.bf16.mxu0 0
        %1261 = vmatpush1.bf16.msra.mxu0 %v623
        %1262 = vmatprep.subr.bf16.mxu0 0
        %1263 = vmatpush1.bf16.msra.mxu0 %v620
        %1264 = vmatprep.subr.bf16.mxu0 0
        %1265 = vmatpush1.bf16.msra.mxu0 %v617
        %1266 = vmatprep.subr.bf16.mxu0 0
        %1267 = vmatpush2.bf16.msra.mxu0 0
        %1268 = vmatprep.subr.bf16.mxu0 0
        %1269 = vmatpush2.bf16.msra.mxu0 0
        %1270 = vmatprep.subr.bf16.mxu0 0
        %1271 = vmatpush2.bf16.msra.mxu0 0
        %1272 = vmatprep.subr.bf16.mxu0 0
        %1273 = vmatpush2.bf16.msra.mxu0 0
        %1274 = vmatprep.subr.bf16.mxu0 0
        %1275 = vmatpush2.bf16.msra.mxu0 0
        %1276 = vmatprep.subr.bf16.mxu0 0
        %1277 = vmatpush2.bf16.msra.mxu0 0
        %1278 = vmatprep.subr.bf16.mxu0 0
        %1279 = vmatpush2.bf16.msra.mxu0 0
        %1280 = vmatprep.subr.bf16.mxu0 0
        %1281 = vmatpush2.bf16.msra.mxu0 0
        %1282 = vmatprep.mubr.bf16.mxu0 0
        %1283 = vmatmul.mubr.bf16.gmra.mxu0 %v1121
        %v1284 = vpop.f32.mrf.mxu0
        %v1285 = vadd.f32 %v483, %v1284
        %v1286 = vpop.f32.mrf.mxu0
        %v1287 = vpop.f32.mrf.mxu0
        %v1288 = vadd.f32 %v483, %v1287
        %v1289 = vpop.f32.mrf.mxu0
        %1290 = vmatprep.mubr.bf16.mxu0 0
        %1291 = vmatmul.mubr.bf16.gmra.mxu0 %v1122
        %v1292 = vpop.f32.mrf.mxu0
        %v1293 = vadd.f32 %v483, %v1292
        %v1294 = vpop.f32.mrf.mxu0
        %v1295 = vpop.f32.mrf.mxu0
        %v1296 = vadd.f32 %v483, %v1295
        %v1297 = vpop.f32.mrf.mxu0
        %1298 = vmatprep.mubr.bf16.mxu0 0
        %1299 = vmatmul.mubr.bf16.gmra.mxu0 %v1123
        %v1300 = vpop.f32.mrf.mxu0
        %v1301 = vadd.f32 %v483, %v1300
        %v1302 = vpop.f32.mrf.mxu0
        %v1303 = vpop.f32.mrf.mxu0
        %v1304 = vadd.f32 %v483, %v1303
        %v1305 = vpop.f32.mrf.mxu0
        %1306 = vmatprep.mubr.bf16.mxu0 0
        %1307 = vmatmul.mubr.bf16.gmra.mxu0 %v1124
        %v1308 = vpop.f32.mrf.mxu0
        %v1309 = vadd.f32 %v483, %v1308
        %v1310 = vpop.f32.mrf.mxu0
        %v1311 = vpop.f32.mrf.mxu0
        %v1312 = vadd.f32 %v483, %v1311
        %v1313 = vpop.f32.mrf.mxu0
        %1314 = vmatprep.mubr.bf16.mxu0 0
        %1315 = vmatmul.mubr.bf16.gmra.mxu0 %v1125
        %v1316 = vpop.f32.mrf.mxu0
        %v1317 = vadd.f32 %v483, %v1316
        %v1318 = vpop.f32.mrf.mxu0
        %v1319 = vpop.f32.mrf.mxu0
        %v1320 = vadd.f32 %v483, %v1319
        %v1321 = vpop.f32.mrf.mxu0
        %1322 = vmatprep.mubr.bf16.mxu0 0
        %1323 = vmatmul.mubr.bf16.gmra.mxu0 %v1126
        %v1324 = vpop.f32.mrf.mxu0
        %v1325 = vadd.f32 %v483, %v1324
        %v1326 = vpop.f32.mrf.mxu0
        %v1327 = vpop.f32.mrf.mxu0
        %v1328 = vadd.f32 %v483, %v1327
        %v1329 = vpop.f32.mrf.mxu0
        %1330 = vmatprep.mubr.bf16.mxu0 0
        %1331 = vmatmul.mubr.bf16.gmra.mxu0 %v1127
        %v1332 = vpop.f32.mrf.mxu0
        %v1333 = vadd.f32 %v483, %v1332
        %v1334 = vpop.f32.mrf.mxu0
        %v1335 = vpop.f32.mrf.mxu0
        %v1336 = vadd.f32 %v483, %v1335
        %v1337 = vpop.f32.mrf.mxu0
        %1338 = vmatprep.mubr.bf16.mxu0 0
        %1339 = vmatmul.mubr.bf16.gmra.mxu0 %v1128
        %v1340 = vpop.f32.mrf.mxu0
        %v1341 = vadd.f32 %v483, %v1340
        %v1342 = vpop.f32.mrf.mxu0
        %v1343 = vpop.f32.mrf.mxu0
        %v1344 = vadd.f32 %v483, %v1343
        %v1345 = vpop.f32.mrf.mxu0
        %1346 = vdwg.mxu0
        %v1347 = vmul.f32 %v1172, 0.5
        %v1348 = vmul.f32 %v1174, 0.5
        %v1349 = vmul.f32 %v1285, 0.5
        %v1350 = vmul.f32 %v1176, 0.5
        %v1351 = vmul.f32 %v1178, 0.5
        %v1352 = vmul.f32 %v1288, 0.5
        %v1353 = vmul.f32 %v1182, 0.5
        %v1354 = vmul.f32 %v1184, 0.5
        %v1355 = vmul.f32 %v1293, 0.5
        %v1356 = vmul.f32 %v1186, 0.5
        %v1357 = vmul.f32 %v1188, 0.5
        %v1358 = vmul.f32 %v1296, 0.5
        %v1359 = vmul.f32 %v1192, 0.5
        %v1360 = vmul.f32 %v1194, 0.5
        %v1361 = vmul.f32 %v1301, 0.5
        %v1362 = vmul.f32 %v1196, 0.5
        %v1363 = vmul.f32 %v1198, 0.5
        %v1364 = vmul.f32 %v1304, 0.5
        %v1365 = vmul.f32 %v1202, 0.5
        %v1366 = vmul.f32 %v1204, 0.5
        %v1367 = vmul.f32 %v1309, 0.5
        %v1368 = vmul.f32 %v1206, 0.5
        %v1369 = vmul.f32 %v1208, 0.5
        %v1370 = vmul.f32 %v1312, 0.5
        %v1371 = vmul.f32 %v1212, 0.5
        %v1372 = vmul.f32 %v1214, 0.5
        %v1373 = vmul.f32 %v1317, 0.5
        %v1374 = vmul.f32 %v1216, 0.5
        %v1375 = vmul.f32 %v1218, 0.5
        %v1376 = vmul.f32 %v1320, 0.5
        %v1377 = vmul.f32 %v1222, 0.5
        %v1378 = vmul.f32 %v1224, 0.5
        %v1379 = vmul.f32 %v1325, 0.5
        %v1380 = vmul.f32 %v1226, 0.5
        %v1381 = vmul.f32 %v1228, 0.5
        %v1382 = vmul.f32 %v1328, 0.5
        %v1383 = vmul.f32 %v1232, 0.5
        %v1384 = vmul.f32 %v1234, 0.5
        %v1385 = vmul.f32 %v1333, 0.5
        %v1386 = vmul.f32 %v1236, 0.5
        %v1387 = vmul.f32 %v1238, 0.5
        %v1388 = vmul.f32 %v1336, 0.5
        %v1389 = vmul.f32 %v1242, 0.5
        %v1390 = vmul.f32 %v1244, 0.5
        %v1391 = vmul.f32 %v1341, 0.5
        %v1392 = vmul.f32 %v1246, 0.5
        %v1393 = vmul.f32 %v1248, 0.5
        %v1394 = vmul.f32 %v1344, 0.5
        %v1395 = vtanh.pop %v1347
        %v1396 = vtanh.pop %v1348
        %v1397 = vtanh.pop %v1349
        %v1398 = vtanh.pop %v1350
        %v1399 = vtanh.pop %v1351
        %v1400 = vtanh.pop %v1352
        %v1401 = vtanh.pop %v1353
        %v1402 = vtanh.pop %v1354
        %v1403 = vtanh.pop %v1355
        %v1404 = vtanh.pop %v1356
        %v1405 = vtanh.pop %v1357
        %v1406 = vtanh.pop %v1358
        %v1407 = vtanh.pop %v1359
        %v1408 = vtanh.pop %v1360
        %v1409 = vtanh.pop %v1361
        %v1410 = vtanh.pop %v1362
        %v1411 = vtanh.pop %v1363
        %v1412 = vtanh.pop %v1364
        %v1413 = vtanh.pop %v1365
        %v1414 = vtanh.pop %v1366
        %v1415 = vtanh.pop %v1367
        %v1416 = vtanh.pop %v1368
        %v1417 = vtanh.pop %v1369
        %v1418 = vtanh.pop %v1370
        %v1419 = vtanh.pop %v1371
        %v1420 = vtanh.pop %v1372
        %v1421 = vtanh.pop %v1373
        %v1422 = vtanh.pop %v1374
        %v1423 = vtanh.pop %v1375
        %v1424 = vtanh.pop %v1376
        %v1425 = vtanh.pop %v1377
        %v1426 = vtanh.pop %v1378
        %v1427 = vtanh.pop %v1379
        %v1428 = vtanh.pop %v1380
        %v1429 = vtanh.pop %v1381
        %v1430 = vtanh.pop %v1382
        %v1431 = vtanh.pop %v1383
        %v1432 = vtanh.pop %v1384
        %v1433 = vtanh.pop %v1385
        %v1434 = vtanh.pop %v1386
        %v1435 = vtanh.pop %v1387
        %v1436 = vtanh.pop %v1388
        %v1437 = vtanh.pop %v1389
        %v1438 = vtanh.pop %v1390
        %v1439 = vtanh.pop %v1391
        %v1440 = vtanh.pop %v1392
        %v1441 = vtanh.pop %v1393
        %v1442 = vtanh.pop %v1394
        %v1443 = vmul.f32 %v1395, 0.5
        %v1444 = vmul.f32 %v1396, 0.5
        %v1445 = vmul.f32 %v1397, 0.5
        %v1446 = vmul.f32 %v1398, 0.5
        %v1447 = vmul.f32 %v1399, 0.5
        %v1448 = vmul.f32 %v1400, 0.5
        %v1449 = vmul.f32 %v1401, 0.5
        %v1450 = vmul.f32 %v1402, 0.5
        %v1451 = vmul.f32 %v1403, 0.5
        %v1452 = vmul.f32 %v1404, 0.5
        %v1453 = vmul.f32 %v1405, 0.5
        %v1454 = vmul.f32 %v1406, 0.5
        %v1455 = vmul.f32 %v1407, 0.5
        %v1456 = vmul.f32 %v1408, 0.5
        %v1457 = vmul.f32 %v1409, 0.5
        %v1458 = vmul.f32 %v1410, 0.5
        %v1459 = vmul.f32 %v1411, 0.5
        %v1460 = vmul.f32 %v1412, 0.5
        %v1461 = vmul.f32 %v1413, 0.5
        %v1462 = vmul.f32 %v1414, 0.5
        %v1463 = vmul.f32 %v1415, 0.5
        %v1464 = vmul.f32 %v1416, 0.5
        %v1465 = vmul.f32 %v1417, 0.5
        %v1466 = vmul.f32 %v1418, 0.5
        %v1467 = vmul.f32 %v1419, 0.5
        %v1468 = vmul.f32 %v1420, 0.5
        %v1469 = vmul.f32 %v1421, 0.5
        %v1470 = vmul.f32 %v1422, 0.5
        %v1471 = vmul.f32 %v1423, 0.5
        %v1472 = vmul.f32 %v1424, 0.5
        %v1473 = vmul.f32 %v1425, 0.5
        %v1474 = vmul.f32 %v1426, 0.5
        %v1475 = vmul.f32 %v1427, 0.5
        %v1476 = vmul.f32 %v1428, 0.5
        %v1477 = vmul.f32 %v1429, 0.5
        %v1478 = vmul.f32 %v1430, 0.5
        %v1479 = vmul.f32 %v1431, 0.5
        %v1480 = vmul.f32 %v1432, 0.5
        %v1481 = vmul.f32 %v1433, 0.5
        %v1482 = vmul.f32 %v1434, 0.5
        %v1483 = vmul.f32 %v1435, 0.5
        %v1484 = vmul.f32 %v1436, 0.5
        %v1485 = vmul.f32 %v1437, 0.5
        %v1486 = vmul.f32 %v1438, 0.5
        %v1487 = vmul.f32 %v1439, 0.5
        %v1488 = vmul.f32 %v1440, 0.5
        %v1489 = vmul.f32 %v1441, 0.5
        %v1490 = vmul.f32 %v1442, 0.5
        %v1491 = vadd.f32 %v1443, 0.5
        %v1492 = vadd.f32 %v1444, 0.5
        %v1493 = vadd.f32 %v1445, 0.5
        %v1494 = vadd.f32 %v1446, 0.5
        %v1495 = vadd.f32 %v1447, 0.5
        %v1496 = vadd.f32 %v1448, 0.5
        %v1497 = vadd.f32 %v1449, 0.5
        %v1498 = vadd.f32 %v1450, 0.5
        %v1499 = vadd.f32 %v1451, 0.5
        %v1500 = vadd.f32 %v1452, 0.5
        %v1501 = vadd.f32 %v1453, 0.5
        %v1502 = vadd.f32 %v1454, 0.5
        %v1503 = vadd.f32 %v1455, 0.5
        %v1504 = vadd.f32 %v1456, 0.5
        %v1505 = vadd.f32 %v1457, 0.5
        %v1506 = vadd.f32 %v1458, 0.5
        %v1507 = vadd.f32 %v1459, 0.5
        %v1508 = vadd.f32 %v1460, 0.5
        %v1509 = vadd.f32 %v1461, 0.5
        %v1510 = vadd.f32 %v1462, 0.5
        %v1511 = vadd.f32 %v1463, 0.5
        %v1512 = vadd.f32 %v1464, 0.5
        %v1513 = vadd.f32 %v1465, 0.5
        %v1514 = vadd.f32 %v1466, 0.5
        %v1515 = vadd.f32 %v1467, 0.5
        %v1516 = vadd.f32 %v1468, 0.5
        %v1517 = vadd.f32 %v1469, 0.5
        %v1518 = vadd.f32 %v1470, 0.5
        %v1519 = vadd.f32 %v1471, 0.5
        %v1520 = vadd.f32 %v1472, 0.5
        %v1521 = vadd.f32 %v1473, 0.5
        %v1522 = vadd.f32 %v1474, 0.5
        %v1523 = vadd.f32 %v1475, 0.5
        %v1524 = vadd.f32 %v1476, 0.5
        %v1525 = vadd.f32 %v1477, 0.5
        %v1526 = vadd.f32 %v1478, 0.5
        %v1527 = vadd.f32 %v1479, 0.5
        %v1528 = vadd.f32 %v1480, 0.5
        %v1529 = vadd.f32 %v1481, 0.5
        %v1530 = vadd.f32 %v1482, 0.5
        %v1531 = vadd.f32 %v1483, 0.5
        %v1532 = vadd.f32 %v1484, 0.5
        %v1533 = vadd.f32 %v1485, 0.5
        %v1534 = vadd.f32 %v1486, 0.5
        %v1535 = vadd.f32 %v1487, 0.5
        %v1536 = vadd.f32 %v1488, 0.5
        %v1537 = vadd.f32 %v1489, 0.5
        %v1538 = vadd.f32 %v1490, 0.5
        %v1539 = vpack.c.bf16 %v1494, %v1491
        %v1540 = vpack.c.bf16 %v1495, %v1492
        %v1541 = vpack.c.bf16 %v1496, %v1493
        %v1542 = vpack.c.bf16 %v1500, %v1497
        %v1543 = vpack.c.bf16 %v1501, %v1498
        %v1544 = vpack.c.bf16 %v1502, %v1499
        %v1545 = vpack.c.bf16 %v1506, %v1503
        %v1546 = vpack.c.bf16 %v1507, %v1504
        %v1547 = vpack.c.bf16 %v1508, %v1505
        %v1548 = vpack.c.bf16 %v1512, %v1509
        %v1549 = vpack.c.bf16 %v1513, %v1510
        %v1550 = vpack.c.bf16 %v1514, %v1511
        %v1551 = vpack.c.bf16 %v1518, %v1515
        %v1552 = vpack.c.bf16 %v1519, %v1516
        %v1553 = vpack.c.bf16 %v1520, %v1517
        %v1554 = vpack.c.bf16 %v1524, %v1521
        %v1555 = vpack.c.bf16 %v1525, %v1522
        %v1556 = vpack.c.bf16 %v1526, %v1523
        %v1557 = vpack.c.bf16 %v1530, %v1527
        %v1558 = vpack.c.bf16 %v1531, %v1528
        %v1559 = vpack.c.bf16 %v1532, %v1529
        %v1560 = vpack.c.bf16 %v1536, %v1533
        %v1561 = vpack.c.bf16 %v1537, %v1534
        %v1562 = vpack.c.bf16 %v1538, %v1535
        %s1563 = smul.u32 4, 48
        %s1564 = smul.u32 %s1563, 3
        %s1565 = sshll.u32 %s1564, 4
        %1566 = dma.done %s342, %s1565
        %v1567 = vld [vmem:[#allocation3] sm:$0xff]
        %v1568 = vld [vmem:[#allocation3 + $0x8] sm:$0xf]
        %v1569 = vld [vmem:[#allocation3 + $0xc] sm:$0xff]
        %v1570 = vld [vmem:[#allocation3 + $0x14] sm:$0xf]
        %v1571 = vld [vmem:[#allocation3 + $0x18] sm:$0xff]
        %v1572 = vld [vmem:[#allocation3 + $0x20] sm:$0xf]
        %v1573 = vld [vmem:[#allocation3 + $0x24] sm:$0xff]
        %v1574 = vld [vmem:[#allocation3 + $0x2c] sm:$0xf]
        %v1575 = vld [vmem:[#allocation3 + $0x30] sm:$0xff]
        %v1576 = vld [vmem:[#allocation3 + $0x38] sm:$0xf]
        %v1577 = vld [vmem:[#allocation3 + $0x3c] sm:$0xff]
        %v1578 = vld [vmem:[#allocation3 + $0x44] sm:$0xf]
        %v1579 = vld [vmem:[#allocation3 + $0x48] sm:$0xff]
        %v1580 = vld [vmem:[#allocation3 + $0x50] sm:$0xf]
        %v1581 = vld [vmem:[#allocation3 + $0x54] sm:$0xff]
        %v1582 = vld [vmem:[#allocation3 + $0x5c] sm:$0xf]
        %v1583 = vld [vmem:[#allocation3 + $0x60] sm:$0xff]
        %v1584 = vld [vmem:[#allocation3 + $0x68] sm:$0xf]
        %v1585 = vld [vmem:[#allocation3 + $0x6c] sm:$0xff]
        %v1586 = vld [vmem:[#allocation3 + $0x74] sm:$0xf]
        %v1587 = vld [vmem:[#allocation3 + $0x78] sm:$0xff]
        %v1588 = vld [vmem:[#allocation3 + $0x80] sm:$0xf]
        %v1589 = vld [vmem:[#allocation3 + $0x84] sm:$0xff]
        %v1590 = vld [vmem:[#allocation3 + $0x8c] sm:$0xf]
        %v1591 = vld [vmem:[#allocation3 + $0x90] sm:$0xff]
        %v1592 = vld [vmem:[#allocation3 + $0x98] sm:$0xf]
        %v1593 = vld [vmem:[#allocation3 + $0x9c] sm:$0xff]
        %v1594 = vld [vmem:[#allocation3 + $0xa4] sm:$0xf]
        %v1595 = vld [vmem:[#allocation3 + $0xa8] sm:$0xff]
        %v1596 = vld [vmem:[#allocation3 + $0xb0] sm:$0xf]
        %v1597 = vld [vmem:[#allocation3 + $0xb4] sm:$0xff]
        %v1598 = vld [vmem:[#allocation3 + $0xbc] sm:$0xf]
        %v1599 = vld [vmem:[#allocation3 + $0xc0] sm:$0xff]
        %v1600 = vld [vmem:[#allocation3 + $0xc8] sm:$0xf]
        %v1601 = vld [vmem:[#allocation3 + $0xcc] sm:$0xff]
        %v1602 = vld [vmem:[#allocation3 + $0xd4] sm:$0xf]
        %v1603 = vld [vmem:[#allocation3 + $0xd8] sm:$0xff]
        %v1604 = vld [vmem:[#allocation3 + $0xe0] sm:$0xf]
        %v1605 = vld [vmem:[#allocation3 + $0xe4] sm:$0xff]
        %v1606 = vld [vmem:[#allocation3 + $0xec] sm:$0xf]
        %v1607 = vld [vmem:[#allocation3 + $0xf0] sm:$0xff]
        %v1608 = vld [vmem:[#allocation3 + $0xf8] sm:$0xf]
        %v1609 = vld [vmem:[#allocation3 + $0xfc] sm:$0xff]
        %v1610 = vld [vmem:[#allocation3 + $0x104] sm:$0xf]
        %v1611 = vld [vmem:[#allocation3 + $0x108] sm:$0xff]
        %v1612 = vld [vmem:[#allocation3 + $0x110] sm:$0xf]
        %v1613 = vld [vmem:[#allocation3 + $0x114] sm:$0xff]
        %v1614 = vld [vmem:[#allocation3 + $0x11c] sm:$0xf]
        %v1615 = vld [vmem:[#allocation3 + $0x120] sm:$0xff]
        %v1616 = vld [vmem:[#allocation3 + $0x128] sm:$0xf]
        %v1617 = vld [vmem:[#allocation3 + $0x12c] sm:$0xff]
        %v1618 = vld [vmem:[#allocation3 + $0x134] sm:$0xf]
        %v1619 = vld [vmem:[#allocation3 + $0x138] sm:$0xff]
        %v1620 = vld [vmem:[#allocation3 + $0x140] sm:$0xf]
        %v1621 = vld [vmem:[#allocation3 + $0x144] sm:$0xff]
        %v1622 = vld [vmem:[#allocation3 + $0x14c] sm:$0xf]
        %v1623 = vld [vmem:[#allocation3 + $0x150] sm:$0xff]
        %v1624 = vld [vmem:[#allocation3 + $0x158] sm:$0xf]
        %v1625 = vld [vmem:[#allocation3 + $0x15c] sm:$0xff]
        %v1626 = vld [vmem:[#allocation3 + $0x164] sm:$0xf]
        %v1627 = vld [vmem:[#allocation3 + $0x168] sm:$0xff]
        %v1628 = vld [vmem:[#allocation3 + $0x170] sm:$0xf]
        %v1629 = vld [vmem:[#allocation3 + $0x174] sm:$0xff]
        %v1630 = vld [vmem:[#allocation3 + $0x17c] sm:$0xf]
        %v1631 = vld [vmem:[#allocation3 + $0x180] sm:$0xff]
        %v1632 = vld [vmem:[#allocation3 + $0x188] sm:$0xf]
        %v1633 = vld [vmem:[#allocation3 + $0x18c] sm:$0xff]
        %v1634 = vld [vmem:[#allocation3 + $0x194] sm:$0xf]
        %v1635 = vld [vmem:[#allocation3 + $0x198] sm:$0xff]
        %v1636 = vld [vmem:[#allocation3 + $0x1a0] sm:$0xf]
        %v1637 = vld [vmem:[#allocation3 + $0x1a4] sm:$0xff]
        %v1638 = vld [vmem:[#allocation3 + $0x1ac] sm:$0xf]
        %v1639 = vld [vmem:[#allocation3 + $0x1b0] sm:$0xff]
        %v1640 = vld [vmem:[#allocation3 + $0x1b8] sm:$0xf]
        %v1641 = vld [vmem:[#allocation3 + $0x1bc] sm:$0xff]
        %v1642 = vld [vmem:[#allocation3 + $0x1c4] sm:$0xf]
        %v1643 = vld [vmem:[#allocation3 + $0x1c8] sm:$0xff]
        %v1644 = vld [vmem:[#allocation3 + $0x1d0] sm:$0xf]
        %v1645 = vld [vmem:[#allocation3 + $0x1d4] sm:$0xff]
        %v1646 = vld [vmem:[#allocation3 + $0x1dc] sm:$0xf]
        %v1647 = vld [vmem:[#allocation3 + $0x1e0] sm:$0xff]
        %v1648 = vld [vmem:[#allocation3 + $0x1e8] sm:$0xf]
        %v1649 = vld [vmem:[#allocation3 + $0x1ec] sm:$0xff]
        %v1650 = vld [vmem:[#allocation3 + $0x1f4] sm:$0xf]
        %v1651 = vld [vmem:[#allocation3 + $0x1f8] sm:$0xff]
        %v1652 = vld [vmem:[#allocation3 + $0x200] sm:$0xf]
        %v1653 = vld [vmem:[#allocation3 + $0x204] sm:$0xff]
        %v1654 = vld [vmem:[#allocation3 + $0x20c] sm:$0xf]
        %v1655 = vld [vmem:[#allocation3 + $0x210] sm:$0xff]
        %v1656 = vld [vmem:[#allocation3 + $0x218] sm:$0xf]
        %v1657 = vld [vmem:[#allocation3 + $0x21c] sm:$0xff]
        %v1658 = vld [vmem:[#allocation3 + $0x224] sm:$0xf]
        %v1659 = vld [vmem:[#allocation3 + $0x228] sm:$0xff]
        %v1660 = vld [vmem:[#allocation3 + $0x230] sm:$0xf]
        %v1661 = vld [vmem:[#allocation3 + $0x234] sm:$0xff]
        %v1662 = vld [vmem:[#allocation3 + $0x23c] sm:$0xf]
        %v1663 = vld [vmem:[#allocation14] sm:$0x7]
        %v1665 = vlaneseq
        %v1666 = vshrl.u32 %v1665, 7
        %v1667 = vsub.s32 0, %v1666
        %v1668 = vrot.slane %v1663, %v1667
        %v1669 = vlaneseq
        %v1670 = vshrl.u32 %v1669, 7
        %v1671 = vsub.s32 1, %v1670
        %v1672 = vrot.slane %v1663, %v1671
        %v1673 = vlaneseq
        %v1674 = vshrl.u32 %v1673, 7
        %v1675 = vsub.s32 2, %v1674
        %v1676 = vrot.slane %v1663, %v1675
        %v1776 = vunpack.c.l.b16 %v1567
        %v1777 = vunpack.c.h.b16 %v1567
        %v1778 = vunpack.c.l.b16 %v1568
        %v1779 = vunpack.c.l.b16 %v1569
        %v1780 = vunpack.c.h.b16 %v1569
        %v1781 = vunpack.c.l.b16 %v1570
        %v1782 = vunpack.c.l.b16 %v1571
        %v1783 = vunpack.c.h.b16 %v1571
        %v1784 = vunpack.c.l.b16 %v1572
        %v1785 = vunpack.c.l.b16 %v1573
        %v1786 = vunpack.c.h.b16 %v1573
        %v1787 = vunpack.c.l.b16 %v1574
        %v1788 = vunpack.c.l.b16 %v1575
        %v1789 = vunpack.c.h.b16 %v1575
        %v1790 = vunpack.c.l.b16 %v1576
        %v1791 = vunpack.c.l.b16 %v1577
        %v1792 = vunpack.c.h.b16 %v1577
        %v1793 = vunpack.c.l.b16 %v1578
        %v1794 = vunpack.c.l.b16 %v1579
        %v1795 = vunpack.c.h.b16 %v1579
        %v1796 = vunpack.c.l.b16 %v1580
        %v1797 = vunpack.c.l.b16 %v1581
        %v1798 = vunpack.c.h.b16 %v1581
        %v1799 = vunpack.c.l.b16 %v1582
        %v1800 = vunpack.c.l.b16 %v1583
        %v1801 = vunpack.c.h.b16 %v1583
        %v1802 = vunpack.c.l.b16 %v1584
        %v1803 = vunpack.c.l.b16 %v1585
        %v1804 = vunpack.c.h.b16 %v1585
        %v1805 = vunpack.c.l.b16 %v1586
        %v1806 = vunpack.c.l.b16 %v1587
        %v1807 = vunpack.c.h.b16 %v1587
        %v1808 = vunpack.c.l.b16 %v1588
        %v1809 = vunpack.c.l.b16 %v1589
        %v1810 = vunpack.c.h.b16 %v1589
        %v1811 = vunpack.c.l.b16 %v1590
        %v1812 = vunpack.c.l.b16 %v1591
        %v1813 = vunpack.c.h.b16 %v1591
        %v1814 = vunpack.c.l.b16 %v1592
        %v1815 = vunpack.c.l.b16 %v1593
        %v1816 = vunpack.c.h.b16 %v1593
        %v1817 = vunpack.c.l.b16 %v1594
        %v1818 = vunpack.c.l.b16 %v1595
        %v1819 = vunpack.c.h.b16 %v1595
        %v1820 = vunpack.c.l.b16 %v1596
        %v1821 = vunpack.c.l.b16 %v1597
        %v1822 = vunpack.c.h.b16 %v1597
        %v1823 = vunpack.c.l.b16 %v1598
        %v1824 = vunpack.c.l.b16 %v1599
        %v1825 = vunpack.c.h.b16 %v1599
        %v1826 = vunpack.c.l.b16 %v1600
        %v1827 = vunpack.c.l.b16 %v1601
        %v1828 = vunpack.c.h.b16 %v1601
        %v1829 = vunpack.c.l.b16 %v1602
        %v1830 = vunpack.c.l.b16 %v1603
        %v1831 = vunpack.c.h.b16 %v1603
        %v1832 = vunpack.c.l.b16 %v1604
        %v1833 = vunpack.c.l.b16 %v1605
        %v1834 = vunpack.c.h.b16 %v1605
        %v1835 = vunpack.c.l.b16 %v1606
        %v1836 = vunpack.c.l.b16 %v1607
        %v1837 = vunpack.c.h.b16 %v1607
        %v1838 = vunpack.c.l.b16 %v1608
        %v1839 = vunpack.c.l.b16 %v1609
        %v1840 = vunpack.c.h.b16 %v1609
        %v1841 = vunpack.c.l.b16 %v1610
        %v1842 = vunpack.c.l.b16 %v1611
        %v1843 = vunpack.c.h.b16 %v1611
        %v1844 = vunpack.c.l.b16 %v1612
        %v1845 = vunpack.c.l.b16 %v1613
        %v1846 = vunpack.c.h.b16 %v1613
        %v1847 = vunpack.c.l.b16 %v1614
        %v1848 = vunpack.c.l.b16 %v1615
        %v1849 = vunpack.c.h.b16 %v1615
        %v1850 = vunpack.c.l.b16 %v1616
        %v1851 = vunpack.c.l.b16 %v1617
        %v1852 = vunpack.c.h.b16 %v1617
        %v1853 = vunpack.c.l.b16 %v1618
        %v1854 = vunpack.c.l.b16 %v1619
        %v1855 = vunpack.c.h.b16 %v1619
        %v1856 = vunpack.c.l.b16 %v1620
        %v1857 = vunpack.c.l.b16 %v1621
        %v1858 = vunpack.c.h.b16 %v1621
        %v1859 = vunpack.c.l.b16 %v1622
        %v1860 = vunpack.c.l.b16 %v1623
        %v1861 = vunpack.c.h.b16 %v1623
        %v1862 = vunpack.c.l.b16 %v1624
        %v1863 = vunpack.c.l.b16 %v1625
        %v1864 = vunpack.c.h.b16 %v1625
        %v1865 = vunpack.c.l.b16 %v1626
        %v1866 = vunpack.c.l.b16 %v1627
        %v1867 = vunpack.c.h.b16 %v1627
        %v1868 = vunpack.c.l.b16 %v1628
        %v1869 = vunpack.c.l.b16 %v1629
        %v1870 = vunpack.c.h.b16 %v1629
        %v1871 = vunpack.c.l.b16 %v1630
        %v1872 = vunpack.c.l.b16 %v1631
        %v1873 = vunpack.c.h.b16 %v1631
        %v1874 = vunpack.c.l.b16 %v1632
        %v1875 = vunpack.c.l.b16 %v1633
        %v1876 = vunpack.c.h.b16 %v1633
        %v1877 = vunpack.c.l.b16 %v1634
        %v1878 = vunpack.c.l.b16 %v1635
        %v1879 = vunpack.c.h.b16 %v1635
        %v1880 = vunpack.c.l.b16 %v1636
        %v1881 = vunpack.c.l.b16 %v1637
        %v1882 = vunpack.c.h.b16 %v1637
        %v1883 = vunpack.c.l.b16 %v1638
        %v1884 = vunpack.c.l.b16 %v1639
        %v1885 = vunpack.c.h.b16 %v1639
        %v1886 = vunpack.c.l.b16 %v1640
        %v1887 = vunpack.c.l.b16 %v1641
        %v1888 = vunpack.c.h.b16 %v1641
        %v1889 = vunpack.c.l.b16 %v1642
        %v1890 = vunpack.c.l.b16 %v1643
        %v1891 = vunpack.c.h.b16 %v1643
        %v1892 = vunpack.c.l.b16 %v1644
        %v1893 = vunpack.c.l.b16 %v1645
        %v1894 = vunpack.c.h.b16 %v1645
        %v1895 = vunpack.c.l.b16 %v1646
        %v1896 = vunpack.c.l.b16 %v1647
        %v1897 = vunpack.c.h.b16 %v1647
        %v1898 = vunpack.c.l.b16 %v1648
        %v1899 = vunpack.c.l.b16 %v1649
        %v1900 = vunpack.c.h.b16 %v1649
        %v1901 = vunpack.c.l.b16 %v1650
        %v1902 = vunpack.c.l.b16 %v1651
        %v1903 = vunpack.c.h.b16 %v1651
        %v1904 = vunpack.c.l.b16 %v1652
        %v1905 = vunpack.c.l.b16 %v1653
        %v1906 = vunpack.c.h.b16 %v1653
        %v1907 = vunpack.c.l.b16 %v1654
        %v1908 = vunpack.c.l.b16 %v1655
        %v1909 = vunpack.c.h.b16 %v1655
        %v1910 = vunpack.c.l.b16 %v1656
        %v1911 = vunpack.c.l.b16 %v1657
        %v1912 = vunpack.c.h.b16 %v1657
        %v1913 = vunpack.c.l.b16 %v1658
        %v1914 = vunpack.c.l.b16 %v1659
        %v1915 = vunpack.c.h.b16 %v1659
        %v1916 = vunpack.c.l.b16 %v1660
        %v1917 = vunpack.c.l.b16 %v1661
        %v1918 = vunpack.c.h.b16 %v1661
        %v1919 = vunpack.c.l.b16 %v1662
        %v1920 = vpack.c.b16 %v1779, %v1776
        %v1921 = vpack.c.b16 %v1780, %v1777
        %v1922 = vpack.c.b16 %v1781, %v1778
        %v1923 = vpack.c.b16 %v1785, %v1782
        %v1924 = vpack.c.b16 %v1786, %v1783
        %v1925 = vpack.c.b16 %v1787, %v1784
        %v1926 = vpack.c.b16 %v1791, %v1788
        %v1927 = vpack.c.b16 %v1792, %v1789
        %v1928 = vpack.c.b16 %v1793, %v1790
        %v1929 = vpack.c.b16 %v1797, %v1794
        %v1930 = vpack.c.b16 %v1798, %v1795
        %v1931 = vpack.c.b16 %v1799, %v1796
        %v1932 = vpack.c.b16 %v1803, %v1800
        %v1933 = vpack.c.b16 %v1804, %v1801
        %v1934 = vpack.c.b16 %v1805, %v1802
        %v1935 = vpack.c.b16 %v1809, %v1806
        %v1936 = vpack.c.b16 %v1810, %v1807
        %v1937 = vpack.c.b16 %v1811, %v1808
        %v1938 = vpack.c.b16 %v1815, %v1812
        %v1939 = vpack.c.b16 %v1816, %v1813
        %v1940 = vpack.c.b16 %v1817, %v1814
        %v1941 = vpack.c.b16 %v1821, %v1818
        %v1942 = vpack.c.b16 %v1822, %v1819
        %v1943 = vpack.c.b16 %v1823, %v1820
        %v1944 = vpack.c.b16 %v1827, %v1824
        %v1945 = vpack.c.b16 %v1828, %v1825
        %v1946 = vpack.c.b16 %v1829, %v1826
        %v1947 = vpack.c.b16 %v1833, %v1830
        %v1948 = vpack.c.b16 %v1834, %v1831
        %v1949 = vpack.c.b16 %v1835, %v1832
        %v1950 = vpack.c.b16 %v1839, %v1836
        %v1951 = vpack.c.b16 %v1840, %v1837
        %v1952 = vpack.c.b16 %v1841, %v1838
        %v1953 = vpack.c.b16 %v1845, %v1842
        %v1954 = vpack.c.b16 %v1846, %v1843
        %v1955 = vpack.c.b16 %v1847, %v1844
        %v1956 = vpack.c.b16 %v1851, %v1848
        %v1957 = vpack.c.b16 %v1852, %v1849
        %v1958 = vpack.c.b16 %v1853, %v1850
        %v1959 = vpack.c.b16 %v1857, %v1854
        %v1960 = vpack.c.b16 %v1858, %v1855
        %v1961 = vpack.c.b16 %v1859, %v1856
        %v1962 = vpack.c.b16 %v1863, %v1860
        %v1963 = vpack.c.b16 %v1864, %v1861
        %v1964 = vpack.c.b16 %v1865, %v1862
        %v1965 = vpack.c.b16 %v1869, %v1866
        %v1966 = vpack.c.b16 %v1870, %v1867
        %v1967 = vpack.c.b16 %v1871, %v1868
        %v1968 = vpack.c.b16 %v1875, %v1872
        %v1969 = vpack.c.b16 %v1876, %v1873
        %v1970 = vpack.c.b16 %v1877, %v1874
        %v1971 = vpack.c.b16 %v1881, %v1878
        %v1972 = vpack.c.b16 %v1882, %v1879
        %v1973 = vpack.c.b16 %v1883, %v1880
        %v1974 = vpack.c.b16 %v1887, %v1884
        %v1975 = vpack.c.b16 %v1888, %v1885
        %v1976 = vpack.c.b16 %v1889, %v1886
        %v1977 = vpack.c.b16 %v1893, %v1890
        %v1978 = vpack.c.b16 %v1894, %v1891
        %v1979 = vpack.c.b16 %v1895, %v1892
        %v1980 = vpack.c.b16 %v1899, %v1896
        %v1981 = vpack.c.b16 %v1900, %v1897
        %v1982 = vpack.c.b16 %v1901, %v1898
        %v1983 = vpack.c.b16 %v1905, %v1902
        %v1984 = vpack.c.b16 %v1906, %v1903
        %v1985 = vpack.c.b16 %v1907, %v1904
        %v1986 = vpack.c.b16 %v1911, %v1908
        %v1987 = vpack.c.b16 %v1912, %v1909
        %v1988 = vpack.c.b16 %v1913, %v1910
        %v1989 = vpack.c.b16 %v1917, %v1914
        %v1990 = vpack.c.b16 %v1918, %v1915
        %v1991 = vpack.c.b16 %v1919, %v1916
        %2064 = vmatprep.subr.bf16.mxu0 %v1942
        %2065 = vmatpush1.bf16.msra.mxu0 %v1941
        %2066 = vmatprep.subr.bf16.mxu0 %v1939
        %2067 = vmatpush1.bf16.msra.mxu0 %v1938
        %2068 = vmatprep.subr.bf16.mxu0 %v1936
        %2069 = vmatpush1.bf16.msra.mxu0 %v1935
        %2070 = vmatprep.subr.bf16.mxu0 %v1933
        %2071 = vmatpush1.bf16.msra.mxu0 %v1932
        %2072 = vmatprep.subr.bf16.mxu0 %v1930
        %2073 = vmatpush1.bf16.msra.mxu0 %v1929
        %2074 = vmatprep.subr.bf16.mxu0 %v1927
        %2075 = vmatpush1.bf16.msra.mxu0 %v1926
        %2076 = vmatprep.subr.bf16.mxu0 %v1924
        %2077 = vmatpush1.bf16.msra.mxu0 %v1923
        %2078 = vmatprep.subr.bf16.mxu0 %v1921
        %2079 = vmatpush1.bf16.msra.mxu0 %v1920
        %2080 = vmatprep.subr.bf16.mxu0 %v1966
        %2081 = vmatpush2.bf16.msra.mxu0 %v1965
        %2082 = vmatprep.subr.bf16.mxu0 %v1963
        %2083 = vmatpush2.bf16.msra.mxu0 %v1962
        %2084 = vmatprep.subr.bf16.mxu0 %v1960
        %2085 = vmatpush2.bf16.msra.mxu0 %v1959
        %2086 = vmatprep.subr.bf16.mxu0 %v1957
        %2087 = vmatpush2.bf16.msra.mxu0 %v1956
        %2088 = vmatprep.subr.bf16.mxu0 %v1954
        %2089 = vmatpush2.bf16.msra.mxu0 %v1953
        %2090 = vmatprep.subr.bf16.mxu0 %v1951
        %2091 = vmatpush2.bf16.msra.mxu0 %v1950
        %2092 = vmatprep.subr.bf16.mxu0 %v1948
        %2093 = vmatpush2.bf16.msra.mxu0 %v1947
        %2094 = vmatprep.subr.bf16.mxu0 %v1945
        %2095 = vmatpush2.bf16.msra.mxu0 %v1944
        %2096 = vmatprep.mubr.bf16.mxu0 %v1066
        %2097 = vmatmul.mubr.bf16.gmra.mxu0 %v1065
        %v2098 = vpop.f32.mrf.mxu0
        %v2099 = vadd.f32 %v1668, %v2098
        %v2100 = vpop.f32.mrf.mxu0
        %v2101 = vadd.f32 %v1672, %v2100
        %v2102 = vpop.f32.mrf.mxu0
        %v2103 = vadd.f32 %v1668, %v2102
        %v2104 = vpop.f32.mrf.mxu0
        %v2105 = vadd.f32 %v1672, %v2104
        %2106 = vmatprep.mubr.bf16.mxu0 %v1069
        %2107 = vmatmul.mubr.bf16.gmra.mxu0 %v1068
        %v2108 = vpop.f32.mrf.mxu0
        %v2109 = vadd.f32 %v1668, %v2108
        %v2110 = vpop.f32.mrf.mxu0
        %v2111 = vadd.f32 %v1672, %v2110
        %v2112 = vpop.f32.mrf.mxu0
        %v2113 = vadd.f32 %v1668, %v2112
        %v2114 = vpop.f32.mrf.mxu0
        %v2115 = vadd.f32 %v1672, %v2114
        %2116 = vmatprep.mubr.bf16.mxu0 %v1072
        %2117 = vmatmul.mubr.bf16.gmra.mxu0 %v1071
        %v2118 = vpop.f32.mrf.mxu0
        %v2119 = vadd.f32 %v1668, %v2118
        %v2120 = vpop.f32.mrf.mxu0
        %v2121 = vadd.f32 %v1672, %v2120
        %v2122 = vpop.f32.mrf.mxu0
        %v2123 = vadd.f32 %v1668, %v2122
        %v2124 = vpop.f32.mrf.mxu0
        %v2125 = vadd.f32 %v1672, %v2124
        %2126 = vmatprep.mubr.bf16.mxu0 %v1075
        %2127 = vmatmul.mubr.bf16.gmra.mxu0 %v1074
        %v2128 = vpop.f32.mrf.mxu0
        %v2129 = vadd.f32 %v1668, %v2128
        %v2130 = vpop.f32.mrf.mxu0
        %v2131 = vadd.f32 %v1672, %v2130
        %v2132 = vpop.f32.mrf.mxu0
        %v2133 = vadd.f32 %v1668, %v2132
        %v2134 = vpop.f32.mrf.mxu0
        %v2135 = vadd.f32 %v1672, %v2134
        %2136 = vmatprep.mubr.bf16.mxu0 %v1078
        %2137 = vmatmul.mubr.bf16.gmra.mxu0 %v1077
        %v2138 = vpop.f32.mrf.mxu0
        %v2139 = vadd.f32 %v1668, %v2138
        %v2140 = vpop.f32.mrf.mxu0
        %v2141 = vadd.f32 %v1672, %v2140
        %v2142 = vpop.f32.mrf.mxu0
        %v2143 = vadd.f32 %v1668, %v2142
        %v2144 = vpop.f32.mrf.mxu0
        %v2145 = vadd.f32 %v1672, %v2144
        %2146 = vmatprep.mubr.bf16.mxu0 %v1081
        %2147 = vmatmul.mubr.bf16.gmra.mxu0 %v1080
        %v2148 = vpop.f32.mrf.mxu0
        %v2149 = vadd.f32 %v1668, %v2148
        %v2150 = vpop.f32.mrf.mxu0
        %v2151 = vadd.f32 %v1672, %v2150
        %v2152 = vpop.f32.mrf.mxu0
        %v2153 = vadd.f32 %v1668, %v2152
        %v2154 = vpop.f32.mrf.mxu0
        %v2155 = vadd.f32 %v1672, %v2154
        %2156 = vmatprep.mubr.bf16.mxu0 %v1084
        %2157 = vmatmul.mubr.bf16.gmra.mxu0 %v1083
        %v2158 = vpop.f32.mrf.mxu0
        %v2159 = vadd.f32 %v1668, %v2158
        %v2160 = vpop.f32.mrf.mxu0
        %v2161 = vadd.f32 %v1672, %v2160
        %v2162 = vpop.f32.mrf.mxu0
        %v2163 = vadd.f32 %v1668, %v2162
        %v2164 = vpop.f32.mrf.mxu0
        %v2165 = vadd.f32 %v1672, %v2164
        %2166 = vmatprep.mubr.bf16.mxu0 %v1087
        %2167 = vmatmul.mubr.bf16.gmra.mxu0 %v1086
        %v2168 = vpop.f32.mrf.mxu0
        %v2169 = vadd.f32 %v1668, %v2168
        %v2170 = vpop.f32.mrf.mxu0
        %v2171 = vadd.f32 %v1672, %v2170
        %v2172 = vpop.f32.mrf.mxu0
        %v2173 = vadd.f32 %v1668, %v2172
        %v2174 = vpop.f32.mrf.mxu0
        %v2175 = vadd.f32 %v1672, %v2174
        %2176 = vdwg.mxu0
        %2177 = vmatprep.subr.bf16.mxu0 %v1990
        %2178 = vmatpush1.bf16.msra.mxu0 %v1989
        %2179 = vmatprep.subr.bf16.mxu0 %v1987
        %2180 = vmatpush1.bf16.msra.mxu0 %v1986
        %2181 = vmatprep.subr.bf16.mxu0 %v1984
        %2182 = vmatpush1.bf16.msra.mxu0 %v1983
        %2183 = vmatprep.subr.bf16.mxu0 %v1981
        %2184 = vmatpush1.bf16.msra.mxu0 %v1980
        %2185 = vmatprep.subr.bf16.mxu0 %v1978
        %2186 = vmatpush1.bf16.msra.mxu0 %v1977
        %2187 = vmatprep.subr.bf16.mxu0 %v1975
        %2188 = vmatpush1.bf16.msra.mxu0 %v1974
        %2189 = vmatprep.subr.bf16.mxu0 %v1972
        %2190 = vmatpush1.bf16.msra.mxu0 %v1971
        %2191 = vmatprep.subr.bf16.mxu0 %v1969
        %2192 = vmatpush1.bf16.msra.mxu0 %v1968
        %2193 = vmatprep.subr.bf16.mxu0 0
        %2194 = vmatpush2.bf16.msra.mxu0 0
        %2195 = vmatprep.subr.bf16.mxu0 0
        %2196 = vmatpush2.bf16.msra.mxu0 0
        %2197 = vmatprep.subr.bf16.mxu0 0
        %2198 = vmatpush2.bf16.msra.mxu0 0
        %2199 = vmatprep.subr.bf16.mxu0 0
        %2200 = vmatpush2.bf16.msra.mxu0 0
        %2201 = vmatprep.subr.bf16.mxu0 0
        %2202 = vmatpush2.bf16.msra.mxu0 0
        %2203 = vmatprep.subr.bf16.mxu0 0
        %2204 = vmatpush2.bf16.msra.mxu0 0
        %2205 = vmatprep.subr.bf16.mxu0 0
        %2206 = vmatpush2.bf16.msra.mxu0 0
        %2207 = vmatprep.subr.bf16.mxu0 0
        %2208 = vmatpush2.bf16.msra.mxu0 0
        %2209 = vmatprep.mubr.bf16.mxu0 0
        %2210 = vmatmul.mubr.bf16.gmra.mxu0 %v1067
        %v2211 = vpop.f32.mrf.mxu0
        %v2212 = vadd.f32 %v2099, %v2211
        %v2213 = vpop.f32.mrf.mxu0
        %v2214 = vadd.f32 %v2101, %v2213
        %v2215 = vpop.f32.mrf.mxu0
        %v2216 = vadd.f32 %v2103, %v2215
        %v2217 = vpop.f32.mrf.mxu0
        %v2218 = vadd.f32 %v2105, %v2217
        %2219 = vmatprep.mubr.bf16.mxu0 0
        %2220 = vmatmul.mubr.bf16.gmra.mxu0 %v1070
        %v2221 = vpop.f32.mrf.mxu0
        %v2222 = vadd.f32 %v2109, %v2221
        %v2223 = vpop.f32.mrf.mxu0
        %v2224 = vadd.f32 %v2111, %v2223
        %v2225 = vpop.f32.mrf.mxu0
        %v2226 = vadd.f32 %v2113, %v2225
        %v2227 = vpop.f32.mrf.mxu0
        %v2228 = vadd.f32 %v2115, %v2227
        %2229 = vmatprep.mubr.bf16.mxu0 0
        %2230 = vmatmul.mubr.bf16.gmra.mxu0 %v1073
        %v2231 = vpop.f32.mrf.mxu0
        %v2232 = vadd.f32 %v2119, %v2231
        %v2233 = vpop.f32.mrf.mxu0
        %v2234 = vadd.f32 %v2121, %v2233
        %v2235 = vpop.f32.mrf.mxu0
        %v2236 = vadd.f32 %v2123, %v2235
        %v2237 = vpop.f32.mrf.mxu0
        %v2238 = vadd.f32 %v2125, %v2237
        %2239 = vmatprep.mubr.bf16.mxu0 0
        %2240 = vmatmul.mubr.bf16.gmra.mxu0 %v1076
        %v2241 = vpop.f32.mrf.mxu0
        %v2242 = vadd.f32 %v2129, %v2241
        %v2243 = vpop.f32.mrf.mxu0
        %v2244 = vadd.f32 %v2131, %v2243
        %v2245 = vpop.f32.mrf.mxu0
        %v2246 = vadd.f32 %v2133, %v2245
        %v2247 = vpop.f32.mrf.mxu0
        %v2248 = vadd.f32 %v2135, %v2247
        %2249 = vmatprep.mubr.bf16.mxu0 0
        %2250 = vmatmul.mubr.bf16.gmra.mxu0 %v1079
        %v2251 = vpop.f32.mrf.mxu0
        %v2252 = vadd.f32 %v2139, %v2251
        %v2253 = vpop.f32.mrf.mxu0
        %v2254 = vadd.f32 %v2141, %v2253
        %v2255 = vpop.f32.mrf.mxu0
        %v2256 = vadd.f32 %v2143, %v2255
        %v2257 = vpop.f32.mrf.mxu0
        %v2258 = vadd.f32 %v2145, %v2257
        %2259 = vmatprep.mubr.bf16.mxu0 0
        %2260 = vmatmul.mubr.bf16.gmra.mxu0 %v1082
        %v2261 = vpop.f32.mrf.mxu0
        %v2262 = vadd.f32 %v2149, %v2261
        %v2263 = vpop.f32.mrf.mxu0
        %v2264 = vadd.f32 %v2151, %v2263
        %v2265 = vpop.f32.mrf.mxu0
        %v2266 = vadd.f32 %v2153, %v2265
        %v2267 = vpop.f32.mrf.mxu0
        %v2268 = vadd.f32 %v2155, %v2267
        %2269 = vmatprep.mubr.bf16.mxu0 0
        %2270 = vmatmul.mubr.bf16.gmra.mxu0 %v1085
        %v2271 = vpop.f32.mrf.mxu0
        %v2272 = vadd.f32 %v2159, %v2271
        %v2273 = vpop.f32.mrf.mxu0
        %v2274 = vadd.f32 %v2161, %v2273
        %v2275 = vpop.f32.mrf.mxu0
        %v2276 = vadd.f32 %v2163, %v2275
        %v2277 = vpop.f32.mrf.mxu0
        %v2278 = vadd.f32 %v2165, %v2277
        %2279 = vmatprep.mubr.bf16.mxu0 0
        %2280 = vmatmul.mubr.bf16.gmra.mxu0 %v1088
        %v2281 = vpop.f32.mrf.mxu0
        %v2282 = vadd.f32 %v2169, %v2281
        %v2283 = vpop.f32.mrf.mxu0
        %v2284 = vadd.f32 %v2171, %v2283
        %v2285 = vpop.f32.mrf.mxu0
        %v2286 = vadd.f32 %v2173, %v2285
        %v2287 = vpop.f32.mrf.mxu0
        %v2288 = vadd.f32 %v2175, %v2287
        %2289 = vdwg.mxu0
        %2290 = vmatprep.subr.bf16.mxu0 0
        %2291 = vmatpush1.bf16.msra.mxu0 %v1943
        %2292 = vmatprep.subr.bf16.mxu0 0
        %2293 = vmatpush1.bf16.msra.mxu0 %v1940
        %2294 = vmatprep.subr.bf16.mxu0 0
        %2295 = vmatpush1.bf16.msra.mxu0 %v1937
        %2296 = vmatprep.subr.bf16.mxu0 0
        %2297 = vmatpush1.bf16.msra.mxu0 %v1934
        %2298 = vmatprep.subr.bf16.mxu0 0
        %2299 = vmatpush1.bf16.msra.mxu0 %v1931
        %2300 = vmatprep.subr.bf16.mxu0 0
        %2301 = vmatpush1.bf16.msra.mxu0 %v1928
        %2302 = vmatprep.subr.bf16.mxu0 0
        %2303 = vmatpush1.bf16.msra.mxu0 %v1925
        %2304 = vmatprep.subr.bf16.mxu0 0
        %2305 = vmatpush1.bf16.msra.mxu0 %v1922
        %2306 = vmatprep.subr.bf16.mxu0 0
        %2307 = vmatpush2.bf16.msra.mxu0 %v1967
        %2308 = vmatprep.subr.bf16.mxu0 0
        %2309 = vmatpush2.bf16.msra.mxu0 %v1964
        %2310 = vmatprep.subr.bf16.mxu0 0
        %2311 = vmatpush2.bf16.msra.mxu0 %v1961
        %2312 = vmatprep.subr.bf16.mxu0 0
        %2313 = vmatpush2.bf16.msra.mxu0 %v1958
        %2314 = vmatprep.subr.bf16.mxu0 0
        %2315 = vmatpush2.bf16.msra.mxu0 %v1955
        %2316 = vmatprep.subr.bf16.mxu0 0
        %2317 = vmatpush2.bf16.msra.mxu0 %v1952
        %2318 = vmatprep.subr.bf16.mxu0 0
        %2319 = vmatpush2.bf16.msra.mxu0 %v1949
        %2320 = vmatprep.subr.bf16.mxu0 0
        %2321 = vmatpush2.bf16.msra.mxu0 %v1946
        %2322 = vmatprep.mubr.bf16.mxu0 %v1066
        %2323 = vmatmul.mubr.bf16.gmra.mxu0 %v1065
        %v2324 = vpop.f32.mrf.mxu0
        %v2325 = vadd.f32 %v1676, %v2324
        %v2326 = vpop.f32.mrf.mxu0
        %v2327 = vpop.f32.mrf.mxu0
        %v2328 = vadd.f32 %v1676, %v2327
        %v2329 = vpop.f32.mrf.mxu0
        %2330 = vmatprep.mubr.bf16.mxu0 %v1069
        %2331 = vmatmul.mubr.bf16.gmra.mxu0 %v1068
        %v2332 = vpop.f32.mrf.mxu0
        %v2333 = vadd.f32 %v1676, %v2332
        %v2334 = vpop.f32.mrf.mxu0
        %v2335 = vpop.f32.mrf.mxu0
        %v2336 = vadd.f32 %v1676, %v2335
        %v2337 = vpop.f32.mrf.mxu0
        %2338 = vmatprep.mubr.bf16.mxu0 %v1072
        %2339 = vmatmul.mubr.bf16.gmra.mxu0 %v1071
        %v2340 = vpop.f32.mrf.mxu0
        %v2341 = vadd.f32 %v1676, %v2340
        %v2342 = vpop.f32.mrf.mxu0
        %v2343 = vpop.f32.mrf.mxu0
        %v2344 = vadd.f32 %v1676, %v2343
        %v2345 = vpop.f32.mrf.mxu0
        %2346 = vmatprep.mubr.bf16.mxu0 %v1075
        %2347 = vmatmul.mubr.bf16.gmra.mxu0 %v1074
        %v2348 = vpop.f32.mrf.mxu0
        %v2349 = vadd.f32 %v1676, %v2348
        %v2350 = vpop.f32.mrf.mxu0
        %v2351 = vpop.f32.mrf.mxu0
        %v2352 = vadd.f32 %v1676, %v2351
        %v2353 = vpop.f32.mrf.mxu0
        %2354 = vmatprep.mubr.bf16.mxu0 %v1078
        %2355 = vmatmul.mubr.bf16.gmra.mxu0 %v1077
        %v2356 = vpop.f32.mrf.mxu0
        %v2357 = vadd.f32 %v1676, %v2356
        %v2358 = vpop.f32.mrf.mxu0
        %v2359 = vpop.f32.mrf.mxu0
        %v2360 = vadd.f32 %v1676, %v2359
        %v2361 = vpop.f32.mrf.mxu0
        %2362 = vmatprep.mubr.bf16.mxu0 %v1081
        %2363 = vmatmul.mubr.bf16.gmra.mxu0 %v1080
        %v2364 = vpop.f32.mrf.mxu0
        %v2365 = vadd.f32 %v1676, %v2364
        %v2366 = vpop.f32.mrf.mxu0
        %v2367 = vpop.f32.mrf.mxu0
        %v2368 = vadd.f32 %v1676, %v2367
        %v2369 = vpop.f32.mrf.mxu0
        %2370 = vmatprep.mubr.bf16.mxu0 %v1084
        %2371 = vmatmul.mubr.bf16.gmra.mxu0 %v1083
        %v2372 = vpop.f32.mrf.mxu0
        %v2373 = vadd.f32 %v1676, %v2372
        %v2374 = vpop.f32.mrf.mxu0
        %v2375 = vpop.f32.mrf.mxu0
        %v2376 = vadd.f32 %v1676, %v2375
        %v2377 = vpop.f32.mrf.mxu0
        %2378 = vmatprep.mubr.bf16.mxu0 %v1087
        %2379 = vmatmul.mubr.bf16.gmra.mxu0 %v1086
        %v2380 = vpop.f32.mrf.mxu0
        %v2381 = vadd.f32 %v1676, %v2380
        %v2382 = vpop.f32.mrf.mxu0
        %v2383 = vpop.f32.mrf.mxu0
        %v2384 = vadd.f32 %v1676, %v2383
        %v2385 = vpop.f32.mrf.mxu0
        %2386 = vdwg.mxu0
        %2387 = vmatprep.subr.bf16.mxu0 0
        %2388 = vmatpush1.bf16.msra.mxu0 %v1991
        %2389 = vmatprep.subr.bf16.mxu0 0
        %2390 = vmatpush1.bf16.msra.mxu0 %v1988
        %2391 = vmatprep.subr.bf16.mxu0 0
        %2392 = vmatpush1.bf16.msra.mxu0 %v1985
        %2393 = vmatprep.subr.bf16.mxu0 0
        %2394 = vmatpush1.bf16.msra.mxu0 %v1982
        %2395 = vmatprep.subr.bf16.mxu0 0
        %2396 = vmatpush1.bf16.msra.mxu0 %v1979
        %2397 = vmatprep.subr.bf16.mxu0 0
        %2398 = vmatpush1.bf16.msra.mxu0 %v1976
        %2399 = vmatprep.subr.bf16.mxu0 0
        %2400 = vmatpush1.bf16.msra.mxu0 %v1973
        %2401 = vmatprep.subr.bf16.mxu0 0
        %2402 = vmatpush1.bf16.msra.mxu0 %v1970
        %2403 = vmatprep.subr.bf16.mxu0 0
        %2404 = vmatpush2.bf16.msra.mxu0 0
        %2405 = vmatprep.subr.bf16.mxu0 0
        %2406 = vmatpush2.bf16.msra.mxu0 0
        %2407 = vmatprep.subr.bf16.mxu0 0
        %2408 = vmatpush2.bf16.msra.mxu0 0
        %2409 = vmatprep.subr.bf16.mxu0 0
        %2410 = vmatpush2.bf16.msra.mxu0 0
        %2411 = vmatprep.subr.bf16.mxu0 0
        %2412 = vmatpush2.bf16.msra.mxu0 0
        %2413 = vmatprep.subr.bf16.mxu0 0
        %2414 = vmatpush2.bf16.msra.mxu0 0
        %2415 = vmatprep.subr.bf16.mxu0 0
        %2416 = vmatpush2.bf16.msra.mxu0 0
        %2417 = vmatprep.subr.bf16.mxu0 0
        %2418 = vmatpush2.bf16.msra.mxu0 0
        %2419 = vmatprep.mubr.bf16.mxu0 0
        %2420 = vmatmul.mubr.bf16.gmra.mxu0 %v1067
        %v2421 = vpop.f32.mrf.mxu0
        %v2422 = vadd.f32 %v2325, %v2421
        %v2423 = vpop.f32.mrf.mxu0
        %v2424 = vpop.f32.mrf.mxu0
        %v2425 = vadd.f32 %v2328, %v2424
        %v2426 = vpop.f32.mrf.mxu0
        %2427 = vmatprep.mubr.bf16.mxu0 0
        %2428 = vmatmul.mubr.bf16.gmra.mxu0 %v1070
        %v2429 = vpop.f32.mrf.mxu0
        %v2430 = vadd.f32 %v2333, %v2429
        %v2431 = vpop.f32.mrf.mxu0
        %v2432 = vpop.f32.mrf.mxu0
        %v2433 = vadd.f32 %v2336, %v2432
        %v2434 = vpop.f32.mrf.mxu0
        %2435 = vmatprep.mubr.bf16.mxu0 0
        %2436 = vmatmul.mubr.bf16.gmra.mxu0 %v1073
        %v2437 = vpop.f32.mrf.mxu0
        %v2438 = vadd.f32 %v2341, %v2437
        %v2439 = vpop.f32.mrf.mxu0
        %v2440 = vpop.f32.mrf.mxu0
        %v2441 = vadd.f32 %v2344, %v2440
        %v2442 = vpop.f32.mrf.mxu0
        %2443 = vmatprep.mubr.bf16.mxu0 0
        %2444 = vmatmul.mubr.bf16.gmra.mxu0 %v1076
        %v2445 = vpop.f32.mrf.mxu0
        %v2446 = vadd.f32 %v2349, %v2445
        %v2447 = vpop.f32.mrf.mxu0
        %v2448 = vpop.f32.mrf.mxu0
        %v2449 = vadd.f32 %v2352, %v2448
        %v2450 = vpop.f32.mrf.mxu0
        %2451 = vmatprep.mubr.bf16.mxu0 0
        %2452 = vmatmul.mubr.bf16.gmra.mxu0 %v1079
        %v2453 = vpop.f32.mrf.mxu0
        %v2454 = vadd.f32 %v2357, %v2453
        %v2455 = vpop.f32.mrf.mxu0
        %v2456 = vpop.f32.mrf.mxu0
        %v2457 = vadd.f32 %v2360, %v2456
        %v2458 = vpop.f32.mrf.mxu0
        %2459 = vmatprep.mubr.bf16.mxu0 0
        %2460 = vmatmul.mubr.bf16.gmra.mxu0 %v1082
        %v2461 = vpop.f32.mrf.mxu0
        %v2462 = vadd.f32 %v2365, %v2461
        %v2463 = vpop.f32.mrf.mxu0
        %v2464 = vpop.f32.mrf.mxu0
        %v2465 = vadd.f32 %v2368, %v2464
        %v2466 = vpop.f32.mrf.mxu0
        %2467 = vmatprep.mubr.bf16.mxu0 0
        %2468 = vmatmul.mubr.bf16.gmra.mxu0 %v1085
        %v2469 = vpop.f32.mrf.mxu0
        %v2470 = vadd.f32 %v2373, %v2469
        %v2471 = vpop.f32.mrf.mxu0
        %v2472 = vpop.f32.mrf.mxu0
        %v2473 = vadd.f32 %v2376, %v2472
        %v2474 = vpop.f32.mrf.mxu0
        %2475 = vmatprep.mubr.bf16.mxu0 0
        %2476 = vmatmul.mubr.bf16.gmra.mxu0 %v1088
        %v2477 = vpop.f32.mrf.mxu0
        %v2478 = vadd.f32 %v2381, %v2477
        %v2479 = vpop.f32.mrf.mxu0
        %v2480 = vpop.f32.mrf.mxu0
        %v2481 = vadd.f32 %v2384, %v2480
        %v2482 = vpop.f32.mrf.mxu0
        %2483 = vdwg.mxu0
        %v2484 = vmul.f32 %v2212, 0.5
        %v2485 = vmul.f32 %v2214, 0.5
        %v2486 = vmul.f32 %v2422, 0.5
        %v2487 = vmul.f32 %v2216, 0.5
        %v2488 = vmul.f32 %v2218, 0.5
        %v2489 = vmul.f32 %v2425, 0.5
        %v2490 = vmul.f32 %v2222, 0.5
        %v2491 = vmul.f32 %v2224, 0.5
        %v2492 = vmul.f32 %v2430, 0.5
        %v2493 = vmul.f32 %v2226, 0.5
        %v2494 = vmul.f32 %v2228, 0.5
        %v2495 = vmul.f32 %v2433, 0.5
        %v2496 = vmul.f32 %v2232, 0.5
        %v2497 = vmul.f32 %v2234, 0.5
        %v2498 = vmul.f32 %v2438, 0.5
        %v2499 = vmul.f32 %v2236, 0.5
        %v2500 = vmul.f32 %v2238, 0.5
        %v2501 = vmul.f32 %v2441, 0.5
        %v2502 = vmul.f32 %v2242, 0.5
        %v2503 = vmul.f32 %v2244, 0.5
        %v2504 = vmul.f32 %v2446, 0.5
        %v2505 = vmul.f32 %v2246, 0.5
        %v2506 = vmul.f32 %v2248, 0.5
        %v2507 = vmul.f32 %v2449, 0.5
        %v2508 = vmul.f32 %v2252, 0.5
        %v2509 = vmul.f32 %v2254, 0.5
        %v2510 = vmul.f32 %v2454, 0.5
        %v2511 = vmul.f32 %v2256, 0.5
        %v2512 = vmul.f32 %v2258, 0.5
        %v2513 = vmul.f32 %v2457, 0.5
        %v2514 = vmul.f32 %v2262, 0.5
        %v2515 = vmul.f32 %v2264, 0.5
        %v2516 = vmul.f32 %v2462, 0.5
        %v2517 = vmul.f32 %v2266, 0.5
        %v2518 = vmul.f32 %v2268, 0.5
        %v2519 = vmul.f32 %v2465, 0.5
        %v2520 = vmul.f32 %v2272, 0.5
        %v2521 = vmul.f32 %v2274, 0.5
        %v2522 = vmul.f32 %v2470, 0.5
        %v2523 = vmul.f32 %v2276, 0.5
        %v2524 = vmul.f32 %v2278, 0.5
        %v2525 = vmul.f32 %v2473, 0.5
        %v2526 = vmul.f32 %v2282, 0.5
        %v2527 = vmul.f32 %v2284, 0.5
        %v2528 = vmul.f32 %v2478, 0.5
        %v2529 = vmul.f32 %v2286, 0.5
        %v2530 = vmul.f32 %v2288, 0.5
        %v2531 = vmul.f32 %v2481, 0.5
        %v2532 = vtanh.pop %v2484
        %v2533 = vtanh.pop %v2485
        %v2534 = vtanh.pop %v2486
        %v2535 = vtanh.pop %v2487
        %v2536 = vtanh.pop %v2488
        %v2537 = vtanh.pop %v2489
        %v2538 = vtanh.pop %v2490
        %v2539 = vtanh.pop %v2491
        %v2540 = vtanh.pop %v2492
        %v2541 = vtanh.pop %v2493
        %v2542 = vtanh.pop %v2494
        %v2543 = vtanh.pop %v2495
        %v2544 = vtanh.pop %v2496
        %v2545 = vtanh.pop %v2497
        %v2546 = vtanh.pop %v2498
        %v2547 = vtanh.pop %v2499
        %v2548 = vtanh.pop %v2500
        %v2549 = vtanh.pop %v2501
        %v2550 = vtanh.pop %v2502
        %v2551 = vtanh.pop %v2503
        %v2552 = vtanh.pop %v2504
        %v2553 = vtanh.pop %v2505
        %v2554 = vtanh.pop %v2506
        %v2555 = vtanh.pop %v2507
        %v2556 = vtanh.pop %v2508
        %v2557 = vtanh.pop %v2509
        %v2558 = vtanh.pop %v2510
        %v2559 = vtanh.pop %v2511
        %v2560 = vtanh.pop %v2512
        %v2561 = vtanh.pop %v2513
        %v2562 = vtanh.pop %v2514
        %v2563 = vtanh.pop %v2515
        %v2564 = vtanh.pop %v2516
        %v2565 = vtanh.pop %v2517
        %v2566 = vtanh.pop %v2518
        %v2567 = vtanh.pop %v2519
        %v2568 = vtanh.pop %v2520
        %v2569 = vtanh.pop %v2521
        %v2570 = vtanh.pop %v2522
        %v2571 = vtanh.pop %v2523
        %v2572 = vtanh.pop %v2524
        %v2573 = vtanh.pop %v2525
        %v2574 = vtanh.pop %v2526
        %v2575 = vtanh.pop %v2527
        %v2576 = vtanh.pop %v2528
        %v2577 = vtanh.pop %v2529
        %v2578 = vtanh.pop %v2530
        %v2579 = vtanh.pop %v2531
        %v2580 = vmul.f32 %v2532, 0.5
        %v2581 = vmul.f32 %v2533, 0.5
        %v2582 = vmul.f32 %v2534, 0.5
        %v2583 = vmul.f32 %v2535, 0.5
        %v2584 = vmul.f32 %v2536, 0.5
        %v2585 = vmul.f32 %v2537, 0.5
        %v2586 = vmul.f32 %v2538, 0.5
        %v2587 = vmul.f32 %v2539, 0.5
        %v2588 = vmul.f32 %v2540, 0.5
        %v2589 = vmul.f32 %v2541, 0.5
        %v2590 = vmul.f32 %v2542, 0.5
        %v2591 = vmul.f32 %v2543, 0.5
        %v2592 = vmul.f32 %v2544, 0.5
        %v2593 = vmul.f32 %v2545, 0.5
        %v2594 = vmul.f32 %v2546, 0.5
        %v2595 = vmul.f32 %v2547, 0.5
        %v2596 = vmul.f32 %v2548, 0.5
        %v2597 = vmul.f32 %v2549, 0.5
        %v2598 = vmul.f32 %v2550, 0.5
        %v2599 = vmul.f32 %v2551, 0.5
        %v2600 = vmul.f32 %v2552, 0.5
        %v2601 = vmul.f32 %v2553, 0.5
        %v2602 = vmul.f32 %v2554, 0.5
        %v2603 = vmul.f32 %v2555, 0.5
        %v2604 = vmul.f32 %v2556, 0.5
        %v2605 = vmul.f32 %v2557, 0.5
        %v2606 = vmul.f32 %v2558, 0.5
        %v2607 = vmul.f32 %v2559, 0.5
        %v2608 = vmul.f32 %v2560, 0.5
        %v2609 = vmul.f32 %v2561, 0.5
        %v2610 = vmul.f32 %v2562, 0.5
        %v2611 = vmul.f32 %v2563, 0.5
        %v2612 = vmul.f32 %v2564, 0.5
        %v2613 = vmul.f32 %v2565, 0.5
        %v2614 = vmul.f32 %v2566, 0.5
        %v2615 = vmul.f32 %v2567, 0.5
        %v2616 = vmul.f32 %v2568, 0.5
        %v2617 = vmul.f32 %v2569, 0.5
        %v2618 = vmul.f32 %v2570, 0.5
        %v2619 = vmul.f32 %v2571, 0.5
        %v2620 = vmul.f32 %v2572, 0.5
        %v2621 = vmul.f32 %v2573, 0.5
        %v2622 = vmul.f32 %v2574, 0.5
        %v2623 = vmul.f32 %v2575, 0.5
        %v2624 = vmul.f32 %v2576, 0.5
        %v2625 = vmul.f32 %v2577, 0.5
        %v2626 = vmul.f32 %v2578, 0.5
        %v2627 = vmul.f32 %v2579, 0.5
        %v2628 = vadd.f32 %v2580, 0.5
        %v2629 = vadd.f32 %v2581, 0.5
        %v2630 = vadd.f32 %v2582, 0.5
        %v2631 = vadd.f32 %v2583, 0.5
        %v2632 = vadd.f32 %v2584, 0.5
        %v2633 = vadd.f32 %v2585, 0.5
        %v2634 = vadd.f32 %v2586, 0.5
        %v2635 = vadd.f32 %v2587, 0.5
        %v2636 = vadd.f32 %v2588, 0.5
        %v2637 = vadd.f32 %v2589, 0.5
        %v2638 = vadd.f32 %v2590, 0.5
        %v2639 = vadd.f32 %v2591, 0.5
        %v2640 = vadd.f32 %v2592, 0.5
        %v2641 = vadd.f32 %v2593, 0.5
        %v2642 = vadd.f32 %v2594, 0.5
        %v2643 = vadd.f32 %v2595, 0.5
        %v2644 = vadd.f32 %v2596, 0.5
        %v2645 = vadd.f32 %v2597, 0.5
        %v2646 = vadd.f32 %v2598, 0.5
        %v2647 = vadd.f32 %v2599, 0.5
        %v2648 = vadd.f32 %v2600, 0.5
        %v2649 = vadd.f32 %v2601, 0.5
        %v2650 = vadd.f32 %v2602, 0.5
        %v2651 = vadd.f32 %v2603, 0.5
        %v2652 = vadd.f32 %v2604, 0.5
        %v2653 = vadd.f32 %v2605, 0.5
        %v2654 = vadd.f32 %v2606, 0.5
        %v2655 = vadd.f32 %v2607, 0.5
        %v2656 = vadd.f32 %v2608, 0.5
        %v2657 = vadd.f32 %v2609, 0.5
        %v2658 = vadd.f32 %v2610, 0.5
        %v2659 = vadd.f32 %v2611, 0.5
        %v2660 = vadd.f32 %v2612, 0.5
        %v2661 = vadd.f32 %v2613, 0.5
        %v2662 = vadd.f32 %v2614, 0.5
        %v2663 = vadd.f32 %v2615, 0.5
        %v2664 = vadd.f32 %v2616, 0.5
        %v2665 = vadd.f32 %v2617, 0.5
        %v2666 = vadd.f32 %v2618, 0.5
        %v2667 = vadd.f32 %v2619, 0.5
        %v2668 = vadd.f32 %v2620, 0.5
        %v2669 = vadd.f32 %v2621, 0.5
        %v2670 = vadd.f32 %v2622, 0.5
        %v2671 = vadd.f32 %v2623, 0.5
        %v2672 = vadd.f32 %v2624, 0.5
        %v2673 = vadd.f32 %v2625, 0.5
        %v2674 = vadd.f32 %v2626, 0.5
        %v2675 = vadd.f32 %v2627, 0.5
        %v2676 = vpack.c.bf16 %v2631, %v2628
        %v2677 = vpack.c.bf16 %v2632, %v2629
        %v2678 = vpack.c.bf16 %v2633, %v2630
        %v2679 = vpack.c.bf16 %v2637, %v2634
        %v2680 = vpack.c.bf16 %v2638, %v2635
        %v2681 = vpack.c.bf16 %v2639, %v2636
        %v2682 = vpack.c.bf16 %v2643, %v2640
        %v2683 = vpack.c.bf16 %v2644, %v2641
        %v2684 = vpack.c.bf16 %v2645, %v2642
        %v2685 = vpack.c.bf16 %v2649, %v2646
        %v2686 = vpack.c.bf16 %v2650, %v2647
        %v2687 = vpack.c.bf16 %v2651, %v2648
        %v2688 = vpack.c.bf16 %v2655, %v2652
        %v2689 = vpack.c.bf16 %v2656, %v2653
        %v2690 = vpack.c.bf16 %v2657, %v2654
        %v2691 = vpack.c.bf16 %v2661, %v2658
        %v2692 = vpack.c.bf16 %v2662, %v2659
        %v2693 = vpack.c.bf16 %v2663, %v2660
        %v2694 = vpack.c.bf16 %v2667, %v2664
        %v2695 = vpack.c.bf16 %v2668, %v2665
        %v2696 = vpack.c.bf16 %v2669, %v2666
        %v2697 = vpack.c.bf16 %v2673, %v2670
        %v2698 = vpack.c.bf16 %v2674, %v2671
        %v2699 = vpack.c.bf16 %v2675, %v2672
        %2700 = vmatprep.subr.bf16.mxu0 %v1942
        %2701 = vmatpush1.bf16.msra.mxu0 %v1941
        %2702 = vmatprep.subr.bf16.mxu0 %v1939
        %2703 = vmatpush1.bf16.msra.mxu0 %v1938
        %2704 = vmatprep.subr.bf16.mxu0 %v1936
        %2705 = vmatpush1.bf16.msra.mxu0 %v1935
        %2706 = vmatprep.subr.bf16.mxu0 %v1933
        %2707 = vmatpush1.bf16.msra.mxu0 %v1932
        %2708 = vmatprep.subr.bf16.mxu0 %v1930
        %2709 = vmatpush1.bf16.msra.mxu0 %v1929
        %2710 = vmatprep.subr.bf16.mxu0 %v1927
        %2711 = vmatpush1.bf16.msra.mxu0 %v1926
        %2712 = vmatprep.subr.bf16.mxu0 %v1924
        %2713 = vmatpush1.bf16.msra.mxu0 %v1923
        %2714 = vmatprep.subr.bf16.mxu0 %v1921
        %2715 = vmatpush1.bf16.msra.mxu0 %v1920
        %2716 = vmatprep.subr.bf16.mxu0 %v1966
        %2717 = vmatpush2.bf16.msra.mxu0 %v1965
        %2718 = vmatprep.subr.bf16.mxu0 %v1963
        %2719 = vmatpush2.bf16.msra.mxu0 %v1962
        %2720 = vmatprep.subr.bf16.mxu0 %v1960
        %2721 = vmatpush2.bf16.msra.mxu0 %v1959
        %2722 = vmatprep.subr.bf16.mxu0 %v1957
        %2723 = vmatpush2.bf16.msra.mxu0 %v1956
        %2724 = vmatprep.subr.bf16.mxu0 %v1954
        %2725 = vmatpush2.bf16.msra.mxu0 %v1953
        %2726 = vmatprep.subr.bf16.mxu0 %v1951
        %2727 = vmatpush2.bf16.msra.mxu0 %v1950
        %2728 = vmatprep.subr.bf16.mxu0 %v1948
        %2729 = vmatpush2.bf16.msra.mxu0 %v1947
        %2730 = vmatprep.subr.bf16.mxu0 %v1945
        %2731 = vmatpush2.bf16.msra.mxu0 %v1944
        %2732 = vmatprep.mubr.bf16.mxu0 %v1540
        %2733 = vmatmul.mubr.bf16.gmra.mxu0 %v1539
        %v2734 = vpop.f32.mrf.mxu0
        %v2735 = vadd.f32 %v1668, %v2734
        %v2736 = vpop.f32.mrf.mxu0
        %v2737 = vadd.f32 %v1672, %v2736
        %v2738 = vpop.f32.mrf.mxu0
        %v2739 = vadd.f32 %v1668, %v2738
        %v2740 = vpop.f32.mrf.mxu0
        %v2741 = vadd.f32 %v1672, %v2740
        %2742 = vmatprep.mubr.bf16.mxu0 %v1543
        %2743 = vmatmul.mubr.bf16.gmra.mxu0 %v1542
        %v2744 = vpop.f32.mrf.mxu0
        %v2745 = vadd.f32 %v1668, %v2744
        %v2746 = vpop.f32.mrf.mxu0
        %v2747 = vadd.f32 %v1672, %v2746
        %v2748 = vpop.f32.mrf.mxu0
        %v2749 = vadd.f32 %v1668, %v2748
        %v2750 = vpop.f32.mrf.mxu0
        %v2751 = vadd.f32 %v1672, %v2750
        %2752 = vmatprep.mubr.bf16.mxu0 %v1546
        %2753 = vmatmul.mubr.bf16.gmra.mxu0 %v1545
        %v2754 = vpop.f32.mrf.mxu0
        %v2755 = vadd.f32 %v1668, %v2754
        %v2756 = vpop.f32.mrf.mxu0
        %v2757 = vadd.f32 %v1672, %v2756
        %v2758 = vpop.f32.mrf.mxu0
        %v2759 = vadd.f32 %v1668, %v2758
        %v2760 = vpop.f32.mrf.mxu0
        %v2761 = vadd.f32 %v1672, %v2760
        %2762 = vmatprep.mubr.bf16.mxu0 %v1549
        %2763 = vmatmul.mubr.bf16.gmra.mxu0 %v1548
        %v2764 = vpop.f32.mrf.mxu0
        %v2765 = vadd.f32 %v1668, %v2764
        %v2766 = vpop.f32.mrf.mxu0
        %v2767 = vadd.f32 %v1672, %v2766
        %v2768 = vpop.f32.mrf.mxu0
        %v2769 = vadd.f32 %v1668, %v2768
        %v2770 = vpop.f32.mrf.mxu0
        %v2771 = vadd.f32 %v1672, %v2770
        %2772 = vmatprep.mubr.bf16.mxu0 %v1552
        %2773 = vmatmul.mubr.bf16.gmra.mxu0 %v1551
        %v2774 = vpop.f32.mrf.mxu0
        %v2775 = vadd.f32 %v1668, %v2774
        %v2776 = vpop.f32.mrf.mxu0
        %v2777 = vadd.f32 %v1672, %v2776
        %v2778 = vpop.f32.mrf.mxu0
        %v2779 = vadd.f32 %v1668, %v2778
        %v2780 = vpop.f32.mrf.mxu0
        %v2781 = vadd.f32 %v1672, %v2780
        %2782 = vmatprep.mubr.bf16.mxu0 %v1555
        %2783 = vmatmul.mubr.bf16.gmra.mxu0 %v1554
        %v2784 = vpop.f32.mrf.mxu0
        %v2785 = vadd.f32 %v1668, %v2784
        %v2786 = vpop.f32.mrf.mxu0
        %v2787 = vadd.f32 %v1672, %v2786
        %v2788 = vpop.f32.mrf.mxu0
        %v2789 = vadd.f32 %v1668, %v2788
        %v2790 = vpop.f32.mrf.mxu0
        %v2791 = vadd.f32 %v1672, %v2790
        %2792 = vmatprep.mubr.bf16.mxu0 %v1558
        %2793 = vmatmul.mubr.bf16.gmra.mxu0 %v1557
        %v2794 = vpop.f32.mrf.mxu0
        %v2795 = vadd.f32 %v1668, %v2794
        %v2796 = vpop.f32.mrf.mxu0
        %v2797 = vadd.f32 %v1672, %v2796
        %v2798 = vpop.f32.mrf.mxu0
        %v2799 = vadd.f32 %v1668, %v2798
        %v2800 = vpop.f32.mrf.mxu0
        %v2801 = vadd.f32 %v1672, %v2800
        %2802 = vmatprep.mubr.bf16.mxu0 %v1561
        %2803 = vmatmul.mubr.bf16.gmra.mxu0 %v1560
        %v2804 = vpop.f32.mrf.mxu0
        %v2805 = vadd.f32 %v1668, %v2804
        %v2806 = vpop.f32.mrf.mxu0
        %v2807 = vadd.f32 %v1672, %v2806
        %v2808 = vpop.f32.mrf.mxu0
        %v2809 = vadd.f32 %v1668, %v2808
        %v2810 = vpop.f32.mrf.mxu0
        %v2811 = vadd.f32 %v1672, %v2810
        %2812 = vdwg.mxu0
        %2813 = vmatprep.subr.bf16.mxu0 %v1990
        %2814 = vmatpush1.bf16.msra.mxu0 %v1989
        %2815 = vmatprep.subr.bf16.mxu0 %v1987
        %2816 = vmatpush1.bf16.msra.mxu0 %v1986
        %2817 = vmatprep.subr.bf16.mxu0 %v1984
        %2818 = vmatpush1.bf16.msra.mxu0 %v1983
        %2819 = vmatprep.subr.bf16.mxu0 %v1981
        %2820 = vmatpush1.bf16.msra.mxu0 %v1980
        %2821 = vmatprep.subr.bf16.mxu0 %v1978
        %2822 = vmatpush1.bf16.msra.mxu0 %v1977
        %2823 = vmatprep.subr.bf16.mxu0 %v1975
        %2824 = vmatpush1.bf16.msra.mxu0 %v1974
        %2825 = vmatprep.subr.bf16.mxu0 %v1972
        %2826 = vmatpush1.bf16.msra.mxu0 %v1971
        %2827 = vmatprep.subr.bf16.mxu0 %v1969
        %2828 = vmatpush1.bf16.msra.mxu0 %v1968
        %2829 = vmatprep.subr.bf16.mxu0 0
        %2830 = vmatpush2.bf16.msra.mxu0 0
        %2831 = vmatprep.subr.bf16.mxu0 0
        %2832 = vmatpush2.bf16.msra.mxu0 0
        %2833 = vmatprep.subr.bf16.mxu0 0
        %2834 = vmatpush2.bf16.msra.mxu0 0
        %2835 = vmatprep.subr.bf16.mxu0 0
        %2836 = vmatpush2.bf16.msra.mxu0 0
        %2837 = vmatprep.subr.bf16.mxu0 0
        %2838 = vmatpush2.bf16.msra.mxu0 0
        %2839 = vmatprep.subr.bf16.mxu0 0
        %2840 = vmatpush2.bf16.msra.mxu0 0
        %2841 = vmatprep.subr.bf16.mxu0 0
        %2842 = vmatpush2.bf16.msra.mxu0 0
        %2843 = vmatprep.subr.bf16.mxu0 0
        %2844 = vmatpush2.bf16.msra.mxu0 0
        %2845 = vmatprep.mubr.bf16.mxu0 0
        %2846 = vmatmul.mubr.bf16.gmra.mxu0 %v1541
        %v2847 = vpop.f32.mrf.mxu0
        %v2848 = vadd.f32 %v2735, %v2847
        %v2849 = vpop.f32.mrf.mxu0
        %v2850 = vadd.f32 %v2737, %v2849
        %v2851 = vpop.f32.mrf.mxu0
        %v2852 = vadd.f32 %v2739, %v2851
        %v2853 = vpop.f32.mrf.mxu0
        %v2854 = vadd.f32 %v2741, %v2853
        %2855 = vmatprep.mubr.bf16.mxu0 0
        %2856 = vmatmul.mubr.bf16.gmra.mxu0 %v1544
        %v2857 = vpop.f32.mrf.mxu0
        %v2858 = vadd.f32 %v2745, %v2857
        %v2859 = vpop.f32.mrf.mxu0
        %v2860 = vadd.f32 %v2747, %v2859
        %v2861 = vpop.f32.mrf.mxu0
        %v2862 = vadd.f32 %v2749, %v2861
        %v2863 = vpop.f32.mrf.mxu0
        %v2864 = vadd.f32 %v2751, %v2863
        %2865 = vmatprep.mubr.bf16.mxu0 0
        %2866 = vmatmul.mubr.bf16.gmra.mxu0 %v1547
        %v2867 = vpop.f32.mrf.mxu0
        %v2868 = vadd.f32 %v2755, %v2867
        %v2869 = vpop.f32.mrf.mxu0
        %v2870 = vadd.f32 %v2757, %v2869
        %v2871 = vpop.f32.mrf.mxu0
        %v2872 = vadd.f32 %v2759, %v2871
        %v2873 = vpop.f32.mrf.mxu0
        %v2874 = vadd.f32 %v2761, %v2873
        %2875 = vmatprep.mubr.bf16.mxu0 0
        %2876 = vmatmul.mubr.bf16.gmra.mxu0 %v1550
        %v2877 = vpop.f32.mrf.mxu0
        %v2878 = vadd.f32 %v2765, %v2877
        %v2879 = vpop.f32.mrf.mxu0
        %v2880 = vadd.f32 %v2767, %v2879
        %v2881 = vpop.f32.mrf.mxu0
        %v2882 = vadd.f32 %v2769, %v2881
        %v2883 = vpop.f32.mrf.mxu0
        %v2884 = vadd.f32 %v2771, %v2883
        %2885 = vmatprep.mubr.bf16.mxu0 0
        %2886 = vmatmul.mubr.bf16.gmra.mxu0 %v1553
        %v2887 = vpop.f32.mrf.mxu0
        %v2888 = vadd.f32 %v2775, %v2887
        %v2889 = vpop.f32.mrf.mxu0
        %v2890 = vadd.f32 %v2777, %v2889
        %v2891 = vpop.f32.mrf.mxu0
        %v2892 = vadd.f32 %v2779, %v2891
        %v2893 = vpop.f32.mrf.mxu0
        %v2894 = vadd.f32 %v2781, %v2893
        %2895 = vmatprep.mubr.bf16.mxu0 0
        %2896 = vmatmul.mubr.bf16.gmra.mxu0 %v1556
        %v2897 = vpop.f32.mrf.mxu0
        %v2898 = vadd.f32 %v2785, %v2897
        %v2899 = vpop.f32.mrf.mxu0
        %v2900 = vadd.f32 %v2787, %v2899
        %v2901 = vpop.f32.mrf.mxu0
        %v2902 = vadd.f32 %v2789, %v2901
        %v2903 = vpop.f32.mrf.mxu0
        %v2904 = vadd.f32 %v2791, %v2903
        %2905 = vmatprep.mubr.bf16.mxu0 0
        %2906 = vmatmul.mubr.bf16.gmra.mxu0 %v1559
        %v2907 = vpop.f32.mrf.mxu0
        %v2908 = vadd.f32 %v2795, %v2907
        %v2909 = vpop.f32.mrf.mxu0
        %v2910 = vadd.f32 %v2797, %v2909
        %v2911 = vpop.f32.mrf.mxu0
        %v2912 = vadd.f32 %v2799, %v2911
        %v2913 = vpop.f32.mrf.mxu0
        %v2914 = vadd.f32 %v2801, %v2913
        %2915 = vmatprep.mubr.bf16.mxu0 0
        %2916 = vmatmul.mubr.bf16.gmra.mxu0 %v1562
        %v2917 = vpop.f32.mrf.mxu0
        %v2918 = vadd.f32 %v2805, %v2917
        %v2919 = vpop.f32.mrf.mxu0
        %v2920 = vadd.f32 %v2807, %v2919
        %v2921 = vpop.f32.mrf.mxu0
        %v2922 = vadd.f32 %v2809, %v2921
        %v2923 = vpop.f32.mrf.mxu0
        %v2924 = vadd.f32 %v2811, %v2923
        %2925 = vdwg.mxu0
        %2926 = vmatprep.subr.bf16.mxu0 0
        %2927 = vmatpush1.bf16.msra.mxu0 %v1943
        %2928 = vmatprep.subr.bf16.mxu0 0
        %2929 = vmatpush1.bf16.msra.mxu0 %v1940
        %2930 = vmatprep.subr.bf16.mxu0 0
        %2931 = vmatpush1.bf16.msra.mxu0 %v1937
        %2932 = vmatprep.subr.bf16.mxu0 0
        %2933 = vmatpush1.bf16.msra.mxu0 %v1934
        %2934 = vmatprep.subr.bf16.mxu0 0
        %2935 = vmatpush1.bf16.msra.mxu0 %v1931
        %2936 = vmatprep.subr.bf16.mxu0 0
        %2937 = vmatpush1.bf16.msra.mxu0 %v1928
        %2938 = vmatprep.subr.bf16.mxu0 0
        %2939 = vmatpush1.bf16.msra.mxu0 %v1925
        %2940 = vmatprep.subr.bf16.mxu0 0
        %2941 = vmatpush1.bf16.msra.mxu0 %v1922
        %2942 = vmatprep.subr.bf16.mxu0 0
        %2943 = vmatpush2.bf16.msra.mxu0 %v1967
        %2944 = vmatprep.subr.bf16.mxu0 0
        %2945 = vmatpush2.bf16.msra.mxu0 %v1964
        %2946 = vmatprep.subr.bf16.mxu0 0
        %2947 = vmatpush2.bf16.msra.mxu0 %v1961
        %2948 = vmatprep.subr.bf16.mxu0 0
        %2949 = vmatpush2.bf16.msra.mxu0 %v1958
        %2950 = vmatprep.subr.bf16.mxu0 0
        %2951 = vmatpush2.bf16.msra.mxu0 %v1955
        %2952 = vmatprep.subr.bf16.mxu0 0
        %2953 = vmatpush2.bf16.msra.mxu0 %v1952
        %2954 = vmatprep.subr.bf16.mxu0 0
        %2955 = vmatpush2.bf16.msra.mxu0 %v1949
        %2956 = vmatprep.subr.bf16.mxu0 0
        %2957 = vmatpush2.bf16.msra.mxu0 %v1946
        %2958 = vmatprep.mubr.bf16.mxu0 %v1540
        %2959 = vmatmul.mubr.bf16.gmra.mxu0 %v1539
        %v2960 = vpop.f32.mrf.mxu0
        %v2961 = vadd.f32 %v1676, %v2960
        %v2962 = vpop.f32.mrf.mxu0
        %v2963 = vpop.f32.mrf.mxu0
        %v2964 = vadd.f32 %v1676, %v2963
        %v2965 = vpop.f32.mrf.mxu0
        %2966 = vmatprep.mubr.bf16.mxu0 %v1543
        %2967 = vmatmul.mubr.bf16.gmra.mxu0 %v1542
        %v2968 = vpop.f32.mrf.mxu0
        %v2969 = vadd.f32 %v1676, %v2968
        %v2970 = vpop.f32.mrf.mxu0
        %v2971 = vpop.f32.mrf.mxu0
        %v2972 = vadd.f32 %v1676, %v2971
        %v2973 = vpop.f32.mrf.mxu0
        %2974 = vmatprep.mubr.bf16.mxu0 %v1546
        %2975 = vmatmul.mubr.bf16.gmra.mxu0 %v1545
        %v2976 = vpop.f32.mrf.mxu0
        %v2977 = vadd.f32 %v1676, %v2976
        %v2978 = vpop.f32.mrf.mxu0
        %v2979 = vpop.f32.mrf.mxu0
        %v2980 = vadd.f32 %v1676, %v2979
        %v2981 = vpop.f32.mrf.mxu0
        %2982 = vmatprep.mubr.bf16.mxu0 %v1549
        %2983 = vmatmul.mubr.bf16.gmra.mxu0 %v1548
        %v2984 = vpop.f32.mrf.mxu0
        %v2985 = vadd.f32 %v1676, %v2984
        %v2986 = vpop.f32.mrf.mxu0
        %v2987 = vpop.f32.mrf.mxu0
        %v2988 = vadd.f32 %v1676, %v2987
        %v2989 = vpop.f32.mrf.mxu0
        %2990 = vmatprep.mubr.bf16.mxu0 %v1552
        %2991 = vmatmul.mubr.bf16.gmra.mxu0 %v1551
        %v2992 = vpop.f32.mrf.mxu0
        %v2993 = vadd.f32 %v1676, %v2992
        %v2994 = vpop.f32.mrf.mxu0
        %v2995 = vpop.f32.mrf.mxu0
        %v2996 = vadd.f32 %v1676, %v2995
        %v2997 = vpop.f32.mrf.mxu0
        %2998 = vmatprep.mubr.bf16.mxu0 %v1555
        %2999 = vmatmul.mubr.bf16.gmra.mxu0 %v1554
        %v3000 = vpop.f32.mrf.mxu0
        %v3001 = vadd.f32 %v1676, %v3000
        %v3002 = vpop.f32.mrf.mxu0
        %v3003 = vpop.f32.mrf.mxu0
        %v3004 = vadd.f32 %v1676, %v3003
        %v3005 = vpop.f32.mrf.mxu0
        %3006 = vmatprep.mubr.bf16.mxu0 %v1558
        %3007 = vmatmul.mubr.bf16.gmra.mxu0 %v1557
        %v3008 = vpop.f32.mrf.mxu0
        %v3009 = vadd.f32 %v1676, %v3008
        %v3010 = vpop.f32.mrf.mxu0
        %v3011 = vpop.f32.mrf.mxu0
        %v3012 = vadd.f32 %v1676, %v3011
        %v3013 = vpop.f32.mrf.mxu0
        %3014 = vmatprep.mubr.bf16.mxu0 %v1561
        %3015 = vmatmul.mubr.bf16.gmra.mxu0 %v1560
        %v3016 = vpop.f32.mrf.mxu0
        %v3017 = vadd.f32 %v1676, %v3016
        %v3018 = vpop.f32.mrf.mxu0
        %v3019 = vpop.f32.mrf.mxu0
        %v3020 = vadd.f32 %v1676, %v3019
        %v3021 = vpop.f32.mrf.mxu0
        %3022 = vdwg.mxu0
        %3023 = vmatprep.subr.bf16.mxu0 0
        %3024 = vmatpush1.bf16.msra.mxu0 %v1991
        %3025 = vmatprep.subr.bf16.mxu0 0
        %3026 = vmatpush1.bf16.msra.mxu0 %v1988
        %3027 = vmatprep.subr.bf16.mxu0 0
        %3028 = vmatpush1.bf16.msra.mxu0 %v1985
        %3029 = vmatprep.subr.bf16.mxu0 0
        %3030 = vmatpush1.bf16.msra.mxu0 %v1982
        %3031 = vmatprep.subr.bf16.mxu0 0
        %3032 = vmatpush1.bf16.msra.mxu0 %v1979
        %3033 = vmatprep.subr.bf16.mxu0 0
        %3034 = vmatpush1.bf16.msra.mxu0 %v1976
        %3035 = vmatprep.subr.bf16.mxu0 0
        %3036 = vmatpush1.bf16.msra.mxu0 %v1973
        %3037 = vmatprep.subr.bf16.mxu0 0
        %3038 = vmatpush1.bf16.msra.mxu0 %v1970
        %3039 = vmatprep.subr.bf16.mxu0 0
        %3040 = vmatpush2.bf16.msra.mxu0 0
        %3041 = vmatprep.subr.bf16.mxu0 0
        %3042 = vmatpush2.bf16.msra.mxu0 0
        %3043 = vmatprep.subr.bf16.mxu0 0
        %3044 = vmatpush2.bf16.msra.mxu0 0
        %3045 = vmatprep.subr.bf16.mxu0 0
        %3046 = vmatpush2.bf16.msra.mxu0 0
        %3047 = vmatprep.subr.bf16.mxu0 0
        %3048 = vmatpush2.bf16.msra.mxu0 0
        %3049 = vmatprep.subr.bf16.mxu0 0
        %3050 = vmatpush2.bf16.msra.mxu0 0
        %3051 = vmatprep.subr.bf16.mxu0 0
        %3052 = vmatpush2.bf16.msra.mxu0 0
        %3053 = vmatprep.subr.bf16.mxu0 0
        %3054 = vmatpush2.bf16.msra.mxu0 0
        %3055 = vmatprep.mubr.bf16.mxu0 0
        %3056 = vmatmul.mubr.bf16.gmra.mxu0 %v1541
        %v3057 = vpop.f32.mrf.mxu0
        %v3058 = vadd.f32 %v2961, %v3057
        %v3059 = vpop.f32.mrf.mxu0
        %v3060 = vpop.f32.mrf.mxu0
        %v3061 = vadd.f32 %v2964, %v3060
        %v3062 = vpop.f32.mrf.mxu0
        %3063 = vmatprep.mubr.bf16.mxu0 0
        %3064 = vmatmul.mubr.bf16.gmra.mxu0 %v1544
        %v3065 = vpop.f32.mrf.mxu0
        %v3066 = vadd.f32 %v2969, %v3065
        %v3067 = vpop.f32.mrf.mxu0
        %v3068 = vpop.f32.mrf.mxu0
        %v3069 = vadd.f32 %v2972, %v3068
        %v3070 = vpop.f32.mrf.mxu0
        %3071 = vmatprep.mubr.bf16.mxu0 0
        %3072 = vmatmul.mubr.bf16.gmra.mxu0 %v1547
        %v3073 = vpop.f32.mrf.mxu0
        %v3074 = vadd.f32 %v2977, %v3073
        %v3075 = vpop.f32.mrf.mxu0
        %v3076 = vpop.f32.mrf.mxu0
        %v3077 = vadd.f32 %v2980, %v3076
        %v3078 = vpop.f32.mrf.mxu0
        %3079 = vmatprep.mubr.bf16.mxu0 0
        %3080 = vmatmul.mubr.bf16.gmra.mxu0 %v1550
        %v3081 = vpop.f32.mrf.mxu0
        %v3082 = vadd.f32 %v2985, %v3081
        %v3083 = vpop.f32.mrf.mxu0
        %v3084 = vpop.f32.mrf.mxu0
        %v3085 = vadd.f32 %v2988, %v3084
        %v3086 = vpop.f32.mrf.mxu0
        %3087 = vmatprep.mubr.bf16.mxu0 0
        %3088 = vmatmul.mubr.bf16.gmra.mxu0 %v1553
        %v3089 = vpop.f32.mrf.mxu0
        %v3090 = vadd.f32 %v2993, %v3089
        %v3091 = vpop.f32.mrf.mxu0
        %v3092 = vpop.f32.mrf.mxu0
        %v3093 = vadd.f32 %v2996, %v3092
        %v3094 = vpop.f32.mrf.mxu0
        %3095 = vmatprep.mubr.bf16.mxu0 0
        %3096 = vmatmul.mubr.bf16.gmra.mxu0 %v1556
        %v3097 = vpop.f32.mrf.mxu0
        %v3098 = vadd.f32 %v3001, %v3097
        %v3099 = vpop.f32.mrf.mxu0
        %v3100 = vpop.f32.mrf.mxu0
        %v3101 = vadd.f32 %v3004, %v3100
        %v3102 = vpop.f32.mrf.mxu0
        %3103 = vmatprep.mubr.bf16.mxu0 0
        %3104 = vmatmul.mubr.bf16.gmra.mxu0 %v1559
        %v3105 = vpop.f32.mrf.mxu0
        %v3106 = vadd.f32 %v3009, %v3105
        %v3107 = vpop.f32.mrf.mxu0
        %v3108 = vpop.f32.mrf.mxu0
        %v3109 = vadd.f32 %v3012, %v3108
        %v3110 = vpop.f32.mrf.mxu0
        %3111 = vmatprep.mubr.bf16.mxu0 0
        %3112 = vmatmul.mubr.bf16.gmra.mxu0 %v1562
        %v3113 = vpop.f32.mrf.mxu0
        %v3114 = vadd.f32 %v3017, %v3113
        %v3115 = vpop.f32.mrf.mxu0
        %v3116 = vpop.f32.mrf.mxu0
        %v3117 = vadd.f32 %v3020, %v3116
        %v3118 = vpop.f32.mrf.mxu0
        %3119 = vdwg.mxu0
        %v3120 = vmul.f32 %v2848, 0.5
        %v3121 = vmul.f32 %v2850, 0.5
        %v3122 = vmul.f32 %v3058, 0.5
        %v3123 = vmul.f32 %v2852, 0.5
        %v3124 = vmul.f32 %v2854, 0.5
        %v3125 = vmul.f32 %v3061, 0.5
        %v3126 = vmul.f32 %v2858, 0.5
        %v3127 = vmul.f32 %v2860, 0.5
        %v3128 = vmul.f32 %v3066, 0.5
        %v3129 = vmul.f32 %v2862, 0.5
        %v3130 = vmul.f32 %v2864, 0.5
        %v3131 = vmul.f32 %v3069, 0.5
        %v3132 = vmul.f32 %v2868, 0.5
        %v3133 = vmul.f32 %v2870, 0.5
        %v3134 = vmul.f32 %v3074, 0.5
        %v3135 = vmul.f32 %v2872, 0.5
        %v3136 = vmul.f32 %v2874, 0.5
        %v3137 = vmul.f32 %v3077, 0.5
        %v3138 = vmul.f32 %v2878, 0.5
        %v3139 = vmul.f32 %v2880, 0.5
        %v3140 = vmul.f32 %v3082, 0.5
        %v3141 = vmul.f32 %v2882, 0.5
        %v3142 = vmul.f32 %v2884, 0.5
        %v3143 = vmul.f32 %v3085, 0.5
        %v3144 = vmul.f32 %v2888, 0.5
        %v3145 = vmul.f32 %v2890, 0.5
        %v3146 = vmul.f32 %v3090, 0.5
        %v3147 = vmul.f32 %v2892, 0.5
        %v3148 = vmul.f32 %v2894, 0.5
        %v3149 = vmul.f32 %v3093, 0.5
        %v3150 = vmul.f32 %v2898, 0.5
        %v3151 = vmul.f32 %v2900, 0.5
        %v3152 = vmul.f32 %v3098, 0.5
        %v3153 = vmul.f32 %v2902, 0.5
        %v3154 = vmul.f32 %v2904, 0.5
        %v3155 = vmul.f32 %v3101, 0.5
        %v3156 = vmul.f32 %v2908, 0.5
        %v3157 = vmul.f32 %v2910, 0.5
        %v3158 = vmul.f32 %v3106, 0.5
        %v3159 = vmul.f32 %v2912, 0.5
        %v3160 = vmul.f32 %v2914, 0.5
        %v3161 = vmul.f32 %v3109, 0.5
        %v3162 = vmul.f32 %v2918, 0.5
        %v3163 = vmul.f32 %v2920, 0.5
        %v3164 = vmul.f32 %v3114, 0.5
        %v3165 = vmul.f32 %v2922, 0.5
        %v3166 = vmul.f32 %v2924, 0.5
        %v3167 = vmul.f32 %v3117, 0.5
        %v3168 = vtanh.pop %v3120
        %v3169 = vtanh.pop %v3121
        %v3170 = vtanh.pop %v3122
        %v3171 = vtanh.pop %v3123
        %v3172 = vtanh.pop %v3124
        %v3173 = vtanh.pop %v3125
        %v3174 = vtanh.pop %v3126
        %v3175 = vtanh.pop %v3127
        %v3176 = vtanh.pop %v3128
        %v3177 = vtanh.pop %v3129
        %v3178 = vtanh.pop %v3130
        %v3179 = vtanh.pop %v3131
        %v3180 = vtanh.pop %v3132
        %v3181 = vtanh.pop %v3133
        %v3182 = vtanh.pop %v3134
        %v3183 = vtanh.pop %v3135
        %v3184 = vtanh.pop %v3136
        %v3185 = vtanh.pop %v3137
        %v3186 = vtanh.pop %v3138
        %v3187 = vtanh.pop %v3139
        %v3188 = vtanh.pop %v3140
        %v3189 = vtanh.pop %v3141
        %v3190 = vtanh.pop %v3142
        %v3191 = vtanh.pop %v3143
        %v3192 = vtanh.pop %v3144
        %v3193 = vtanh.pop %v3145
        %v3194 = vtanh.pop %v3146
        %v3195 = vtanh.pop %v3147
        %v3196 = vtanh.pop %v3148
        %v3197 = vtanh.pop %v3149
        %v3198 = vtanh.pop %v3150
        %v3199 = vtanh.pop %v3151
        %v3200 = vtanh.pop %v3152
        %v3201 = vtanh.pop %v3153
        %v3202 = vtanh.pop %v3154
        %v3203 = vtanh.pop %v3155
        %v3204 = vtanh.pop %v3156
        %v3205 = vtanh.pop %v3157
        %v3206 = vtanh.pop %v3158
        %v3207 = vtanh.pop %v3159
        %v3208 = vtanh.pop %v3160
        %v3209 = vtanh.pop %v3161
        %v3210 = vtanh.pop %v3162
        %v3211 = vtanh.pop %v3163
        %v3212 = vtanh.pop %v3164
        %v3213 = vtanh.pop %v3165
        %v3214 = vtanh.pop %v3166
        %v3215 = vtanh.pop %v3167
        %v3216 = vmul.f32 %v3168, 0.5
        %v3217 = vmul.f32 %v3169, 0.5
        %v3218 = vmul.f32 %v3170, 0.5
        %v3219 = vmul.f32 %v3171, 0.5
        %v3220 = vmul.f32 %v3172, 0.5
        %v3221 = vmul.f32 %v3173, 0.5
        %v3222 = vmul.f32 %v3174, 0.5
        %v3223 = vmul.f32 %v3175, 0.5
        %v3224 = vmul.f32 %v3176, 0.5
        %v3225 = vmul.f32 %v3177, 0.5
        %v3226 = vmul.f32 %v3178, 0.5
        %v3227 = vmul.f32 %v3179, 0.5
        %v3228 = vmul.f32 %v3180, 0.5
        %v3229 = vmul.f32 %v3181, 0.5
        %v3230 = vmul.f32 %v3182, 0.5
        %v3231 = vmul.f32 %v3183, 0.5
        %v3232 = vmul.f32 %v3184, 0.5
        %v3233 = vmul.f32 %v3185, 0.5
        %v3234 = vmul.f32 %v3186, 0.5
        %v3235 = vmul.f32 %v3187, 0.5
        %v3236 = vmul.f32 %v3188, 0.5
        %v3237 = vmul.f32 %v3189, 0.5
        %v3238 = vmul.f32 %v3190, 0.5
        %v3239 = vmul.f32 %v3191, 0.5
        %v3240 = vmul.f32 %v3192, 0.5
        %v3241 = vmul.f32 %v3193, 0.5
        %v3242 = vmul.f32 %v3194, 0.5
        %v3243 = vmul.f32 %v3195, 0.5
        %v3244 = vmul.f32 %v3196, 0.5
        %v3245 = vmul.f32 %v3197, 0.5
        %v3246 = vmul.f32 %v3198, 0.5
        %v3247 = vmul.f32 %v3199, 0.5
        %v3248 = vmul.f32 %v3200, 0.5
        %v3249 = vmul.f32 %v3201, 0.5
        %v3250 = vmul.f32 %v3202, 0.5
        %v3251 = vmul.f32 %v3203, 0.5
        %v3252 = vmul.f32 %v3204, 0.5
        %v3253 = vmul.f32 %v3205, 0.5
        %v3254 = vmul.f32 %v3206, 0.5
        %v3255 = vmul.f32 %v3207, 0.5
        %v3256 = vmul.f32 %v3208, 0.5
        %v3257 = vmul.f32 %v3209, 0.5
        %v3258 = vmul.f32 %v3210, 0.5
        %v3259 = vmul.f32 %v3211, 0.5
        %v3260 = vmul.f32 %v3212, 0.5
        %v3261 = vmul.f32 %v3213, 0.5
        %v3262 = vmul.f32 %v3214, 0.5
        %v3263 = vmul.f32 %v3215, 0.5
        %v3264 = vadd.f32 %v3216, 0.5
        %v3265 = vadd.f32 %v3217, 0.5
        %v3266 = vadd.f32 %v3218, 0.5
        %v3267 = vadd.f32 %v3219, 0.5
        %v3268 = vadd.f32 %v3220, 0.5
        %v3269 = vadd.f32 %v3221, 0.5
        %v3270 = vadd.f32 %v3222, 0.5
        %v3271 = vadd.f32 %v3223, 0.5
        %v3272 = vadd.f32 %v3224, 0.5
        %v3273 = vadd.f32 %v3225, 0.5
        %v3274 = vadd.f32 %v3226, 0.5
        %v3275 = vadd.f32 %v3227, 0.5
        %v3276 = vadd.f32 %v3228, 0.5
        %v3277 = vadd.f32 %v3229, 0.5
        %v3278 = vadd.f32 %v3230, 0.5
        %v3279 = vadd.f32 %v3231, 0.5
        %v3280 = vadd.f32 %v3232, 0.5
        %v3281 = vadd.f32 %v3233, 0.5
        %v3282 = vadd.f32 %v3234, 0.5
        %v3283 = vadd.f32 %v3235, 0.5
        %v3284 = vadd.f32 %v3236, 0.5
        %v3285 = vadd.f32 %v3237, 0.5
        %v3286 = vadd.f32 %v3238, 0.5
        %v3287 = vadd.f32 %v3239, 0.5
        %v3288 = vadd.f32 %v3240, 0.5
        %v3289 = vadd.f32 %v3241, 0.5
        %v3290 = vadd.f32 %v3242, 0.5
        %v3291 = vadd.f32 %v3243, 0.5
        %v3292 = vadd.f32 %v3244, 0.5
        %v3293 = vadd.f32 %v3245, 0.5
        %v3294 = vadd.f32 %v3246, 0.5
        %v3295 = vadd.f32 %v3247, 0.5
        %v3296 = vadd.f32 %v3248, 0.5
        %v3297 = vadd.f32 %v3249, 0.5
        %v3298 = vadd.f32 %v3250, 0.5
        %v3299 = vadd.f32 %v3251, 0.5
        %v3300 = vadd.f32 %v3252, 0.5
        %v3301 = vadd.f32 %v3253, 0.5
        %v3302 = vadd.f32 %v3254, 0.5
        %v3303 = vadd.f32 %v3255, 0.5
        %v3304 = vadd.f32 %v3256, 0.5
        %v3305 = vadd.f32 %v3257, 0.5
        %v3306 = vadd.f32 %v3258, 0.5
        %v3307 = vadd.f32 %v3259, 0.5
        %v3308 = vadd.f32 %v3260, 0.5
        %v3309 = vadd.f32 %v3261, 0.5
        %v3310 = vadd.f32 %v3262, 0.5
        %v3311 = vadd.f32 %v3263, 0.5
        %v3312 = vpack.c.bf16 %v3267, %v3264
        %v3313 = vpack.c.bf16 %v3268, %v3265
        %v3314 = vpack.c.bf16 %v3269, %v3266
        %v3315 = vpack.c.bf16 %v3273, %v3270
        %v3316 = vpack.c.bf16 %v3274, %v3271
        %v3317 = vpack.c.bf16 %v3275, %v3272
        %v3318 = vpack.c.bf16 %v3279, %v3276
        %v3319 = vpack.c.bf16 %v3280, %v3277
        %v3320 = vpack.c.bf16 %v3281, %v3278
        %v3321 = vpack.c.bf16 %v3285, %v3282
        %v3322 = vpack.c.bf16 %v3286, %v3283
        %v3323 = vpack.c.bf16 %v3287, %v3284
        %v3324 = vpack.c.bf16 %v3291, %v3288
        %v3325 = vpack.c.bf16 %v3292, %v3289
        %v3326 = vpack.c.bf16 %v3293, %v3290
        %v3327 = vpack.c.bf16 %v3297, %v3294
        %v3328 = vpack.c.bf16 %v3298, %v3295
        %v3329 = vpack.c.bf16 %v3299, %v3296
        %v3330 = vpack.c.bf16 %v3303, %v3300
        %v3331 = vpack.c.bf16 %v3304, %v3301
        %v3332 = vpack.c.bf16 %v3305, %v3302
        %v3333 = vpack.c.bf16 %v3309, %v3306
        %v3334 = vpack.c.bf16 %v3310, %v3307
        %v3335 = vpack.c.bf16 %v3311, %v3308
        %s3336 = smul.u32 %s1563, 4
        %s3337 = sshll.u32 %s3336, 4
        %3338 = dma.done %s354, %s3337
        %v3339 = vld [vmem:[#allocation4] sm:$0xff]
        %v3340 = vld [vmem:[#allocation4 + $0x8] sm:$0xff]
        %v3341 = vld [vmem:[#allocation4 + $0x10] sm:$0xff]
        %v3342 = vld [vmem:[#allocation4 + $0x18] sm:$0xff]
        %v3343 = vld [vmem:[#allocation4 + $0x20] sm:$0xff]
        %v3344 = vld [vmem:[#allocation4 + $0x28] sm:$0xff]
        %v3345 = vld [vmem:[#allocation4 + $0x30] sm:$0xff]
        %v3346 = vld [vmem:[#allocation4 + $0x38] sm:$0xff]
        %v3347 = vld [vmem:[#allocation4 + $0x40] sm:$0xff]
        %v3348 = vld [vmem:[#allocation4 + $0x48] sm:$0xff]
        %v3349 = vld [vmem:[#allocation4 + $0x50] sm:$0xff]
        %v3350 = vld [vmem:[#allocation4 + $0x58] sm:$0xff]
        %v3351 = vld [vmem:[#allocation4 + $0x60] sm:$0xff]
        %v3352 = vld [vmem:[#allocation4 + $0x68] sm:$0xff]
        %v3353 = vld [vmem:[#allocation4 + $0x70] sm:$0xff]
        %v3354 = vld [vmem:[#allocation4 + $0x78] sm:$0xff]
        %v3355 = vld [vmem:[#allocation4 + $0x80] sm:$0xff]
        %v3356 = vld [vmem:[#allocation4 + $0x88] sm:$0xff]
        %v3357 = vld [vmem:[#allocation4 + $0x90] sm:$0xff]
        %v3358 = vld [vmem:[#allocation4 + $0x98] sm:$0xff]
        %v3359 = vld [vmem:[#allocation4 + $0xa0] sm:$0xff]
        %v3360 = vld [vmem:[#allocation4 + $0xa8] sm:$0xff]
        %v3361 = vld [vmem:[#allocation4 + $0xb0] sm:$0xff]
        %v3362 = vld [vmem:[#allocation4 + $0xb8] sm:$0xff]
        %v3363 = vld [vmem:[#allocation4 + $0xc0] sm:$0xff]
        %v3364 = vld [vmem:[#allocation4 + $0xc8] sm:$0xff]
        %v3365 = vld [vmem:[#allocation4 + $0xd0] sm:$0xff]
        %v3366 = vld [vmem:[#allocation4 + $0xd8] sm:$0xff]
        %v3367 = vld [vmem:[#allocation4 + $0xe0] sm:$0xff]
        %v3368 = vld [vmem:[#allocation4 + $0xe8] sm:$0xff]
        %v3369 = vld [vmem:[#allocation4 + $0xf0] sm:$0xff]
        %v3370 = vld [vmem:[#allocation4 + $0xf8] sm:$0xff]
        %v3371 = vld [vmem:[#allocation4 + $0x100] sm:$0xff]
        %v3372 = vld [vmem:[#allocation4 + $0x108] sm:$0xff]
        %v3373 = vld [vmem:[#allocation4 + $0x110] sm:$0xff]
        %v3374 = vld [vmem:[#allocation4 + $0x118] sm:$0xff]
        %v3375 = vld [vmem:[#allocation4 + $0x120] sm:$0xff]
        %v3376 = vld [vmem:[#allocation4 + $0x128] sm:$0xff]
        %v3377 = vld [vmem:[#allocation4 + $0x130] sm:$0xff]
        %v3378 = vld [vmem:[#allocation4 + $0x138] sm:$0xff]
        %v3379 = vld [vmem:[#allocation4 + $0x140] sm:$0xff]
        %v3380 = vld [vmem:[#allocation4 + $0x148] sm:$0xff]
        %v3381 = vld [vmem:[#allocation4 + $0x150] sm:$0xff]
        %v3382 = vld [vmem:[#allocation4 + $0x158] sm:$0xff]
        %v3383 = vld [vmem:[#allocation4 + $0x160] sm:$0xff]
        %v3384 = vld [vmem:[#allocation4 + $0x168] sm:$0xff]
        %v3385 = vld [vmem:[#allocation4 + $0x170] sm:$0xff]
        %v3386 = vld [vmem:[#allocation4 + $0x178] sm:$0xff]
        %v3387 = vld [vmem:[#allocation4 + $0x180] sm:$0xff]
        %v3388 = vld [vmem:[#allocation4 + $0x188] sm:$0xff]
        %v3389 = vld [vmem:[#allocation4 + $0x190] sm:$0xff]
        %v3390 = vld [vmem:[#allocation4 + $0x198] sm:$0xff]
        %v3391 = vld [vmem:[#allocation4 + $0x1a0] sm:$0xff]
        %v3392 = vld [vmem:[#allocation4 + $0x1a8] sm:$0xff]
        %v3393 = vld [vmem:[#allocation4 + $0x1b0] sm:$0xff]
        %v3394 = vld [vmem:[#allocation4 + $0x1b8] sm:$0xff]
        %v3395 = vld [vmem:[#allocation4 + $0x1c0] sm:$0xff]
        %v3396 = vld [vmem:[#allocation4 + $0x1c8] sm:$0xff]
        %v3397 = vld [vmem:[#allocation4 + $0x1d0] sm:$0xff]
        %v3398 = vld [vmem:[#allocation4 + $0x1d8] sm:$0xff]
        %v3399 = vld [vmem:[#allocation4 + $0x1e0] sm:$0xff]
        %v3400 = vld [vmem:[#allocation4 + $0x1e8] sm:$0xff]
        %v3401 = vld [vmem:[#allocation4 + $0x1f0] sm:$0xff]
        %v3402 = vld [vmem:[#allocation4 + $0x1f8] sm:$0xff]
        %v3403 = vld [vmem:[#allocation4 + $0x200] sm:$0xff]
        %v3404 = vld [vmem:[#allocation4 + $0x208] sm:$0xff]
        %v3405 = vld [vmem:[#allocation4 + $0x210] sm:$0xff]
        %v3406 = vld [vmem:[#allocation4 + $0x218] sm:$0xff]
        %v3407 = vld [vmem:[#allocation4 + $0x220] sm:$0xff]
        %v3408 = vld [vmem:[#allocation4 + $0x228] sm:$0xff]
        %v3409 = vld [vmem:[#allocation4 + $0x230] sm:$0xff]
        %v3410 = vld [vmem:[#allocation4 + $0x238] sm:$0xff]
        %v3411 = vld [vmem:[#allocation4 + $0x240] sm:$0xff]
        %v3412 = vld [vmem:[#allocation4 + $0x248] sm:$0xff]
        %v3413 = vld [vmem:[#allocation4 + $0x250] sm:$0xff]
        %v3414 = vld [vmem:[#allocation4 + $0x258] sm:$0xff]
        %v3415 = vld [vmem:[#allocation4 + $0x260] sm:$0xff]
        %v3416 = vld [vmem:[#allocation4 + $0x268] sm:$0xff]
        %v3417 = vld [vmem:[#allocation4 + $0x270] sm:$0xff]
        %v3418 = vld [vmem:[#allocation4 + $0x278] sm:$0xff]
        %v3419 = vld [vmem:[#allocation4 + $0x280] sm:$0xff]
        %v3420 = vld [vmem:[#allocation4 + $0x288] sm:$0xff]
        %v3421 = vld [vmem:[#allocation4 + $0x290] sm:$0xff]
        %v3422 = vld [vmem:[#allocation4 + $0x298] sm:$0xff]
        %v3423 = vld [vmem:[#allocation4 + $0x2a0] sm:$0xff]
        %v3424 = vld [vmem:[#allocation4 + $0x2a8] sm:$0xff]
        %v3425 = vld [vmem:[#allocation4 + $0x2b0] sm:$0xff]
        %v3426 = vld [vmem:[#allocation4 + $0x2b8] sm:$0xff]
        %v3427 = vld [vmem:[#allocation4 + $0x2c0] sm:$0xff]
        %v3428 = vld [vmem:[#allocation4 + $0x2c8] sm:$0xff]
        %v3429 = vld [vmem:[#allocation4 + $0x2d0] sm:$0xff]
        %v3430 = vld [vmem:[#allocation4 + $0x2d8] sm:$0xff]
        %v3431 = vld [vmem:[#allocation4 + $0x2e0] sm:$0xff]
        %v3432 = vld [vmem:[#allocation4 + $0x2e8] sm:$0xff]
        %v3433 = vld [vmem:[#allocation4 + $0x2f0] sm:$0xff]
        %v3434 = vld [vmem:[#allocation4 + $0x2f8] sm:$0xff]
        %v3435 = vld [vmem:[%s9] sm:$0xf]
        %v3437 = vlaneseq
        %v3438 = vshrl.u32 %v3437, 7
        %v3439 = vsub.s32 0, %v3438
        %v3440 = vrot.slane %v3435, %v3439
        %v3441 = vlaneseq
        %v3442 = vshrl.u32 %v3441, 7
        %v3443 = vsub.s32 1, %v3442
        %v3444 = vrot.slane %v3435, %v3443
        %v3445 = vlaneseq
        %v3446 = vshrl.u32 %v3445, 7
        %v3447 = vsub.s32 2, %v3446
        %v3448 = vrot.slane %v3435, %v3447
        %v3449 = vlaneseq
        %v3450 = vshrl.u32 %v3449, 7
        %v3451 = vsub.s32 3, %v3450
        %v3452 = vrot.slane %v3435, %v3451
        %v3553 = vunpack.c.l.b16 %v3339
        %v3554 = vunpack.c.h.b16 %v3339
        %v3555 = vunpack.c.l.b16 %v3340
        %v3556 = vunpack.c.h.b16 %v3340
        %v3557 = vunpack.c.l.b16 %v3341
        %v3558 = vunpack.c.h.b16 %v3341
        %v3559 = vunpack.c.l.b16 %v3342
        %v3560 = vunpack.c.h.b16 %v3342
        %v3561 = vunpack.c.l.b16 %v3343
        %v3562 = vunpack.c.h.b16 %v3343
        %v3563 = vunpack.c.l.b16 %v3344
        %v3564 = vunpack.c.h.b16 %v3344
        %v3565 = vunpack.c.l.b16 %v3345
        %v3566 = vunpack.c.h.b16 %v3345
        %v3567 = vunpack.c.l.b16 %v3346
        %v3568 = vunpack.c.h.b16 %v3346
        %v3569 = vunpack.c.l.b16 %v3347
        %v3570 = vunpack.c.h.b16 %v3347
        %v3571 = vunpack.c.l.b16 %v3348
        %v3572 = vunpack.c.h.b16 %v3348
        %v3573 = vunpack.c.l.b16 %v3349
        %v3574 = vunpack.c.h.b16 %v3349
        %v3575 = vunpack.c.l.b16 %v3350
        %v3576 = vunpack.c.h.b16 %v3350
        %v3577 = vunpack.c.l.b16 %v3351
        %v3578 = vunpack.c.h.b16 %v3351
        %v3579 = vunpack.c.l.b16 %v3352
        %v3580 = vunpack.c.h.b16 %v3352
        %v3581 = vunpack.c.l.b16 %v3353
        %v3582 = vunpack.c.h.b16 %v3353
        %v3583 = vunpack.c.l.b16 %v3354
        %v3584 = vunpack.c.h.b16 %v3354
        %v3585 = vunpack.c.l.b16 %v3355
        %v3586 = vunpack.c.h.b16 %v3355
        %v3587 = vunpack.c.l.b16 %v3356
        %v3588 = vunpack.c.h.b16 %v3356
        %v3589 = vunpack.c.l.b16 %v3357
        %v3590 = vunpack.c.h.b16 %v3357
        %v3591 = vunpack.c.l.b16 %v3358
        %v3592 = vunpack.c.h.b16 %v3358
        %v3593 = vunpack.c.l.b16 %v3359
        %v3594 = vunpack.c.h.b16 %v3359
        %v3595 = vunpack.c.l.b16 %v3360
        %v3596 = vunpack.c.h.b16 %v3360
        %v3597 = vunpack.c.l.b16 %v3361
        %v3598 = vunpack.c.h.b16 %v3361
        %v3599 = vunpack.c.l.b16 %v3362
        %v3600 = vunpack.c.h.b16 %v3362
        %v3601 = vunpack.c.l.b16 %v3363
        %v3602 = vunpack.c.h.b16 %v3363
        %v3603 = vunpack.c.l.b16 %v3364
        %v3604 = vunpack.c.h.b16 %v3364
        %v3605 = vunpack.c.l.b16 %v3365
        %v3606 = vunpack.c.h.b16 %v3365
        %v3607 = vunpack.c.l.b16 %v3366
        %v3608 = vunpack.c.h.b16 %v3366
        %v3609 = vunpack.c.l.b16 %v3367
        %v3610 = vunpack.c.h.b16 %v3367
        %v3611 = vunpack.c.l.b16 %v3368
        %v3612 = vunpack.c.h.b16 %v3368
        %v3613 = vunpack.c.l.b16 %v3369
        %v3614 = vunpack.c.h.b16 %v3369
        %v3615 = vunpack.c.l.b16 %v3370
        %v3616 = vunpack.c.h.b16 %v3370
        %v3617 = vunpack.c.l.b16 %v3371
        %v3618 = vunpack.c.h.b16 %v3371
        %v3619 = vunpack.c.l.b16 %v3372
        %v3620 = vunpack.c.h.b16 %v3372
        %v3621 = vunpack.c.l.b16 %v3373
        %v3622 = vunpack.c.h.b16 %v3373
        %v3623 = vunpack.c.l.b16 %v3374
        %v3624 = vunpack.c.h.b16 %v3374
        %v3625 = vunpack.c.l.b16 %v3375
        %v3626 = vunpack.c.h.b16 %v3375
        %v3627 = vunpack.c.l.b16 %v3376
        %v3628 = vunpack.c.h.b16 %v3376
        %v3629 = vunpack.c.l.b16 %v3377
        %v3630 = vunpack.c.h.b16 %v3377
        %v3631 = vunpack.c.l.b16 %v3378
        %v3632 = vunpack.c.h.b16 %v3378
        %v3633 = vunpack.c.l.b16 %v3379
        %v3634 = vunpack.c.h.b16 %v3379
        %v3635 = vunpack.c.l.b16 %v3380
        %v3636 = vunpack.c.h.b16 %v3380
        %v3637 = vunpack.c.l.b16 %v3381
        %v3638 = vunpack.c.h.b16 %v3381
        %v3639 = vunpack.c.l.b16 %v3382
        %v3640 = vunpack.c.h.b16 %v3382
        %v3641 = vunpack.c.l.b16 %v3383
        %v3642 = vunpack.c.h.b16 %v3383
        %v3643 = vunpack.c.l.b16 %v3384
        %v3644 = vunpack.c.h.b16 %v3384
        %v3645 = vunpack.c.l.b16 %v3385
        %v3646 = vunpack.c.h.b16 %v3385
        %v3647 = vunpack.c.l.b16 %v3386
        %v3648 = vunpack.c.h.b16 %v3386
        %v3649 = vunpack.c.l.b16 %v3387
        %v3650 = vunpack.c.h.b16 %v3387
        %v3651 = vunpack.c.l.b16 %v3388
        %v3652 = vunpack.c.h.b16 %v3388
        %v3653 = vunpack.c.l.b16 %v3389
        %v3654 = vunpack.c.h.b16 %v3389
        %v3655 = vunpack.c.l.b16 %v3390
        %v3656 = vunpack.c.h.b16 %v3390
        %v3657 = vunpack.c.l.b16 %v3391
        %v3658 = vunpack.c.h.b16 %v3391
        %v3659 = vunpack.c.l.b16 %v3392
        %v3660 = vunpack.c.h.b16 %v3392
        %v3661 = vunpack.c.l.b16 %v3393
        %v3662 = vunpack.c.h.b16 %v3393
        %v3663 = vunpack.c.l.b16 %v3394
        %v3664 = vunpack.c.h.b16 %v3394
        %v3665 = vunpack.c.l.b16 %v3395
        %v3666 = vunpack.c.h.b16 %v3395
        %v3667 = vunpack.c.l.b16 %v3396
        %v3668 = vunpack.c.h.b16 %v3396
        %v3669 = vunpack.c.l.b16 %v3397
        %v3670 = vunpack.c.h.b16 %v3397
        %v3671 = vunpack.c.l.b16 %v3398
        %v3672 = vunpack.c.h.b16 %v3398
        %v3673 = vunpack.c.l.b16 %v3399
        %v3674 = vunpack.c.h.b16 %v3399
        %v3675 = vunpack.c.l.b16 %v3400
        %v3676 = vunpack.c.h.b16 %v3400
        %v3677 = vunpack.c.l.b16 %v3401
        %v3678 = vunpack.c.h.b16 %v3401
        %v3679 = vunpack.c.l.b16 %v3402
        %v3680 = vunpack.c.h.b16 %v3402
        %v3681 = vunpack.c.l.b16 %v3403
        %v3682 = vunpack.c.h.b16 %v3403
        %v3683 = vunpack.c.l.b16 %v3404
        %v3684 = vunpack.c.h.b16 %v3404
        %v3685 = vunpack.c.l.b16 %v3405
        %v3686 = vunpack.c.h.b16 %v3405
        %v3687 = vunpack.c.l.b16 %v3406
        %v3688 = vunpack.c.h.b16 %v3406
        %v3689 = vunpack.c.l.b16 %v3407
        %v3690 = vunpack.c.h.b16 %v3407
        %v3691 = vunpack.c.l.b16 %v3408
        %v3692 = vunpack.c.h.b16 %v3408
        %v3693 = vunpack.c.l.b16 %v3409
        %v3694 = vunpack.c.h.b16 %v3409
        %v3695 = vunpack.c.l.b16 %v3410
        %v3696 = vunpack.c.h.b16 %v3410
        %v3697 = vunpack.c.l.b16 %v3411
        %v3698 = vunpack.c.h.b16 %v3411
        %v3699 = vunpack.c.l.b16 %v3412
        %v3700 = vunpack.c.h.b16 %v3412
        %v3701 = vunpack.c.l.b16 %v3413
        %v3702 = vunpack.c.h.b16 %v3413
        %v3703 = vunpack.c.l.b16 %v3414
        %v3704 = vunpack.c.h.b16 %v3414
        %v3705 = vunpack.c.l.b16 %v3415
        %v3706 = vunpack.c.h.b16 %v3415
        %v3707 = vunpack.c.l.b16 %v3416
        %v3708 = vunpack.c.h.b16 %v3416
        %v3709 = vunpack.c.l.b16 %v3417
        %v3710 = vunpack.c.h.b16 %v3417
        %v3711 = vunpack.c.l.b16 %v3418
        %v3712 = vunpack.c.h.b16 %v3418
        %v3713 = vunpack.c.l.b16 %v3419
        %v3714 = vunpack.c.h.b16 %v3419
        %v3715 = vunpack.c.l.b16 %v3420
        %v3716 = vunpack.c.h.b16 %v3420
        %v3717 = vunpack.c.l.b16 %v3421
        %v3718 = vunpack.c.h.b16 %v3421
        %v3719 = vunpack.c.l.b16 %v3422
        %v3720 = vunpack.c.h.b16 %v3422
        %v3721 = vunpack.c.l.b16 %v3423
        %v3722 = vunpack.c.h.b16 %v3423
        %v3723 = vunpack.c.l.b16 %v3424
        %v3724 = vunpack.c.h.b16 %v3424
        %v3725 = vunpack.c.l.b16 %v3425
        %v3726 = vunpack.c.h.b16 %v3425
        %v3727 = vunpack.c.l.b16 %v3426
        %v3728 = vunpack.c.h.b16 %v3426
        %v3729 = vunpack.c.l.b16 %v3427
        %v3730 = vunpack.c.h.b16 %v3427
        %v3731 = vunpack.c.l.b16 %v3428
        %v3732 = vunpack.c.h.b16 %v3428
        %v3733 = vunpack.c.l.b16 %v3429
        %v3734 = vunpack.c.h.b16 %v3429
        %v3735 = vunpack.c.l.b16 %v3430
        %v3736 = vunpack.c.h.b16 %v3430
        %v3737 = vunpack.c.l.b16 %v3431
        %v3738 = vunpack.c.h.b16 %v3431
        %v3739 = vunpack.c.l.b16 %v3432
        %v3740 = vunpack.c.h.b16 %v3432
        %v3741 = vunpack.c.l.b16 %v3433
        %v3742 = vunpack.c.h.b16 %v3433
        %v3743 = vunpack.c.l.b16 %v3434
        %v3744 = vunpack.c.h.b16 %v3434
        %v3745 = vpack.c.b16 %v3557, %v3553
        %v3746 = vpack.c.b16 %v3558, %v3554
        %v3747 = vpack.c.b16 %v3559, %v3555
        %v3748 = vpack.c.b16 %v3560, %v3556
        %v3749 = vpack.c.b16 %v3565, %v3561
        %v3750 = vpack.c.b16 %v3566, %v3562
        %v3751 = vpack.c.b16 %v3567, %v3563
        %v3752 = vpack.c.b16 %v3568, %v3564
        %v3753 = vpack.c.b16 %v3573, %v3569
        %v3754 = vpack.c.b16 %v3574, %v3570
        %v3755 = vpack.c.b16 %v3575, %v3571
        %v3756 = vpack.c.b16 %v3576, %v3572
        %v3757 = vpack.c.b16 %v3581, %v3577
        %v3758 = vpack.c.b16 %v3582, %v3578
        %v3759 = vpack.c.b16 %v3583, %v3579
        %v3760 = vpack.c.b16 %v3584, %v3580
        %v3761 = vpack.c.b16 %v3589, %v3585
        %v3762 = vpack.c.b16 %v3590, %v3586
        %v3763 = vpack.c.b16 %v3591, %v3587
        %v3764 = vpack.c.b16 %v3592, %v3588
        %v3765 = vpack.c.b16 %v3597, %v3593
        %v3766 = vpack.c.b16 %v3598, %v3594
        %v3767 = vpack.c.b16 %v3599, %v3595
        %v3768 = vpack.c.b16 %v3600, %v3596
        %v3769 = vpack.c.b16 %v3605, %v3601
        %v3770 = vpack.c.b16 %v3606, %v3602
        %v3771 = vpack.c.b16 %v3607, %v3603
        %v3772 = vpack.c.b16 %v3608, %v3604
        %v3773 = vpack.c.b16 %v3613, %v3609
        %v3774 = vpack.c.b16 %v3614, %v3610
        %v3775 = vpack.c.b16 %v3615, %v3611
        %v3776 = vpack.c.b16 %v3616, %v3612
        %v3777 = vpack.c.b16 %v3621, %v3617
        %v3778 = vpack.c.b16 %v3622, %v3618
        %v3779 = vpack.c.b16 %v3623, %v3619
        %v3780 = vpack.c.b16 %v3624, %v3620
        %v3781 = vpack.c.b16 %v3629, %v3625
        %v3782 = vpack.c.b16 %v3630, %v3626
        %v3783 = vpack.c.b16 %v3631, %v3627
        %v3784 = vpack.c.b16 %v3632, %v3628
        %v3785 = vpack.c.b16 %v3637, %v3633
        %v3786 = vpack.c.b16 %v3638, %v3634
        %v3787 = vpack.c.b16 %v3639, %v3635
        %v3788 = vpack.c.b16 %v3640, %v3636
        %v3789 = vpack.c.b16 %v3645, %v3641
        %v3790 = vpack.c.b16 %v3646, %v3642
        %v3791 = vpack.c.b16 %v3647, %v3643
        %v3792 = vpack.c.b16 %v3648, %v3644
        %v3793 = vpack.c.b16 %v3653, %v3649
        %v3794 = vpack.c.b16 %v3654, %v3650
        %v3795 = vpack.c.b16 %v3655, %v3651
        %v3796 = vpack.c.b16 %v3656, %v3652
        %v3797 = vpack.c.b16 %v3661, %v3657
        %v3798 = vpack.c.b16 %v3662, %v3658
        %v3799 = vpack.c.b16 %v3663, %v3659
        %v3800 = vpack.c.b16 %v3664, %v3660
        %v3801 = vpack.c.b16 %v3669, %v3665
        %v3802 = vpack.c.b16 %v3670, %v3666
        %v3803 = vpack.c.b16 %v3671, %v3667
        %v3804 = vpack.c.b16 %v3672, %v3668
        %v3805 = vpack.c.b16 %v3677, %v3673
        %v3806 = vpack.c.b16 %v3678, %v3674
        %v3807 = vpack.c.b16 %v3679, %v3675
        %v3808 = vpack.c.b16 %v3680, %v3676
        %v3809 = vpack.c.b16 %v3685, %v3681
        %v3810 = vpack.c.b16 %v3686, %v3682
        %v3811 = vpack.c.b16 %v3687, %v3683
        %v3812 = vpack.c.b16 %v3688, %v3684
        %v3813 = vpack.c.b16 %v3693, %v3689
        %v3814 = vpack.c.b16 %v3694, %v3690
        %v3815 = vpack.c.b16 %v3695, %v3691
        %v3816 = vpack.c.b16 %v3696, %v3692
        %v3817 = vpack.c.b16 %v3701, %v3697
        %v3818 = vpack.c.b16 %v3702, %v3698
        %v3819 = vpack.c.b16 %v3703, %v3699
        %v3820 = vpack.c.b16 %v3704, %v3700
        %v3821 = vpack.c.b16 %v3709, %v3705
        %v3822 = vpack.c.b16 %v3710, %v3706
        %v3823 = vpack.c.b16 %v3711, %v3707
        %v3824 = vpack.c.b16 %v3712, %v3708
        %v3825 = vpack.c.b16 %v3717, %v3713
        %v3826 = vpack.c.b16 %v3718, %v3714
        %v3827 = vpack.c.b16 %v3719, %v3715
        %v3828 = vpack.c.b16 %v3720, %v3716
        %v3829 = vpack.c.b16 %v3725, %v3721
        %v3830 = vpack.c.b16 %v3726, %v3722
        %v3831 = vpack.c.b16 %v3727, %v3723
        %v3832 = vpack.c.b16 %v3728, %v3724
        %v3833 = vpack.c.b16 %v3733, %v3729
        %v3834 = vpack.c.b16 %v3734, %v3730
        %v3835 = vpack.c.b16 %v3735, %v3731
        %v3836 = vpack.c.b16 %v3736, %v3732
        %v3837 = vpack.c.b16 %v3741, %v3737
        %v3838 = vpack.c.b16 %v3742, %v3738
        %v3839 = vpack.c.b16 %v3743, %v3739
        %v3840 = vpack.c.b16 %v3744, %v3740
        %3937 = vmatprep.subr.bf16.mxu0 %v3774
        %3938 = vmatpush1.bf16.msra.mxu0 %v3773
        %3939 = vmatprep.subr.bf16.mxu0 %v3770
        %3940 = vmatpush1.bf16.msra.mxu0 %v3769
        %3941 = vmatprep.subr.bf16.mxu0 %v3766
        %3942 = vmatpush1.bf16.msra.mxu0 %v3765
        %3943 = vmatprep.subr.bf16.mxu0 %v3762
        %3944 = vmatpush1.bf16.msra.mxu0 %v3761
        %3945 = vmatprep.subr.bf16.mxu0 %v3758
        %3946 = vmatpush1.bf16.msra.mxu0 %v3757
        %3947 = vmatprep.subr.bf16.mxu0 %v3754
        %3948 = vmatpush1.bf16.msra.mxu0 %v3753
        %3949 = vmatprep.subr.bf16.mxu0 %v3750
        %3950 = vmatpush1.bf16.msra.mxu0 %v3749
        %3951 = vmatprep.subr.bf16.mxu0 %v3746
        %3952 = vmatpush1.bf16.msra.mxu0 %v3745
        %3953 = vmatprep.subr.bf16.mxu0 %v3806
        %3954 = vmatpush2.bf16.msra.mxu0 %v3805
        %3955 = vmatprep.subr.bf16.mxu0 %v3802
        %3956 = vmatpush2.bf16.msra.mxu0 %v3801
        %3957 = vmatprep.subr.bf16.mxu0 %v3798
        %3958 = vmatpush2.bf16.msra.mxu0 %v3797
        %3959 = vmatprep.subr.bf16.mxu0 %v3794
        %3960 = vmatpush2.bf16.msra.mxu0 %v3793
        %3961 = vmatprep.subr.bf16.mxu0 %v3790
        %3962 = vmatpush2.bf16.msra.mxu0 %v3789
        %3963 = vmatprep.subr.bf16.mxu0 %v3786
        %3964 = vmatpush2.bf16.msra.mxu0 %v3785
        %3965 = vmatprep.subr.bf16.mxu0 %v3782
        %3966 = vmatpush2.bf16.msra.mxu0 %v3781
        %3967 = vmatprep.subr.bf16.mxu0 %v3778
        %3968 = vmatpush2.bf16.msra.mxu0 %v3777
        %3969 = vmatprep.mubr.bf16.mxu0 %v2677
        %3970 = vmatmul.mubr.bf16.gmra.mxu0 %v2676
        %v3971 = vpop.f32.mrf.mxu0
        %v3972 = vadd.f32 %v3440, %v3971
        %v3973 = vpop.f32.mrf.mxu0
        %v3974 = vadd.f32 %v3444, %v3973
        %v3975 = vpop.f32.mrf.mxu0
        %v3976 = vadd.f32 %v3440, %v3975
        %v3977 = vpop.f32.mrf.mxu0
        %v3978 = vadd.f32 %v3444, %v3977
        %3979 = vmatprep.mubr.bf16.mxu0 %v2680
        %3980 = vmatmul.mubr.bf16.gmra.mxu0 %v2679
        %v3981 = vpop.f32.mrf.mxu0
        %v3982 = vadd.f32 %v3440, %v3981
        %v3983 = vpop.f32.mrf.mxu0
        %v3984 = vadd.f32 %v3444, %v3983
        %v3985 = vpop.f32.mrf.mxu0
        %v3986 = vadd.f32 %v3440, %v3985
        %v3987 = vpop.f32.mrf.mxu0
        %v3988 = vadd.f32 %v3444, %v3987
        %3989 = vmatprep.mubr.bf16.mxu0 %v2683
        %3990 = vmatmul.mubr.bf16.gmra.mxu0 %v2682
        %v3991 = vpop.f32.mrf.mxu0
        %v3992 = vadd.f32 %v3440, %v3991
        %v3993 = vpop.f32.mrf.mxu0
        %v3994 = vadd.f32 %v3444, %v3993
        %v3995 = vpop.f32.mrf.mxu0
        %v3996 = vadd.f32 %v3440, %v3995
        %v3997 = vpop.f32.mrf.mxu0
        %v3998 = vadd.f32 %v3444, %v3997
        %3999 = vmatprep.mubr.bf16.mxu0 %v2686
        %4000 = vmatmul.mubr.bf16.gmra.mxu0 %v2685
        %v4001 = vpop.f32.mrf.mxu0
        %v4002 = vadd.f32 %v3440, %v4001
        %v4003 = vpop.f32.mrf.mxu0
        %v4004 = vadd.f32 %v3444, %v4003
        %v4005 = vpop.f32.mrf.mxu0
        %v4006 = vadd.f32 %v3440, %v4005
        %v4007 = vpop.f32.mrf.mxu0
        %v4008 = vadd.f32 %v3444, %v4007
        %4009 = vmatprep.mubr.bf16.mxu0 %v2689
        %4010 = vmatmul.mubr.bf16.gmra.mxu0 %v2688
        %v4011 = vpop.f32.mrf.mxu0
        %v4012 = vadd.f32 %v3440, %v4011
        %v4013 = vpop.f32.mrf.mxu0
        %v4014 = vadd.f32 %v3444, %v4013
        %v4015 = vpop.f32.mrf.mxu0
        %v4016 = vadd.f32 %v3440, %v4015
        %v4017 = vpop.f32.mrf.mxu0
        %v4018 = vadd.f32 %v3444, %v4017
        %4019 = vmatprep.mubr.bf16.mxu0 %v2692
        %4020 = vmatmul.mubr.bf16.gmra.mxu0 %v2691
        %v4021 = vpop.f32.mrf.mxu0
        %v4022 = vadd.f32 %v3440, %v4021
        %v4023 = vpop.f32.mrf.mxu0
        %v4024 = vadd.f32 %v3444, %v4023
        %v4025 = vpop.f32.mrf.mxu0
        %v4026 = vadd.f32 %v3440, %v4025
        %v4027 = vpop.f32.mrf.mxu0
        %v4028 = vadd.f32 %v3444, %v4027
        %4029 = vmatprep.mubr.bf16.mxu0 %v2695
        %4030 = vmatmul.mubr.bf16.gmra.mxu0 %v2694
        %v4031 = vpop.f32.mrf.mxu0
        %v4032 = vadd.f32 %v3440, %v4031
        %v4033 = vpop.f32.mrf.mxu0
        %v4034 = vadd.f32 %v3444, %v4033
        %v4035 = vpop.f32.mrf.mxu0
        %v4036 = vadd.f32 %v3440, %v4035
        %v4037 = vpop.f32.mrf.mxu0
        %v4038 = vadd.f32 %v3444, %v4037
        %4039 = vmatprep.mubr.bf16.mxu0 %v2698
        %4040 = vmatmul.mubr.bf16.gmra.mxu0 %v2697
        %v4041 = vpop.f32.mrf.mxu0
        %v4042 = vadd.f32 %v3440, %v4041
        %v4043 = vpop.f32.mrf.mxu0
        %v4044 = vadd.f32 %v3444, %v4043
        %v4045 = vpop.f32.mrf.mxu0
        %v4046 = vadd.f32 %v3440, %v4045
        %v4047 = vpop.f32.mrf.mxu0
        %v4048 = vadd.f32 %v3444, %v4047
        %4049 = vdwg.mxu0
        %4050 = vmatprep.subr.bf16.mxu0 %v3838
        %4051 = vmatpush1.bf16.msra.mxu0 %v3837
        %4052 = vmatprep.subr.bf16.mxu0 %v3834
        %4053 = vmatpush1.bf16.msra.mxu0 %v3833
        %4054 = vmatprep.subr.bf16.mxu0 %v3830
        %4055 = vmatpush1.bf16.msra.mxu0 %v3829
        %4056 = vmatprep.subr.bf16.mxu0 %v3826
        %4057 = vmatpush1.bf16.msra.mxu0 %v3825
        %4058 = vmatprep.subr.bf16.mxu0 %v3822
        %4059 = vmatpush1.bf16.msra.mxu0 %v3821
        %4060 = vmatprep.subr.bf16.mxu0 %v3818
        %4061 = vmatpush1.bf16.msra.mxu0 %v3817
        %4062 = vmatprep.subr.bf16.mxu0 %v3814
        %4063 = vmatpush1.bf16.msra.mxu0 %v3813
        %4064 = vmatprep.subr.bf16.mxu0 %v3810
        %4065 = vmatpush1.bf16.msra.mxu0 %v3809
        %4066 = vmatprep.subr.bf16.mxu0 0
        %4067 = vmatpush2.bf16.msra.mxu0 0
        %4068 = vmatprep.subr.bf16.mxu0 0
        %4069 = vmatpush2.bf16.msra.mxu0 0
        %4070 = vmatprep.subr.bf16.mxu0 0
        %4071 = vmatpush2.bf16.msra.mxu0 0
        %4072 = vmatprep.subr.bf16.mxu0 0
        %4073 = vmatpush2.bf16.msra.mxu0 0
        %4074 = vmatprep.subr.bf16.mxu0 0
        %4075 = vmatpush2.bf16.msra.mxu0 0
        %4076 = vmatprep.subr.bf16.mxu0 0
        %4077 = vmatpush2.bf16.msra.mxu0 0
        %4078 = vmatprep.subr.bf16.mxu0 0
        %4079 = vmatpush2.bf16.msra.mxu0 0
        %4080 = vmatprep.subr.bf16.mxu0 0
        %4081 = vmatpush2.bf16.msra.mxu0 0
        %4082 = vmatprep.mubr.bf16.mxu0 0
        %4083 = vmatmul.mubr.bf16.gmra.mxu0 %v2678
        %v4084 = vpop.f32.mrf.mxu0
        %v4085 = vadd.f32 %v3972, %v4084
        %v4086 = vpop.f32.mrf.mxu0
        %v4087 = vadd.f32 %v3974, %v4086
        %v4088 = vpop.f32.mrf.mxu0
        %v4089 = vadd.f32 %v3976, %v4088
        %v4090 = vpop.f32.mrf.mxu0
        %v4091 = vadd.f32 %v3978, %v4090
        %4092 = vmatprep.mubr.bf16.mxu0 0
        %4093 = vmatmul.mubr.bf16.gmra.mxu0 %v2681
        %v4094 = vpop.f32.mrf.mxu0
        %v4095 = vadd.f32 %v3982, %v4094
        %v4096 = vpop.f32.mrf.mxu0
        %v4097 = vadd.f32 %v3984, %v4096
        %v4098 = vpop.f32.mrf.mxu0
        %v4099 = vadd.f32 %v3986, %v4098
        %v4100 = vpop.f32.mrf.mxu0
        %v4101 = vadd.f32 %v3988, %v4100
        %4102 = vmatprep.mubr.bf16.mxu0 0
        %4103 = vmatmul.mubr.bf16.gmra.mxu0 %v2684
        %v4104 = vpop.f32.mrf.mxu0
        %v4105 = vadd.f32 %v3992, %v4104
        %v4106 = vpop.f32.mrf.mxu0
        %v4107 = vadd.f32 %v3994, %v4106
        %v4108 = vpop.f32.mrf.mxu0
        %v4109 = vadd.f32 %v3996, %v4108
        %v4110 = vpop.f32.mrf.mxu0
        %v4111 = vadd.f32 %v3998, %v4110
        %4112 = vmatprep.mubr.bf16.mxu0 0
        %4113 = vmatmul.mubr.bf16.gmra.mxu0 %v2687
        %v4114 = vpop.f32.mrf.mxu0
        %v4115 = vadd.f32 %v4002, %v4114
        %v4116 = vpop.f32.mrf.mxu0
        %v4117 = vadd.f32 %v4004, %v4116
        %v4118 = vpop.f32.mrf.mxu0
        %v4119 = vadd.f32 %v4006, %v4118
        %v4120 = vpop.f32.mrf.mxu0
        %v4121 = vadd.f32 %v4008, %v4120
        %4122 = vmatprep.mubr.bf16.mxu0 0
        %4123 = vmatmul.mubr.bf16.gmra.mxu0 %v2690
        %v4124 = vpop.f32.mrf.mxu0
        %v4125 = vadd.f32 %v4012, %v4124
        %v4126 = vpop.f32.mrf.mxu0
        %v4127 = vadd.f32 %v4014, %v4126
        %v4128 = vpop.f32.mrf.mxu0
        %v4129 = vadd.f32 %v4016, %v4128
        %v4130 = vpop.f32.mrf.mxu0
        %v4131 = vadd.f32 %v4018, %v4130
        %4132 = vmatprep.mubr.bf16.mxu0 0
        %4133 = vmatmul.mubr.bf16.gmra.mxu0 %v2693
        %v4134 = vpop.f32.mrf.mxu0
        %v4135 = vadd.f32 %v4022, %v4134
        %v4136 = vpop.f32.mrf.mxu0
        %v4137 = vadd.f32 %v4024, %v4136
        %v4138 = vpop.f32.mrf.mxu0
        %v4139 = vadd.f32 %v4026, %v4138
        %v4140 = vpop.f32.mrf.mxu0
        %v4141 = vadd.f32 %v4028, %v4140
        %4142 = vmatprep.mubr.bf16.mxu0 0
        %4143 = vmatmul.mubr.bf16.gmra.mxu0 %v2696
        %v4144 = vpop.f32.mrf.mxu0
        %v4145 = vadd.f32 %v4032, %v4144
        %v4146 = vpop.f32.mrf.mxu0
        %v4147 = vadd.f32 %v4034, %v4146
        %v4148 = vpop.f32.mrf.mxu0
        %v4149 = vadd.f32 %v4036, %v4148
        %v4150 = vpop.f32.mrf.mxu0
        %v4151 = vadd.f32 %v4038, %v4150
        %4152 = vmatprep.mubr.bf16.mxu0 0
        %4153 = vmatmul.mubr.bf16.gmra.mxu0 %v2699
        %v4154 = vpop.f32.mrf.mxu0
        %v4155 = vadd.f32 %v4042, %v4154
        %v4156 = vpop.f32.mrf.mxu0
        %v4157 = vadd.f32 %v4044, %v4156
        %v4158 = vpop.f32.mrf.mxu0
        %v4159 = vadd.f32 %v4046, %v4158
        %v4160 = vpop.f32.mrf.mxu0
        %v4161 = vadd.f32 %v4048, %v4160
        %4162 = vdwg.mxu0
        %4163 = vmatprep.subr.bf16.mxu0 %v3776
        %4164 = vmatpush1.bf16.msra.mxu0 %v3775
        %4165 = vmatprep.subr.bf16.mxu0 %v3772
        %4166 = vmatpush1.bf16.msra.mxu0 %v3771
        %4167 = vmatprep.subr.bf16.mxu0 %v3768
        %4168 = vmatpush1.bf16.msra.mxu0 %v3767
        %4169 = vmatprep.subr.bf16.mxu0 %v3764
        %4170 = vmatpush1.bf16.msra.mxu0 %v3763
        %4171 = vmatprep.subr.bf16.mxu0 %v3760
        %4172 = vmatpush1.bf16.msra.mxu0 %v3759
        %4173 = vmatprep.subr.bf16.mxu0 %v3756
        %4174 = vmatpush1.bf16.msra.mxu0 %v3755
        %4175 = vmatprep.subr.bf16.mxu0 %v3752
        %4176 = vmatpush1.bf16.msra.mxu0 %v3751
        %4177 = vmatprep.subr.bf16.mxu0 %v3748
        %4178 = vmatpush1.bf16.msra.mxu0 %v3747
        %4179 = vmatprep.subr.bf16.mxu0 %v3808
        %4180 = vmatpush2.bf16.msra.mxu0 %v3807
        %4181 = vmatprep.subr.bf16.mxu0 %v3804
        %4182 = vmatpush2.bf16.msra.mxu0 %v3803
        %4183 = vmatprep.subr.bf16.mxu0 %v3800
        %4184 = vmatpush2.bf16.msra.mxu0 %v3799
        %4185 = vmatprep.subr.bf16.mxu0 %v3796
        %4186 = vmatpush2.bf16.msra.mxu0 %v3795
        %4187 = vmatprep.subr.bf16.mxu0 %v3792
        %4188 = vmatpush2.bf16.msra.mxu0 %v3791
        %4189 = vmatprep.subr.bf16.mxu0 %v3788
        %4190 = vmatpush2.bf16.msra.mxu0 %v3787
        %4191 = vmatprep.subr.bf16.mxu0 %v3784
        %4192 = vmatpush2.bf16.msra.mxu0 %v3783
        %4193 = vmatprep.subr.bf16.mxu0 %v3780
        %4194 = vmatpush2.bf16.msra.mxu0 %v3779
        %4195 = vmatprep.mubr.bf16.mxu0 %v2677
        %4196 = vmatmul.mubr.bf16.gmra.mxu0 %v2676
        %v4197 = vpop.f32.mrf.mxu0
        %v4198 = vadd.f32 %v3448, %v4197
        %v4199 = vpop.f32.mrf.mxu0
        %v4200 = vadd.f32 %v3452, %v4199
        %v4201 = vpop.f32.mrf.mxu0
        %v4202 = vadd.f32 %v3448, %v4201
        %v4203 = vpop.f32.mrf.mxu0
        %v4204 = vadd.f32 %v3452, %v4203
        %4205 = vmatprep.mubr.bf16.mxu0 %v2680
        %4206 = vmatmul.mubr.bf16.gmra.mxu0 %v2679
        %v4207 = vpop.f32.mrf.mxu0
        %v4208 = vadd.f32 %v3448, %v4207
        %v4209 = vpop.f32.mrf.mxu0
        %v4210 = vadd.f32 %v3452, %v4209
        %v4211 = vpop.f32.mrf.mxu0
        %v4212 = vadd.f32 %v3448, %v4211
        %v4213 = vpop.f32.mrf.mxu0
        %v4214 = vadd.f32 %v3452, %v4213
        %4215 = vmatprep.mubr.bf16.mxu0 %v2683
        %4216 = vmatmul.mubr.bf16.gmra.mxu0 %v2682
        %v4217 = vpop.f32.mrf.mxu0
        %v4218 = vadd.f32 %v3448, %v4217
        %v4219 = vpop.f32.mrf.mxu0
        %v4220 = vadd.f32 %v3452, %v4219
        %v4221 = vpop.f32.mrf.mxu0
        %v4222 = vadd.f32 %v3448, %v4221
        %v4223 = vpop.f32.mrf.mxu0
        %v4224 = vadd.f32 %v3452, %v4223
        %4225 = vmatprep.mubr.bf16.mxu0 %v2686
        %4226 = vmatmul.mubr.bf16.gmra.mxu0 %v2685
        %v4227 = vpop.f32.mrf.mxu0
        %v4228 = vadd.f32 %v3448, %v4227
        %v4229 = vpop.f32.mrf.mxu0
        %v4230 = vadd.f32 %v3452, %v4229
        %v4231 = vpop.f32.mrf.mxu0
        %v4232 = vadd.f32 %v3448, %v4231
        %v4233 = vpop.f32.mrf.mxu0
        %v4234 = vadd.f32 %v3452, %v4233
        %4235 = vmatprep.mubr.bf16.mxu0 %v2689
        %4236 = vmatmul.mubr.bf16.gmra.mxu0 %v2688
        %v4237 = vpop.f32.mrf.mxu0
        %v4238 = vadd.f32 %v3448, %v4237
        %v4239 = vpop.f32.mrf.mxu0
        %v4240 = vadd.f32 %v3452, %v4239
        %v4241 = vpop.f32.mrf.mxu0
        %v4242 = vadd.f32 %v3448, %v4241
        %v4243 = vpop.f32.mrf.mxu0
        %v4244 = vadd.f32 %v3452, %v4243
        %4245 = vmatprep.mubr.bf16.mxu0 %v2692
        %4246 = vmatmul.mubr.bf16.gmra.mxu0 %v2691
        %v4247 = vpop.f32.mrf.mxu0
        %v4248 = vadd.f32 %v3448, %v4247
        %v4249 = vpop.f32.mrf.mxu0
        %v4250 = vadd.f32 %v3452, %v4249
        %v4251 = vpop.f32.mrf.mxu0
        %v4252 = vadd.f32 %v3448, %v4251
        %v4253 = vpop.f32.mrf.mxu0
        %v4254 = vadd.f32 %v3452, %v4253
        %4255 = vmatprep.mubr.bf16.mxu0 %v2695
        %4256 = vmatmul.mubr.bf16.gmra.mxu0 %v2694
        %v4257 = vpop.f32.mrf.mxu0
        %v4258 = vadd.f32 %v3448, %v4257
        %v4259 = vpop.f32.mrf.mxu0
        %v4260 = vadd.f32 %v3452, %v4259
        %v4261 = vpop.f32.mrf.mxu0
        %v4262 = vadd.f32 %v3448, %v4261
        %v4263 = vpop.f32.mrf.mxu0
        %v4264 = vadd.f32 %v3452, %v4263
        %4265 = vmatprep.mubr.bf16.mxu0 %v2698
        %4266 = vmatmul.mubr.bf16.gmra.mxu0 %v2697
        %v4267 = vpop.f32.mrf.mxu0
        %v4268 = vadd.f32 %v3448, %v4267
        %v4269 = vpop.f32.mrf.mxu0
        %v4270 = vadd.f32 %v3452, %v4269
        %v4271 = vpop.f32.mrf.mxu0
        %v4272 = vadd.f32 %v3448, %v4271
        %v4273 = vpop.f32.mrf.mxu0
        %v4274 = vadd.f32 %v3452, %v4273
        %4275 = vdwg.mxu0
        %4276 = vmatprep.subr.bf16.mxu0 %v3840
        %4277 = vmatpush1.bf16.msra.mxu0 %v3839
        %4278 = vmatprep.subr.bf16.mxu0 %v3836
        %4279 = vmatpush1.bf16.msra.mxu0 %v3835
        %4280 = vmatprep.subr.bf16.mxu0 %v3832
        %4281 = vmatpush1.bf16.msra.mxu0 %v3831
        %4282 = vmatprep.subr.bf16.mxu0 %v3828
        %4283 = vmatpush1.bf16.msra.mxu0 %v3827
        %4284 = vmatprep.subr.bf16.mxu0 %v3824
        %4285 = vmatpush1.bf16.msra.mxu0 %v3823
        %4286 = vmatprep.subr.bf16.mxu0 %v3820
        %4287 = vmatpush1.bf16.msra.mxu0 %v3819
        %4288 = vmatprep.subr.bf16.mxu0 %v3816
        %4289 = vmatpush1.bf16.msra.mxu0 %v3815
        %4290 = vmatprep.subr.bf16.mxu0 %v3812
        %4291 = vmatpush1.bf16.msra.mxu0 %v3811
        %4292 = vmatprep.subr.bf16.mxu0 0
        %4293 = vmatpush2.bf16.msra.mxu0 0
        %4294 = vmatprep.subr.bf16.mxu0 0
        %4295 = vmatpush2.bf16.msra.mxu0 0
        %4296 = vmatprep.subr.bf16.mxu0 0
        %4297 = vmatpush2.bf16.msra.mxu0 0
        %4298 = vmatprep.subr.bf16.mxu0 0
        %4299 = vmatpush2.bf16.msra.mxu0 0
        %4300 = vmatprep.subr.bf16.mxu0 0
        %4301 = vmatpush2.bf16.msra.mxu0 0
        %4302 = vmatprep.subr.bf16.mxu0 0
        %4303 = vmatpush2.bf16.msra.mxu0 0
        %4304 = vmatprep.subr.bf16.mxu0 0
        %4305 = vmatpush2.bf16.msra.mxu0 0
        %4306 = vmatprep.subr.bf16.mxu0 0
        %4307 = vmatpush2.bf16.msra.mxu0 0
        %4308 = vmatprep.mubr.bf16.mxu0 0
        %4309 = vmatmul.mubr.bf16.gmra.mxu0 %v2678
        %v4310 = vpop.f32.mrf.mxu0
        %v4311 = vadd.f32 %v4198, %v4310
        %v4312 = vpop.f32.mrf.mxu0
        %v4313 = vadd.f32 %v4200, %v4312
        %v4314 = vpop.f32.mrf.mxu0
        %v4315 = vadd.f32 %v4202, %v4314
        %v4316 = vpop.f32.mrf.mxu0
        %v4317 = vadd.f32 %v4204, %v4316
        %4318 = vmatprep.mubr.bf16.mxu0 0
        %4319 = vmatmul.mubr.bf16.gmra.mxu0 %v2681
        %v4320 = vpop.f32.mrf.mxu0
        %v4321 = vadd.f32 %v4208, %v4320
        %v4322 = vpop.f32.mrf.mxu0
        %v4323 = vadd.f32 %v4210, %v4322
        %v4324 = vpop.f32.mrf.mxu0
        %v4325 = vadd.f32 %v4212, %v4324
        %v4326 = vpop.f32.mrf.mxu0
        %v4327 = vadd.f32 %v4214, %v4326
        %4328 = vmatprep.mubr.bf16.mxu0 0
        %4329 = vmatmul.mubr.bf16.gmra.mxu0 %v2684
        %v4330 = vpop.f32.mrf.mxu0
        %v4331 = vadd.f32 %v4218, %v4330
        %v4332 = vpop.f32.mrf.mxu0
        %v4333 = vadd.f32 %v4220, %v4332
        %v4334 = vpop.f32.mrf.mxu0
        %v4335 = vadd.f32 %v4222, %v4334
        %v4336 = vpop.f32.mrf.mxu0
        %v4337 = vadd.f32 %v4224, %v4336
        %4338 = vmatprep.mubr.bf16.mxu0 0
        %4339 = vmatmul.mubr.bf16.gmra.mxu0 %v2687
        %v4340 = vpop.f32.mrf.mxu0
        %v4341 = vadd.f32 %v4228, %v4340
        %v4342 = vpop.f32.mrf.mxu0
        %v4343 = vadd.f32 %v4230, %v4342
        %v4344 = vpop.f32.mrf.mxu0
        %v4345 = vadd.f32 %v4232, %v4344
        %v4346 = vpop.f32.mrf.mxu0
        %v4347 = vadd.f32 %v4234, %v4346
        %4348 = vmatprep.mubr.bf16.mxu0 0
        %4349 = vmatmul.mubr.bf16.gmra.mxu0 %v2690
        %v4350 = vpop.f32.mrf.mxu0
        %v4351 = vadd.f32 %v4238, %v4350
        %v4352 = vpop.f32.mrf.mxu0
        %v4353 = vadd.f32 %v4240, %v4352
        %v4354 = vpop.f32.mrf.mxu0
        %v4355 = vadd.f32 %v4242, %v4354
        %v4356 = vpop.f32.mrf.mxu0
        %v4357 = vadd.f32 %v4244, %v4356
        %4358 = vmatprep.mubr.bf16.mxu0 0
        %4359 = vmatmul.mubr.bf16.gmra.mxu0 %v2693
        %v4360 = vpop.f32.mrf.mxu0
        %v4361 = vadd.f32 %v4248, %v4360
        %v4362 = vpop.f32.mrf.mxu0
        %v4363 = vadd.f32 %v4250, %v4362
        %v4364 = vpop.f32.mrf.mxu0
        %v4365 = vadd.f32 %v4252, %v4364
        %v4366 = vpop.f32.mrf.mxu0
        %v4367 = vadd.f32 %v4254, %v4366
        %4368 = vmatprep.mubr.bf16.mxu0 0
        %4369 = vmatmul.mubr.bf16.gmra.mxu0 %v2696
        %v4370 = vpop.f32.mrf.mxu0
        %v4371 = vadd.f32 %v4258, %v4370
        %v4372 = vpop.f32.mrf.mxu0
        %v4373 = vadd.f32 %v4260, %v4372
        %v4374 = vpop.f32.mrf.mxu0
        %v4375 = vadd.f32 %v4262, %v4374
        %v4376 = vpop.f32.mrf.mxu0
        %v4377 = vadd.f32 %v4264, %v4376
        %4378 = vmatprep.mubr.bf16.mxu0 0
        %4379 = vmatmul.mubr.bf16.gmra.mxu0 %v2699
        %v4380 = vpop.f32.mrf.mxu0
        %v4381 = vadd.f32 %v4268, %v4380
        %v4382 = vpop.f32.mrf.mxu0
        %v4383 = vadd.f32 %v4270, %v4382
        %v4384 = vpop.f32.mrf.mxu0
        %v4385 = vadd.f32 %v4272, %v4384
        %v4386 = vpop.f32.mrf.mxu0
        %v4387 = vadd.f32 %v4274, %v4386
        %4388 = vdwg.mxu0
        %v4389 = vmul.f32 %v4085, 0.5
        %v4390 = vmul.f32 %v4087, 0.5
        %v4391 = vmul.f32 %v4311, 0.5
        %v4392 = vmul.f32 %v4313, 0.5
        %v4393 = vmul.f32 %v4089, 0.5
        %v4394 = vmul.f32 %v4091, 0.5
        %v4395 = vmul.f32 %v4315, 0.5
        %v4396 = vmul.f32 %v4317, 0.5
        %v4397 = vmul.f32 %v4095, 0.5
        %v4398 = vmul.f32 %v4097, 0.5
        %v4399 = vmul.f32 %v4321, 0.5
        %v4400 = vmul.f32 %v4323, 0.5
        %v4401 = vmul.f32 %v4099, 0.5
        %v4402 = vmul.f32 %v4101, 0.5
        %v4403 = vmul.f32 %v4325, 0.5
        %v4404 = vmul.f32 %v4327, 0.5
        %v4405 = vmul.f32 %v4105, 0.5
        %v4406 = vmul.f32 %v4107, 0.5
        %v4407 = vmul.f32 %v4331, 0.5
        %v4408 = vmul.f32 %v4333, 0.5
        %v4409 = vmul.f32 %v4109, 0.5
        %v4410 = vmul.f32 %v4111, 0.5
        %v4411 = vmul.f32 %v4335, 0.5
        %v4412 = vmul.f32 %v4337, 0.5
        %v4413 = vmul.f32 %v4115, 0.5
        %v4414 = vmul.f32 %v4117, 0.5
        %v4415 = vmul.f32 %v4341, 0.5
        %v4416 = vmul.f32 %v4343, 0.5
        %v4417 = vmul.f32 %v4119, 0.5
        %v4418 = vmul.f32 %v4121, 0.5
        %v4419 = vmul.f32 %v4345, 0.5
        %v4420 = vmul.f32 %v4347, 0.5
        %v4421 = vmul.f32 %v4125, 0.5
        %v4422 = vmul.f32 %v4127, 0.5
        %v4423 = vmul.f32 %v4351, 0.5
        %v4424 = vmul.f32 %v4353, 0.5
        %v4425 = vmul.f32 %v4129, 0.5
        %v4426 = vmul.f32 %v4131, 0.5
        %v4427 = vmul.f32 %v4355, 0.5
        %v4428 = vmul.f32 %v4357, 0.5
        %v4429 = vmul.f32 %v4135, 0.5
        %v4430 = vmul.f32 %v4137, 0.5
        %v4431 = vmul.f32 %v4361, 0.5
        %v4432 = vmul.f32 %v4363, 0.5
        %v4433 = vmul.f32 %v4139, 0.5
        %v4434 = vmul.f32 %v4141, 0.5
        %v4435 = vmul.f32 %v4365, 0.5
        %v4436 = vmul.f32 %v4367, 0.5
        %v4437 = vmul.f32 %v4145, 0.5
        %v4438 = vmul.f32 %v4147, 0.5
        %v4439 = vmul.f32 %v4371, 0.5
        %v4440 = vmul.f32 %v4373, 0.5
        %v4441 = vmul.f32 %v4149, 0.5
        %v4442 = vmul.f32 %v4151, 0.5
        %v4443 = vmul.f32 %v4375, 0.5
        %v4444 = vmul.f32 %v4377, 0.5
        %v4445 = vmul.f32 %v4155, 0.5
        %v4446 = vmul.f32 %v4157, 0.5
        %v4447 = vmul.f32 %v4381, 0.5
        %v4448 = vmul.f32 %v4383, 0.5
        %v4449 = vmul.f32 %v4159, 0.5
        %v4450 = vmul.f32 %v4161, 0.5
        %v4451 = vmul.f32 %v4385, 0.5
        %v4452 = vmul.f32 %v4387, 0.5
        %v4453 = vtanh.pop %v4389
        %v4454 = vtanh.pop %v4390
        %v4455 = vtanh.pop %v4391
        %v4456 = vtanh.pop %v4392
        %v4457 = vtanh.pop %v4393
        %v4458 = vtanh.pop %v4394
        %v4459 = vtanh.pop %v4395
        %v4460 = vtanh.pop %v4396
        %v4461 = vtanh.pop %v4397
        %v4462 = vtanh.pop %v4398
        %v4463 = vtanh.pop %v4399
        %v4464 = vtanh.pop %v4400
        %v4465 = vtanh.pop %v4401
        %v4466 = vtanh.pop %v4402
        %v4467 = vtanh.pop %v4403
        %v4468 = vtanh.pop %v4404
        %v4469 = vtanh.pop %v4405
        %v4470 = vtanh.pop %v4406
        %v4471 = vtanh.pop %v4407
        %v4472 = vtanh.pop %v4408
        %v4473 = vtanh.pop %v4409
        %v4474 = vtanh.pop %v4410
        %v4475 = vtanh.pop %v4411
        %v4476 = vtanh.pop %v4412
        %v4477 = vtanh.pop %v4413
        %v4478 = vtanh.pop %v4414
        %v4479 = vtanh.pop %v4415
        %v4480 = vtanh.pop %v4416
        %v4481 = vtanh.pop %v4417
        %v4482 = vtanh.pop %v4418
        %v4483 = vtanh.pop %v4419
        %v4484 = vtanh.pop %v4420
        %v4485 = vtanh.pop %v4421
        %v4486 = vtanh.pop %v4422
        %v4487 = vtanh.pop %v4423
        %v4488 = vtanh.pop %v4424
        %v4489 = vtanh.pop %v4425
        %v4490 = vtanh.pop %v4426
        %v4491 = vtanh.pop %v4427
        %v4492 = vtanh.pop %v4428
        %v4493 = vtanh.pop %v4429
        %v4494 = vtanh.pop %v4430
        %v4495 = vtanh.pop %v4431
        %v4496 = vtanh.pop %v4432
        %v4497 = vtanh.pop %v4433
        %v4498 = vtanh.pop %v4434
        %v4499 = vtanh.pop %v4435
        %v4500 = vtanh.pop %v4436
        %v4501 = vtanh.pop %v4437
        %v4502 = vtanh.pop %v4438
        %v4503 = vtanh.pop %v4439
        %v4504 = vtanh.pop %v4440
        %v4505 = vtanh.pop %v4441
        %v4506 = vtanh.pop %v4442
        %v4507 = vtanh.pop %v4443
        %v4508 = vtanh.pop %v4444
        %v4509 = vtanh.pop %v4445
        %v4510 = vtanh.pop %v4446
        %v4511 = vtanh.pop %v4447
        %v4512 = vtanh.pop %v4448
        %v4513 = vtanh.pop %v4449
        %v4514 = vtanh.pop %v4450
        %v4515 = vtanh.pop %v4451
        %v4516 = vtanh.pop %v4452
        %v4517 = vmul.f32 %v4453, 0.5
        %v4518 = vmul.f32 %v4454, 0.5
        %v4519 = vmul.f32 %v4455, 0.5
        %v4520 = vmul.f32 %v4456, 0.5
        %v4521 = vmul.f32 %v4457, 0.5
        %v4522 = vmul.f32 %v4458, 0.5
        %v4523 = vmul.f32 %v4459, 0.5
        %v4524 = vmul.f32 %v4460, 0.5
        %v4525 = vmul.f32 %v4461, 0.5
        %v4526 = vmul.f32 %v4462, 0.5
        %v4527 = vmul.f32 %v4463, 0.5
        %v4528 = vmul.f32 %v4464, 0.5
        %v4529 = vmul.f32 %v4465, 0.5
        %v4530 = vmul.f32 %v4466, 0.5
        %v4531 = vmul.f32 %v4467, 0.5
        %v4532 = vmul.f32 %v4468, 0.5
        %v4533 = vmul.f32 %v4469, 0.5
        %v4534 = vmul.f32 %v4470, 0.5
        %v4535 = vmul.f32 %v4471, 0.5
        %v4536 = vmul.f32 %v4472, 0.5
        %v4537 = vmul.f32 %v4473, 0.5
        %v4538 = vmul.f32 %v4474, 0.5
        %v4539 = vmul.f32 %v4475, 0.5
        %v4540 = vmul.f32 %v4476, 0.5
        %v4541 = vmul.f32 %v4477, 0.5
        %v4542 = vmul.f32 %v4478, 0.5
        %v4543 = vmul.f32 %v4479, 0.5
        %v4544 = vmul.f32 %v4480, 0.5
        %v4545 = vmul.f32 %v4481, 0.5
        %v4546 = vmul.f32 %v4482, 0.5
        %v4547 = vmul.f32 %v4483, 0.5
        %v4548 = vmul.f32 %v4484, 0.5
        %v4549 = vmul.f32 %v4485, 0.5
        %v4550 = vmul.f32 %v4486, 0.5
        %v4551 = vmul.f32 %v4487, 0.5
        %v4552 = vmul.f32 %v4488, 0.5
        %v4553 = vmul.f32 %v4489, 0.5
        %v4554 = vmul.f32 %v4490, 0.5
        %v4555 = vmul.f32 %v4491, 0.5
        %v4556 = vmul.f32 %v4492, 0.5
        %v4557 = vmul.f32 %v4493, 0.5
        %v4558 = vmul.f32 %v4494, 0.5
        %v4559 = vmul.f32 %v4495, 0.5
        %v4560 = vmul.f32 %v4496, 0.5
        %v4561 = vmul.f32 %v4497, 0.5
        %v4562 = vmul.f32 %v4498, 0.5
        %v4563 = vmul.f32 %v4499, 0.5
        %v4564 = vmul.f32 %v4500, 0.5
        %v4565 = vmul.f32 %v4501, 0.5
        %v4566 = vmul.f32 %v4502, 0.5
        %v4567 = vmul.f32 %v4503, 0.5
        %v4568 = vmul.f32 %v4504, 0.5
        %v4569 = vmul.f32 %v4505, 0.5
        %v4570 = vmul.f32 %v4506, 0.5
        %v4571 = vmul.f32 %v4507, 0.5
        %v4572 = vmul.f32 %v4508, 0.5
        %v4573 = vmul.f32 %v4509, 0.5
        %v4574 = vmul.f32 %v4510, 0.5
        %v4575 = vmul.f32 %v4511, 0.5
        %v4576 = vmul.f32 %v4512, 0.5
        %v4577 = vmul.f32 %v4513, 0.5
        %v4578 = vmul.f32 %v4514, 0.5
        %v4579 = vmul.f32 %v4515, 0.5
        %v4580 = vmul.f32 %v4516, 0.5
        %v4581 = vadd.f32 %v4517, 0.5
        %v4582 = vadd.f32 %v4518, 0.5
        %v4583 = vadd.f32 %v4519, 0.5
        %v4584 = vadd.f32 %v4520, 0.5
        %v4585 = vadd.f32 %v4521, 0.5
        %v4586 = vadd.f32 %v4522, 0.5
        %v4587 = vadd.f32 %v4523, 0.5
        %v4588 = vadd.f32 %v4524, 0.5
        %v4589 = vadd.f32 %v4525, 0.5
        %v4590 = vadd.f32 %v4526, 0.5
        %v4591 = vadd.f32 %v4527, 0.5
        %v4592 = vadd.f32 %v4528, 0.5
        %v4593 = vadd.f32 %v4529, 0.5
        %v4594 = vadd.f32 %v4530, 0.5
        %v4595 = vadd.f32 %v4531, 0.5
        %v4596 = vadd.f32 %v4532, 0.5
        %v4597 = vadd.f32 %v4533, 0.5
        %v4598 = vadd.f32 %v4534, 0.5
        %v4599 = vadd.f32 %v4535, 0.5
        %v4600 = vadd.f32 %v4536, 0.5
        %v4601 = vadd.f32 %v4537, 0.5
        %v4602 = vadd.f32 %v4538, 0.5
        %v4603 = vadd.f32 %v4539, 0.5
        %v4604 = vadd.f32 %v4540, 0.5
        %v4605 = vadd.f32 %v4541, 0.5
        %v4606 = vadd.f32 %v4542, 0.5
        %v4607 = vadd.f32 %v4543, 0.5
        %v4608 = vadd.f32 %v4544, 0.5
        %v4609 = vadd.f32 %v4545, 0.5
        %v4610 = vadd.f32 %v4546, 0.5
        %v4611 = vadd.f32 %v4547, 0.5
        %v4612 = vadd.f32 %v4548, 0.5
        %v4613 = vadd.f32 %v4549, 0.5
        %v4614 = vadd.f32 %v4550, 0.5
        %v4615 = vadd.f32 %v4551, 0.5
        %v4616 = vadd.f32 %v4552, 0.5
        %v4617 = vadd.f32 %v4553, 0.5
        %v4618 = vadd.f32 %v4554, 0.5
        %v4619 = vadd.f32 %v4555, 0.5
        %v4620 = vadd.f32 %v4556, 0.5
        %v4621 = vadd.f32 %v4557, 0.5
        %v4622 = vadd.f32 %v4558, 0.5
        %v4623 = vadd.f32 %v4559, 0.5
        %v4624 = vadd.f32 %v4560, 0.5
        %v4625 = vadd.f32 %v4561, 0.5
        %v4626 = vadd.f32 %v4562, 0.5
        %v4627 = vadd.f32 %v4563, 0.5
        %v4628 = vadd.f32 %v4564, 0.5
        %v4629 = vadd.f32 %v4565, 0.5
        %v4630 = vadd.f32 %v4566, 0.5
        %v4631 = vadd.f32 %v4567, 0.5
        %v4632 = vadd.f32 %v4568, 0.5
        %v4633 = vadd.f32 %v4569, 0.5
        %v4634 = vadd.f32 %v4570, 0.5
        %v4635 = vadd.f32 %v4571, 0.5
        %v4636 = vadd.f32 %v4572, 0.5
        %v4637 = vadd.f32 %v4573, 0.5
        %v4638 = vadd.f32 %v4574, 0.5
        %v4639 = vadd.f32 %v4575, 0.5
        %v4640 = vadd.f32 %v4576, 0.5
        %v4641 = vadd.f32 %v4577, 0.5
        %v4642 = vadd.f32 %v4578, 0.5
        %v4643 = vadd.f32 %v4579, 0.5
        %v4644 = vadd.f32 %v4580, 0.5
        %v4645 = vpack.c.bf16 %v4585, %v4581
        %v4646 = vpack.c.bf16 %v4586, %v4582
        %v4647 = vpack.c.bf16 %v4587, %v4583
        %v4648 = vpack.c.bf16 %v4588, %v4584
        %v4649 = vpack.c.bf16 %v4593, %v4589
        %v4650 = vpack.c.bf16 %v4594, %v4590
        %v4651 = vpack.c.bf16 %v4595, %v4591
        %v4652 = vpack.c.bf16 %v4596, %v4592
        %v4653 = vpack.c.bf16 %v4601, %v4597
        %v4654 = vpack.c.bf16 %v4602, %v4598
        %v4655 = vpack.c.bf16 %v4603, %v4599
        %v4656 = vpack.c.bf16 %v4604, %v4600
        %v4657 = vpack.c.bf16 %v4609, %v4605
        %v4658 = vpack.c.bf16 %v4610, %v4606
        %v4659 = vpack.c.bf16 %v4611, %v4607
        %v4660 = vpack.c.bf16 %v4612, %v4608
        %v4661 = vpack.c.bf16 %v4617, %v4613
        %v4662 = vpack.c.bf16 %v4618, %v4614
        %v4663 = vpack.c.bf16 %v4619, %v4615
        %v4664 = vpack.c.bf16 %v4620, %v4616
        %v4665 = vpack.c.bf16 %v4625, %v4621
        %v4666 = vpack.c.bf16 %v4626, %v4622
        %v4667 = vpack.c.bf16 %v4627, %v4623
        %v4668 = vpack.c.bf16 %v4628, %v4624
        %v4669 = vpack.c.bf16 %v4633, %v4629
        %v4670 = vpack.c.bf16 %v4634, %v4630
        %v4671 = vpack.c.bf16 %v4635, %v4631
        %v4672 = vpack.c.bf16 %v4636, %v4632
        %v4673 = vpack.c.bf16 %v4641, %v4637
        %v4674 = vpack.c.bf16 %v4642, %v4638
        %v4675 = vpack.c.bf16 %v4643, %v4639
        %v4676 = vpack.c.bf16 %v4644, %v4640
        %4677 = vmatprep.subr.bf16.mxu0 %v3774
        %4678 = vmatpush1.bf16.msra.mxu0 %v3773
        %4679 = vmatprep.subr.bf16.mxu0 %v3770
        %4680 = vmatpush1.bf16.msra.mxu0 %v3769
        %4681 = vmatprep.subr.bf16.mxu0 %v3766
        %4682 = vmatpush1.bf16.msra.mxu0 %v3765
        %4683 = vmatprep.subr.bf16.mxu0 %v3762
        %4684 = vmatpush1.bf16.msra.mxu0 %v3761
        %4685 = vmatprep.subr.bf16.mxu0 %v3758
        %4686 = vmatpush1.bf16.msra.mxu0 %v3757
        %4687 = vmatprep.subr.bf16.mxu0 %v3754
        %4688 = vmatpush1.bf16.msra.mxu0 %v3753
        %4689 = vmatprep.subr.bf16.mxu0 %v3750
        %4690 = vmatpush1.bf16.msra.mxu0 %v3749
        %4691 = vmatprep.subr.bf16.mxu0 %v3746
        %4692 = vmatpush1.bf16.msra.mxu0 %v3745
        %4693 = vmatprep.subr.bf16.mxu0 %v3806
        %4694 = vmatpush2.bf16.msra.mxu0 %v3805
        %4695 = vmatprep.subr.bf16.mxu0 %v3802
        %4696 = vmatpush2.bf16.msra.mxu0 %v3801
        %4697 = vmatprep.subr.bf16.mxu0 %v3798
        %4698 = vmatpush2.bf16.msra.mxu0 %v3797
        %4699 = vmatprep.subr.bf16.mxu0 %v3794
        %4700 = vmatpush2.bf16.msra.mxu0 %v3793
        %4701 = vmatprep.subr.bf16.mxu0 %v3790
        %4702 = vmatpush2.bf16.msra.mxu0 %v3789
        %4703 = vmatprep.subr.bf16.mxu0 %v3786
        %4704 = vmatpush2.bf16.msra.mxu0 %v3785
        %4705 = vmatprep.subr.bf16.mxu0 %v3782
        %4706 = vmatpush2.bf16.msra.mxu0 %v3781
        %4707 = vmatprep.subr.bf16.mxu0 %v3778
        %4708 = vmatpush2.bf16.msra.mxu0 %v3777
        %4709 = vmatprep.mubr.bf16.mxu0 %v3313
        %4710 = vmatmul.mubr.bf16.gmra.mxu0 %v3312
        %v4711 = vpop.f32.mrf.mxu0
        %v4712 = vadd.f32 %v3440, %v4711
        %v4713 = vpop.f32.mrf.mxu0
        %v4714 = vadd.f32 %v3444, %v4713
        %v4715 = vpop.f32.mrf.mxu0
        %v4716 = vadd.f32 %v3440, %v4715
        %v4717 = vpop.f32.mrf.mxu0
        %v4718 = vadd.f32 %v3444, %v4717
        %4719 = vmatprep.mubr.bf16.mxu0 %v3316
        %4720 = vmatmul.mubr.bf16.gmra.mxu0 %v3315
        %v4721 = vpop.f32.mrf.mxu0
        %v4722 = vadd.f32 %v3440, %v4721
        %v4723 = vpop.f32.mrf.mxu0
        %v4724 = vadd.f32 %v3444, %v4723
        %v4725 = vpop.f32.mrf.mxu0
        %v4726 = vadd.f32 %v3440, %v4725
        %v4727 = vpop.f32.mrf.mxu0
        %v4728 = vadd.f32 %v3444, %v4727
        %4729 = vmatprep.mubr.bf16.mxu0 %v3319
        %4730 = vmatmul.mubr.bf16.gmra.mxu0 %v3318
        %v4731 = vpop.f32.mrf.mxu0
        %v4732 = vadd.f32 %v3440, %v4731
        %v4733 = vpop.f32.mrf.mxu0
        %v4734 = vadd.f32 %v3444, %v4733
        %v4735 = vpop.f32.mrf.mxu0
        %v4736 = vadd.f32 %v3440, %v4735
        %v4737 = vpop.f32.mrf.mxu0
        %v4738 = vadd.f32 %v3444, %v4737
        %4739 = vmatprep.mubr.bf16.mxu0 %v3322
        %4740 = vmatmul.mubr.bf16.gmra.mxu0 %v3321
        %v4741 = vpop.f32.mrf.mxu0
        %v4742 = vadd.f32 %v3440, %v4741
        %v4743 = vpop.f32.mrf.mxu0
        %v4744 = vadd.f32 %v3444, %v4743
        %v4745 = vpop.f32.mrf.mxu0
        %v4746 = vadd.f32 %v3440, %v4745
        %v4747 = vpop.f32.mrf.mxu0
        %v4748 = vadd.f32 %v3444, %v4747
        %4749 = vmatprep.mubr.bf16.mxu0 %v3325
        %4750 = vmatmul.mubr.bf16.gmra.mxu0 %v3324
        %v4751 = vpop.f32.mrf.mxu0
        %v4752 = vadd.f32 %v3440, %v4751
        %v4753 = vpop.f32.mrf.mxu0
        %v4754 = vadd.f32 %v3444, %v4753
        %v4755 = vpop.f32.mrf.mxu0
        %v4756 = vadd.f32 %v3440, %v4755
        %v4757 = vpop.f32.mrf.mxu0
        %v4758 = vadd.f32 %v3444, %v4757
        %4759 = vmatprep.mubr.bf16.mxu0 %v3328
        %4760 = vmatmul.mubr.bf16.gmra.mxu0 %v3327
        %v4761 = vpop.f32.mrf.mxu0
        %v4762 = vadd.f32 %v3440, %v4761
        %v4763 = vpop.f32.mrf.mxu0
        %v4764 = vadd.f32 %v3444, %v4763
        %v4765 = vpop.f32.mrf.mxu0
        %v4766 = vadd.f32 %v3440, %v4765
        %v4767 = vpop.f32.mrf.mxu0
        %v4768 = vadd.f32 %v3444, %v4767
        %4769 = vmatprep.mubr.bf16.mxu0 %v3331
        %4770 = vmatmul.mubr.bf16.gmra.mxu0 %v3330
        %v4771 = vpop.f32.mrf.mxu0
        %v4772 = vadd.f32 %v3440, %v4771
        %v4773 = vpop.f32.mrf.mxu0
        %v4774 = vadd.f32 %v3444, %v4773
        %v4775 = vpop.f32.mrf.mxu0
        %v4776 = vadd.f32 %v3440, %v4775
        %v4777 = vpop.f32.mrf.mxu0
        %v4778 = vadd.f32 %v3444, %v4777
        %4779 = vmatprep.mubr.bf16.mxu0 %v3334
        %4780 = vmatmul.mubr.bf16.gmra.mxu0 %v3333
        %v4781 = vpop.f32.mrf.mxu0
        %v4782 = vadd.f32 %v3440, %v4781
        %v4783 = vpop.f32.mrf.mxu0
        %v4784 = vadd.f32 %v3444, %v4783
        %v4785 = vpop.f32.mrf.mxu0
        %v4786 = vadd.f32 %v3440, %v4785
        %v4787 = vpop.f32.mrf.mxu0
        %v4788 = vadd.f32 %v3444, %v4787
        %4789 = vdwg.mxu0
        %4790 = vmatprep.subr.bf16.mxu0 %v3838
        %4791 = vmatpush1.bf16.msra.mxu0 %v3837
        %4792 = vmatprep.subr.bf16.mxu0 %v3834
        %4793 = vmatpush1.bf16.msra.mxu0 %v3833
        %4794 = vmatprep.subr.bf16.mxu0 %v3830
        %4795 = vmatpush1.bf16.msra.mxu0 %v3829
        %4796 = vmatprep.subr.bf16.mxu0 %v3826
        %4797 = vmatpush1.bf16.msra.mxu0 %v3825
        %4798 = vmatprep.subr.bf16.mxu0 %v3822
        %4799 = vmatpush1.bf16.msra.mxu0 %v3821
        %4800 = vmatprep.subr.bf16.mxu0 %v3818
        %4801 = vmatpush1.bf16.msra.mxu0 %v3817
        %4802 = vmatprep.subr.bf16.mxu0 %v3814
        %4803 = vmatpush1.bf16.msra.mxu0 %v3813
        %4804 = vmatprep.subr.bf16.mxu0 %v3810
        %4805 = vmatpush1.bf16.msra.mxu0 %v3809
        %4806 = vmatprep.subr.bf16.mxu0 0
        %4807 = vmatpush2.bf16.msra.mxu0 0
        %4808 = vmatprep.subr.bf16.mxu0 0
        %4809 = vmatpush2.bf16.msra.mxu0 0
        %4810 = vmatprep.subr.bf16.mxu0 0
        %4811 = vmatpush2.bf16.msra.mxu0 0
        %4812 = vmatprep.subr.bf16.mxu0 0
        %4813 = vmatpush2.bf16.msra.mxu0 0
        %4814 = vmatprep.subr.bf16.mxu0 0
        %4815 = vmatpush2.bf16.msra.mxu0 0
        %4816 = vmatprep.subr.bf16.mxu0 0
        %4817 = vmatpush2.bf16.msra.mxu0 0
        %4818 = vmatprep.subr.bf16.mxu0 0
        %4819 = vmatpush2.bf16.msra.mxu0 0
        %4820 = vmatprep.subr.bf16.mxu0 0
        %4821 = vmatpush2.bf16.msra.mxu0 0
        %4822 = vmatprep.mubr.bf16.mxu0 0
        %4823 = vmatmul.mubr.bf16.gmra.mxu0 %v3314
        %v4824 = vpop.f32.mrf.mxu0
        %v4825 = vadd.f32 %v4712, %v4824
        %v4826 = vpop.f32.mrf.mxu0
        %v4827 = vadd.f32 %v4714, %v4826
        %v4828 = vpop.f32.mrf.mxu0
        %v4829 = vadd.f32 %v4716, %v4828
        %v4830 = vpop.f32.mrf.mxu0
        %v4831 = vadd.f32 %v4718, %v4830
        %4832 = vmatprep.mubr.bf16.mxu0 0
        %4833 = vmatmul.mubr.bf16.gmra.mxu0 %v3317
        %v4834 = vpop.f32.mrf.mxu0
        %v4835 = vadd.f32 %v4722, %v4834
        %v4836 = vpop.f32.mrf.mxu0
        %v4837 = vadd.f32 %v4724, %v4836
        %v4838 = vpop.f32.mrf.mxu0
        %v4839 = vadd.f32 %v4726, %v4838
        %v4840 = vpop.f32.mrf.mxu0
        %v4841 = vadd.f32 %v4728, %v4840
        %4842 = vmatprep.mubr.bf16.mxu0 0
        %4843 = vmatmul.mubr.bf16.gmra.mxu0 %v3320
        %v4844 = vpop.f32.mrf.mxu0
        %v4845 = vadd.f32 %v4732, %v4844
        %v4846 = vpop.f32.mrf.mxu0
        %v4847 = vadd.f32 %v4734, %v4846
        %v4848 = vpop.f32.mrf.mxu0
        %v4849 = vadd.f32 %v4736, %v4848
        %v4850 = vpop.f32.mrf.mxu0
        %v4851 = vadd.f32 %v4738, %v4850
        %4852 = vmatprep.mubr.bf16.mxu0 0
        %4853 = vmatmul.mubr.bf16.gmra.mxu0 %v3323
        %v4854 = vpop.f32.mrf.mxu0
        %v4855 = vadd.f32 %v4742, %v4854
        %v4856 = vpop.f32.mrf.mxu0
        %v4857 = vadd.f32 %v4744, %v4856
        %v4858 = vpop.f32.mrf.mxu0
        %v4859 = vadd.f32 %v4746, %v4858
        %v4860 = vpop.f32.mrf.mxu0
        %v4861 = vadd.f32 %v4748, %v4860
        %4862 = vmatprep.mubr.bf16.mxu0 0
        %4863 = vmatmul.mubr.bf16.gmra.mxu0 %v3326
        %v4864 = vpop.f32.mrf.mxu0
        %v4865 = vadd.f32 %v4752, %v4864
        %v4866 = vpop.f32.mrf.mxu0
        %v4867 = vadd.f32 %v4754, %v4866
        %v4868 = vpop.f32.mrf.mxu0
        %v4869 = vadd.f32 %v4756, %v4868
        %v4870 = vpop.f32.mrf.mxu0
        %v4871 = vadd.f32 %v4758, %v4870
        %4872 = vmatprep.mubr.bf16.mxu0 0
        %4873 = vmatmul.mubr.bf16.gmra.mxu0 %v3329
        %v4874 = vpop.f32.mrf.mxu0
        %v4875 = vadd.f32 %v4762, %v4874
        %v4876 = vpop.f32.mrf.mxu0
        %v4877 = vadd.f32 %v4764, %v4876
        %v4878 = vpop.f32.mrf.mxu0
        %v4879 = vadd.f32 %v4766, %v4878
        %v4880 = vpop.f32.mrf.mxu0
        %v4881 = vadd.f32 %v4768, %v4880
        %4882 = vmatprep.mubr.bf16.mxu0 0
        %4883 = vmatmul.mubr.bf16.gmra.mxu0 %v3332
        %v4884 = vpop.f32.mrf.mxu0
        %v4885 = vadd.f32 %v4772, %v4884
        %v4886 = vpop.f32.mrf.mxu0
        %v4887 = vadd.f32 %v4774, %v4886
        %v4888 = vpop.f32.mrf.mxu0
        %v4889 = vadd.f32 %v4776, %v4888
        %v4890 = vpop.f32.mrf.mxu0
        %v4891 = vadd.f32 %v4778, %v4890
        %4892 = vmatprep.mubr.bf16.mxu0 0
        %4893 = vmatmul.mubr.bf16.gmra.mxu0 %v3335
        %v4894 = vpop.f32.mrf.mxu0
        %v4895 = vadd.f32 %v4782, %v4894
        %v4896 = vpop.f32.mrf.mxu0
        %v4897 = vadd.f32 %v4784, %v4896
        %v4898 = vpop.f32.mrf.mxu0
        %v4899 = vadd.f32 %v4786, %v4898
        %v4900 = vpop.f32.mrf.mxu0
        %v4901 = vadd.f32 %v4788, %v4900
        %4902 = vdwg.mxu0
        %4903 = vmatprep.subr.bf16.mxu0 %v3776
        %4904 = vmatpush1.bf16.msra.mxu0 %v3775
        %4905 = vmatprep.subr.bf16.mxu0 %v3772
        %4906 = vmatpush1.bf16.msra.mxu0 %v3771
        %4907 = vmatprep.subr.bf16.mxu0 %v3768
        %4908 = vmatpush1.bf16.msra.mxu0 %v3767
        %4909 = vmatprep.subr.bf16.mxu0 %v3764
        %4910 = vmatpush1.bf16.msra.mxu0 %v3763
        %4911 = vmatprep.subr.bf16.mxu0 %v3760
        %4912 = vmatpush1.bf16.msra.mxu0 %v3759
        %4913 = vmatprep.subr.bf16.mxu0 %v3756
        %4914 = vmatpush1.bf16.msra.mxu0 %v3755
        %4915 = vmatprep.subr.bf16.mxu0 %v3752
        %4916 = vmatpush1.bf16.msra.mxu0 %v3751
        %4917 = vmatprep.subr.bf16.mxu0 %v3748
        %4918 = vmatpush1.bf16.msra.mxu0 %v3747
        %4919 = vmatprep.subr.bf16.mxu0 %v3808
        %4920 = vmatpush2.bf16.msra.mxu0 %v3807
        %4921 = vmatprep.subr.bf16.mxu0 %v3804
        %4922 = vmatpush2.bf16.msra.mxu0 %v3803
        %4923 = vmatprep.subr.bf16.mxu0 %v3800
        %4924 = vmatpush2.bf16.msra.mxu0 %v3799
        %4925 = vmatprep.subr.bf16.mxu0 %v3796
        %4926 = vmatpush2.bf16.msra.mxu0 %v3795
        %4927 = vmatprep.subr.bf16.mxu0 %v3792
        %4928 = vmatpush2.bf16.msra.mxu0 %v3791
        %4929 = vmatprep.subr.bf16.mxu0 %v3788
        %4930 = vmatpush2.bf16.msra.mxu0 %v3787
        %4931 = vmatprep.subr.bf16.mxu0 %v3784
        %4932 = vmatpush2.bf16.msra.mxu0 %v3783
        %4933 = vmatprep.subr.bf16.mxu0 %v3780
        %4934 = vmatpush2.bf16.msra.mxu0 %v3779
        %4935 = vmatprep.mubr.bf16.mxu0 %v3313
        %4936 = vmatmul.mubr.bf16.gmra.mxu0 %v3312
        %v4937 = vpop.f32.mrf.mxu0
        %v4938 = vadd.f32 %v3448, %v4937
        %v4939 = vpop.f32.mrf.mxu0
        %v4940 = vadd.f32 %v3452, %v4939
        %v4941 = vpop.f32.mrf.mxu0
        %v4942 = vadd.f32 %v3448, %v4941
        %v4943 = vpop.f32.mrf.mxu0
        %v4944 = vadd.f32 %v3452, %v4943
        %4945 = vmatprep.mubr.bf16.mxu0 %v3316
        %4946 = vmatmul.mubr.bf16.gmra.mxu0 %v3315
        %v4947 = vpop.f32.mrf.mxu0
        %v4948 = vadd.f32 %v3448, %v4947
        %v4949 = vpop.f32.mrf.mxu0
        %v4950 = vadd.f32 %v3452, %v4949
        %v4951 = vpop.f32.mrf.mxu0
        %v4952 = vadd.f32 %v3448, %v4951
        %v4953 = vpop.f32.mrf.mxu0
        %v4954 = vadd.f32 %v3452, %v4953
        %4955 = vmatprep.mubr.bf16.mxu0 %v3319
        %4956 = vmatmul.mubr.bf16.gmra.mxu0 %v3318
        %v4957 = vpop.f32.mrf.mxu0
        %v4958 = vadd.f32 %v3448, %v4957
        %v4959 = vpop.f32.mrf.mxu0
        %v4960 = vadd.f32 %v3452, %v4959
        %v4961 = vpop.f32.mrf.mxu0
        %v4962 = vadd.f32 %v3448, %v4961
        %v4963 = vpop.f32.mrf.mxu0
        %v4964 = vadd.f32 %v3452, %v4963
        %4965 = vmatprep.mubr.bf16.mxu0 %v3322
        %4966 = vmatmul.mubr.bf16.gmra.mxu0 %v3321
        %v4967 = vpop.f32.mrf.mxu0
        %v4968 = vadd.f32 %v3448, %v4967
        %v4969 = vpop.f32.mrf.mxu0
        %v4970 = vadd.f32 %v3452, %v4969
        %v4971 = vpop.f32.mrf.mxu0
        %v4972 = vadd.f32 %v3448, %v4971
        %v4973 = vpop.f32.mrf.mxu0
        %v4974 = vadd.f32 %v3452, %v4973
        %4975 = vmatprep.mubr.bf16.mxu0 %v3325
        %4976 = vmatmul.mubr.bf16.gmra.mxu0 %v3324
        %v4977 = vpop.f32.mrf.mxu0
        %v4978 = vadd.f32 %v3448, %v4977
        %v4979 = vpop.f32.mrf.mxu0
        %v4980 = vadd.f32 %v3452, %v4979
        %v4981 = vpop.f32.mrf.mxu0
        %v4982 = vadd.f32 %v3448, %v4981
        %v4983 = vpop.f32.mrf.mxu0
        %v4984 = vadd.f32 %v3452, %v4983
        %4985 = vmatprep.mubr.bf16.mxu0 %v3328
        %4986 = vmatmul.mubr.bf16.gmra.mxu0 %v3327
        %v4987 = vpop.f32.mrf.mxu0
        %v4988 = vadd.f32 %v3448, %v4987
        %v4989 = vpop.f32.mrf.mxu0
        %v4990 = vadd.f32 %v3452, %v4989
        %v4991 = vpop.f32.mrf.mxu0
        %v4992 = vadd.f32 %v3448, %v4991
        %v4993 = vpop.f32.mrf.mxu0
        %v4994 = vadd.f32 %v3452, %v4993
        %4995 = vmatprep.mubr.bf16.mxu0 %v3331
        %4996 = vmatmul.mubr.bf16.gmra.mxu0 %v3330
        %v4997 = vpop.f32.mrf.mxu0
        %v4998 = vadd.f32 %v3448, %v4997
        %v4999 = vpop.f32.mrf.mxu0
        %v5000 = vadd.f32 %v3452, %v4999
        %v5001 = vpop.f32.mrf.mxu0
        %v5002 = vadd.f32 %v3448, %v5001
        %v5003 = vpop.f32.mrf.mxu0
        %v5004 = vadd.f32 %v3452, %v5003
        %5005 = vmatprep.mubr.bf16.mxu0 %v3334
        %5006 = vmatmul.mubr.bf16.gmra.mxu0 %v3333
        %v5007 = vpop.f32.mrf.mxu0
        %v5008 = vadd.f32 %v3448, %v5007
        %v5009 = vpop.f32.mrf.mxu0
        %v5010 = vadd.f32 %v3452, %v5009
        %v5011 = vpop.f32.mrf.mxu0
        %v5012 = vadd.f32 %v3448, %v5011
        %v5013 = vpop.f32.mrf.mxu0
        %v5014 = vadd.f32 %v3452, %v5013
        %5015 = vdwg.mxu0
        %5016 = vmatprep.subr.bf16.mxu0 %v3840
        %5017 = vmatpush1.bf16.msra.mxu0 %v3839
        %5018 = vmatprep.subr.bf16.mxu0 %v3836
        %5019 = vmatpush1.bf16.msra.mxu0 %v3835
        %5020 = vmatprep.subr.bf16.mxu0 %v3832
        %5021 = vmatpush1.bf16.msra.mxu0 %v3831
        %5022 = vmatprep.subr.bf16.mxu0 %v3828
        %5023 = vmatpush1.bf16.msra.mxu0 %v3827
        %5024 = vmatprep.subr.bf16.mxu0 %v3824
        %5025 = vmatpush1.bf16.msra.mxu0 %v3823
        %5026 = vmatprep.subr.bf16.mxu0 %v3820
        %5027 = vmatpush1.bf16.msra.mxu0 %v3819
        %5028 = vmatprep.subr.bf16.mxu0 %v3816
        %5029 = vmatpush1.bf16.msra.mxu0 %v3815
        %5030 = vmatprep.subr.bf16.mxu0 %v3812
        %5031 = vmatpush1.bf16.msra.mxu0 %v3811
        %5032 = vmatprep.subr.bf16.mxu0 0
        %5033 = vmatpush2.bf16.msra.mxu0 0
        %5034 = vmatprep.subr.bf16.mxu0 0
        %5035 = vmatpush2.bf16.msra.mxu0 0
        %5036 = vmatprep.subr.bf16.mxu0 0
        %5037 = vmatpush2.bf16.msra.mxu0 0
        %5038 = vmatprep.subr.bf16.mxu0 0
        %5039 = vmatpush2.bf16.msra.mxu0 0
        %5040 = vmatprep.subr.bf16.mxu0 0
        %5041 = vmatpush2.bf16.msra.mxu0 0
        %5042 = vmatprep.subr.bf16.mxu0 0
        %5043 = vmatpush2.bf16.msra.mxu0 0
        %5044 = vmatprep.subr.bf16.mxu0 0
        %5045 = vmatpush2.bf16.msra.mxu0 0
        %5046 = vmatprep.subr.bf16.mxu0 0
        %5047 = vmatpush2.bf16.msra.mxu0 0
        %5048 = vmatprep.mubr.bf16.mxu0 0
        %5049 = vmatmul.mubr.bf16.gmra.mxu0 %v3314
        %v5050 = vpop.f32.mrf.mxu0
        %v5051 = vadd.f32 %v4938, %v5050
        %v5052 = vpop.f32.mrf.mxu0
        %v5053 = vadd.f32 %v4940, %v5052
        %v5054 = vpop.f32.mrf.mxu0
        %v5055 = vadd.f32 %v4942, %v5054
        %v5056 = vpop.f32.mrf.mxu0
        %v5057 = vadd.f32 %v4944, %v5056
        %5058 = vmatprep.mubr.bf16.mxu0 0
        %5059 = vmatmul.mubr.bf16.gmra.mxu0 %v3317
        %v5060 = vpop.f32.mrf.mxu0
        %v5061 = vadd.f32 %v4948, %v5060
        %v5062 = vpop.f32.mrf.mxu0
        %v5063 = vadd.f32 %v4950, %v5062
        %v5064 = vpop.f32.mrf.mxu0
        %v5065 = vadd.f32 %v4952, %v5064
        %v5066 = vpop.f32.mrf.mxu0
        %v5067 = vadd.f32 %v4954, %v5066
        %5068 = vmatprep.mubr.bf16.mxu0 0
        %5069 = vmatmul.mubr.bf16.gmra.mxu0 %v3320
        %v5070 = vpop.f32.mrf.mxu0
        %v5071 = vadd.f32 %v4958, %v5070
        %v5072 = vpop.f32.mrf.mxu0
        %v5073 = vadd.f32 %v4960, %v5072
        %v5074 = vpop.f32.mrf.mxu0
        %v5075 = vadd.f32 %v4962, %v5074
        %v5076 = vpop.f32.mrf.mxu0
        %v5077 = vadd.f32 %v4964, %v5076
        %5078 = vmatprep.mubr.bf16.mxu0 0
        %5079 = vmatmul.mubr.bf16.gmra.mxu0 %v3323
        %v5080 = vpop.f32.mrf.mxu0
        %v5081 = vadd.f32 %v4968, %v5080
        %v5082 = vpop.f32.mrf.mxu0
        %v5083 = vadd.f32 %v4970, %v5082
        %v5084 = vpop.f32.mrf.mxu0
        %v5085 = vadd.f32 %v4972, %v5084
        %v5086 = vpop.f32.mrf.mxu0
        %v5087 = vadd.f32 %v4974, %v5086
        %5088 = vmatprep.mubr.bf16.mxu0 0
        %5089 = vmatmul.mubr.bf16.gmra.mxu0 %v3326
        %v5090 = vpop.f32.mrf.mxu0
        %v5091 = vadd.f32 %v4978, %v5090
        %v5092 = vpop.f32.mrf.mxu0
        %v5093 = vadd.f32 %v4980, %v5092
        %v5094 = vpop.f32.mrf.mxu0
        %v5095 = vadd.f32 %v4982, %v5094
        %v5096 = vpop.f32.mrf.mxu0
        %v5097 = vadd.f32 %v4984, %v5096
        %5098 = vmatprep.mubr.bf16.mxu0 0
        %5099 = vmatmul.mubr.bf16.gmra.mxu0 %v3329
        %v5100 = vpop.f32.mrf.mxu0
        %v5101 = vadd.f32 %v4988, %v5100
        %v5102 = vpop.f32.mrf.mxu0
        %v5103 = vadd.f32 %v4990, %v5102
        %v5104 = vpop.f32.mrf.mxu0
        %v5105 = vadd.f32 %v4992, %v5104
        %v5106 = vpop.f32.mrf.mxu0
        %v5107 = vadd.f32 %v4994, %v5106
        %5108 = vmatprep.mubr.bf16.mxu0 0
        %5109 = vmatmul.mubr.bf16.gmra.mxu0 %v3332
        %v5110 = vpop.f32.mrf.mxu0
        %v5111 = vadd.f32 %v4998, %v5110
        %v5112 = vpop.f32.mrf.mxu0
        %v5113 = vadd.f32 %v5000, %v5112
        %v5114 = vpop.f32.mrf.mxu0
        %v5115 = vadd.f32 %v5002, %v5114
        %v5116 = vpop.f32.mrf.mxu0
        %v5117 = vadd.f32 %v5004, %v5116
        %5118 = vmatprep.mubr.bf16.mxu0 0
        %5119 = vmatmul.mubr.bf16.gmra.mxu0 %v3335
        %v5120 = vpop.f32.mrf.mxu0
        %v5121 = vadd.f32 %v5008, %v5120
        %v5122 = vpop.f32.mrf.mxu0
        %v5123 = vadd.f32 %v5010, %v5122
        %v5124 = vpop.f32.mrf.mxu0
        %v5125 = vadd.f32 %v5012, %v5124
        %v5126 = vpop.f32.mrf.mxu0
        %v5127 = vadd.f32 %v5014, %v5126
        %5128 = vdwg.mxu0
        %v5129 = vmul.f32 %v4825, 0.5
        %v5130 = vmul.f32 %v4827, 0.5
        %v5131 = vmul.f32 %v5051, 0.5
        %v5132 = vmul.f32 %v5053, 0.5
        %v5133 = vmul.f32 %v4829, 0.5
        %v5134 = vmul.f32 %v4831, 0.5
        %v5135 = vmul.f32 %v5055, 0.5
        %v5136 = vmul.f32 %v5057, 0.5
        %v5137 = vmul.f32 %v4835, 0.5
        %v5138 = vmul.f32 %v4837, 0.5
        %v5139 = vmul.f32 %v5061, 0.5
        %v5140 = vmul.f32 %v5063, 0.5
        %v5141 = vmul.f32 %v4839, 0.5
        %v5142 = vmul.f32 %v4841, 0.5
        %v5143 = vmul.f32 %v5065, 0.5
        %v5144 = vmul.f32 %v5067, 0.5
        %v5145 = vmul.f32 %v4845, 0.5
        %v5146 = vmul.f32 %v4847, 0.5
        %v5147 = vmul.f32 %v5071, 0.5
        %v5148 = vmul.f32 %v5073, 0.5
        %v5149 = vmul.f32 %v4849, 0.5
        %v5150 = vmul.f32 %v4851, 0.5
        %v5151 = vmul.f32 %v5075, 0.5
        %v5152 = vmul.f32 %v5077, 0.5
        %v5153 = vmul.f32 %v4855, 0.5
        %v5154 = vmul.f32 %v4857, 0.5
        %v5155 = vmul.f32 %v5081, 0.5
        %v5156 = vmul.f32 %v5083, 0.5
        %v5157 = vmul.f32 %v4859, 0.5
        %v5158 = vmul.f32 %v4861, 0.5
        %v5159 = vmul.f32 %v5085, 0.5
        %v5160 = vmul.f32 %v5087, 0.5
        %v5161 = vmul.f32 %v4865, 0.5
        %v5162 = vmul.f32 %v4867, 0.5
        %v5163 = vmul.f32 %v5091, 0.5
        %v5164 = vmul.f32 %v5093, 0.5
        %v5165 = vmul.f32 %v4869, 0.5
        %v5166 = vmul.f32 %v4871, 0.5
        %v5167 = vmul.f32 %v5095, 0.5
        %v5168 = vmul.f32 %v5097, 0.5
        %v5169 = vmul.f32 %v4875, 0.5
        %v5170 = vmul.f32 %v4877, 0.5
        %v5171 = vmul.f32 %v5101, 0.5
        %v5172 = vmul.f32 %v5103, 0.5
        %v5173 = vmul.f32 %v4879, 0.5
        %v5174 = vmul.f32 %v4881, 0.5
        %v5175 = vmul.f32 %v5105, 0.5
        %v5176 = vmul.f32 %v5107, 0.5
        %v5177 = vmul.f32 %v4885, 0.5
        %v5178 = vmul.f32 %v4887, 0.5
        %v5179 = vmul.f32 %v5111, 0.5
        %v5180 = vmul.f32 %v5113, 0.5
        %v5181 = vmul.f32 %v4889, 0.5
        %v5182 = vmul.f32 %v4891, 0.5
        %v5183 = vmul.f32 %v5115, 0.5
        %v5184 = vmul.f32 %v5117, 0.5
        %v5185 = vmul.f32 %v4895, 0.5
        %v5186 = vmul.f32 %v4897, 0.5
        %v5187 = vmul.f32 %v5121, 0.5
        %v5188 = vmul.f32 %v5123, 0.5
        %v5189 = vmul.f32 %v4899, 0.5
        %v5190 = vmul.f32 %v4901, 0.5
        %v5191 = vmul.f32 %v5125, 0.5
        %v5192 = vmul.f32 %v5127, 0.5
        %v5193 = vtanh.pop %v5129
        %v5194 = vtanh.pop %v5130
        %v5195 = vtanh.pop %v5131
        %v5196 = vtanh.pop %v5132
        %v5197 = vtanh.pop %v5133
        %v5198 = vtanh.pop %v5134
        %v5199 = vtanh.pop %v5135
        %v5200 = vtanh.pop %v5136
        %v5201 = vtanh.pop %v5137
        %v5202 = vtanh.pop %v5138
        %v5203 = vtanh.pop %v5139
        %v5204 = vtanh.pop %v5140
        %v5205 = vtanh.pop %v5141
        %v5206 = vtanh.pop %v5142
        %v5207 = vtanh.pop %v5143
        %v5208 = vtanh.pop %v5144
        %v5209 = vtanh.pop %v5145
        %v5210 = vtanh.pop %v5146
        %v5211 = vtanh.pop %v5147
        %v5212 = vtanh.pop %v5148
        %v5213 = vtanh.pop %v5149
        %v5214 = vtanh.pop %v5150
        %v5215 = vtanh.pop %v5151
        %v5216 = vtanh.pop %v5152
        %v5217 = vtanh.pop %v5153
        %v5218 = vtanh.pop %v5154
        %v5219 = vtanh.pop %v5155
        %v5220 = vtanh.pop %v5156
        %v5221 = vtanh.pop %v5157
        %v5222 = vtanh.pop %v5158
        %v5223 = vtanh.pop %v5159
        %v5224 = vtanh.pop %v5160
        %v5225 = vtanh.pop %v5161
        %v5226 = vtanh.pop %v5162
        %v5227 = vtanh.pop %v5163
        %v5228 = vtanh.pop %v5164
        %v5229 = vtanh.pop %v5165
        %v5230 = vtanh.pop %v5166
        %v5231 = vtanh.pop %v5167
        %v5232 = vtanh.pop %v5168
        %v5233 = vtanh.pop %v5169
        %v5234 = vtanh.pop %v5170
        %v5235 = vtanh.pop %v5171
        %v5236 = vtanh.pop %v5172
        %v5237 = vtanh.pop %v5173
        %v5238 = vtanh.pop %v5174
        %v5239 = vtanh.pop %v5175
        %v5240 = vtanh.pop %v5176
        %v5241 = vtanh.pop %v5177
        %v5242 = vtanh.pop %v5178
        %v5243 = vtanh.pop %v5179
        %v5244 = vtanh.pop %v5180
        %v5245 = vtanh.pop %v5181
        %v5246 = vtanh.pop %v5182
        %v5247 = vtanh.pop %v5183
        %v5248 = vtanh.pop %v5184
        %v5249 = vtanh.pop %v5185
        %v5250 = vtanh.pop %v5186
        %v5251 = vtanh.pop %v5187
        %v5252 = vtanh.pop %v5188
        %v5253 = vtanh.pop %v5189
        %v5254 = vtanh.pop %v5190
        %v5255 = vtanh.pop %v5191
        %v5256 = vtanh.pop %v5192
        %v5257 = vmul.f32 %v5193, 0.5
        %v5258 = vmul.f32 %v5194, 0.5
        %v5259 = vmul.f32 %v5195, 0.5
        %v5260 = vmul.f32 %v5196, 0.5
        %v5261 = vmul.f32 %v5197, 0.5
        %v5262 = vmul.f32 %v5198, 0.5
        %v5263 = vmul.f32 %v5199, 0.5
        %v5264 = vmul.f32 %v5200, 0.5
        %v5265 = vmul.f32 %v5201, 0.5
        %v5266 = vmul.f32 %v5202, 0.5
        %v5267 = vmul.f32 %v5203, 0.5
        %v5268 = vmul.f32 %v5204, 0.5
        %v5269 = vmul.f32 %v5205, 0.5
        %v5270 = vmul.f32 %v5206, 0.5
        %v5271 = vmul.f32 %v5207, 0.5
        %v5272 = vmul.f32 %v5208, 0.5
        %v5273 = vmul.f32 %v5209, 0.5
        %v5274 = vmul.f32 %v5210, 0.5
        %v5275 = vmul.f32 %v5211, 0.5
        %v5276 = vmul.f32 %v5212, 0.5
        %v5277 = vmul.f32 %v5213, 0.5
        %v5278 = vmul.f32 %v5214, 0.5
        %v5279 = vmul.f32 %v5215, 0.5
        %v5280 = vmul.f32 %v5216, 0.5
        %v5281 = vmul.f32 %v5217, 0.5
        %v5282 = vmul.f32 %v5218, 0.5
        %v5283 = vmul.f32 %v5219, 0.5
        %v5284 = vmul.f32 %v5220, 0.5
        %v5285 = vmul.f32 %v5221, 0.5
        %v5286 = vmul.f32 %v5222, 0.5
        %v5287 = vmul.f32 %v5223, 0.5
        %v5288 = vmul.f32 %v5224, 0.5
        %v5289 = vmul.f32 %v5225, 0.5
        %v5290 = vmul.f32 %v5226, 0.5
        %v5291 = vmul.f32 %v5227, 0.5
        %v5292 = vmul.f32 %v5228, 0.5
        %v5293 = vmul.f32 %v5229, 0.5
        %v5294 = vmul.f32 %v5230, 0.5
        %v5295 = vmul.f32 %v5231, 0.5
        %v5296 = vmul.f32 %v5232, 0.5
        %v5297 = vmul.f32 %v5233, 0.5
        %v5298 = vmul.f32 %v5234, 0.5
        %v5299 = vmul.f32 %v5235, 0.5
        %v5300 = vmul.f32 %v5236, 0.5
        %v5301 = vmul.f32 %v5237, 0.5
        %v5302 = vmul.f32 %v5238, 0.5
        %v5303 = vmul.f32 %v5239, 0.5
        %v5304 = vmul.f32 %v5240, 0.5
        %v5305 = vmul.f32 %v5241, 0.5
        %v5306 = vmul.f32 %v5242, 0.5
        %v5307 = vmul.f32 %v5243, 0.5
        %v5308 = vmul.f32 %v5244, 0.5
        %v5309 = vmul.f32 %v5245, 0.5
        %v5310 = vmul.f32 %v5246, 0.5
        %v5311 = vmul.f32 %v5247, 0.5
        %v5312 = vmul.f32 %v5248, 0.5
        %v5313 = vmul.f32 %v5249, 0.5
        %v5314 = vmul.f32 %v5250, 0.5
        %v5315 = vmul.f32 %v5251, 0.5
        %v5316 = vmul.f32 %v5252, 0.5
        %v5317 = vmul.f32 %v5253, 0.5
        %v5318 = vmul.f32 %v5254, 0.5
        %v5319 = vmul.f32 %v5255, 0.5
        %v5320 = vmul.f32 %v5256, 0.5
        %v5321 = vadd.f32 %v5257, 0.5
        %v5322 = vadd.f32 %v5258, 0.5
        %v5323 = vadd.f32 %v5259, 0.5
        %v5324 = vadd.f32 %v5260, 0.5
        %v5325 = vadd.f32 %v5261, 0.5
        %v5326 = vadd.f32 %v5262, 0.5
        %v5327 = vadd.f32 %v5263, 0.5
        %v5328 = vadd.f32 %v5264, 0.5
        %v5329 = vadd.f32 %v5265, 0.5
        %v5330 = vadd.f32 %v5266, 0.5
        %v5331 = vadd.f32 %v5267, 0.5
        %v5332 = vadd.f32 %v5268, 0.5
        %v5333 = vadd.f32 %v5269, 0.5
        %v5334 = vadd.f32 %v5270, 0.5
        %v5335 = vadd.f32 %v5271, 0.5
        %v5336 = vadd.f32 %v5272, 0.5
        %v5337 = vadd.f32 %v5273, 0.5
        %v5338 = vadd.f32 %v5274, 0.5
        %v5339 = vadd.f32 %v5275, 0.5
        %v5340 = vadd.f32 %v5276, 0.5
        %v5341 = vadd.f32 %v5277, 0.5
        %v5342 = vadd.f32 %v5278, 0.5
        %v5343 = vadd.f32 %v5279, 0.5
        %v5344 = vadd.f32 %v5280, 0.5
        %v5345 = vadd.f32 %v5281, 0.5
        %v5346 = vadd.f32 %v5282, 0.5
        %v5347 = vadd.f32 %v5283, 0.5
        %v5348 = vadd.f32 %v5284, 0.5
        %v5349 = vadd.f32 %v5285, 0.5
        %v5350 = vadd.f32 %v5286, 0.5
        %v5351 = vadd.f32 %v5287, 0.5
        %v5352 = vadd.f32 %v5288, 0.5
        %v5353 = vadd.f32 %v5289, 0.5
        %v5354 = vadd.f32 %v5290, 0.5
        %v5355 = vadd.f32 %v5291, 0.5
        %v5356 = vadd.f32 %v5292, 0.5
        %v5357 = vadd.f32 %v5293, 0.5
        %v5358 = vadd.f32 %v5294, 0.5
        %v5359 = vadd.f32 %v5295, 0.5
        %v5360 = vadd.f32 %v5296, 0.5
        %v5361 = vadd.f32 %v5297, 0.5
        %v5362 = vadd.f32 %v5298, 0.5
        %v5363 = vadd.f32 %v5299, 0.5
        %v5364 = vadd.f32 %v5300, 0.5
        %v5365 = vadd.f32 %v5301, 0.5
        %v5366 = vadd.f32 %v5302, 0.5
        %v5367 = vadd.f32 %v5303, 0.5
        %v5368 = vadd.f32 %v5304, 0.5
        %v5369 = vadd.f32 %v5305, 0.5
        %v5370 = vadd.f32 %v5306, 0.5
        %v5371 = vadd.f32 %v5307, 0.5
        %v5372 = vadd.f32 %v5308, 0.5
        %v5373 = vadd.f32 %v5309, 0.5
        %v5374 = vadd.f32 %v5310, 0.5
        %v5375 = vadd.f32 %v5311, 0.5
        %v5376 = vadd.f32 %v5312, 0.5
        %v5377 = vadd.f32 %v5313, 0.5
        %v5378 = vadd.f32 %v5314, 0.5
        %v5379 = vadd.f32 %v5315, 0.5
        %v5380 = vadd.f32 %v5316, 0.5
        %v5381 = vadd.f32 %v5317, 0.5
        %v5382 = vadd.f32 %v5318, 0.5
        %v5383 = vadd.f32 %v5319, 0.5
        %v5384 = vadd.f32 %v5320, 0.5
        %v5385 = vpack.c.bf16 %v5325, %v5321
        %v5386 = vpack.c.bf16 %v5326, %v5322
        %v5387 = vpack.c.bf16 %v5327, %v5323
        %v5388 = vpack.c.bf16 %v5328, %v5324
        %v5389 = vpack.c.bf16 %v5333, %v5329
        %v5390 = vpack.c.bf16 %v5334, %v5330
        %v5391 = vpack.c.bf16 %v5335, %v5331
        %v5392 = vpack.c.bf16 %v5336, %v5332
        %v5393 = vpack.c.bf16 %v5341, %v5337
        %v5394 = vpack.c.bf16 %v5342, %v5338
        %v5395 = vpack.c.bf16 %v5343, %v5339
        %v5396 = vpack.c.bf16 %v5344, %v5340
        %v5397 = vpack.c.bf16 %v5349, %v5345
        %v5398 = vpack.c.bf16 %v5350, %v5346
        %v5399 = vpack.c.bf16 %v5351, %v5347
        %v5400 = vpack.c.bf16 %v5352, %v5348
        %v5401 = vpack.c.bf16 %v5357, %v5353
        %v5402 = vpack.c.bf16 %v5358, %v5354
        %v5403 = vpack.c.bf16 %v5359, %v5355
        %v5404 = vpack.c.bf16 %v5360, %v5356
        %v5405 = vpack.c.bf16 %v5365, %v5361
        %v5406 = vpack.c.bf16 %v5366, %v5362
        %v5407 = vpack.c.bf16 %v5367, %v5363
        %v5408 = vpack.c.bf16 %v5368, %v5364
        %v5409 = vpack.c.bf16 %v5373, %v5369
        %v5410 = vpack.c.bf16 %v5374, %v5370
        %v5411 = vpack.c.bf16 %v5375, %v5371
        %v5412 = vpack.c.bf16 %v5376, %v5372
        %v5413 = vpack.c.bf16 %v5381, %v5377
        %v5414 = vpack.c.bf16 %v5382, %v5378
        %v5415 = vpack.c.bf16 %v5383, %v5379
        %v5416 = vpack.c.bf16 %v5384, %v5380
        %s5417 = smul.u32 4, 64
        %s5418 = smul.u32 %s5417, 4
        %s5419 = sshll.u32 %s5418, 4
        %5420 = dma.done %s366, %s5419
        %v5421 = vld [vmem:[#allocation5] sm:$0xff]
        %v5422 = vld [vmem:[#allocation5 + $0x8] sm:$0xff]
        %v5423 = vld [vmem:[#allocation5 + $0x10] sm:$0xff]
        %v5424 = vld [vmem:[#allocation5 + $0x18] sm:$0xff]
        %v5425 = vld [vmem:[#allocation5 + $0x20] sm:$0xff]
        %v5426 = vld [vmem:[#allocation5 + $0x28] sm:$0xff]
        %v5427 = vld [vmem:[#allocation5 + $0x30] sm:$0xff]
        %v5428 = vld [vmem:[#allocation5 + $0x38] sm:$0xff]
        %v5429 = vld [vmem:[#allocation5 + $0x40] sm:$0xff]
        %v5430 = vld [vmem:[#allocation5 + $0x48] sm:$0xff]
        %v5431 = vld [vmem:[#allocation5 + $0x50] sm:$0xff]
        %v5432 = vld [vmem:[#allocation5 + $0x58] sm:$0xff]
        %v5433 = vld [vmem:[#allocation5 + $0x60] sm:$0xff]
        %v5434 = vld [vmem:[#allocation5 + $0x68] sm:$0xff]
        %v5435 = vld [vmem:[#allocation5 + $0x70] sm:$0xff]
        %v5436 = vld [vmem:[#allocation5 + $0x78] sm:$0xff]
        %v5437 = vld [vmem:[#allocation5 + $0x80] sm:$0xff]
        %v5438 = vld [vmem:[#allocation5 + $0x88] sm:$0xff]
        %v5439 = vld [vmem:[#allocation5 + $0x90] sm:$0xff]
        %v5440 = vld [vmem:[#allocation5 + $0x98] sm:$0xff]
        %v5441 = vld [vmem:[#allocation5 + $0xa0] sm:$0xff]
        %v5442 = vld [vmem:[#allocation5 + $0xa8] sm:$0xff]
        %v5443 = vld [vmem:[#allocation5 + $0xb0] sm:$0xff]
        %v5444 = vld [vmem:[#allocation5 + $0xb8] sm:$0xff]
        %v5445 = vld [vmem:[#allocation5 + $0xc0] sm:$0xff]
        %v5446 = vld [vmem:[#allocation5 + $0xc8] sm:$0xff]
        %v5447 = vld [vmem:[#allocation5 + $0xd0] sm:$0xff]
        %v5448 = vld [vmem:[#allocation5 + $0xd8] sm:$0xff]
        %v5449 = vld [vmem:[#allocation5 + $0xe0] sm:$0xff]
        %v5450 = vld [vmem:[#allocation5 + $0xe8] sm:$0xff]
        %v5451 = vld [vmem:[#allocation5 + $0xf0] sm:$0xff]
        %v5452 = vld [vmem:[#allocation5 + $0xf8] sm:$0xff]
        %v5453 = vld [vmem:[#allocation5 + $0x100] sm:$0xff]
        %v5454 = vld [vmem:[#allocation5 + $0x108] sm:$0xff]
        %v5455 = vld [vmem:[#allocation5 + $0x110] sm:$0xff]
        %v5456 = vld [vmem:[#allocation5 + $0x118] sm:$0xff]
        %v5457 = vld [vmem:[#allocation5 + $0x120] sm:$0xff]
        %v5458 = vld [vmem:[#allocation5 + $0x128] sm:$0xff]
        %v5459 = vld [vmem:[#allocation5 + $0x130] sm:$0xff]
        %v5460 = vld [vmem:[#allocation5 + $0x138] sm:$0xff]
        %v5461 = vld [vmem:[#allocation5 + $0x140] sm:$0xff]
        %v5462 = vld [vmem:[#allocation5 + $0x148] sm:$0xff]
        %v5463 = vld [vmem:[#allocation5 + $0x150] sm:$0xff]
        %v5464 = vld [vmem:[#allocation5 + $0x158] sm:$0xff]
        %v5465 = vld [vmem:[#allocation5 + $0x160] sm:$0xff]
        %v5466 = vld [vmem:[#allocation5 + $0x168] sm:$0xff]
        %v5467 = vld [vmem:[#allocation5 + $0x170] sm:$0xff]
        %v5468 = vld [vmem:[#allocation5 + $0x178] sm:$0xff]
        %v5469 = vld [vmem:[#allocation5 + $0x180] sm:$0xff]
        %v5470 = vld [vmem:[#allocation5 + $0x188] sm:$0xff]
        %v5471 = vld [vmem:[#allocation5 + $0x190] sm:$0xff]
        %v5472 = vld [vmem:[#allocation5 + $0x198] sm:$0xff]
        %v5473 = vld [vmem:[#allocation5 + $0x1a0] sm:$0xff]
        %v5474 = vld [vmem:[#allocation5 + $0x1a8] sm:$0xff]
        %v5475 = vld [vmem:[#allocation5 + $0x1b0] sm:$0xff]
        %v5476 = vld [vmem:[#allocation5 + $0x1b8] sm:$0xff]
        %v5477 = vld [vmem:[#allocation5 + $0x1c0] sm:$0xff]
        %v5478 = vld [vmem:[#allocation5 + $0x1c8] sm:$0xff]
        %v5479 = vld [vmem:[#allocation5 + $0x1d0] sm:$0xff]
        %v5480 = vld [vmem:[#allocation5 + $0x1d8] sm:$0xff]
        %v5481 = vld [vmem:[#allocation5 + $0x1e0] sm:$0xff]
        %v5482 = vld [vmem:[#allocation5 + $0x1e8] sm:$0xff]
        %v5483 = vld [vmem:[#allocation5 + $0x1f0] sm:$0xff]
        %v5484 = vld [vmem:[#allocation5 + $0x1f8] sm:$0xff]
        %v5485 = vld [vmem:[#allocation5 + $0x200] sm:$0xff]
        %v5486 = vld [vmem:[#allocation5 + $0x208] sm:$0xff]
        %v5487 = vld [vmem:[#allocation5 + $0x210] sm:$0xff]
        %v5488 = vld [vmem:[#allocation5 + $0x218] sm:$0xff]
        %v5489 = vld [vmem:[#allocation5 + $0x220] sm:$0xff]
        %v5490 = vld [vmem:[#allocation5 + $0x228] sm:$0xff]
        %v5491 = vld [vmem:[#allocation5 + $0x230] sm:$0xff]
        %v5492 = vld [vmem:[#allocation5 + $0x238] sm:$0xff]
        %v5493 = vld [vmem:[#allocation5 + $0x240] sm:$0xff]
        %v5494 = vld [vmem:[#allocation5 + $0x248] sm:$0xff]
        %v5495 = vld [vmem:[#allocation5 + $0x250] sm:$0xff]
        %v5496 = vld [vmem:[#allocation5 + $0x258] sm:$0xff]
        %v5497 = vld [vmem:[#allocation5 + $0x260] sm:$0xff]
        %v5498 = vld [vmem:[#allocation5 + $0x268] sm:$0xff]
        %v5499 = vld [vmem:[#allocation5 + $0x270] sm:$0xff]
        %v5500 = vld [vmem:[#allocation5 + $0x278] sm:$0xff]
        %v5501 = vld [vmem:[#allocation5 + $0x280] sm:$0xff]
        %v5502 = vld [vmem:[#allocation5 + $0x288] sm:$0xff]
        %v5503 = vld [vmem:[#allocation5 + $0x290] sm:$0xff]
        %v5504 = vld [vmem:[#allocation5 + $0x298] sm:$0xff]
        %v5505 = vld [vmem:[#allocation5 + $0x2a0] sm:$0xff]
        %v5506 = vld [vmem:[#allocation5 + $0x2a8] sm:$0xff]
        %v5507 = vld [vmem:[#allocation5 + $0x2b0] sm:$0xff]
        %v5508 = vld [vmem:[#allocation5 + $0x2b8] sm:$0xff]
        %v5509 = vld [vmem:[#allocation5 + $0x2c0] sm:$0xff]
        %v5510 = vld [vmem:[#allocation5 + $0x2c8] sm:$0xff]
        %v5511 = vld [vmem:[#allocation5 + $0x2d0] sm:$0xff]
        %v5512 = vld [vmem:[#allocation5 + $0x2d8] sm:$0xff]
        %v5513 = vld [vmem:[#allocation5 + $0x2e0] sm:$0xff]
        %v5514 = vld [vmem:[#allocation5 + $0x2e8] sm:$0xff]
        %v5515 = vld [vmem:[#allocation5 + $0x2f0] sm:$0xff]
        %v5516 = vld [vmem:[#allocation5 + $0x2f8] sm:$0xff]
        %v5517 = vld [vmem:[#allocation5 + $0x300] sm:$0xff]
        %v5518 = vld [vmem:[#allocation5 + $0x308] sm:$0xff]
        %v5519 = vld [vmem:[#allocation5 + $0x310] sm:$0xff]
        %v5520 = vld [vmem:[#allocation5 + $0x318] sm:$0xff]
        %v5521 = vld [vmem:[#allocation5 + $0x320] sm:$0xff]
        %v5522 = vld [vmem:[#allocation5 + $0x328] sm:$0xff]
        %v5523 = vld [vmem:[#allocation5 + $0x330] sm:$0xff]
        %v5524 = vld [vmem:[#allocation5 + $0x338] sm:$0xff]
        %v5525 = vld [vmem:[#allocation5 + $0x340] sm:$0xff]
        %v5526 = vld [vmem:[#allocation5 + $0x348] sm:$0xff]
        %v5527 = vld [vmem:[#allocation5 + $0x350] sm:$0xff]
        %v5528 = vld [vmem:[#allocation5 + $0x358] sm:$0xff]
        %v5529 = vld [vmem:[#allocation5 + $0x360] sm:$0xff]
        %v5530 = vld [vmem:[#allocation5 + $0x368] sm:$0xff]
        %v5531 = vld [vmem:[#allocation5 + $0x370] sm:$0xff]
        %v5532 = vld [vmem:[#allocation5 + $0x378] sm:$0xff]
        %v5533 = vld [vmem:[#allocation5 + $0x380] sm:$0xff]
        %v5534 = vld [vmem:[#allocation5 + $0x388] sm:$0xff]
        %v5535 = vld [vmem:[#allocation5 + $0x390] sm:$0xff]
        %v5536 = vld [vmem:[#allocation5 + $0x398] sm:$0xff]
        %v5537 = vld [vmem:[#allocation5 + $0x3a0] sm:$0xff]
        %v5538 = vld [vmem:[#allocation5 + $0x3a8] sm:$0xff]
        %v5539 = vld [vmem:[#allocation5 + $0x3b0] sm:$0xff]
        %v5540 = vld [vmem:[#allocation5 + $0x3b8] sm:$0xff]
        %v5541 = vld [vmem:[#allocation5 + $0x3c0] sm:$0xff]
        %v5542 = vld [vmem:[#allocation5 + $0x3c8] sm:$0xff]
        %v5543 = vld [vmem:[#allocation5 + $0x3d0] sm:$0xff]
        %v5544 = vld [vmem:[#allocation5 + $0x3d8] sm:$0xff]
        %v5545 = vld [vmem:[#allocation5 + $0x3e0] sm:$0xff]
        %v5546 = vld [vmem:[#allocation5 + $0x3e8] sm:$0xff]
        %v5547 = vld [vmem:[#allocation5 + $0x3f0] sm:$0xff]
        %v5548 = vld [vmem:[#allocation5 + $0x3f8] sm:$0xff]
        %v5549 = vld [vmem:[%s10] sm:$0xf]
        %v5551 = vlaneseq
        %v5552 = vshrl.u32 %v5551, 7
        %v5553 = vsub.s32 0, %v5552
        %v5554 = vrot.slane %v5549, %v5553
        %v5555 = vlaneseq
        %v5556 = vshrl.u32 %v5555, 7
        %v5557 = vsub.s32 1, %v5556
        %v5558 = vrot.slane %v5549, %v5557
        %v5559 = vlaneseq
        %v5560 = vshrl.u32 %v5559, 7
        %v5561 = vsub.s32 2, %v5560
        %v5562 = vrot.slane %v5549, %v5561
        %v5563 = vlaneseq
        %v5564 = vshrl.u32 %v5563, 7
        %v5565 = vsub.s32 3, %v5564
        %v5566 = vrot.slane %v5549, %v5565
        %v5699 = vunpack.c.l.b16 %v5421
        %v5700 = vunpack.c.h.b16 %v5421
        %v5701 = vunpack.c.l.b16 %v5422
        %v5702 = vunpack.c.h.b16 %v5422
        %v5703 = vunpack.c.l.b16 %v5423
        %v5704 = vunpack.c.h.b16 %v5423
        %v5705 = vunpack.c.l.b16 %v5424
        %v5706 = vunpack.c.h.b16 %v5424
        %v5707 = vunpack.c.l.b16 %v5425
        %v5708 = vunpack.c.h.b16 %v5425
        %v5709 = vunpack.c.l.b16 %v5426
        %v5710 = vunpack.c.h.b16 %v5426
        %v5711 = vunpack.c.l.b16 %v5427
        %v5712 = vunpack.c.h.b16 %v5427
        %v5713 = vunpack.c.l.b16 %v5428
        %v5714 = vunpack.c.h.b16 %v5428
        %v5715 = vunpack.c.l.b16 %v5429
        %v5716 = vunpack.c.h.b16 %v5429
        %v5717 = vunpack.c.l.b16 %v5430
        %v5718 = vunpack.c.h.b16 %v5430
        %v5719 = vunpack.c.l.b16 %v5431
        %v5720 = vunpack.c.h.b16 %v5431
        %v5721 = vunpack.c.l.b16 %v5432
        %v5722 = vunpack.c.h.b16 %v5432
        %v5723 = vunpack.c.l.b16 %v5433
        %v5724 = vunpack.c.h.b16 %v5433
        %v5725 = vunpack.c.l.b16 %v5434
        %v5726 = vunpack.c.h.b16 %v5434
        %v5727 = vunpack.c.l.b16 %v5435
        %v5728 = vunpack.c.h.b16 %v5435
        %v5729 = vunpack.c.l.b16 %v5436
        %v5730 = vunpack.c.h.b16 %v5436
        %v5731 = vunpack.c.l.b16 %v5437
        %v5732 = vunpack.c.h.b16 %v5437
        %v5733 = vunpack.c.l.b16 %v5438
        %v5734 = vunpack.c.h.b16 %v5438
        %v5735 = vunpack.c.l.b16 %v5439
        %v5736 = vunpack.c.h.b16 %v5439
        %v5737 = vunpack.c.l.b16 %v5440
        %v5738 = vunpack.c.h.b16 %v5440
        %v5739 = vunpack.c.l.b16 %v5441
        %v5740 = vunpack.c.h.b16 %v5441
        %v5741 = vunpack.c.l.b16 %v5442
        %v5742 = vunpack.c.h.b16 %v5442
        %v5743 = vunpack.c.l.b16 %v5443
        %v5744 = vunpack.c.h.b16 %v5443
        %v5745 = vunpack.c.l.b16 %v5444
        %v5746 = vunpack.c.h.b16 %v5444
        %v5747 = vunpack.c.l.b16 %v5445
        %v5748 = vunpack.c.h.b16 %v5445
        %v5749 = vunpack.c.l.b16 %v5446
        %v5750 = vunpack.c.h.b16 %v5446
        %v5751 = vunpack.c.l.b16 %v5447
        %v5752 = vunpack.c.h.b16 %v5447
        %v5753 = vunpack.c.l.b16 %v5448
        %v5754 = vunpack.c.h.b16 %v5448
        %v5755 = vunpack.c.l.b16 %v5449
        %v5756 = vunpack.c.h.b16 %v5449
        %v5757 = vunpack.c.l.b16 %v5450
        %v5758 = vunpack.c.h.b16 %v5450
        %v5759 = vunpack.c.l.b16 %v5451
        %v5760 = vunpack.c.h.b16 %v5451
        %v5761 = vunpack.c.l.b16 %v5452
        %v5762 = vunpack.c.h.b16 %v5452
        %v5763 = vunpack.c.l.b16 %v5453
        %v5764 = vunpack.c.h.b16 %v5453
        %v5765 = vunpack.c.l.b16 %v5454
        %v5766 = vunpack.c.h.b16 %v5454
        %v5767 = vunpack.c.l.b16 %v5455
        %v5768 = vunpack.c.h.b16 %v5455
        %v5769 = vunpack.c.l.b16 %v5456
        %v5770 = vunpack.c.h.b16 %v5456
        %v5771 = vunpack.c.l.b16 %v5457
        %v5772 = vunpack.c.h.b16 %v5457
        %v5773 = vunpack.c.l.b16 %v5458
        %v5774 = vunpack.c.h.b16 %v5458
        %v5775 = vunpack.c.l.b16 %v5459
        %v5776 = vunpack.c.h.b16 %v5459
        %v5777 = vunpack.c.l.b16 %v5460
        %v5778 = vunpack.c.h.b16 %v5460
        %v5779 = vunpack.c.l.b16 %v5461
        %v5780 = vunpack.c.h.b16 %v5461
        %v5781 = vunpack.c.l.b16 %v5462
        %v5782 = vunpack.c.h.b16 %v5462
        %v5783 = vunpack.c.l.b16 %v5463
        %v5784 = vunpack.c.h.b16 %v5463
        %v5785 = vunpack.c.l.b16 %v5464
        %v5786 = vunpack.c.h.b16 %v5464
        %v5787 = vunpack.c.l.b16 %v5465
        %v5788 = vunpack.c.h.b16 %v5465
        %v5789 = vunpack.c.l.b16 %v5466
        %v5790 = vunpack.c.h.b16 %v5466
        %v5791 = vunpack.c.l.b16 %v5467
        %v5792 = vunpack.c.h.b16 %v5467
        %v5793 = vunpack.c.l.b16 %v5468
        %v5794 = vunpack.c.h.b16 %v5468
        %v5795 = vunpack.c.l.b16 %v5469
        %v5796 = vunpack.c.h.b16 %v5469
        %v5797 = vunpack.c.l.b16 %v5470
        %v5798 = vunpack.c.h.b16 %v5470
        %v5799 = vunpack.c.l.b16 %v5471
        %v5800 = vunpack.c.h.b16 %v5471
        %v5801 = vunpack.c.l.b16 %v5472
        %v5802 = vunpack.c.h.b16 %v5472
        %v5803 = vunpack.c.l.b16 %v5473
        %v5804 = vunpack.c.h.b16 %v5473
        %v5805 = vunpack.c.l.b16 %v5474
        %v5806 = vunpack.c.h.b16 %v5474
        %v5807 = vunpack.c.l.b16 %v5475
        %v5808 = vunpack.c.h.b16 %v5475
        %v5809 = vunpack.c.l.b16 %v5476
        %v5810 = vunpack.c.h.b16 %v5476
        %v5811 = vunpack.c.l.b16 %v5477
        %v5812 = vunpack.c.h.b16 %v5477
        %v5813 = vunpack.c.l.b16 %v5478
        %v5814 = vunpack.c.h.b16 %v5478
        %v5815 = vunpack.c.l.b16 %v5479
        %v5816 = vunpack.c.h.b16 %v5479
        %v5817 = vunpack.c.l.b16 %v5480
        %v5818 = vunpack.c.h.b16 %v5480
        %v5819 = vunpack.c.l.b16 %v5481
        %v5820 = vunpack.c.h.b16 %v5481
        %v5821 = vunpack.c.l.b16 %v5482
        %v5822 = vunpack.c.h.b16 %v5482
        %v5823 = vunpack.c.l.b16 %v5483
        %v5824 = vunpack.c.h.b16 %v5483
        %v5825 = vunpack.c.l.b16 %v5484
        %v5826 = vunpack.c.h.b16 %v5484
        %v5827 = vunpack.c.l.b16 %v5485
        %v5828 = vunpack.c.h.b16 %v5485
        %v5829 = vunpack.c.l.b16 %v5486
        %v5830 = vunpack.c.h.b16 %v5486
        %v5831 = vunpack.c.l.b16 %v5487
        %v5832 = vunpack.c.h.b16 %v5487
        %v5833 = vunpack.c.l.b16 %v5488
        %v5834 = vunpack.c.h.b16 %v5488
        %v5835 = vunpack.c.l.b16 %v5489
        %v5836 = vunpack.c.h.b16 %v5489
        %v5837 = vunpack.c.l.b16 %v5490
        %v5838 = vunpack.c.h.b16 %v5490
        %v5839 = vunpack.c.l.b16 %v5491
        %v5840 = vunpack.c.h.b16 %v5491
        %v5841 = vunpack.c.l.b16 %v5492
        %v5842 = vunpack.c.h.b16 %v5492
        %v5843 = vunpack.c.l.b16 %v5493
        %v5844 = vunpack.c.h.b16 %v5493
        %v5845 = vunpack.c.l.b16 %v5494
        %v5846 = vunpack.c.h.b16 %v5494
        %v5847 = vunpack.c.l.b16 %v5495
        %v5848 = vunpack.c.h.b16 %v5495
        %v5849 = vunpack.c.l.b16 %v5496
        %v5850 = vunpack.c.h.b16 %v5496
        %v5851 = vunpack.c.l.b16 %v5497
        %v5852 = vunpack.c.h.b16 %v5497
        %v5853 = vunpack.c.l.b16 %v5498
        %v5854 = vunpack.c.h.b16 %v5498
        %v5855 = vunpack.c.l.b16 %v5499
        %v5856 = vunpack.c.h.b16 %v5499
        %v5857 = vunpack.c.l.b16 %v5500
        %v5858 = vunpack.c.h.b16 %v5500
        %v5859 = vunpack.c.l.b16 %v5501
        %v5860 = vunpack.c.h.b16 %v5501
        %v5861 = vunpack.c.l.b16 %v5502
        %v5862 = vunpack.c.h.b16 %v5502
        %v5863 = vunpack.c.l.b16 %v5503
        %v5864 = vunpack.c.h.b16 %v5503
        %v5865 = vunpack.c.l.b16 %v5504
        %v5866 = vunpack.c.h.b16 %v5504
        %v5867 = vunpack.c.l.b16 %v5505
        %v5868 = vunpack.c.h.b16 %v5505
        %v5869 = vunpack.c.l.b16 %v5506
        %v5870 = vunpack.c.h.b16 %v5506
        %v5871 = vunpack.c.l.b16 %v5507
        %v5872 = vunpack.c.h.b16 %v5507
        %v5873 = vunpack.c.l.b16 %v5508
        %v5874 = vunpack.c.h.b16 %v5508
        %v5875 = vunpack.c.l.b16 %v5509
        %v5876 = vunpack.c.h.b16 %v5509
        %v5877 = vunpack.c.l.b16 %v5510
        %v5878 = vunpack.c.h.b16 %v5510
        %v5879 = vunpack.c.l.b16 %v5511
        %v5880 = vunpack.c.h.b16 %v5511
        %v5881 = vunpack.c.l.b16 %v5512
        %v5882 = vunpack.c.h.b16 %v5512
        %v5883 = vunpack.c.l.b16 %v5513
        %v5884 = vunpack.c.h.b16 %v5513
        %v5885 = vunpack.c.l.b16 %v5514
        %v5886 = vunpack.c.h.b16 %v5514
        %v5887 = vunpack.c.l.b16 %v5515
        %v5888 = vunpack.c.h.b16 %v5515
        %v5889 = vunpack.c.l.b16 %v5516
        %v5890 = vunpack.c.h.b16 %v5516
        %v5891 = vunpack.c.l.b16 %v5517
        %v5892 = vunpack.c.h.b16 %v5517
        %v5893 = vunpack.c.l.b16 %v5518
        %v5894 = vunpack.c.h.b16 %v5518
        %v5895 = vunpack.c.l.b16 %v5519
        %v5896 = vunpack.c.h.b16 %v5519
        %v5897 = vunpack.c.l.b16 %v5520
        %v5898 = vunpack.c.h.b16 %v5520
        %v5899 = vunpack.c.l.b16 %v5521
        %v5900 = vunpack.c.h.b16 %v5521
        %v5901 = vunpack.c.l.b16 %v5522
        %v5902 = vunpack.c.h.b16 %v5522
        %v5903 = vunpack.c.l.b16 %v5523
        %v5904 = vunpack.c.h.b16 %v5523
        %v5905 = vunpack.c.l.b16 %v5524
        %v5906 = vunpack.c.h.b16 %v5524
        %v5907 = vunpack.c.l.b16 %v5525
        %v5908 = vunpack.c.h.b16 %v5525
        %v5909 = vunpack.c.l.b16 %v5526
        %v5910 = vunpack.c.h.b16 %v5526
        %v5911 = vunpack.c.l.b16 %v5527
        %v5912 = vunpack.c.h.b16 %v5527
        %v5913 = vunpack.c.l.b16 %v5528
        %v5914 = vunpack.c.h.b16 %v5528
        %v5915 = vunpack.c.l.b16 %v5529
        %v5916 = vunpack.c.h.b16 %v5529
        %v5917 = vunpack.c.l.b16 %v5530
        %v5918 = vunpack.c.h.b16 %v5530
        %v5919 = vunpack.c.l.b16 %v5531
        %v5920 = vunpack.c.h.b16 %v5531
        %v5921 = vunpack.c.l.b16 %v5532
        %v5922 = vunpack.c.h.b16 %v5532
        %v5923 = vunpack.c.l.b16 %v5533
        %v5924 = vunpack.c.h.b16 %v5533
        %v5925 = vunpack.c.l.b16 %v5534
        %v5926 = vunpack.c.h.b16 %v5534
        %v5927 = vunpack.c.l.b16 %v5535
        %v5928 = vunpack.c.h.b16 %v5535
        %v5929 = vunpack.c.l.b16 %v5536
        %v5930 = vunpack.c.h.b16 %v5536
        %v5931 = vunpack.c.l.b16 %v5537
        %v5932 = vunpack.c.h.b16 %v5537
        %v5933 = vunpack.c.l.b16 %v5538
        %v5934 = vunpack.c.h.b16 %v5538
        %v5935 = vunpack.c.l.b16 %v5539
        %v5936 = vunpack.c.h.b16 %v5539
        %v5937 = vunpack.c.l.b16 %v5540
        %v5938 = vunpack.c.h.b16 %v5540
        %v5939 = vunpack.c.l.b16 %v5541
        %v5940 = vunpack.c.h.b16 %v5541
        %v5941 = vunpack.c.l.b16 %v5542
        %v5942 = vunpack.c.h.b16 %v5542
        %v5943 = vunpack.c.l.b16 %v5543
        %v5944 = vunpack.c.h.b16 %v5543
        %v5945 = vunpack.c.l.b16 %v5544
        %v5946 = vunpack.c.h.b16 %v5544
        %v5947 = vunpack.c.l.b16 %v5545
        %v5948 = vunpack.c.h.b16 %v5545
        %v5949 = vunpack.c.l.b16 %v5546
        %v5950 = vunpack.c.h.b16 %v5546
        %v5951 = vunpack.c.l.b16 %v5547
        %v5952 = vunpack.c.h.b16 %v5547
        %v5953 = vunpack.c.l.b16 %v5548
        %v5954 = vunpack.c.h.b16 %v5548
        %v5955 = vpack.c.b16 %v5703, %v5699
        %v5956 = vpack.c.b16 %v5704, %v5700
        %v5957 = vpack.c.b16 %v5705, %v5701
        %v5958 = vpack.c.b16 %v5706, %v5702
        %v5959 = vpack.c.b16 %v5711, %v5707
        %v5960 = vpack.c.b16 %v5712, %v5708
        %v5961 = vpack.c.b16 %v5713, %v5709
        %v5962 = vpack.c.b16 %v5714, %v5710
        %v5963 = vpack.c.b16 %v5719, %v5715
        %v5964 = vpack.c.b16 %v5720, %v5716
        %v5965 = vpack.c.b16 %v5721, %v5717
        %v5966 = vpack.c.b16 %v5722, %v5718
        %v5967 = vpack.c.b16 %v5727, %v5723
        %v5968 = vpack.c.b16 %v5728, %v5724
        %v5969 = vpack.c.b16 %v5729, %v5725
        %v5970 = vpack.c.b16 %v5730, %v5726
        %v5971 = vpack.c.b16 %v5735, %v5731
        %v5972 = vpack.c.b16 %v5736, %v5732
        %v5973 = vpack.c.b16 %v5737, %v5733
        %v5974 = vpack.c.b16 %v5738, %v5734
        %v5975 = vpack.c.b16 %v5743, %v5739
        %v5976 = vpack.c.b16 %v5744, %v5740
        %v5977 = vpack.c.b16 %v5745, %v5741
        %v5978 = vpack.c.b16 %v5746, %v5742
        %v5979 = vpack.c.b16 %v5751, %v5747
        %v5980 = vpack.c.b16 %v5752, %v5748
        %v5981 = vpack.c.b16 %v5753, %v5749
        %v5982 = vpack.c.b16 %v5754, %v5750
        %v5983 = vpack.c.b16 %v5759, %v5755
        %v5984 = vpack.c.b16 %v5760, %v5756
        %v5985 = vpack.c.b16 %v5761, %v5757
        %v5986 = vpack.c.b16 %v5762, %v5758
        %v5987 = vpack.c.b16 %v5767, %v5763
        %v5988 = vpack.c.b16 %v5768, %v5764
        %v5989 = vpack.c.b16 %v5769, %v5765
        %v5990 = vpack.c.b16 %v5770, %v5766
        %v5991 = vpack.c.b16 %v5775, %v5771
        %v5992 = vpack.c.b16 %v5776, %v5772
        %v5993 = vpack.c.b16 %v5777, %v5773
        %v5994 = vpack.c.b16 %v5778, %v5774
        %v5995 = vpack.c.b16 %v5783, %v5779
        %v5996 = vpack.c.b16 %v5784, %v5780
        %v5997 = vpack.c.b16 %v5785, %v5781
        %v5998 = vpack.c.b16 %v5786, %v5782
        %v5999 = vpack.c.b16 %v5791, %v5787
        %v6000 = vpack.c.b16 %v5792, %v5788
        %v6001 = vpack.c.b16 %v5793, %v5789
        %v6002 = vpack.c.b16 %v5794, %v5790
        %v6003 = vpack.c.b16 %v5799, %v5795
        %v6004 = vpack.c.b16 %v5800, %v5796
        %v6005 = vpack.c.b16 %v5801, %v5797
        %v6006 = vpack.c.b16 %v5802, %v5798
        %v6007 = vpack.c.b16 %v5807, %v5803
        %v6008 = vpack.c.b16 %v5808, %v5804
        %v6009 = vpack.c.b16 %v5809, %v5805
        %v6010 = vpack.c.b16 %v5810, %v5806
        %v6011 = vpack.c.b16 %v5815, %v5811
        %v6012 = vpack.c.b16 %v5816, %v5812
        %v6013 = vpack.c.b16 %v5817, %v5813
        %v6014 = vpack.c.b16 %v5818, %v5814
        %v6015 = vpack.c.b16 %v5823, %v5819
        %v6016 = vpack.c.b16 %v5824, %v5820
        %v6017 = vpack.c.b16 %v5825, %v5821
        %v6018 = vpack.c.b16 %v5826, %v5822
        %v6019 = vpack.c.b16 %v5831, %v5827
        %v6020 = vpack.c.b16 %v5832, %v5828
        %v6021 = vpack.c.b16 %v5833, %v5829
        %v6022 = vpack.c.b16 %v5834, %v5830
        %v6023 = vpack.c.b16 %v5839, %v5835
        %v6024 = vpack.c.b16 %v5840, %v5836
        %v6025 = vpack.c.b16 %v5841, %v5837
        %v6026 = vpack.c.b16 %v5842, %v5838
        %v6027 = vpack.c.b16 %v5847, %v5843
        %v6028 = vpack.c.b16 %v5848, %v5844
        %v6029 = vpack.c.b16 %v5849, %v5845
        %v6030 = vpack.c.b16 %v5850, %v5846
        %v6031 = vpack.c.b16 %v5855, %v5851
        %v6032 = vpack.c.b16 %v5856, %v5852
        %v6033 = vpack.c.b16 %v5857, %v5853
        %v6034 = vpack.c.b16 %v5858, %v5854
        %v6035 = vpack.c.b16 %v5863, %v5859
        %v6036 = vpack.c.b16 %v5864, %v5860
        %v6037 = vpack.c.b16 %v5865, %v5861
        %v6038 = vpack.c.b16 %v5866, %v5862
        %v6039 = vpack.c.b16 %v5871, %v5867
        %v6040 = vpack.c.b16 %v5872, %v5868
        %v6041 = vpack.c.b16 %v5873, %v5869
        %v6042 = vpack.c.b16 %v5874, %v5870
        %v6043 = vpack.c.b16 %v5879, %v5875
        %v6044 = vpack.c.b16 %v5880, %v5876
        %v6045 = vpack.c.b16 %v5881, %v5877
        %v6046 = vpack.c.b16 %v5882, %v5878
        %v6047 = vpack.c.b16 %v5887, %v5883
        %v6048 = vpack.c.b16 %v5888, %v5884
        %v6049 = vpack.c.b16 %v5889, %v5885
        %v6050 = vpack.c.b16 %v5890, %v5886
        %v6051 = vpack.c.b16 %v5895, %v5891
        %v6052 = vpack.c.b16 %v5896, %v5892
        %v6053 = vpack.c.b16 %v5897, %v5893
        %v6054 = vpack.c.b16 %v5898, %v5894
        %v6055 = vpack.c.b16 %v5903, %v5899
        %v6056 = vpack.c.b16 %v5904, %v5900
        %v6057 = vpack.c.b16 %v5905, %v5901
        %v6058 = vpack.c.b16 %v5906, %v5902
        %v6059 = vpack.c.b16 %v5911, %v5907
        %v6060 = vpack.c.b16 %v5912, %v5908
        %v6061 = vpack.c.b16 %v5913, %v5909
        %v6062 = vpack.c.b16 %v5914, %v5910
        %v6063 = vpack.c.b16 %v5919, %v5915
        %v6064 = vpack.c.b16 %v5920, %v5916
        %v6065 = vpack.c.b16 %v5921, %v5917
        %v6066 = vpack.c.b16 %v5922, %v5918
        %v6067 = vpack.c.b16 %v5927, %v5923
        %v6068 = vpack.c.b16 %v5928, %v5924
        %v6069 = vpack.c.b16 %v5929, %v5925
        %v6070 = vpack.c.b16 %v5930, %v5926
        %v6071 = vpack.c.b16 %v5935, %v5931
        %v6072 = vpack.c.b16 %v5936, %v5932
        %v6073 = vpack.c.b16 %v5937, %v5933
        %v6074 = vpack.c.b16 %v5938, %v5934
        %v6075 = vpack.c.b16 %v5943, %v5939
        %v6076 = vpack.c.b16 %v5944, %v5940
        %v6077 = vpack.c.b16 %v5945, %v5941
        %v6078 = vpack.c.b16 %v5946, %v5942
        %v6079 = vpack.c.b16 %v5951, %v5947
        %v6080 = vpack.c.b16 %v5952, %v5948
        %v6081 = vpack.c.b16 %v5953, %v5949
        %v6082 = vpack.c.b16 %v5954, %v5950
        %6211 = vmatprep.subr.bf16.mxu0 %v5984
        %6212 = vmatpush1.bf16.msra.mxu0 %v5983
        %6213 = vmatprep.subr.bf16.mxu0 %v5980
        %6214 = vmatpush1.bf16.msra.mxu0 %v5979
        %6215 = vmatprep.subr.bf16.mxu0 %v5976
        %6216 = vmatpush1.bf16.msra.mxu0 %v5975
        %6217 = vmatprep.subr.bf16.mxu0 %v5972
        %6218 = vmatpush1.bf16.msra.mxu0 %v5971
        %6219 = vmatprep.subr.bf16.mxu0 %v5968
        %6220 = vmatpush1.bf16.msra.mxu0 %v5967
        %6221 = vmatprep.subr.bf16.mxu0 %v5964
        %6222 = vmatpush1.bf16.msra.mxu0 %v5963
        %6223 = vmatprep.subr.bf16.mxu0 %v5960
        %6224 = vmatpush1.bf16.msra.mxu0 %v5959
        %6225 = vmatprep.subr.bf16.mxu0 %v5956
        %6226 = vmatpush1.bf16.msra.mxu0 %v5955
        %6227 = vmatprep.subr.bf16.mxu0 %v6016
        %6228 = vmatpush2.bf16.msra.mxu0 %v6015
        %6229 = vmatprep.subr.bf16.mxu0 %v6012
        %6230 = vmatpush2.bf16.msra.mxu0 %v6011
        %6231 = vmatprep.subr.bf16.mxu0 %v6008
        %6232 = vmatpush2.bf16.msra.mxu0 %v6007
        %6233 = vmatprep.subr.bf16.mxu0 %v6004
        %6234 = vmatpush2.bf16.msra.mxu0 %v6003
        %6235 = vmatprep.subr.bf16.mxu0 %v6000
        %6236 = vmatpush2.bf16.msra.mxu0 %v5999
        %6237 = vmatprep.subr.bf16.mxu0 %v5996
        %6238 = vmatpush2.bf16.msra.mxu0 %v5995
        %6239 = vmatprep.subr.bf16.mxu0 %v5992
        %6240 = vmatpush2.bf16.msra.mxu0 %v5991
        %6241 = vmatprep.subr.bf16.mxu0 %v5988
        %6242 = vmatpush2.bf16.msra.mxu0 %v5987
        %6243 = vmatprep.mubr.bf16.mxu0 %v4646
        %6244 = vmatmul.mubr.bf16.gmra.mxu0 %v4645
        %v6245 = vpop.f32.mrf.mxu0
        %v6246 = vadd.f32 %v5554, %v6245
        %v6247 = vpop.f32.mrf.mxu0
        %v6248 = vadd.f32 %v5558, %v6247
        %v6249 = vpop.f32.mrf.mxu0
        %v6250 = vadd.f32 %v5554, %v6249
        %v6251 = vpop.f32.mrf.mxu0
        %v6252 = vadd.f32 %v5558, %v6251
        %6253 = vmatprep.mubr.bf16.mxu0 %v4650
        %6254 = vmatmul.mubr.bf16.gmra.mxu0 %v4649
        %v6255 = vpop.f32.mrf.mxu0
        %v6256 = vadd.f32 %v5554, %v6255
        %v6257 = vpop.f32.mrf.mxu0
        %v6258 = vadd.f32 %v5558, %v6257
        %v6259 = vpop.f32.mrf.mxu0
        %v6260 = vadd.f32 %v5554, %v6259
        %v6261 = vpop.f32.mrf.mxu0
        %v6262 = vadd.f32 %v5558, %v6261
        %6263 = vmatprep.mubr.bf16.mxu0 %v4654
        %6264 = vmatmul.mubr.bf16.gmra.mxu0 %v4653
        %v6265 = vpop.f32.mrf.mxu0
        %v6266 = vadd.f32 %v5554, %v6265
        %v6267 = vpop.f32.mrf.mxu0
        %v6268 = vadd.f32 %v5558, %v6267
        %v6269 = vpop.f32.mrf.mxu0
        %v6270 = vadd.f32 %v5554, %v6269
        %v6271 = vpop.f32.mrf.mxu0
        %v6272 = vadd.f32 %v5558, %v6271
        %6273 = vmatprep.mubr.bf16.mxu0 %v4658
        %6274 = vmatmul.mubr.bf16.gmra.mxu0 %v4657
        %v6275 = vpop.f32.mrf.mxu0
        %v6276 = vadd.f32 %v5554, %v6275
        %v6277 = vpop.f32.mrf.mxu0
        %v6278 = vadd.f32 %v5558, %v6277
        %v6279 = vpop.f32.mrf.mxu0
        %v6280 = vadd.f32 %v5554, %v6279
        %v6281 = vpop.f32.mrf.mxu0
        %v6282 = vadd.f32 %v5558, %v6281
        %6283 = vmatprep.mubr.bf16.mxu0 %v4662
        %6284 = vmatmul.mubr.bf16.gmra.mxu0 %v4661
        %v6285 = vpop.f32.mrf.mxu0
        %v6286 = vadd.f32 %v5554, %v6285
        %v6287 = vpop.f32.mrf.mxu0
        %v6288 = vadd.f32 %v5558, %v6287
        %v6289 = vpop.f32.mrf.mxu0
        %v6290 = vadd.f32 %v5554, %v6289
        %v6291 = vpop.f32.mrf.mxu0
        %v6292 = vadd.f32 %v5558, %v6291
        %6293 = vmatprep.mubr.bf16.mxu0 %v4666
        %6294 = vmatmul.mubr.bf16.gmra.mxu0 %v4665
        %v6295 = vpop.f32.mrf.mxu0
        %v6296 = vadd.f32 %v5554, %v6295
        %v6297 = vpop.f32.mrf.mxu0
        %v6298 = vadd.f32 %v5558, %v6297
        %v6299 = vpop.f32.mrf.mxu0
        %v6300 = vadd.f32 %v5554, %v6299
        %v6301 = vpop.f32.mrf.mxu0
        %v6302 = vadd.f32 %v5558, %v6301
        %6303 = vmatprep.mubr.bf16.mxu0 %v4670
        %6304 = vmatmul.mubr.bf16.gmra.mxu0 %v4669
        %v6305 = vpop.f32.mrf.mxu0
        %v6306 = vadd.f32 %v5554, %v6305
        %v6307 = vpop.f32.mrf.mxu0
        %v6308 = vadd.f32 %v5558, %v6307
        %v6309 = vpop.f32.mrf.mxu0
        %v6310 = vadd.f32 %v5554, %v6309
        %v6311 = vpop.f32.mrf.mxu0
        %v6312 = vadd.f32 %v5558, %v6311
        %6313 = vmatprep.mubr.bf16.mxu0 %v4674
        %6314 = vmatmul.mubr.bf16.gmra.mxu0 %v4673
        %v6315 = vpop.f32.mrf.mxu0
        %v6316 = vadd.f32 %v5554, %v6315
        %v6317 = vpop.f32.mrf.mxu0
        %v6318 = vadd.f32 %v5558, %v6317
        %v6319 = vpop.f32.mrf.mxu0
        %v6320 = vadd.f32 %v5554, %v6319
        %v6321 = vpop.f32.mrf.mxu0
        %v6322 = vadd.f32 %v5558, %v6321
        %6323 = vdwg.mxu0
        %6324 = vmatprep.subr.bf16.mxu0 %v6048
        %6325 = vmatpush1.bf16.msra.mxu0 %v6047
        %6326 = vmatprep.subr.bf16.mxu0 %v6044
        %6327 = vmatpush1.bf16.msra.mxu0 %v6043
        %6328 = vmatprep.subr.bf16.mxu0 %v6040
        %6329 = vmatpush1.bf16.msra.mxu0 %v6039
        %6330 = vmatprep.subr.bf16.mxu0 %v6036
        %6331 = vmatpush1.bf16.msra.mxu0 %v6035
        %6332 = vmatprep.subr.bf16.mxu0 %v6032
        %6333 = vmatpush1.bf16.msra.mxu0 %v6031
        %6334 = vmatprep.subr.bf16.mxu0 %v6028
        %6335 = vmatpush1.bf16.msra.mxu0 %v6027
        %6336 = vmatprep.subr.bf16.mxu0 %v6024
        %6337 = vmatpush1.bf16.msra.mxu0 %v6023
        %6338 = vmatprep.subr.bf16.mxu0 %v6020
        %6339 = vmatpush1.bf16.msra.mxu0 %v6019
        %6340 = vmatprep.subr.bf16.mxu0 %v6080
        %6341 = vmatpush2.bf16.msra.mxu0 %v6079
        %6342 = vmatprep.subr.bf16.mxu0 %v6076
        %6343 = vmatpush2.bf16.msra.mxu0 %v6075
        %6344 = vmatprep.subr.bf16.mxu0 %v6072
        %6345 = vmatpush2.bf16.msra.mxu0 %v6071
        %6346 = vmatprep.subr.bf16.mxu0 %v6068
        %6347 = vmatpush2.bf16.msra.mxu0 %v6067
        %6348 = vmatprep.subr.bf16.mxu0 %v6064
        %6349 = vmatpush2.bf16.msra.mxu0 %v6063
        %6350 = vmatprep.subr.bf16.mxu0 %v6060
        %6351 = vmatpush2.bf16.msra.mxu0 %v6059
        %6352 = vmatprep.subr.bf16.mxu0 %v6056
        %6353 = vmatpush2.bf16.msra.mxu0 %v6055
        %6354 = vmatprep.subr.bf16.mxu0 %v6052
        %6355 = vmatpush2.bf16.msra.mxu0 %v6051
        %6356 = vmatprep.mubr.bf16.mxu0 %v4648
        %6357 = vmatmul.mubr.bf16.gmra.mxu0 %v4647
        %v6358 = vpop.f32.mrf.mxu0
        %v6359 = vadd.f32 %v6246, %v6358
        %v6360 = vpop.f32.mrf.mxu0
        %v6361 = vadd.f32 %v6248, %v6360
        %v6362 = vpop.f32.mrf.mxu0
        %v6363 = vadd.f32 %v6250, %v6362
        %v6364 = vpop.f32.mrf.mxu0
        %v6365 = vadd.f32 %v6252, %v6364
        %6366 = vmatprep.mubr.bf16.mxu0 %v4652
        %6367 = vmatmul.mubr.bf16.gmra.mxu0 %v4651
        %v6368 = vpop.f32.mrf.mxu0
        %v6369 = vadd.f32 %v6256, %v6368
        %v6370 = vpop.f32.mrf.mxu0
        %v6371 = vadd.f32 %v6258, %v6370
        %v6372 = vpop.f32.mrf.mxu0
        %v6373 = vadd.f32 %v6260, %v6372
        %v6374 = vpop.f32.mrf.mxu0
        %v6375 = vadd.f32 %v6262, %v6374
        %6376 = vmatprep.mubr.bf16.mxu0 %v4656
        %6377 = vmatmul.mubr.bf16.gmra.mxu0 %v4655
        %v6378 = vpop.f32.mrf.mxu0
        %v6379 = vadd.f32 %v6266, %v6378
        %v6380 = vpop.f32.mrf.mxu0
        %v6381 = vadd.f32 %v6268, %v6380
        %v6382 = vpop.f32.mrf.mxu0
        %v6383 = vadd.f32 %v6270, %v6382
        %v6384 = vpop.f32.mrf.mxu0
        %v6385 = vadd.f32 %v6272, %v6384
        %6386 = vmatprep.mubr.bf16.mxu0 %v4660
        %6387 = vmatmul.mubr.bf16.gmra.mxu0 %v4659
        %v6388 = vpop.f32.mrf.mxu0
        %v6389 = vadd.f32 %v6276, %v6388
        %v6390 = vpop.f32.mrf.mxu0
        %v6391 = vadd.f32 %v6278, %v6390
        %v6392 = vpop.f32.mrf.mxu0
        %v6393 = vadd.f32 %v6280, %v6392
        %v6394 = vpop.f32.mrf.mxu0
        %v6395 = vadd.f32 %v6282, %v6394
        %6396 = vmatprep.mubr.bf16.mxu0 %v4664
        %6397 = vmatmul.mubr.bf16.gmra.mxu0 %v4663
        %v6398 = vpop.f32.mrf.mxu0
        %v6399 = vadd.f32 %v6286, %v6398
        %v6400 = vpop.f32.mrf.mxu0
        %v6401 = vadd.f32 %v6288, %v6400
        %v6402 = vpop.f32.mrf.mxu0
        %v6403 = vadd.f32 %v6290, %v6402
        %v6404 = vpop.f32.mrf.mxu0
        %v6405 = vadd.f32 %v6292, %v6404
        %6406 = vmatprep.mubr.bf16.mxu0 %v4668
        %6407 = vmatmul.mubr.bf16.gmra.mxu0 %v4667
        %v6408 = vpop.f32.mrf.mxu0
        %v6409 = vadd.f32 %v6296, %v6408
        %v6410 = vpop.f32.mrf.mxu0
        %v6411 = vadd.f32 %v6298, %v6410
        %v6412 = vpop.f32.mrf.mxu0
        %v6413 = vadd.f32 %v6300, %v6412
        %v6414 = vpop.f32.mrf.mxu0
        %v6415 = vadd.f32 %v6302, %v6414
        %6416 = vmatprep.mubr.bf16.mxu0 %v4672
        %6417 = vmatmul.mubr.bf16.gmra.mxu0 %v4671
        %v6418 = vpop.f32.mrf.mxu0
        %v6419 = vadd.f32 %v6306, %v6418
        %v6420 = vpop.f32.mrf.mxu0
        %v6421 = vadd.f32 %v6308, %v6420
        %v6422 = vpop.f32.mrf.mxu0
        %v6423 = vadd.f32 %v6310, %v6422
        %v6424 = vpop.f32.mrf.mxu0
        %v6425 = vadd.f32 %v6312, %v6424
        %6426 = vmatprep.mubr.bf16.mxu0 %v4676
        %6427 = vmatmul.mubr.bf16.gmra.mxu0 %v4675
        %v6428 = vpop.f32.mrf.mxu0
        %v6429 = vadd.f32 %v6316, %v6428
        %v6430 = vpop.f32.mrf.mxu0
        %v6431 = vadd.f32 %v6318, %v6430
        %v6432 = vpop.f32.mrf.mxu0
        %v6433 = vadd.f32 %v6320, %v6432
        %v6434 = vpop.f32.mrf.mxu0
        %v6435 = vadd.f32 %v6322, %v6434
        %6436 = vdwg.mxu0
        %6437 = vmatprep.subr.bf16.mxu0 %v5986
        %6438 = vmatpush1.bf16.msra.mxu0 %v5985
        %6439 = vmatprep.subr.bf16.mxu0 %v5982
        %6440 = vmatpush1.bf16.msra.mxu0 %v5981
        %6441 = vmatprep.subr.bf16.mxu0 %v5978
        %6442 = vmatpush1.bf16.msra.mxu0 %v5977
        %6443 = vmatprep.subr.bf16.mxu0 %v5974
        %6444 = vmatpush1.bf16.msra.mxu0 %v5973
        %6445 = vmatprep.subr.bf16.mxu0 %v5970
        %6446 = vmatpush1.bf16.msra.mxu0 %v5969
        %6447 = vmatprep.subr.bf16.mxu0 %v5966
        %6448 = vmatpush1.bf16.msra.mxu0 %v5965
        %6449 = vmatprep.subr.bf16.mxu0 %v5962
        %6450 = vmatpush1.bf16.msra.mxu0 %v5961
        %6451 = vmatprep.subr.bf16.mxu0 %v5958
        %6452 = vmatpush1.bf16.msra.mxu0 %v5957
        %6453 = vmatprep.subr.bf16.mxu0 %v6018
        %6454 = vmatpush2.bf16.msra.mxu0 %v6017
        %6455 = vmatprep.subr.bf16.mxu0 %v6014
        %6456 = vmatpush2.bf16.msra.mxu0 %v6013
        %6457 = vmatprep.subr.bf16.mxu0 %v6010
        %6458 = vmatpush2.bf16.msra.mxu0 %v6009
        %6459 = vmatprep.subr.bf16.mxu0 %v6006
        %6460 = vmatpush2.bf16.msra.mxu0 %v6005
        %6461 = vmatprep.subr.bf16.mxu0 %v6002
        %6462 = vmatpush2.bf16.msra.mxu0 %v6001
        %6463 = vmatprep.subr.bf16.mxu0 %v5998
        %6464 = vmatpush2.bf16.msra.mxu0 %v5997
        %6465 = vmatprep.subr.bf16.mxu0 %v5994
        %6466 = vmatpush2.bf16.msra.mxu0 %v5993
        %6467 = vmatprep.subr.bf16.mxu0 %v5990
        %6468 = vmatpush2.bf16.msra.mxu0 %v5989
        %6469 = vmatprep.mubr.bf16.mxu0 %v4646
        %6470 = vmatmul.mubr.bf16.gmra.mxu0 %v4645
        %v6471 = vpop.f32.mrf.mxu0
        %v6472 = vadd.f32 %v5562, %v6471
        %v6473 = vpop.f32.mrf.mxu0
        %v6474 = vadd.f32 %v5566, %v6473
        %v6475 = vpop.f32.mrf.mxu0
        %v6476 = vadd.f32 %v5562, %v6475
        %v6477 = vpop.f32.mrf.mxu0
        %v6478 = vadd.f32 %v5566, %v6477
        %6479 = vmatprep.mubr.bf16.mxu0 %v4650
        %6480 = vmatmul.mubr.bf16.gmra.mxu0 %v4649
        %v6481 = vpop.f32.mrf.mxu0
        %v6482 = vadd.f32 %v5562, %v6481
        %v6483 = vpop.f32.mrf.mxu0
        %v6484 = vadd.f32 %v5566, %v6483
        %v6485 = vpop.f32.mrf.mxu0
        %v6486 = vadd.f32 %v5562, %v6485
        %v6487 = vpop.f32.mrf.mxu0
        %v6488 = vadd.f32 %v5566, %v6487
        %6489 = vmatprep.mubr.bf16.mxu0 %v4654
        %6490 = vmatmul.mubr.bf16.gmra.mxu0 %v4653
        %v6491 = vpop.f32.mrf.mxu0
        %v6492 = vadd.f32 %v5562, %v6491
        %v6493 = vpop.f32.mrf.mxu0
        %v6494 = vadd.f32 %v5566, %v6493
        %v6495 = vpop.f32.mrf.mxu0
        %v6496 = vadd.f32 %v5562, %v6495
        %v6497 = vpop.f32.mrf.mxu0
        %v6498 = vadd.f32 %v5566, %v6497
        %6499 = vmatprep.mubr.bf16.mxu0 %v4658
        %6500 = vmatmul.mubr.bf16.gmra.mxu0 %v4657
        %v6501 = vpop.f32.mrf.mxu0
        %v6502 = vadd.f32 %v5562, %v6501
        %v6503 = vpop.f32.mrf.mxu0
        %v6504 = vadd.f32 %v5566, %v6503
        %v6505 = vpop.f32.mrf.mxu0
        %v6506 = vadd.f32 %v5562, %v6505
        %v6507 = vpop.f32.mrf.mxu0
        %v6508 = vadd.f32 %v5566, %v6507
        %6509 = vmatprep.mubr.bf16.mxu0 %v4662
        %6510 = vmatmul.mubr.bf16.gmra.mxu0 %v4661
        %v6511 = vpop.f32.mrf.mxu0
        %v6512 = vadd.f32 %v5562, %v6511
        %v6513 = vpop.f32.mrf.mxu0
        %v6514 = vadd.f32 %v5566, %v6513
        %v6515 = vpop.f32.mrf.mxu0
        %v6516 = vadd.f32 %v5562, %v6515
        %v6517 = vpop.f32.mrf.mxu0
        %v6518 = vadd.f32 %v5566, %v6517
        %6519 = vmatprep.mubr.bf16.mxu0 %v4666
        %6520 = vmatmul.mubr.bf16.gmra.mxu0 %v4665
        %v6521 = vpop.f32.mrf.mxu0
        %v6522 = vadd.f32 %v5562, %v6521
        %v6523 = vpop.f32.mrf.mxu0
        %v6524 = vadd.f32 %v5566, %v6523
        %v6525 = vpop.f32.mrf.mxu0
        %v6526 = vadd.f32 %v5562, %v6525
        %v6527 = vpop.f32.mrf.mxu0
        %v6528 = vadd.f32 %v5566, %v6527
        %6529 = vmatprep.mubr.bf16.mxu0 %v4670
        %6530 = vmatmul.mubr.bf16.gmra.mxu0 %v4669
        %v6531 = vpop.f32.mrf.mxu0
        %v6532 = vadd.f32 %v5562, %v6531
        %v6533 = vpop.f32.mrf.mxu0
        %v6534 = vadd.f32 %v5566, %v6533
        %v6535 = vpop.f32.mrf.mxu0
        %v6536 = vadd.f32 %v5562, %v6535
        %v6537 = vpop.f32.mrf.mxu0
        %v6538 = vadd.f32 %v5566, %v6537
        %6539 = vmatprep.mubr.bf16.mxu0 %v4674
        %6540 = vmatmul.mubr.bf16.gmra.mxu0 %v4673
        %v6541 = vpop.f32.mrf.mxu0
        %v6542 = vadd.f32 %v5562, %v6541
        %v6543 = vpop.f32.mrf.mxu0
        %v6544 = vadd.f32 %v5566, %v6543
        %v6545 = vpop.f32.mrf.mxu0
        %v6546 = vadd.f32 %v5562, %v6545
        %v6547 = vpop.f32.mrf.mxu0
        %v6548 = vadd.f32 %v5566, %v6547
        %6549 = vdwg.mxu0
        %6550 = vmatprep.subr.bf16.mxu0 %v6050
        %6551 = vmatpush1.bf16.msra.mxu0 %v6049
        %6552 = vmatprep.subr.bf16.mxu0 %v6046
        %6553 = vmatpush1.bf16.msra.mxu0 %v6045
        %6554 = vmatprep.subr.bf16.mxu0 %v6042
        %6555 = vmatpush1.bf16.msra.mxu0 %v6041
        %6556 = vmatprep.subr.bf16.mxu0 %v6038
        %6557 = vmatpush1.bf16.msra.mxu0 %v6037
        %6558 = vmatprep.subr.bf16.mxu0 %v6034
        %6559 = vmatpush1.bf16.msra.mxu0 %v6033
        %6560 = vmatprep.subr.bf16.mxu0 %v6030
        %6561 = vmatpush1.bf16.msra.mxu0 %v6029
        %6562 = vmatprep.subr.bf16.mxu0 %v6026
        %6563 = vmatpush1.bf16.msra.mxu0 %v6025
        %6564 = vmatprep.subr.bf16.mxu0 %v6022
        %6565 = vmatpush1.bf16.msra.mxu0 %v6021
        %6566 = vmatprep.subr.bf16.mxu0 %v6082
        %6567 = vmatpush2.bf16.msra.mxu0 %v6081
        %6568 = vmatprep.subr.bf16.mxu0 %v6078
        %6569 = vmatpush2.bf16.msra.mxu0 %v6077
        %6570 = vmatprep.subr.bf16.mxu0 %v6074
        %6571 = vmatpush2.bf16.msra.mxu0 %v6073
        %6572 = vmatprep.subr.bf16.mxu0 %v6070
        %6573 = vmatpush2.bf16.msra.mxu0 %v6069
        %6574 = vmatprep.subr.bf16.mxu0 %v6066
        %6575 = vmatpush2.bf16.msra.mxu0 %v6065
        %6576 = vmatprep.subr.bf16.mxu0 %v6062
        %6577 = vmatpush2.bf16.msra.mxu0 %v6061
        %6578 = vmatprep.subr.bf16.mxu0 %v6058
        %6579 = vmatpush2.bf16.msra.mxu0 %v6057
        %6580 = vmatprep.subr.bf16.mxu0 %v6054
        %6581 = vmatpush2.bf16.msra.mxu0 %v6053
        %6582 = vmatprep.mubr.bf16.mxu0 %v4648
        %6583 = vmatmul.mubr.bf16.gmra.mxu0 %v4647
        %v6584 = vpop.f32.mrf.mxu0
        %v6585 = vadd.f32 %v6472, %v6584
        %v6586 = vpop.f32.mrf.mxu0
        %v6587 = vadd.f32 %v6474, %v6586
        %v6588 = vpop.f32.mrf.mxu0
        %v6589 = vadd.f32 %v6476, %v6588
        %v6590 = vpop.f32.mrf.mxu0
        %v6591 = vadd.f32 %v6478, %v6590
        %6592 = vmatprep.mubr.bf16.mxu0 %v4652
        %6593 = vmatmul.mubr.bf16.gmra.mxu0 %v4651
        %v6594 = vpop.f32.mrf.mxu0
        %v6595 = vadd.f32 %v6482, %v6594
        %v6596 = vpop.f32.mrf.mxu0
        %v6597 = vadd.f32 %v6484, %v6596
        %v6598 = vpop.f32.mrf.mxu0
        %v6599 = vadd.f32 %v6486, %v6598
        %v6600 = vpop.f32.mrf.mxu0
        %v6601 = vadd.f32 %v6488, %v6600
        %6602 = vmatprep.mubr.bf16.mxu0 %v4656
        %6603 = vmatmul.mubr.bf16.gmra.mxu0 %v4655
        %v6604 = vpop.f32.mrf.mxu0
        %v6605 = vadd.f32 %v6492, %v6604
        %v6606 = vpop.f32.mrf.mxu0
        %v6607 = vadd.f32 %v6494, %v6606
        %v6608 = vpop.f32.mrf.mxu0
        %v6609 = vadd.f32 %v6496, %v6608
        %v6610 = vpop.f32.mrf.mxu0
        %v6611 = vadd.f32 %v6498, %v6610
        %6612 = vmatprep.mubr.bf16.mxu0 %v4660
        %6613 = vmatmul.mubr.bf16.gmra.mxu0 %v4659
        %v6614 = vpop.f32.mrf.mxu0
        %v6615 = vadd.f32 %v6502, %v6614
        %v6616 = vpop.f32.mrf.mxu0
        %v6617 = vadd.f32 %v6504, %v6616
        %v6618 = vpop.f32.mrf.mxu0
        %v6619 = vadd.f32 %v6506, %v6618
        %v6620 = vpop.f32.mrf.mxu0
        %v6621 = vadd.f32 %v6508, %v6620
        %6622 = vmatprep.mubr.bf16.mxu0 %v4664
        %6623 = vmatmul.mubr.bf16.gmra.mxu0 %v4663
        %v6624 = vpop.f32.mrf.mxu0
        %v6625 = vadd.f32 %v6512, %v6624
        %v6626 = vpop.f32.mrf.mxu0
        %v6627 = vadd.f32 %v6514, %v6626
        %v6628 = vpop.f32.mrf.mxu0
        %v6629 = vadd.f32 %v6516, %v6628
        %v6630 = vpop.f32.mrf.mxu0
        %v6631 = vadd.f32 %v6518, %v6630
        %6632 = vmatprep.mubr.bf16.mxu0 %v4668
        %6633 = vmatmul.mubr.bf16.gmra.mxu0 %v4667
        %v6634 = vpop.f32.mrf.mxu0
        %v6635 = vadd.f32 %v6522, %v6634
        %v6636 = vpop.f32.mrf.mxu0
        %v6637 = vadd.f32 %v6524, %v6636
        %v6638 = vpop.f32.mrf.mxu0
        %v6639 = vadd.f32 %v6526, %v6638
        %v6640 = vpop.f32.mrf.mxu0
        %v6641 = vadd.f32 %v6528, %v6640
        %6642 = vmatprep.mubr.bf16.mxu0 %v4672
        %6643 = vmatmul.mubr.bf16.gmra.mxu0 %v4671
        %v6644 = vpop.f32.mrf.mxu0
        %v6645 = vadd.f32 %v6532, %v6644
        %v6646 = vpop.f32.mrf.mxu0
        %v6647 = vadd.f32 %v6534, %v6646
        %v6648 = vpop.f32.mrf.mxu0
        %v6649 = vadd.f32 %v6536, %v6648
        %v6650 = vpop.f32.mrf.mxu0
        %v6651 = vadd.f32 %v6538, %v6650
        %6652 = vmatprep.mubr.bf16.mxu0 %v4676
        %6653 = vmatmul.mubr.bf16.gmra.mxu0 %v4675
        %v6654 = vpop.f32.mrf.mxu0
        %v6655 = vadd.f32 %v6542, %v6654
        %v6656 = vpop.f32.mrf.mxu0
        %v6657 = vadd.f32 %v6544, %v6656
        %v6658 = vpop.f32.mrf.mxu0
        %v6659 = vadd.f32 %v6546, %v6658
        %v6660 = vpop.f32.mrf.mxu0
        %v6661 = vadd.f32 %v6548, %v6660
        %6662 = vdwg.mxu0
        %v6663 = vmul.f32 %v6359, 0.5
        %v6664 = vmul.f32 %v6361, 0.5
        %v6665 = vmul.f32 %v6585, 0.5
        %v6666 = vmul.f32 %v6587, 0.5
        %v6667 = vmul.f32 %v6363, 0.5
        %v6668 = vmul.f32 %v6365, 0.5
        %v6669 = vmul.f32 %v6589, 0.5
        %v6670 = vmul.f32 %v6591, 0.5
        %v6671 = vmul.f32 %v6369, 0.5
        %v6672 = vmul.f32 %v6371, 0.5
        %v6673 = vmul.f32 %v6595, 0.5
        %v6674 = vmul.f32 %v6597, 0.5
        %v6675 = vmul.f32 %v6373, 0.5
        %v6676 = vmul.f32 %v6375, 0.5
        %v6677 = vmul.f32 %v6599, 0.5
        %v6678 = vmul.f32 %v6601, 0.5
        %v6679 = vmul.f32 %v6379, 0.5
        %v6680 = vmul.f32 %v6381, 0.5
        %v6681 = vmul.f32 %v6605, 0.5
        %v6682 = vmul.f32 %v6607, 0.5
        %v6683 = vmul.f32 %v6383, 0.5
        %v6684 = vmul.f32 %v6385, 0.5
        %v6685 = vmul.f32 %v6609, 0.5
        %v6686 = vmul.f32 %v6611, 0.5
        %v6687 = vmul.f32 %v6389, 0.5
        %v6688 = vmul.f32 %v6391, 0.5
        %v6689 = vmul.f32 %v6615, 0.5
        %v6690 = vmul.f32 %v6617, 0.5
        %v6691 = vmul.f32 %v6393, 0.5
        %v6692 = vmul.f32 %v6395, 0.5
        %v6693 = vmul.f32 %v6619, 0.5
        %v6694 = vmul.f32 %v6621, 0.5
        %v6695 = vmul.f32 %v6399, 0.5
        %v6696 = vmul.f32 %v6401, 0.5
        %v6697 = vmul.f32 %v6625, 0.5
        %v6698 = vmul.f32 %v6627, 0.5
        %v6699 = vmul.f32 %v6403, 0.5
        %v6700 = vmul.f32 %v6405, 0.5
        %v6701 = vmul.f32 %v6629, 0.5
        %v6702 = vmul.f32 %v6631, 0.5
        %v6703 = vmul.f32 %v6409, 0.5
        %v6704 = vmul.f32 %v6411, 0.5
        %v6705 = vmul.f32 %v6635, 0.5
        %v6706 = vmul.f32 %v6637, 0.5
        %v6707 = vmul.f32 %v6413, 0.5
        %v6708 = vmul.f32 %v6415, 0.5
        %v6709 = vmul.f32 %v6639, 0.5
        %v6710 = vmul.f32 %v6641, 0.5
        %v6711 = vmul.f32 %v6419, 0.5
        %v6712 = vmul.f32 %v6421, 0.5
        %v6713 = vmul.f32 %v6645, 0.5
        %v6714 = vmul.f32 %v6647, 0.5
        %v6715 = vmul.f32 %v6423, 0.5
        %v6716 = vmul.f32 %v6425, 0.5
        %v6717 = vmul.f32 %v6649, 0.5
        %v6718 = vmul.f32 %v6651, 0.5
        %v6719 = vmul.f32 %v6429, 0.5
        %v6720 = vmul.f32 %v6431, 0.5
        %v6721 = vmul.f32 %v6655, 0.5
        %v6722 = vmul.f32 %v6657, 0.5
        %v6723 = vmul.f32 %v6433, 0.5
        %v6724 = vmul.f32 %v6435, 0.5
        %v6725 = vmul.f32 %v6659, 0.5
        %v6726 = vmul.f32 %v6661, 0.5
        %v6727 = vtanh.pop %v6663
        %v6728 = vtanh.pop %v6664
        %v6729 = vtanh.pop %v6665
        %v6730 = vtanh.pop %v6666
        %v6731 = vtanh.pop %v6667
        %v6732 = vtanh.pop %v6668
        %v6733 = vtanh.pop %v6669
        %v6734 = vtanh.pop %v6670
        %v6735 = vtanh.pop %v6671
        %v6736 = vtanh.pop %v6672
        %v6737 = vtanh.pop %v6673
        %v6738 = vtanh.pop %v6674
        %v6739 = vtanh.pop %v6675
        %v6740 = vtanh.pop %v6676
        %v6741 = vtanh.pop %v6677
        %v6742 = vtanh.pop %v6678
        %v6743 = vtanh.pop %v6679
        %v6744 = vtanh.pop %v6680
        %v6745 = vtanh.pop %v6681
        %v6746 = vtanh.pop %v6682
        %v6747 = vtanh.pop %v6683
        %v6748 = vtanh.pop %v6684
        %v6749 = vtanh.pop %v6685
        %v6750 = vtanh.pop %v6686
        %v6751 = vtanh.pop %v6687
        %v6752 = vtanh.pop %v6688
        %v6753 = vtanh.pop %v6689
        %v6754 = vtanh.pop %v6690
        %v6755 = vtanh.pop %v6691
        %v6756 = vtanh.pop %v6692
        %v6757 = vtanh.pop %v6693
        %v6758 = vtanh.pop %v6694
        %v6759 = vtanh.pop %v6695
        %v6760 = vtanh.pop %v6696
        %v6761 = vtanh.pop %v6697
        %v6762 = vtanh.pop %v6698
        %v6763 = vtanh.pop %v6699
        %v6764 = vtanh.pop %v6700
        %v6765 = vtanh.pop %v6701
        %v6766 = vtanh.pop %v6702
        %v6767 = vtanh.pop %v6703
        %v6768 = vtanh.pop %v6704
        %v6769 = vtanh.pop %v6705
        %v6770 = vtanh.pop %v6706
        %v6771 = vtanh.pop %v6707
        %v6772 = vtanh.pop %v6708
        %v6773 = vtanh.pop %v6709
        %v6774 = vtanh.pop %v6710
        %v6775 = vtanh.pop %v6711
        %v6776 = vtanh.pop %v6712
        %v6777 = vtanh.pop %v6713
        %v6778 = vtanh.pop %v6714
        %v6779 = vtanh.pop %v6715
        %v6780 = vtanh.pop %v6716
        %v6781 = vtanh.pop %v6717
        %v6782 = vtanh.pop %v6718
        %v6783 = vtanh.pop %v6719
        %v6784 = vtanh.pop %v6720
        %v6785 = vtanh.pop %v6721
        %v6786 = vtanh.pop %v6722
        %v6787 = vtanh.pop %v6723
        %v6788 = vtanh.pop %v6724
        %v6789 = vtanh.pop %v6725
        %v6790 = vtanh.pop %v6726
        %v6791 = vmul.f32 %v6727, 0.5
        %v6792 = vmul.f32 %v6728, 0.5
        %v6793 = vmul.f32 %v6729, 0.5
        %v6794 = vmul.f32 %v6730, 0.5
        %v6795 = vmul.f32 %v6731, 0.5
        %v6796 = vmul.f32 %v6732, 0.5
        %v6797 = vmul.f32 %v6733, 0.5
        %v6798 = vmul.f32 %v6734, 0.5
        %v6799 = vmul.f32 %v6735, 0.5
        %v6800 = vmul.f32 %v6736, 0.5
        %v6801 = vmul.f32 %v6737, 0.5
        %v6802 = vmul.f32 %v6738, 0.5
        %v6803 = vmul.f32 %v6739, 0.5
        %v6804 = vmul.f32 %v6740, 0.5
        %v6805 = vmul.f32 %v6741, 0.5
        %v6806 = vmul.f32 %v6742, 0.5
        %v6807 = vmul.f32 %v6743, 0.5
        %v6808 = vmul.f32 %v6744, 0.5
        %v6809 = vmul.f32 %v6745, 0.5
        %v6810 = vmul.f32 %v6746, 0.5
        %v6811 = vmul.f32 %v6747, 0.5
        %v6812 = vmul.f32 %v6748, 0.5
        %v6813 = vmul.f32 %v6749, 0.5
        %v6814 = vmul.f32 %v6750, 0.5
        %v6815 = vmul.f32 %v6751, 0.5
        %v6816 = vmul.f32 %v6752, 0.5
        %v6817 = vmul.f32 %v6753, 0.5
        %v6818 = vmul.f32 %v6754, 0.5
        %v6819 = vmul.f32 %v6755, 0.5
        %v6820 = vmul.f32 %v6756, 0.5
        %v6821 = vmul.f32 %v6757, 0.5
        %v6822 = vmul.f32 %v6758, 0.5
        %v6823 = vmul.f32 %v6759, 0.5
        %v6824 = vmul.f32 %v6760, 0.5
        %v6825 = vmul.f32 %v6761, 0.5
        %v6826 = vmul.f32 %v6762, 0.5
        %v6827 = vmul.f32 %v6763, 0.5
        %v6828 = vmul.f32 %v6764, 0.5
        %v6829 = vmul.f32 %v6765, 0.5
        %v6830 = vmul.f32 %v6766, 0.5
        %v6831 = vmul.f32 %v6767, 0.5
        %v6832 = vmul.f32 %v6768, 0.5
        %v6833 = vmul.f32 %v6769, 0.5
        %v6834 = vmul.f32 %v6770, 0.5
        %v6835 = vmul.f32 %v6771, 0.5
        %v6836 = vmul.f32 %v6772, 0.5
        %v6837 = vmul.f32 %v6773, 0.5
        %v6838 = vmul.f32 %v6774, 0.5
        %v6839 = vmul.f32 %v6775, 0.5
        %v6840 = vmul.f32 %v6776, 0.5
        %v6841 = vmul.f32 %v6777, 0.5
        %v6842 = vmul.f32 %v6778, 0.5
        %v6843 = vmul.f32 %v6779, 0.5
        %v6844 = vmul.f32 %v6780, 0.5
        %v6845 = vmul.f32 %v6781, 0.5
        %v6846 = vmul.f32 %v6782, 0.5
        %v6847 = vmul.f32 %v6783, 0.5
        %v6848 = vmul.f32 %v6784, 0.5
        %v6849 = vmul.f32 %v6785, 0.5
        %v6850 = vmul.f32 %v6786, 0.5
        %v6851 = vmul.f32 %v6787, 0.5
        %v6852 = vmul.f32 %v6788, 0.5
        %v6853 = vmul.f32 %v6789, 0.5
        %v6854 = vmul.f32 %v6790, 0.5
        %v6855 = vadd.f32 %v6791, 0.5
        %v6856 = vadd.f32 %v6792, 0.5
        %v6857 = vadd.f32 %v6793, 0.5
        %v6858 = vadd.f32 %v6794, 0.5
        %v6859 = vadd.f32 %v6795, 0.5
        %v6860 = vadd.f32 %v6796, 0.5
        %v6861 = vadd.f32 %v6797, 0.5
        %v6862 = vadd.f32 %v6798, 0.5
        %v6863 = vadd.f32 %v6799, 0.5
        %v6864 = vadd.f32 %v6800, 0.5
        %v6865 = vadd.f32 %v6801, 0.5
        %v6866 = vadd.f32 %v6802, 0.5
        %v6867 = vadd.f32 %v6803, 0.5
        %v6868 = vadd.f32 %v6804, 0.5
        %v6869 = vadd.f32 %v6805, 0.5
        %v6870 = vadd.f32 %v6806, 0.5
        %v6871 = vadd.f32 %v6807, 0.5
        %v6872 = vadd.f32 %v6808, 0.5
        %v6873 = vadd.f32 %v6809, 0.5
        %v6874 = vadd.f32 %v6810, 0.5
        %v6875 = vadd.f32 %v6811, 0.5
        %v6876 = vadd.f32 %v6812, 0.5
        %v6877 = vadd.f32 %v6813, 0.5
        %v6878 = vadd.f32 %v6814, 0.5
        %v6879 = vadd.f32 %v6815, 0.5
        %v6880 = vadd.f32 %v6816, 0.5
        %v6881 = vadd.f32 %v6817, 0.5
        %v6882 = vadd.f32 %v6818, 0.5
        %v6883 = vadd.f32 %v6819, 0.5
        %v6884 = vadd.f32 %v6820, 0.5
        %v6885 = vadd.f32 %v6821, 0.5
        %v6886 = vadd.f32 %v6822, 0.5
        %v6887 = vadd.f32 %v6823, 0.5
        %v6888 = vadd.f32 %v6824, 0.5
        %v6889 = vadd.f32 %v6825, 0.5
        %v6890 = vadd.f32 %v6826, 0.5
        %v6891 = vadd.f32 %v6827, 0.5
        %v6892 = vadd.f32 %v6828, 0.5
        %v6893 = vadd.f32 %v6829, 0.5
        %v6894 = vadd.f32 %v6830, 0.5
        %v6895 = vadd.f32 %v6831, 0.5
        %v6896 = vadd.f32 %v6832, 0.5
        %v6897 = vadd.f32 %v6833, 0.5
        %v6898 = vadd.f32 %v6834, 0.5
        %v6899 = vadd.f32 %v6835, 0.5
        %v6900 = vadd.f32 %v6836, 0.5
        %v6901 = vadd.f32 %v6837, 0.5
        %v6902 = vadd.f32 %v6838, 0.5
        %v6903 = vadd.f32 %v6839, 0.5
        %v6904 = vadd.f32 %v6840, 0.5
        %v6905 = vadd.f32 %v6841, 0.5
        %v6906 = vadd.f32 %v6842, 0.5
        %v6907 = vadd.f32 %v6843, 0.5
        %v6908 = vadd.f32 %v6844, 0.5
        %v6909 = vadd.f32 %v6845, 0.5
        %v6910 = vadd.f32 %v6846, 0.5
        %v6911 = vadd.f32 %v6847, 0.5
        %v6912 = vadd.f32 %v6848, 0.5
        %v6913 = vadd.f32 %v6849, 0.5
        %v6914 = vadd.f32 %v6850, 0.5
        %v6915 = vadd.f32 %v6851, 0.5
        %v6916 = vadd.f32 %v6852, 0.5
        %v6917 = vadd.f32 %v6853, 0.5
        %v6918 = vadd.f32 %v6854, 0.5
        %v6919 = vpack.c.bf16 %v6859, %v6855
        %v6920 = vpack.c.bf16 %v6860, %v6856
        %v6921 = vpack.c.bf16 %v6861, %v6857
        %v6922 = vpack.c.bf16 %v6862, %v6858
        %v6923 = vpack.c.bf16 %v6867, %v6863
        %v6924 = vpack.c.bf16 %v6868, %v6864
        %v6925 = vpack.c.bf16 %v6869, %v6865
        %v6926 = vpack.c.bf16 %v6870, %v6866
        %v6927 = vpack.c.bf16 %v6875, %v6871
        %v6928 = vpack.c.bf16 %v6876, %v6872
        %v6929 = vpack.c.bf16 %v6877, %v6873
        %v6930 = vpack.c.bf16 %v6878, %v6874
        %v6931 = vpack.c.bf16 %v6883, %v6879
        %v6932 = vpack.c.bf16 %v6884, %v6880
        %v6933 = vpack.c.bf16 %v6885, %v6881
        %v6934 = vpack.c.bf16 %v6886, %v6882
        %v6935 = vpack.c.bf16 %v6891, %v6887
        %v6936 = vpack.c.bf16 %v6892, %v6888
        %v6937 = vpack.c.bf16 %v6893, %v6889
        %v6938 = vpack.c.bf16 %v6894, %v6890
        %v6939 = vpack.c.bf16 %v6899, %v6895
        %v6940 = vpack.c.bf16 %v6900, %v6896
        %v6941 = vpack.c.bf16 %v6901, %v6897
        %v6942 = vpack.c.bf16 %v6902, %v6898
        %v6943 = vpack.c.bf16 %v6907, %v6903
        %v6944 = vpack.c.bf16 %v6908, %v6904
        %v6945 = vpack.c.bf16 %v6909, %v6905
        %v6946 = vpack.c.bf16 %v6910, %v6906
        %v6947 = vpack.c.bf16 %v6915, %v6911
        %v6948 = vpack.c.bf16 %v6916, %v6912
        %v6949 = vpack.c.bf16 %v6917, %v6913
        %v6950 = vpack.c.bf16 %v6918, %v6914
        %6951 = vmatprep.subr.bf16.mxu0 %v5984
        %6952 = vmatpush1.bf16.msra.mxu0 %v5983
        %6953 = vmatprep.subr.bf16.mxu0 %v5980
        %6954 = vmatpush1.bf16.msra.mxu0 %v5979
        %6955 = vmatprep.subr.bf16.mxu0 %v5976
        %6956 = vmatpush1.bf16.msra.mxu0 %v5975
        %6957 = vmatprep.subr.bf16.mxu0 %v5972
        %6958 = vmatpush1.bf16.msra.mxu0 %v5971
        %6959 = vmatprep.subr.bf16.mxu0 %v5968
        %6960 = vmatpush1.bf16.msra.mxu0 %v5967
        %6961 = vmatprep.subr.bf16.mxu0 %v5964
        %6962 = vmatpush1.bf16.msra.mxu0 %v5963
        %6963 = vmatprep.subr.bf16.mxu0 %v5960
        %6964 = vmatpush1.bf16.msra.mxu0 %v5959
        %6965 = vmatprep.subr.bf16.mxu0 %v5956
        %6966 = vmatpush1.bf16.msra.mxu0 %v5955
        %6967 = vmatprep.subr.bf16.mxu0 %v6016
        %6968 = vmatpush2.bf16.msra.mxu0 %v6015
        %6969 = vmatprep.subr.bf16.mxu0 %v6012
        %6970 = vmatpush2.bf16.msra.mxu0 %v6011
        %6971 = vmatprep.subr.bf16.mxu0 %v6008
        %6972 = vmatpush2.bf16.msra.mxu0 %v6007
        %6973 = vmatprep.subr.bf16.mxu0 %v6004
        %6974 = vmatpush2.bf16.msra.mxu0 %v6003
        %6975 = vmatprep.subr.bf16.mxu0 %v6000
        %6976 = vmatpush2.bf16.msra.mxu0 %v5999
        %6977 = vmatprep.subr.bf16.mxu0 %v5996
        %6978 = vmatpush2.bf16.msra.mxu0 %v5995
        %6979 = vmatprep.subr.bf16.mxu0 %v5992
        %6980 = vmatpush2.bf16.msra.mxu0 %v5991
        %6981 = vmatprep.subr.bf16.mxu0 %v5988
        %6982 = vmatpush2.bf16.msra.mxu0 %v5987
        %6983 = vmatprep.mubr.bf16.mxu0 %v5386
        %6984 = vmatmul.mubr.bf16.gmra.mxu0 %v5385
        %v6985 = vpop.f32.mrf.mxu0
        %v6986 = vadd.f32 %v5554, %v6985
        %v6987 = vpop.f32.mrf.mxu0
        %v6988 = vadd.f32 %v5558, %v6987
        %v6989 = vpop.f32.mrf.mxu0
        %v6990 = vadd.f32 %v5554, %v6989
        %v6991 = vpop.f32.mrf.mxu0
        %v6992 = vadd.f32 %v5558, %v6991
        %6993 = vmatprep.mubr.bf16.mxu0 %v5390
        %6994 = vmatmul.mubr.bf16.gmra.mxu0 %v5389
        %v6995 = vpop.f32.mrf.mxu0
        %v6996 = vadd.f32 %v5554, %v6995
        %v6997 = vpop.f32.mrf.mxu0
        %v6998 = vadd.f32 %v5558, %v6997
        %v6999 = vpop.f32.mrf.mxu0
        %v7000 = vadd.f32 %v5554, %v6999
        %v7001 = vpop.f32.mrf.mxu0
        %v7002 = vadd.f32 %v5558, %v7001
        %7003 = vmatprep.mubr.bf16.mxu0 %v5394
        %7004 = vmatmul.mubr.bf16.gmra.mxu0 %v5393
        %v7005 = vpop.f32.mrf.mxu0
        %v7006 = vadd.f32 %v5554, %v7005
        %v7007 = vpop.f32.mrf.mxu0
        %v7008 = vadd.f32 %v5558, %v7007
        %v7009 = vpop.f32.mrf.mxu0
        %v7010 = vadd.f32 %v5554, %v7009
        %v7011 = vpop.f32.mrf.mxu0
        %v7012 = vadd.f32 %v5558, %v7011
        %7013 = vmatprep.mubr.bf16.mxu0 %v5398
        %7014 = vmatmul.mubr.bf16.gmra.mxu0 %v5397
        %v7015 = vpop.f32.mrf.mxu0
        %v7016 = vadd.f32 %v5554, %v7015
        %v7017 = vpop.f32.mrf.mxu0
        %v7018 = vadd.f32 %v5558, %v7017
        %v7019 = vpop.f32.mrf.mxu0
        %v7020 = vadd.f32 %v5554, %v7019
        %v7021 = vpop.f32.mrf.mxu0
        %v7022 = vadd.f32 %v5558, %v7021
        %7023 = vmatprep.mubr.bf16.mxu0 %v5402
        %7024 = vmatmul.mubr.bf16.gmra.mxu0 %v5401
        %v7025 = vpop.f32.mrf.mxu0
        %v7026 = vadd.f32 %v5554, %v7025
        %v7027 = vpop.f32.mrf.mxu0
        %v7028 = vadd.f32 %v5558, %v7027
        %v7029 = vpop.f32.mrf.mxu0
        %v7030 = vadd.f32 %v5554, %v7029
        %v7031 = vpop.f32.mrf.mxu0
        %v7032 = vadd.f32 %v5558, %v7031
        %7033 = vmatprep.mubr.bf16.mxu0 %v5406
        %7034 = vmatmul.mubr.bf16.gmra.mxu0 %v5405
        %v7035 = vpop.f32.mrf.mxu0
        %v7036 = vadd.f32 %v5554, %v7035
        %v7037 = vpop.f32.mrf.mxu0
        %v7038 = vadd.f32 %v5558, %v7037
        %v7039 = vpop.f32.mrf.mxu0
        %v7040 = vadd.f32 %v5554, %v7039
        %v7041 = vpop.f32.mrf.mxu0
        %v7042 = vadd.f32 %v5558, %v7041
        %7043 = vmatprep.mubr.bf16.mxu0 %v5410
        %7044 = vmatmul.mubr.bf16.gmra.mxu0 %v5409
        %v7045 = vpop.f32.mrf.mxu0
        %v7046 = vadd.f32 %v5554, %v7045
        %v7047 = vpop.f32.mrf.mxu0
        %v7048 = vadd.f32 %v5558, %v7047
        %v7049 = vpop.f32.mrf.mxu0
        %v7050 = vadd.f32 %v5554, %v7049
        %v7051 = vpop.f32.mrf.mxu0
        %v7052 = vadd.f32 %v5558, %v7051
        %7053 = vmatprep.mubr.bf16.mxu0 %v5414
        %7054 = vmatmul.mubr.bf16.gmra.mxu0 %v5413
        %v7055 = vpop.f32.mrf.mxu0
        %v7056 = vadd.f32 %v5554, %v7055
        %v7057 = vpop.f32.mrf.mxu0
        %v7058 = vadd.f32 %v5558, %v7057
        %v7059 = vpop.f32.mrf.mxu0
        %v7060 = vadd.f32 %v5554, %v7059
        %v7061 = vpop.f32.mrf.mxu0
        %v7062 = vadd.f32 %v5558, %v7061
        %7063 = vdwg.mxu0
        %7064 = vmatprep.subr.bf16.mxu0 %v6048
        %7065 = vmatpush1.bf16.msra.mxu0 %v6047
        %7066 = vmatprep.subr.bf16.mxu0 %v6044
        %7067 = vmatpush1.bf16.msra.mxu0 %v6043
        %7068 = vmatprep.subr.bf16.mxu0 %v6040
        %7069 = vmatpush1.bf16.msra.mxu0 %v6039
        %7070 = vmatprep.subr.bf16.mxu0 %v6036
        %7071 = vmatpush1.bf16.msra.mxu0 %v6035
        %7072 = vmatprep.subr.bf16.mxu0 %v6032
        %7073 = vmatpush1.bf16.msra.mxu0 %v6031
        %7074 = vmatprep.subr.bf16.mxu0 %v6028
        %7075 = vmatpush1.bf16.msra.mxu0 %v6027
        %7076 = vmatprep.subr.bf16.mxu0 %v6024
        %7077 = vmatpush1.bf16.msra.mxu0 %v6023
        %7078 = vmatprep.subr.bf16.mxu0 %v6020
        %7079 = vmatpush1.bf16.msra.mxu0 %v6019
        %7080 = vmatprep.subr.bf16.mxu0 %v6080
        %7081 = vmatpush2.bf16.msra.mxu0 %v6079
        %7082 = vmatprep.subr.bf16.mxu0 %v6076
        %7083 = vmatpush2.bf16.msra.mxu0 %v6075
        %7084 = vmatprep.subr.bf16.mxu0 %v6072
        %7085 = vmatpush2.bf16.msra.mxu0 %v6071
        %7086 = vmatprep.subr.bf16.mxu0 %v6068
        %7087 = vmatpush2.bf16.msra.mxu0 %v6067
        %7088 = vmatprep.subr.bf16.mxu0 %v6064
        %7089 = vmatpush2.bf16.msra.mxu0 %v6063
        %7090 = vmatprep.subr.bf16.mxu0 %v6060
        %7091 = vmatpush2.bf16.msra.mxu0 %v6059
        %7092 = vmatprep.subr.bf16.mxu0 %v6056
        %7093 = vmatpush2.bf16.msra.mxu0 %v6055
        %7094 = vmatprep.subr.bf16.mxu0 %v6052
        %7095 = vmatpush2.bf16.msra.mxu0 %v6051
        %7096 = vmatprep.mubr.bf16.mxu0 %v5388
        %7097 = vmatmul.mubr.bf16.gmra.mxu0 %v5387
        %v7098 = vpop.f32.mrf.mxu0
        %v7099 = vadd.f32 %v6986, %v7098
        %v7100 = vpop.f32.mrf.mxu0
        %v7101 = vadd.f32 %v6988, %v7100
        %v7102 = vpop.f32.mrf.mxu0
        %v7103 = vadd.f32 %v6990, %v7102
        %v7104 = vpop.f32.mrf.mxu0
        %v7105 = vadd.f32 %v6992, %v7104
        %7106 = vmatprep.mubr.bf16.mxu0 %v5392
        %7107 = vmatmul.mubr.bf16.gmra.mxu0 %v5391
        %v7108 = vpop.f32.mrf.mxu0
        %v7109 = vadd.f32 %v6996, %v7108
        %v7110 = vpop.f32.mrf.mxu0
        %v7111 = vadd.f32 %v6998, %v7110
        %v7112 = vpop.f32.mrf.mxu0
        %v7113 = vadd.f32 %v7000, %v7112
        %v7114 = vpop.f32.mrf.mxu0
        %v7115 = vadd.f32 %v7002, %v7114
        %7116 = vmatprep.mubr.bf16.mxu0 %v5396
        %7117 = vmatmul.mubr.bf16.gmra.mxu0 %v5395
        %v7118 = vpop.f32.mrf.mxu0
        %v7119 = vadd.f32 %v7006, %v7118
        %v7120 = vpop.f32.mrf.mxu0
        %v7121 = vadd.f32 %v7008, %v7120
        %v7122 = vpop.f32.mrf.mxu0
        %v7123 = vadd.f32 %v7010, %v7122
        %v7124 = vpop.f32.mrf.mxu0
        %v7125 = vadd.f32 %v7012, %v7124
        %7126 = vmatprep.mubr.bf16.mxu0 %v5400
        %7127 = vmatmul.mubr.bf16.gmra.mxu0 %v5399
        %v7128 = vpop.f32.mrf.mxu0
        %v7129 = vadd.f32 %v7016, %v7128
        %v7130 = vpop.f32.mrf.mxu0
        %v7131 = vadd.f32 %v7018, %v7130
        %v7132 = vpop.f32.mrf.mxu0
        %v7133 = vadd.f32 %v7020, %v7132
        %v7134 = vpop.f32.mrf.mxu0
        %v7135 = vadd.f32 %v7022, %v7134
        %7136 = vmatprep.mubr.bf16.mxu0 %v5404
        %7137 = vmatmul.mubr.bf16.gmra.mxu0 %v5403
        %v7138 = vpop.f32.mrf.mxu0
        %v7139 = vadd.f32 %v7026, %v7138
        %v7140 = vpop.f32.mrf.mxu0
        %v7141 = vadd.f32 %v7028, %v7140
        %v7142 = vpop.f32.mrf.mxu0
        %v7143 = vadd.f32 %v7030, %v7142
        %v7144 = vpop.f32.mrf.mxu0
        %v7145 = vadd.f32 %v7032, %v7144
        %7146 = vmatprep.mubr.bf16.mxu0 %v5408
        %7147 = vmatmul.mubr.bf16.gmra.mxu0 %v5407
        %v7148 = vpop.f32.mrf.mxu0
        %v7149 = vadd.f32 %v7036, %v7148
        %v7150 = vpop.f32.mrf.mxu0
        %v7151 = vadd.f32 %v7038, %v7150
        %v7152 = vpop.f32.mrf.mxu0
        %v7153 = vadd.f32 %v7040, %v7152
        %v7154 = vpop.f32.mrf.mxu0
        %v7155 = vadd.f32 %v7042, %v7154
        %7156 = vmatprep.mubr.bf16.mxu0 %v5412
        %7157 = vmatmul.mubr.bf16.gmra.mxu0 %v5411
        %v7158 = vpop.f32.mrf.mxu0
        %v7159 = vadd.f32 %v7046, %v7158
        %v7160 = vpop.f32.mrf.mxu0
        %v7161 = vadd.f32 %v7048, %v7160
        %v7162 = vpop.f32.mrf.mxu0
        %v7163 = vadd.f32 %v7050, %v7162
        %v7164 = vpop.f32.mrf.mxu0
        %v7165 = vadd.f32 %v7052, %v7164
        %7166 = vmatprep.mubr.bf16.mxu0 %v5416
        %7167 = vmatmul.mubr.bf16.gmra.mxu0 %v5415
        %v7168 = vpop.f32.mrf.mxu0
        %v7169 = vadd.f32 %v7056, %v7168
        %v7170 = vpop.f32.mrf.mxu0
        %v7171 = vadd.f32 %v7058, %v7170
        %v7172 = vpop.f32.mrf.mxu0
        %v7173 = vadd.f32 %v7060, %v7172
        %v7174 = vpop.f32.mrf.mxu0
        %v7175 = vadd.f32 %v7062, %v7174
        %7176 = vdwg.mxu0
        %7177 = vmatprep.subr.bf16.mxu0 %v5986
        %7178 = vmatpush1.bf16.msra.mxu0 %v5985
        %7179 = vmatprep.subr.bf16.mxu0 %v5982
        %7180 = vmatpush1.bf16.msra.mxu0 %v5981
        %7181 = vmatprep.subr.bf16.mxu0 %v5978
        %7182 = vmatpush1.bf16.msra.mxu0 %v5977
        %7183 = vmatprep.subr.bf16.mxu0 %v5974
        %7184 = vmatpush1.bf16.msra.mxu0 %v5973
        %7185 = vmatprep.subr.bf16.mxu0 %v5970
        %7186 = vmatpush1.bf16.msra.mxu0 %v5969
        %7187 = vmatprep.subr.bf16.mxu0 %v5966
        %7188 = vmatpush1.bf16.msra.mxu0 %v5965
        %7189 = vmatprep.subr.bf16.mxu0 %v5962
        %7190 = vmatpush1.bf16.msra.mxu0 %v5961
        %7191 = vmatprep.subr.bf16.mxu0 %v5958
        %7192 = vmatpush1.bf16.msra.mxu0 %v5957
        %7193 = vmatprep.subr.bf16.mxu0 %v6018
        %7194 = vmatpush2.bf16.msra.mxu0 %v6017
        %7195 = vmatprep.subr.bf16.mxu0 %v6014
        %7196 = vmatpush2.bf16.msra.mxu0 %v6013
        %7197 = vmatprep.subr.bf16.mxu0 %v6010
        %7198 = vmatpush2.bf16.msra.mxu0 %v6009
        %7199 = vmatprep.subr.bf16.mxu0 %v6006
        %7200 = vmatpush2.bf16.msra.mxu0 %v6005
        %7201 = vmatprep.subr.bf16.mxu0 %v6002
        %7202 = vmatpush2.bf16.msra.mxu0 %v6001
        %7203 = vmatprep.subr.bf16.mxu0 %v5998
        %7204 = vmatpush2.bf16.msra.mxu0 %v5997
        %7205 = vmatprep.subr.bf16.mxu0 %v5994
        %7206 = vmatpush2.bf16.msra.mxu0 %v5993
        %7207 = vmatprep.subr.bf16.mxu0 %v5990
        %7208 = vmatpush2.bf16.msra.mxu0 %v5989
        %7209 = vmatprep.mubr.bf16.mxu0 %v5386
        %7210 = vmatmul.mubr.bf16.gmra.mxu0 %v5385
        %v7211 = vpop.f32.mrf.mxu0
        %v7212 = vadd.f32 %v5562, %v7211
        %v7213 = vpop.f32.mrf.mxu0
        %v7214 = vadd.f32 %v5566, %v7213
        %v7215 = vpop.f32.mrf.mxu0
        %v7216 = vadd.f32 %v5562, %v7215
        %v7217 = vpop.f32.mrf.mxu0
        %v7218 = vadd.f32 %v5566, %v7217
        %7219 = vmatprep.mubr.bf16.mxu0 %v5390
        %7220 = vmatmul.mubr.bf16.gmra.mxu0 %v5389
        %v7221 = vpop.f32.mrf.mxu0
        %v7222 = vadd.f32 %v5562, %v7221
        %v7223 = vpop.f32.mrf.mxu0
        %v7224 = vadd.f32 %v5566, %v7223
        %v7225 = vpop.f32.mrf.mxu0
        %v7226 = vadd.f32 %v5562, %v7225
        %v7227 = vpop.f32.mrf.mxu0
        %v7228 = vadd.f32 %v5566, %v7227
        %7229 = vmatprep.mubr.bf16.mxu0 %v5394
        %7230 = vmatmul.mubr.bf16.gmra.mxu0 %v5393
        %v7231 = vpop.f32.mrf.mxu0
        %v7232 = vadd.f32 %v5562, %v7231
        %v7233 = vpop.f32.mrf.mxu0
        %v7234 = vadd.f32 %v5566, %v7233
        %v7235 = vpop.f32.mrf.mxu0
        %v7236 = vadd.f32 %v5562, %v7235
        %v7237 = vpop.f32.mrf.mxu0
        %v7238 = vadd.f32 %v5566, %v7237
        %7239 = vmatprep.mubr.bf16.mxu0 %v5398
        %7240 = vmatmul.mubr.bf16.gmra.mxu0 %v5397
        %v7241 = vpop.f32.mrf.mxu0
        %v7242 = vadd.f32 %v5562, %v7241
        %v7243 = vpop.f32.mrf.mxu0
        %v7244 = vadd.f32 %v5566, %v7243
        %v7245 = vpop.f32.mrf.mxu0
        %v7246 = vadd.f32 %v5562, %v7245
        %v7247 = vpop.f32.mrf.mxu0
        %v7248 = vadd.f32 %v5566, %v7247
        %7249 = vmatprep.mubr.bf16.mxu0 %v5402
        %7250 = vmatmul.mubr.bf16.gmra.mxu0 %v5401
        %v7251 = vpop.f32.mrf.mxu0
        %v7252 = vadd.f32 %v5562, %v7251
        %v7253 = vpop.f32.mrf.mxu0
        %v7254 = vadd.f32 %v5566, %v7253
        %v7255 = vpop.f32.mrf.mxu0
        %v7256 = vadd.f32 %v5562, %v7255
        %v7257 = vpop.f32.mrf.mxu0
        %v7258 = vadd.f32 %v5566, %v7257
        %7259 = vmatprep.mubr.bf16.mxu0 %v5406
        %7260 = vmatmul.mubr.bf16.gmra.mxu0 %v5405
        %v7261 = vpop.f32.mrf.mxu0
        %v7262 = vadd.f32 %v5562, %v7261
        %v7263 = vpop.f32.mrf.mxu0
        %v7264 = vadd.f32 %v5566, %v7263
        %v7265 = vpop.f32.mrf.mxu0
        %v7266 = vadd.f32 %v5562, %v7265
        %v7267 = vpop.f32.mrf.mxu0
        %v7268 = vadd.f32 %v5566, %v7267
        %7269 = vmatprep.mubr.bf16.mxu0 %v5410
        %7270 = vmatmul.mubr.bf16.gmra.mxu0 %v5409
        %v7271 = vpop.f32.mrf.mxu0
        %v7272 = vadd.f32 %v5562, %v7271
        %v7273 = vpop.f32.mrf.mxu0
        %v7274 = vadd.f32 %v5566, %v7273
        %v7275 = vpop.f32.mrf.mxu0
        %v7276 = vadd.f32 %v5562, %v7275
        %v7277 = vpop.f32.mrf.mxu0
        %v7278 = vadd.f32 %v5566, %v7277
        %7279 = vmatprep.mubr.bf16.mxu0 %v5414
        %7280 = vmatmul.mubr.bf16.gmra.mxu0 %v5413
        %v7281 = vpop.f32.mrf.mxu0
        %v7282 = vadd.f32 %v5562, %v7281
        %v7283 = vpop.f32.mrf.mxu0
        %v7284 = vadd.f32 %v5566, %v7283
        %v7285 = vpop.f32.mrf.mxu0
        %v7286 = vadd.f32 %v5562, %v7285
        %v7287 = vpop.f32.mrf.mxu0
        %v7288 = vadd.f32 %v5566, %v7287
        %7289 = vdwg.mxu0
        %7290 = vmatprep.subr.bf16.mxu0 %v6050
        %7291 = vmatpush1.bf16.msra.mxu0 %v6049
        %7292 = vmatprep.subr.bf16.mxu0 %v6046
        %7293 = vmatpush1.bf16.msra.mxu0 %v6045
        %7294 = vmatprep.subr.bf16.mxu0 %v6042
        %7295 = vmatpush1.bf16.msra.mxu0 %v6041
        %7296 = vmatprep.subr.bf16.mxu0 %v6038
        %7297 = vmatpush1.bf16.msra.mxu0 %v6037
        %7298 = vmatprep.subr.bf16.mxu0 %v6034
        %7299 = vmatpush1.bf16.msra.mxu0 %v6033
        %7300 = vmatprep.subr.bf16.mxu0 %v6030
        %7301 = vmatpush1.bf16.msra.mxu0 %v6029
        %7302 = vmatprep.subr.bf16.mxu0 %v6026
        %7303 = vmatpush1.bf16.msra.mxu0 %v6025
        %7304 = vmatprep.subr.bf16.mxu0 %v6022
        %7305 = vmatpush1.bf16.msra.mxu0 %v6021
        %7306 = vmatprep.subr.bf16.mxu0 %v6082
        %7307 = vmatpush2.bf16.msra.mxu0 %v6081
        %7308 = vmatprep.subr.bf16.mxu0 %v6078
        %7309 = vmatpush2.bf16.msra.mxu0 %v6077
        %7310 = vmatprep.subr.bf16.mxu0 %v6074
        %7311 = vmatpush2.bf16.msra.mxu0 %v6073
        %7312 = vmatprep.subr.bf16.mxu0 %v6070
        %7313 = vmatpush2.bf16.msra.mxu0 %v6069
        %7314 = vmatprep.subr.bf16.mxu0 %v6066
        %7315 = vmatpush2.bf16.msra.mxu0 %v6065
        %7316 = vmatprep.subr.bf16.mxu0 %v6062
        %7317 = vmatpush2.bf16.msra.mxu0 %v6061
        %7318 = vmatprep.subr.bf16.mxu0 %v6058
        %7319 = vmatpush2.bf16.msra.mxu0 %v6057
        %7320 = vmatprep.subr.bf16.mxu0 %v6054
        %7321 = vmatpush2.bf16.msra.mxu0 %v6053
        %7322 = vmatprep.mubr.bf16.mxu0 %v5388
        %7323 = vmatmul.mubr.bf16.gmra.mxu0 %v5387
        %v7324 = vpop.f32.mrf.mxu0
        %v7325 = vadd.f32 %v7212, %v7324
        %v7326 = vpop.f32.mrf.mxu0
        %v7327 = vadd.f32 %v7214, %v7326
        %v7328 = vpop.f32.mrf.mxu0
        %v7329 = vadd.f32 %v7216, %v7328
        %v7330 = vpop.f32.mrf.mxu0
        %v7331 = vadd.f32 %v7218, %v7330
        %7332 = vmatprep.mubr.bf16.mxu0 %v5392
        %7333 = vmatmul.mubr.bf16.gmra.mxu0 %v5391
        %v7334 = vpop.f32.mrf.mxu0
        %v7335 = vadd.f32 %v7222, %v7334
        %v7336 = vpop.f32.mrf.mxu0
        %v7337 = vadd.f32 %v7224, %v7336
        %v7338 = vpop.f32.mrf.mxu0
        %v7339 = vadd.f32 %v7226, %v7338
        %v7340 = vpop.f32.mrf.mxu0
        %v7341 = vadd.f32 %v7228, %v7340
        %7342 = vmatprep.mubr.bf16.mxu0 %v5396
        %7343 = vmatmul.mubr.bf16.gmra.mxu0 %v5395
        %v7344 = vpop.f32.mrf.mxu0
        %v7345 = vadd.f32 %v7232, %v7344
        %v7346 = vpop.f32.mrf.mxu0
        %v7347 = vadd.f32 %v7234, %v7346
        %v7348 = vpop.f32.mrf.mxu0
        %v7349 = vadd.f32 %v7236, %v7348
        %v7350 = vpop.f32.mrf.mxu0
        %v7351 = vadd.f32 %v7238, %v7350
        %7352 = vmatprep.mubr.bf16.mxu0 %v5400
        %7353 = vmatmul.mubr.bf16.gmra.mxu0 %v5399
        %v7354 = vpop.f32.mrf.mxu0
        %v7355 = vadd.f32 %v7242, %v7354
        %v7356 = vpop.f32.mrf.mxu0
        %v7357 = vadd.f32 %v7244, %v7356
        %v7358 = vpop.f32.mrf.mxu0
        %v7359 = vadd.f32 %v7246, %v7358
        %v7360 = vpop.f32.mrf.mxu0
        %v7361 = vadd.f32 %v7248, %v7360
        %7362 = vmatprep.mubr.bf16.mxu0 %v5404
        %7363 = vmatmul.mubr.bf16.gmra.mxu0 %v5403
        %v7364 = vpop.f32.mrf.mxu0
        %v7365 = vadd.f32 %v7252, %v7364
        %v7366 = vpop.f32.mrf.mxu0
        %v7367 = vadd.f32 %v7254, %v7366
        %v7368 = vpop.f32.mrf.mxu0
        %v7369 = vadd.f32 %v7256, %v7368
        %v7370 = vpop.f32.mrf.mxu0
        %v7371 = vadd.f32 %v7258, %v7370
        %7372 = vmatprep.mubr.bf16.mxu0 %v5408
        %7373 = vmatmul.mubr.bf16.gmra.mxu0 %v5407
        %v7374 = vpop.f32.mrf.mxu0
        %v7375 = vadd.f32 %v7262, %v7374
        %v7376 = vpop.f32.mrf.mxu0
        %v7377 = vadd.f32 %v7264, %v7376
        %v7378 = vpop.f32.mrf.mxu0
        %v7379 = vadd.f32 %v7266, %v7378
        %v7380 = vpop.f32.mrf.mxu0
        %v7381 = vadd.f32 %v7268, %v7380
        %7382 = vmatprep.mubr.bf16.mxu0 %v5412
        %7383 = vmatmul.mubr.bf16.gmra.mxu0 %v5411
        %v7384 = vpop.f32.mrf.mxu0
        %v7385 = vadd.f32 %v7272, %v7384
        %v7386 = vpop.f32.mrf.mxu0
        %v7387 = vadd.f32 %v7274, %v7386
        %v7388 = vpop.f32.mrf.mxu0
        %v7389 = vadd.f32 %v7276, %v7388
        %v7390 = vpop.f32.mrf.mxu0
        %v7391 = vadd.f32 %v7278, %v7390
        %7392 = vmatprep.mubr.bf16.mxu0 %v5416
        %7393 = vmatmul.mubr.bf16.gmra.mxu0 %v5415
        %v7394 = vpop.f32.mrf.mxu0
        %v7395 = vadd.f32 %v7282, %v7394
        %v7396 = vpop.f32.mrf.mxu0
        %v7397 = vadd.f32 %v7284, %v7396
        %v7398 = vpop.f32.mrf.mxu0
        %v7399 = vadd.f32 %v7286, %v7398
        %v7400 = vpop.f32.mrf.mxu0
        %v7401 = vadd.f32 %v7288, %v7400
        %7402 = vdwg.mxu0
        %v7403 = vmul.f32 %v7099, 0.5
        %v7404 = vmul.f32 %v7101, 0.5
        %v7405 = vmul.f32 %v7325, 0.5
        %v7406 = vmul.f32 %v7327, 0.5
        %v7407 = vmul.f32 %v7103, 0.5
        %v7408 = vmul.f32 %v7105, 0.5
        %v7409 = vmul.f32 %v7329, 0.5
        %v7410 = vmul.f32 %v7331, 0.5
        %v7411 = vmul.f32 %v7109, 0.5
        %v7412 = vmul.f32 %v7111, 0.5
        %v7413 = vmul.f32 %v7335, 0.5
        %v7414 = vmul.f32 %v7337, 0.5
        %v7415 = vmul.f32 %v7113, 0.5
        %v7416 = vmul.f32 %v7115, 0.5
        %v7417 = vmul.f32 %v7339, 0.5
        %v7418 = vmul.f32 %v7341, 0.5
        %v7419 = vmul.f32 %v7119, 0.5
        %v7420 = vmul.f32 %v7121, 0.5
        %v7421 = vmul.f32 %v7345, 0.5
        %v7422 = vmul.f32 %v7347, 0.5
        %v7423 = vmul.f32 %v7123, 0.5
        %v7424 = vmul.f32 %v7125, 0.5
        %v7425 = vmul.f32 %v7349, 0.5
        %v7426 = vmul.f32 %v7351, 0.5
        %v7427 = vmul.f32 %v7129, 0.5
        %v7428 = vmul.f32 %v7131, 0.5
        %v7429 = vmul.f32 %v7355, 0.5
        %v7430 = vmul.f32 %v7357, 0.5
        %v7431 = vmul.f32 %v7133, 0.5
        %v7432 = vmul.f32 %v7135, 0.5
        %v7433 = vmul.f32 %v7359, 0.5
        %v7434 = vmul.f32 %v7361, 0.5
        %v7435 = vmul.f32 %v7139, 0.5
        %v7436 = vmul.f32 %v7141, 0.5
        %v7437 = vmul.f32 %v7365, 0.5
        %v7438 = vmul.f32 %v7367, 0.5
        %v7439 = vmul.f32 %v7143, 0.5
        %v7440 = vmul.f32 %v7145, 0.5
        %v7441 = vmul.f32 %v7369, 0.5
        %v7442 = vmul.f32 %v7371, 0.5
        %v7443 = vmul.f32 %v7149, 0.5
        %v7444 = vmul.f32 %v7151, 0.5
        %v7445 = vmul.f32 %v7375, 0.5
        %v7446 = vmul.f32 %v7377, 0.5
        %v7447 = vmul.f32 %v7153, 0.5
        %v7448 = vmul.f32 %v7155, 0.5
        %v7449 = vmul.f32 %v7379, 0.5
        %v7450 = vmul.f32 %v7381, 0.5
        %v7451 = vmul.f32 %v7159, 0.5
        %v7452 = vmul.f32 %v7161, 0.5
        %v7453 = vmul.f32 %v7385, 0.5
        %v7454 = vmul.f32 %v7387, 0.5
        %v7455 = vmul.f32 %v7163, 0.5
        %v7456 = vmul.f32 %v7165, 0.5
        %v7457 = vmul.f32 %v7389, 0.5
        %v7458 = vmul.f32 %v7391, 0.5
        %v7459 = vmul.f32 %v7169, 0.5
        %v7460 = vmul.f32 %v7171, 0.5
        %v7461 = vmul.f32 %v7395, 0.5
        %v7462 = vmul.f32 %v7397, 0.5
        %v7463 = vmul.f32 %v7173, 0.5
        %v7464 = vmul.f32 %v7175, 0.5
        %v7465 = vmul.f32 %v7399, 0.5
        %v7466 = vmul.f32 %v7401, 0.5
        %v7467 = vtanh.pop %v7403
        %v7468 = vtanh.pop %v7404
        %v7469 = vtanh.pop %v7405
        %v7470 = vtanh.pop %v7406
        %v7471 = vtanh.pop %v7407
        %v7472 = vtanh.pop %v7408
        %v7473 = vtanh.pop %v7409
        %v7474 = vtanh.pop %v7410
        %v7475 = vtanh.pop %v7411
        %v7476 = vtanh.pop %v7412
        %v7477 = vtanh.pop %v7413
        %v7478 = vtanh.pop %v7414
        %v7479 = vtanh.pop %v7415
        %v7480 = vtanh.pop %v7416
        %v7481 = vtanh.pop %v7417
        %v7482 = vtanh.pop %v7418
        %v7483 = vtanh.pop %v7419
        %v7484 = vtanh.pop %v7420
        %v7485 = vtanh.pop %v7421
        %v7486 = vtanh.pop %v7422
        %v7487 = vtanh.pop %v7423
        %v7488 = vtanh.pop %v7424
        %v7489 = vtanh.pop %v7425
        %v7490 = vtanh.pop %v7426
        %v7491 = vtanh.pop %v7427
        %v7492 = vtanh.pop %v7428
        %v7493 = vtanh.pop %v7429
        %v7494 = vtanh.pop %v7430
        %v7495 = vtanh.pop %v7431
        %v7496 = vtanh.pop %v7432
        %v7497 = vtanh.pop %v7433
        %v7498 = vtanh.pop %v7434
        %v7499 = vtanh.pop %v7435
        %v7500 = vtanh.pop %v7436
        %v7501 = vtanh.pop %v7437
        %v7502 = vtanh.pop %v7438
        %v7503 = vtanh.pop %v7439
        %v7504 = vtanh.pop %v7440
        %v7505 = vtanh.pop %v7441
        %v7506 = vtanh.pop %v7442
        %v7507 = vtanh.pop %v7443
        %v7508 = vtanh.pop %v7444
        %v7509 = vtanh.pop %v7445
        %v7510 = vtanh.pop %v7446
        %v7511 = vtanh.pop %v7447
        %v7512 = vtanh.pop %v7448
        %v7513 = vtanh.pop %v7449
        %v7514 = vtanh.pop %v7450
        %v7515 = vtanh.pop %v7451
        %v7516 = vtanh.pop %v7452
        %v7517 = vtanh.pop %v7453
        %v7518 = vtanh.pop %v7454
        %v7519 = vtanh.pop %v7455
        %v7520 = vtanh.pop %v7456
        %v7521 = vtanh.pop %v7457
        %v7522 = vtanh.pop %v7458
        %v7523 = vtanh.pop %v7459
        %v7524 = vtanh.pop %v7460
        %v7525 = vtanh.pop %v7461
        %v7526 = vtanh.pop %v7462
        %v7527 = vtanh.pop %v7463
        %v7528 = vtanh.pop %v7464
        %v7529 = vtanh.pop %v7465
        %v7530 = vtanh.pop %v7466
        %v7531 = vmul.f32 %v7467, 0.5
        %v7532 = vmul.f32 %v7468, 0.5
        %v7533 = vmul.f32 %v7469, 0.5
        %v7534 = vmul.f32 %v7470, 0.5
        %v7535 = vmul.f32 %v7471, 0.5
        %v7536 = vmul.f32 %v7472, 0.5
        %v7537 = vmul.f32 %v7473, 0.5
        %v7538 = vmul.f32 %v7474, 0.5
        %v7539 = vmul.f32 %v7475, 0.5
        %v7540 = vmul.f32 %v7476, 0.5
        %v7541 = vmul.f32 %v7477, 0.5
        %v7542 = vmul.f32 %v7478, 0.5
        %v7543 = vmul.f32 %v7479, 0.5
        %v7544 = vmul.f32 %v7480, 0.5
        %v7545 = vmul.f32 %v7481, 0.5
        %v7546 = vmul.f32 %v7482, 0.5
        %v7547 = vmul.f32 %v7483, 0.5
        %v7548 = vmul.f32 %v7484, 0.5
        %v7549 = vmul.f32 %v7485, 0.5
        %v7550 = vmul.f32 %v7486, 0.5
        %v7551 = vmul.f32 %v7487, 0.5
        %v7552 = vmul.f32 %v7488, 0.5
        %v7553 = vmul.f32 %v7489, 0.5
        %v7554 = vmul.f32 %v7490, 0.5
        %v7555 = vmul.f32 %v7491, 0.5
        %v7556 = vmul.f32 %v7492, 0.5
        %v7557 = vmul.f32 %v7493, 0.5
        %v7558 = vmul.f32 %v7494, 0.5
        %v7559 = vmul.f32 %v7495, 0.5
        %v7560 = vmul.f32 %v7496, 0.5
        %v7561 = vmul.f32 %v7497, 0.5
        %v7562 = vmul.f32 %v7498, 0.5
        %v7563 = vmul.f32 %v7499, 0.5
        %v7564 = vmul.f32 %v7500, 0.5
        %v7565 = vmul.f32 %v7501, 0.5
        %v7566 = vmul.f32 %v7502, 0.5
        %v7567 = vmul.f32 %v7503, 0.5
        %v7568 = vmul.f32 %v7504, 0.5
        %v7569 = vmul.f32 %v7505, 0.5
        %v7570 = vmul.f32 %v7506, 0.5
        %v7571 = vmul.f32 %v7507, 0.5
        %v7572 = vmul.f32 %v7508, 0.5
        %v7573 = vmul.f32 %v7509, 0.5
        %v7574 = vmul.f32 %v7510, 0.5
        %v7575 = vmul.f32 %v7511, 0.5
        %v7576 = vmul.f32 %v7512, 0.5
        %v7577 = vmul.f32 %v7513, 0.5
        %v7578 = vmul.f32 %v7514, 0.5
        %v7579 = vmul.f32 %v7515, 0.5
        %v7580 = vmul.f32 %v7516, 0.5
        %v7581 = vmul.f32 %v7517, 0.5
        %v7582 = vmul.f32 %v7518, 0.5
        %v7583 = vmul.f32 %v7519, 0.5
        %v7584 = vmul.f32 %v7520, 0.5
        %v7585 = vmul.f32 %v7521, 0.5
        %v7586 = vmul.f32 %v7522, 0.5
        %v7587 = vmul.f32 %v7523, 0.5
        %v7588 = vmul.f32 %v7524, 0.5
        %v7589 = vmul.f32 %v7525, 0.5
        %v7590 = vmul.f32 %v7526, 0.5
        %v7591 = vmul.f32 %v7527, 0.5
        %v7592 = vmul.f32 %v7528, 0.5
        %v7593 = vmul.f32 %v7529, 0.5
        %v7594 = vmul.f32 %v7530, 0.5
        %v7595 = vadd.f32 %v7531, 0.5
        %v7596 = vadd.f32 %v7532, 0.5
        %v7597 = vadd.f32 %v7533, 0.5
        %v7598 = vadd.f32 %v7534, 0.5
        %v7599 = vadd.f32 %v7535, 0.5
        %v7600 = vadd.f32 %v7536, 0.5
        %v7601 = vadd.f32 %v7537, 0.5
        %v7602 = vadd.f32 %v7538, 0.5
        %v7603 = vadd.f32 %v7539, 0.5
        %v7604 = vadd.f32 %v7540, 0.5
        %v7605 = vadd.f32 %v7541, 0.5
        %v7606 = vadd.f32 %v7542, 0.5
        %v7607 = vadd.f32 %v7543, 0.5
        %v7608 = vadd.f32 %v7544, 0.5
        %v7609 = vadd.f32 %v7545, 0.5
        %v7610 = vadd.f32 %v7546, 0.5
        %v7611 = vadd.f32 %v7547, 0.5
        %v7612 = vadd.f32 %v7548, 0.5
        %v7613 = vadd.f32 %v7549, 0.5
        %v7614 = vadd.f32 %v7550, 0.5
        %v7615 = vadd.f32 %v7551, 0.5
        %v7616 = vadd.f32 %v7552, 0.5
        %v7617 = vadd.f32 %v7553, 0.5
        %v7618 = vadd.f32 %v7554, 0.5
        %v7619 = vadd.f32 %v7555, 0.5
        %v7620 = vadd.f32 %v7556, 0.5
        %v7621 = vadd.f32 %v7557, 0.5
        %v7622 = vadd.f32 %v7558, 0.5
        %v7623 = vadd.f32 %v7559, 0.5
        %v7624 = vadd.f32 %v7560, 0.5
        %v7625 = vadd.f32 %v7561, 0.5
        %v7626 = vadd.f32 %v7562, 0.5
        %v7627 = vadd.f32 %v7563, 0.5
        %v7628 = vadd.f32 %v7564, 0.5
        %v7629 = vadd.f32 %v7565, 0.5
        %v7630 = vadd.f32 %v7566, 0.5
        %v7631 = vadd.f32 %v7567, 0.5
        %v7632 = vadd.f32 %v7568, 0.5
        %v7633 = vadd.f32 %v7569, 0.5
        %v7634 = vadd.f32 %v7570, 0.5
        %v7635 = vadd.f32 %v7571, 0.5
        %v7636 = vadd.f32 %v7572, 0.5
        %v7637 = vadd.f32 %v7573, 0.5
        %v7638 = vadd.f32 %v7574, 0.5
        %v7639 = vadd.f32 %v7575, 0.5
        %v7640 = vadd.f32 %v7576, 0.5
        %v7641 = vadd.f32 %v7577, 0.5
        %v7642 = vadd.f32 %v7578, 0.5
        %v7643 = vadd.f32 %v7579, 0.5
        %v7644 = vadd.f32 %v7580, 0.5
        %v7645 = vadd.f32 %v7581, 0.5
        %v7646 = vadd.f32 %v7582, 0.5
        %v7647 = vadd.f32 %v7583, 0.5
        %v7648 = vadd.f32 %v7584, 0.5
        %v7649 = vadd.f32 %v7585, 0.5
        %v7650 = vadd.f32 %v7586, 0.5
        %v7651 = vadd.f32 %v7587, 0.5
        %v7652 = vadd.f32 %v7588, 0.5
        %v7653 = vadd.f32 %v7589, 0.5
        %v7654 = vadd.f32 %v7590, 0.5
        %v7655 = vadd.f32 %v7591, 0.5
        %v7656 = vadd.f32 %v7592, 0.5
        %v7657 = vadd.f32 %v7593, 0.5
        %v7658 = vadd.f32 %v7594, 0.5
        %v7659 = vpack.c.bf16 %v7599, %v7595
        %v7660 = vpack.c.bf16 %v7600, %v7596
        %v7661 = vpack.c.bf16 %v7601, %v7597
        %v7662 = vpack.c.bf16 %v7602, %v7598
        %v7663 = vpack.c.bf16 %v7607, %v7603
        %v7664 = vpack.c.bf16 %v7608, %v7604
        %v7665 = vpack.c.bf16 %v7609, %v7605
        %v7666 = vpack.c.bf16 %v7610, %v7606
        %v7667 = vpack.c.bf16 %v7615, %v7611
        %v7668 = vpack.c.bf16 %v7616, %v7612
        %v7669 = vpack.c.bf16 %v7617, %v7613
        %v7670 = vpack.c.bf16 %v7618, %v7614
        %v7671 = vpack.c.bf16 %v7623, %v7619
        %v7672 = vpack.c.bf16 %v7624, %v7620
        %v7673 = vpack.c.bf16 %v7625, %v7621
        %v7674 = vpack.c.bf16 %v7626, %v7622
        %v7675 = vpack.c.bf16 %v7631, %v7627
        %v7676 = vpack.c.bf16 %v7632, %v7628
        %v7677 = vpack.c.bf16 %v7633, %v7629
        %v7678 = vpack.c.bf16 %v7634, %v7630
        %v7679 = vpack.c.bf16 %v7639, %v7635
        %v7680 = vpack.c.bf16 %v7640, %v7636
        %v7681 = vpack.c.bf16 %v7641, %v7637
        %v7682 = vpack.c.bf16 %v7642, %v7638
        %v7683 = vpack.c.bf16 %v7647, %v7643
        %v7684 = vpack.c.bf16 %v7648, %v7644
        %v7685 = vpack.c.bf16 %v7649, %v7645
        %v7686 = vpack.c.bf16 %v7650, %v7646
        %v7687 = vpack.c.bf16 %v7655, %v7651
        %v7688 = vpack.c.bf16 %v7656, %v7652
        %v7689 = vpack.c.bf16 %v7657, %v7653
        %v7690 = vpack.c.bf16 %v7658, %v7654
        %s7691 = sshll.u32 %s5418, 4
        %7692 = dma.done %s378, %s7691
        %v7693 = vld [vmem:[#allocation6] sm:$0xff]
        %v7694 = vld [vmem:[#allocation6 + $0x8] sm:$0xff]
        %v7695 = vld [vmem:[#allocation6 + $0x10] sm:$0xff]
        %v7696 = vld [vmem:[#allocation6 + $0x18] sm:$0xff]
        %v7697 = vld [vmem:[#allocation6 + $0x20] sm:$0xff]
        %v7698 = vld [vmem:[#allocation6 + $0x28] sm:$0xff]
        %v7699 = vld [vmem:[#allocation6 + $0x30] sm:$0xff]
        %v7700 = vld [vmem:[#allocation6 + $0x38] sm:$0xff]
        %v7701 = vld [vmem:[#allocation6 + $0x40] sm:$0xff]
        %v7702 = vld [vmem:[#allocation6 + $0x48] sm:$0xff]
        %v7703 = vld [vmem:[#allocation6 + $0x50] sm:$0xff]
        %v7704 = vld [vmem:[#allocation6 + $0x58] sm:$0xff]
        %v7705 = vld [vmem:[#allocation6 + $0x60] sm:$0xff]
        %v7706 = vld [vmem:[#allocation6 + $0x68] sm:$0xff]
        %v7707 = vld [vmem:[#allocation6 + $0x70] sm:$0xff]
        %v7708 = vld [vmem:[#allocation6 + $0x78] sm:$0xff]
        %v7709 = vld [vmem:[#allocation6 + $0x80] sm:$0xff]
        %v7710 = vld [vmem:[#allocation6 + $0x88] sm:$0xff]
        %v7711 = vld [vmem:[#allocation6 + $0x90] sm:$0xff]
        %v7712 = vld [vmem:[#allocation6 + $0x98] sm:$0xff]
        %v7713 = vld [vmem:[#allocation6 + $0xa0] sm:$0xff]
        %v7714 = vld [vmem:[#allocation6 + $0xa8] sm:$0xff]
        %v7715 = vld [vmem:[#allocation6 + $0xb0] sm:$0xff]
        %v7716 = vld [vmem:[#allocation6 + $0xb8] sm:$0xff]
        %v7717 = vld [vmem:[#allocation6 + $0xc0] sm:$0xff]
        %v7718 = vld [vmem:[#allocation6 + $0xc8] sm:$0xff]
        %v7719 = vld [vmem:[#allocation6 + $0xd0] sm:$0xff]
        %v7720 = vld [vmem:[#allocation6 + $0xd8] sm:$0xff]
        %v7721 = vld [vmem:[#allocation6 + $0xe0] sm:$0xff]
        %v7722 = vld [vmem:[#allocation6 + $0xe8] sm:$0xff]
        %v7723 = vld [vmem:[#allocation6 + $0xf0] sm:$0xff]
        %v7724 = vld [vmem:[#allocation6 + $0xf8] sm:$0xff]
        %v7725 = vld [vmem:[#allocation6 + $0x100] sm:$0xff]
        %v7726 = vld [vmem:[#allocation6 + $0x108] sm:$0xff]
        %v7727 = vld [vmem:[#allocation6 + $0x110] sm:$0xff]
        %v7728 = vld [vmem:[#allocation6 + $0x118] sm:$0xff]
        %v7729 = vld [vmem:[#allocation6 + $0x120] sm:$0xff]
        %v7730 = vld [vmem:[#allocation6 + $0x128] sm:$0xff]
        %v7731 = vld [vmem:[#allocation6 + $0x130] sm:$0xff]
        %v7732 = vld [vmem:[#allocation6 + $0x138] sm:$0xff]
        %v7733 = vld [vmem:[#allocation6 + $0x140] sm:$0xff]
        %v7734 = vld [vmem:[#allocation6 + $0x148] sm:$0xff]
        %v7735 = vld [vmem:[#allocation6 + $0x150] sm:$0xff]
        %v7736 = vld [vmem:[#allocation6 + $0x158] sm:$0xff]
        %v7737 = vld [vmem:[#allocation6 + $0x160] sm:$0xff]
        %v7738 = vld [vmem:[#allocation6 + $0x168] sm:$0xff]
        %v7739 = vld [vmem:[#allocation6 + $0x170] sm:$0xff]
        %v7740 = vld [vmem:[#allocation6 + $0x178] sm:$0xff]
        %v7741 = vld [vmem:[#allocation6 + $0x180] sm:$0xff]
        %v7742 = vld [vmem:[#allocation6 + $0x188] sm:$0xff]
        %v7743 = vld [vmem:[#allocation6 + $0x190] sm:$0xff]
        %v7744 = vld [vmem:[#allocation6 + $0x198] sm:$0xff]
        %v7745 = vld [vmem:[#allocation6 + $0x1a0] sm:$0xff]
        %v7746 = vld [vmem:[#allocation6 + $0x1a8] sm:$0xff]
        %v7747 = vld [vmem:[#allocation6 + $0x1b0] sm:$0xff]
        %v7748 = vld [vmem:[#allocation6 + $0x1b8] sm:$0xff]
        %v7749 = vld [vmem:[#allocation6 + $0x1c0] sm:$0xff]
        %v7750 = vld [vmem:[#allocation6 + $0x1c8] sm:$0xff]
        %v7751 = vld [vmem:[#allocation6 + $0x1d0] sm:$0xff]
        %v7752 = vld [vmem:[#allocation6 + $0x1d8] sm:$0xff]
        %v7753 = vld [vmem:[#allocation6 + $0x1e0] sm:$0xff]
        %v7754 = vld [vmem:[#allocation6 + $0x1e8] sm:$0xff]
        %v7755 = vld [vmem:[#allocation6 + $0x1f0] sm:$0xff]
        %v7756 = vld [vmem:[#allocation6 + $0x1f8] sm:$0xff]
        %v7757 = vld [vmem:[#allocation6 + $0x200] sm:$0xff]
        %v7758 = vld [vmem:[#allocation6 + $0x208] sm:$0xff]
        %v7759 = vld [vmem:[#allocation6 + $0x210] sm:$0xff]
        %v7760 = vld [vmem:[#allocation6 + $0x218] sm:$0xff]
        %v7761 = vld [vmem:[#allocation6 + $0x220] sm:$0xff]
        %v7762 = vld [vmem:[#allocation6 + $0x228] sm:$0xff]
        %v7763 = vld [vmem:[#allocation6 + $0x230] sm:$0xff]
        %v7764 = vld [vmem:[#allocation6 + $0x238] sm:$0xff]
        %v7765 = vld [vmem:[#allocation6 + $0x240] sm:$0xff]
        %v7766 = vld [vmem:[#allocation6 + $0x248] sm:$0xff]
        %v7767 = vld [vmem:[#allocation6 + $0x250] sm:$0xff]
        %v7768 = vld [vmem:[#allocation6 + $0x258] sm:$0xff]
        %v7769 = vld [vmem:[#allocation6 + $0x260] sm:$0xff]
        %v7770 = vld [vmem:[#allocation6 + $0x268] sm:$0xff]
        %v7771 = vld [vmem:[#allocation6 + $0x270] sm:$0xff]
        %v7772 = vld [vmem:[#allocation6 + $0x278] sm:$0xff]
        %v7773 = vld [vmem:[#allocation6 + $0x280] sm:$0xff]
        %v7774 = vld [vmem:[#allocation6 + $0x288] sm:$0xff]
        %v7775 = vld [vmem:[#allocation6 + $0x290] sm:$0xff]
        %v7776 = vld [vmem:[#allocation6 + $0x298] sm:$0xff]
        %v7777 = vld [vmem:[#allocation6 + $0x2a0] sm:$0xff]
        %v7778 = vld [vmem:[#allocation6 + $0x2a8] sm:$0xff]
        %v7779 = vld [vmem:[#allocation6 + $0x2b0] sm:$0xff]
        %v7780 = vld [vmem:[#allocation6 + $0x2b8] sm:$0xff]
        %v7781 = vld [vmem:[#allocation6 + $0x2c0] sm:$0xff]
        %v7782 = vld [vmem:[#allocation6 + $0x2c8] sm:$0xff]
        %v7783 = vld [vmem:[#allocation6 + $0x2d0] sm:$0xff]
        %v7784 = vld [vmem:[#allocation6 + $0x2d8] sm:$0xff]
        %v7785 = vld [vmem:[#allocation6 + $0x2e0] sm:$0xff]
        %v7786 = vld [vmem:[#allocation6 + $0x2e8] sm:$0xff]
        %v7787 = vld [vmem:[#allocation6 + $0x2f0] sm:$0xff]
        %v7788 = vld [vmem:[#allocation6 + $0x2f8] sm:$0xff]
        %v7789 = vld [vmem:[#allocation6 + $0x300] sm:$0xff]
        %v7790 = vld [vmem:[#allocation6 + $0x308] sm:$0xff]
        %v7791 = vld [vmem:[#allocation6 + $0x310] sm:$0xff]
        %v7792 = vld [vmem:[#allocation6 + $0x318] sm:$0xff]
        %v7793 = vld [vmem:[#allocation6 + $0x320] sm:$0xff]
        %v7794 = vld [vmem:[#allocation6 + $0x328] sm:$0xff]
        %v7795 = vld [vmem:[#allocation6 + $0x330] sm:$0xff]
        %v7796 = vld [vmem:[#allocation6 + $0x338] sm:$0xff]
        %v7797 = vld [vmem:[#allocation6 + $0x340] sm:$0xff]
        %v7798 = vld [vmem:[#allocation6 + $0x348] sm:$0xff]
        %v7799 = vld [vmem:[#allocation6 + $0x350] sm:$0xff]
        %v7800 = vld [vmem:[#allocation6 + $0x358] sm:$0xff]
        %v7801 = vld [vmem:[#allocation6 + $0x360] sm:$0xff]
        %v7802 = vld [vmem:[#allocation6 + $0x368] sm:$0xff]
        %v7803 = vld [vmem:[#allocation6 + $0x370] sm:$0xff]
        %v7804 = vld [vmem:[#allocation6 + $0x378] sm:$0xff]
        %v7805 = vld [vmem:[#allocation6 + $0x380] sm:$0xff]
        %v7806 = vld [vmem:[#allocation6 + $0x388] sm:$0xff]
        %v7807 = vld [vmem:[#allocation6 + $0x390] sm:$0xff]
        %v7808 = vld [vmem:[#allocation6 + $0x398] sm:$0xff]
        %v7809 = vld [vmem:[#allocation6 + $0x3a0] sm:$0xff]
        %v7810 = vld [vmem:[#allocation6 + $0x3a8] sm:$0xff]
        %v7811 = vld [vmem:[#allocation6 + $0x3b0] sm:$0xff]
        %v7812 = vld [vmem:[#allocation6 + $0x3b8] sm:$0xff]
        %v7813 = vld [vmem:[#allocation6 + $0x3c0] sm:$0xff]
        %v7814 = vld [vmem:[#allocation6 + $0x3c8] sm:$0xff]
        %v7815 = vld [vmem:[#allocation6 + $0x3d0] sm:$0xff]
        %v7816 = vld [vmem:[#allocation6 + $0x3d8] sm:$0xff]
        %v7817 = vld [vmem:[#allocation6 + $0x3e0] sm:$0xff]
        %v7818 = vld [vmem:[#allocation6 + $0x3e8] sm:$0xff]
        %v7819 = vld [vmem:[#allocation6 + $0x3f0] sm:$0xff]
        %v7820 = vld [vmem:[#allocation6 + $0x3f8] sm:$0xff]
        %v7821 = vld [vmem:[%s11] sm:$0xf]
        %v7823 = vlaneseq
        %v7824 = vshrl.u32 %v7823, 7
        %v7825 = vsub.s32 0, %v7824
        %v7826 = vrot.slane %v7821, %v7825
        %v7827 = vlaneseq
        %v7828 = vshrl.u32 %v7827, 7
        %v7829 = vsub.s32 1, %v7828
        %v7830 = vrot.slane %v7821, %v7829
        %v7831 = vlaneseq
        %v7832 = vshrl.u32 %v7831, 7
        %v7833 = vsub.s32 2, %v7832
        %v7834 = vrot.slane %v7821, %v7833
        %v7835 = vlaneseq
        %v7836 = vshrl.u32 %v7835, 7
        %v7837 = vsub.s32 3, %v7836
        %v7838 = vrot.slane %v7821, %v7837
        %v7971 = vunpack.c.l.b16 %v7693
        %v7972 = vunpack.c.h.b16 %v7693
        %v7973 = vunpack.c.l.b16 %v7694
        %v7974 = vunpack.c.h.b16 %v7694
        %v7975 = vunpack.c.l.b16 %v7695
        %v7976 = vunpack.c.h.b16 %v7695
        %v7977 = vunpack.c.l.b16 %v7696
        %v7978 = vunpack.c.h.b16 %v7696
        %v7979 = vunpack.c.l.b16 %v7697
        %v7980 = vunpack.c.h.b16 %v7697
        %v7981 = vunpack.c.l.b16 %v7698
        %v7982 = vunpack.c.h.b16 %v7698
        %v7983 = vunpack.c.l.b16 %v7699
        %v7984 = vunpack.c.h.b16 %v7699
        %v7985 = vunpack.c.l.b16 %v7700
        %v7986 = vunpack.c.h.b16 %v7700
        %v7987 = vunpack.c.l.b16 %v7701
        %v7988 = vunpack.c.h.b16 %v7701
        %v7989 = vunpack.c.l.b16 %v7702
        %v7990 = vunpack.c.h.b16 %v7702
        %v7991 = vunpack.c.l.b16 %v7703
        %v7992 = vunpack.c.h.b16 %v7703
        %v7993 = vunpack.c.l.b16 %v7704
        %v7994 = vunpack.c.h.b16 %v7704
        %v7995 = vunpack.c.l.b16 %v7705
        %v7996 = vunpack.c.h.b16 %v7705
        %v7997 = vunpack.c.l.b16 %v7706
        %v7998 = vunpack.c.h.b16 %v7706
        %v7999 = vunpack.c.l.b16 %v7707
        %v8000 = vunpack.c.h.b16 %v7707
        %v8001 = vunpack.c.l.b16 %v7708
        %v8002 = vunpack.c.h.b16 %v7708
        %v8003 = vunpack.c.l.b16 %v7709
        %v8004 = vunpack.c.h.b16 %v7709
        %v8005 = vunpack.c.l.b16 %v7710
        %v8006 = vunpack.c.h.b16 %v7710
        %v8007 = vunpack.c.l.b16 %v7711
        %v8008 = vunpack.c.h.b16 %v7711
        %v8009 = vunpack.c.l.b16 %v7712
        %v8010 = vunpack.c.h.b16 %v7712
        %v8011 = vunpack.c.l.b16 %v7713
        %v8012 = vunpack.c.h.b16 %v7713
        %v8013 = vunpack.c.l.b16 %v7714
        %v8014 = vunpack.c.h.b16 %v7714
        %v8015 = vunpack.c.l.b16 %v7715
        %v8016 = vunpack.c.h.b16 %v7715
        %v8017 = vunpack.c.l.b16 %v7716
        %v8018 = vunpack.c.h.b16 %v7716
        %v8019 = vunpack.c.l.b16 %v7717
        %v8020 = vunpack.c.h.b16 %v7717
        %v8021 = vunpack.c.l.b16 %v7718
        %v8022 = vunpack.c.h.b16 %v7718
        %v8023 = vunpack.c.l.b16 %v7719
        %v8024 = vunpack.c.h.b16 %v7719
        %v8025 = vunpack.c.l.b16 %v7720
        %v8026 = vunpack.c.h.b16 %v7720
        %v8027 = vunpack.c.l.b16 %v7721
        %v8028 = vunpack.c.h.b16 %v7721
        %v8029 = vunpack.c.l.b16 %v7722
        %v8030 = vunpack.c.h.b16 %v7722
        %v8031 = vunpack.c.l.b16 %v7723
        %v8032 = vunpack.c.h.b16 %v7723
        %v8033 = vunpack.c.l.b16 %v7724
        %v8034 = vunpack.c.h.b16 %v7724
        %v8035 = vunpack.c.l.b16 %v7725
        %v8036 = vunpack.c.h.b16 %v7725
        %v8037 = vunpack.c.l.b16 %v7726
        %v8038 = vunpack.c.h.b16 %v7726
        %v8039 = vunpack.c.l.b16 %v7727
        %v8040 = vunpack.c.h.b16 %v7727
        %v8041 = vunpack.c.l.b16 %v7728
        %v8042 = vunpack.c.h.b16 %v7728
        %v8043 = vunpack.c.l.b16 %v7729
        %v8044 = vunpack.c.h.b16 %v7729
        %v8045 = vunpack.c.l.b16 %v7730
        %v8046 = vunpack.c.h.b16 %v7730
        %v8047 = vunpack.c.l.b16 %v7731
        %v8048 = vunpack.c.h.b16 %v7731
        %v8049 = vunpack.c.l.b16 %v7732
        %v8050 = vunpack.c.h.b16 %v7732
        %v8051 = vunpack.c.l.b16 %v7733
        %v8052 = vunpack.c.h.b16 %v7733
        %v8053 = vunpack.c.l.b16 %v7734
        %v8054 = vunpack.c.h.b16 %v7734
        %v8055 = vunpack.c.l.b16 %v7735
        %v8056 = vunpack.c.h.b16 %v7735
        %v8057 = vunpack.c.l.b16 %v7736
        %v8058 = vunpack.c.h.b16 %v7736
        %v8059 = vunpack.c.l.b16 %v7737
        %v8060 = vunpack.c.h.b16 %v7737
        %v8061 = vunpack.c.l.b16 %v7738
        %v8062 = vunpack.c.h.b16 %v7738
        %v8063 = vunpack.c.l.b16 %v7739
        %v8064 = vunpack.c.h.b16 %v7739
        %v8065 = vunpack.c.l.b16 %v7740
        %v8066 = vunpack.c.h.b16 %v7740
        %v8067 = vunpack.c.l.b16 %v7741
        %v8068 = vunpack.c.h.b16 %v7741
        %v8069 = vunpack.c.l.b16 %v7742
        %v8070 = vunpack.c.h.b16 %v7742
        %v8071 = vunpack.c.l.b16 %v7743
        %v8072 = vunpack.c.h.b16 %v7743
        %v8073 = vunpack.c.l.b16 %v7744
        %v8074 = vunpack.c.h.b16 %v7744
        %v8075 = vunpack.c.l.b16 %v7745
        %v8076 = vunpack.c.h.b16 %v7745
        %v8077 = vunpack.c.l.b16 %v7746
        %v8078 = vunpack.c.h.b16 %v7746
        %v8079 = vunpack.c.l.b16 %v7747
        %v8080 = vunpack.c.h.b16 %v7747
        %v8081 = vunpack.c.l.b16 %v7748
        %v8082 = vunpack.c.h.b16 %v7748
        %v8083 = vunpack.c.l.b16 %v7749
        %v8084 = vunpack.c.h.b16 %v7749
        %v8085 = vunpack.c.l.b16 %v7750
        %v8086 = vunpack.c.h.b16 %v7750
        %v8087 = vunpack.c.l.b16 %v7751
        %v8088 = vunpack.c.h.b16 %v7751
        %v8089 = vunpack.c.l.b16 %v7752
        %v8090 = vunpack.c.h.b16 %v7752
        %v8091 = vunpack.c.l.b16 %v7753
        %v8092 = vunpack.c.h.b16 %v7753
        %v8093 = vunpack.c.l.b16 %v7754
        %v8094 = vunpack.c.h.b16 %v7754
        %v8095 = vunpack.c.l.b16 %v7755
        %v8096 = vunpack.c.h.b16 %v7755
        %v8097 = vunpack.c.l.b16 %v7756
        %v8098 = vunpack.c.h.b16 %v7756
        %v8099 = vunpack.c.l.b16 %v7757
        %v8100 = vunpack.c.h.b16 %v7757
        %v8101 = vunpack.c.l.b16 %v7758
        %v8102 = vunpack.c.h.b16 %v7758
        %v8103 = vunpack.c.l.b16 %v7759
        %v8104 = vunpack.c.h.b16 %v7759
        %v8105 = vunpack.c.l.b16 %v7760
        %v8106 = vunpack.c.h.b16 %v7760
        %v8107 = vunpack.c.l.b16 %v7761
        %v8108 = vunpack.c.h.b16 %v7761
        %v8109 = vunpack.c.l.b16 %v7762
        %v8110 = vunpack.c.h.b16 %v7762
        %v8111 = vunpack.c.l.b16 %v7763
        %v8112 = vunpack.c.h.b16 %v7763
        %v8113 = vunpack.c.l.b16 %v7764
        %v8114 = vunpack.c.h.b16 %v7764
        %v8115 = vunpack.c.l.b16 %v7765
        %v8116 = vunpack.c.h.b16 %v7765
        %v8117 = vunpack.c.l.b16 %v7766
        %v8118 = vunpack.c.h.b16 %v7766
        %v8119 = vunpack.c.l.b16 %v7767
        %v8120 = vunpack.c.h.b16 %v7767
        %v8121 = vunpack.c.l.b16 %v7768
        %v8122 = vunpack.c.h.b16 %v7768
        %v8123 = vunpack.c.l.b16 %v7769
        %v8124 = vunpack.c.h.b16 %v7769
        %v8125 = vunpack.c.l.b16 %v7770
        %v8126 = vunpack.c.h.b16 %v7770
        %v8127 = vunpack.c.l.b16 %v7771
        %v8128 = vunpack.c.h.b16 %v7771
        %v8129 = vunpack.c.l.b16 %v7772
        %v8130 = vunpack.c.h.b16 %v7772
        %v8131 = vunpack.c.l.b16 %v7773
        %v8132 = vunpack.c.h.b16 %v7773
        %v8133 = vunpack.c.l.b16 %v7774
        %v8134 = vunpack.c.h.b16 %v7774
        %v8135 = vunpack.c.l.b16 %v7775
        %v8136 = vunpack.c.h.b16 %v7775
        %v8137 = vunpack.c.l.b16 %v7776
        %v8138 = vunpack.c.h.b16 %v7776
        %v8139 = vunpack.c.l.b16 %v7777
        %v8140 = vunpack.c.h.b16 %v7777
        %v8141 = vunpack.c.l.b16 %v7778
        %v8142 = vunpack.c.h.b16 %v7778
        %v8143 = vunpack.c.l.b16 %v7779
        %v8144 = vunpack.c.h.b16 %v7779
        %v8145 = vunpack.c.l.b16 %v7780
        %v8146 = vunpack.c.h.b16 %v7780
        %v8147 = vunpack.c.l.b16 %v7781
        %v8148 = vunpack.c.h.b16 %v7781
        %v8149 = vunpack.c.l.b16 %v7782
        %v8150 = vunpack.c.h.b16 %v7782
        %v8151 = vunpack.c.l.b16 %v7783
        %v8152 = vunpack.c.h.b16 %v7783
        %v8153 = vunpack.c.l.b16 %v7784
        %v8154 = vunpack.c.h.b16 %v7784
        %v8155 = vunpack.c.l.b16 %v7785
        %v8156 = vunpack.c.h.b16 %v7785
        %v8157 = vunpack.c.l.b16 %v7786
        %v8158 = vunpack.c.h.b16 %v7786
        %v8159 = vunpack.c.l.b16 %v7787
        %v8160 = vunpack.c.h.b16 %v7787
        %v8161 = vunpack.c.l.b16 %v7788
        %v8162 = vunpack.c.h.b16 %v7788
        %v8163 = vunpack.c.l.b16 %v7789
        %v8164 = vunpack.c.h.b16 %v7789
        %v8165 = vunpack.c.l.b16 %v7790
        %v8166 = vunpack.c.h.b16 %v7790
        %v8167 = vunpack.c.l.b16 %v7791
        %v8168 = vunpack.c.h.b16 %v7791
        %v8169 = vunpack.c.l.b16 %v7792
        %v8170 = vunpack.c.h.b16 %v7792
        %v8171 = vunpack.c.l.b16 %v7793
        %v8172 = vunpack.c.h.b16 %v7793
        %v8173 = vunpack.c.l.b16 %v7794
        %v8174 = vunpack.c.h.b16 %v7794
        %v8175 = vunpack.c.l.b16 %v7795
        %v8176 = vunpack.c.h.b16 %v7795
        %v8177 = vunpack.c.l.b16 %v7796
        %v8178 = vunpack.c.h.b16 %v7796
        %v8179 = vunpack.c.l.b16 %v7797
        %v8180 = vunpack.c.h.b16 %v7797
        %v8181 = vunpack.c.l.b16 %v7798
        %v8182 = vunpack.c.h.b16 %v7798
        %v8183 = vunpack.c.l.b16 %v7799
        %v8184 = vunpack.c.h.b16 %v7799
        %v8185 = vunpack.c.l.b16 %v7800
        %v8186 = vunpack.c.h.b16 %v7800
        %v8187 = vunpack.c.l.b16 %v7801
        %v8188 = vunpack.c.h.b16 %v7801
        %v8189 = vunpack.c.l.b16 %v7802
        %v8190 = vunpack.c.h.b16 %v7802
        %v8191 = vunpack.c.l.b16 %v7803
        %v8192 = vunpack.c.h.b16 %v7803
        %v8193 = vunpack.c.l.b16 %v7804
        %v8194 = vunpack.c.h.b16 %v7804
        %v8195 = vunpack.c.l.b16 %v7805
        %v8196 = vunpack.c.h.b16 %v7805
        %v8197 = vunpack.c.l.b16 %v7806
        %v8198 = vunpack.c.h.b16 %v7806
        %v8199 = vunpack.c.l.b16 %v7807
        %v8200 = vunpack.c.h.b16 %v7807
        %v8201 = vunpack.c.l.b16 %v7808
        %v8202 = vunpack.c.h.b16 %v7808
        %v8203 = vunpack.c.l.b16 %v7809
        %v8204 = vunpack.c.h.b16 %v7809
        %v8205 = vunpack.c.l.b16 %v7810
        %v8206 = vunpack.c.h.b16 %v7810
        %v8207 = vunpack.c.l.b16 %v7811
        %v8208 = vunpack.c.h.b16 %v7811
        %v8209 = vunpack.c.l.b16 %v7812
        %v8210 = vunpack.c.h.b16 %v7812
        %v8211 = vunpack.c.l.b16 %v7813
        %v8212 = vunpack.c.h.b16 %v7813
        %v8213 = vunpack.c.l.b16 %v7814
        %v8214 = vunpack.c.h.b16 %v7814
        %v8215 = vunpack.c.l.b16 %v7815
        %v8216 = vunpack.c.h.b16 %v7815
        %v8217 = vunpack.c.l.b16 %v7816
        %v8218 = vunpack.c.h.b16 %v7816
        %v8219 = vunpack.c.l.b16 %v7817
        %v8220 = vunpack.c.h.b16 %v7817
        %v8221 = vunpack.c.l.b16 %v7818
        %v8222 = vunpack.c.h.b16 %v7818
        %v8223 = vunpack.c.l.b16 %v7819
        %v8224 = vunpack.c.h.b16 %v7819
        %v8225 = vunpack.c.l.b16 %v7820
        %v8226 = vunpack.c.h.b16 %v7820
        %v8227 = vpack.c.b16 %v7975, %v7971
        %v8228 = vpack.c.b16 %v7976, %v7972
        %v8229 = vpack.c.b16 %v7977, %v7973
        %v8230 = vpack.c.b16 %v7978, %v7974
        %v8231 = vpack.c.b16 %v7983, %v7979
        %v8232 = vpack.c.b16 %v7984, %v7980
        %v8233 = vpack.c.b16 %v7985, %v7981
        %v8234 = vpack.c.b16 %v7986, %v7982
        %v8235 = vpack.c.b16 %v7991, %v7987
        %v8236 = vpack.c.b16 %v7992, %v7988
        %v8237 = vpack.c.b16 %v7993, %v7989
        %v8238 = vpack.c.b16 %v7994, %v7990
        %v8239 = vpack.c.b16 %v7999, %v7995
        %v8240 = vpack.c.b16 %v8000, %v7996
        %v8241 = vpack.c.b16 %v8001, %v7997
        %v8242 = vpack.c.b16 %v8002, %v7998
        %v8243 = vpack.c.b16 %v8007, %v8003
        %v8244 = vpack.c.b16 %v8008, %v8004
        %v8245 = vpack.c.b16 %v8009, %v8005
        %v8246 = vpack.c.b16 %v8010, %v8006
        %v8247 = vpack.c.b16 %v8015, %v8011
        %v8248 = vpack.c.b16 %v8016, %v8012
        %v8249 = vpack.c.b16 %v8017, %v8013
        %v8250 = vpack.c.b16 %v8018, %v8014
        %v8251 = vpack.c.b16 %v8023, %v8019
        %v8252 = vpack.c.b16 %v8024, %v8020
        %v8253 = vpack.c.b16 %v8025, %v8021
        %v8254 = vpack.c.b16 %v8026, %v8022
        %v8255 = vpack.c.b16 %v8031, %v8027
        %v8256 = vpack.c.b16 %v8032, %v8028
        %v8257 = vpack.c.b16 %v8033, %v8029
        %v8258 = vpack.c.b16 %v8034, %v8030
        %v8259 = vpack.c.b16 %v8039, %v8035
        %v8260 = vpack.c.b16 %v8040, %v8036
        %v8261 = vpack.c.b16 %v8041, %v8037
        %v8262 = vpack.c.b16 %v8042, %v8038
        %v8263 = vpack.c.b16 %v8047, %v8043
        %v8264 = vpack.c.b16 %v8048, %v8044
        %v8265 = vpack.c.b16 %v8049, %v8045
        %v8266 = vpack.c.b16 %v8050, %v8046
        %v8267 = vpack.c.b16 %v8055, %v8051
        %v8268 = vpack.c.b16 %v8056, %v8052
        %v8269 = vpack.c.b16 %v8057, %v8053
        %v8270 = vpack.c.b16 %v8058, %v8054
        %v8271 = vpack.c.b16 %v8063, %v8059
        %v8272 = vpack.c.b16 %v8064, %v8060
        %v8273 = vpack.c.b16 %v8065, %v8061
        %v8274 = vpack.c.b16 %v8066, %v8062
        %v8275 = vpack.c.b16 %v8071, %v8067
        %v8276 = vpack.c.b16 %v8072, %v8068
        %v8277 = vpack.c.b16 %v8073, %v8069
        %v8278 = vpack.c.b16 %v8074, %v8070
        %v8279 = vpack.c.b16 %v8079, %v8075
        %v8280 = vpack.c.b16 %v8080, %v8076
        %v8281 = vpack.c.b16 %v8081, %v8077
        %v8282 = vpack.c.b16 %v8082, %v8078
        %v8283 = vpack.c.b16 %v8087, %v8083
        %v8284 = vpack.c.b16 %v8088, %v8084
        %v8285 = vpack.c.b16 %v8089, %v8085
        %v8286 = vpack.c.b16 %v8090, %v8086
        %v8287 = vpack.c.b16 %v8095, %v8091
        %v8288 = vpack.c.b16 %v8096, %v8092
        %v8289 = vpack.c.b16 %v8097, %v8093
        %v8290 = vpack.c.b16 %v8098, %v8094
        %v8291 = vpack.c.b16 %v8103, %v8099
        %v8292 = vpack.c.b16 %v8104, %v8100
        %v8293 = vpack.c.b16 %v8105, %v8101
        %v8294 = vpack.c.b16 %v8106, %v8102
        %v8295 = vpack.c.b16 %v8111, %v8107
        %v8296 = vpack.c.b16 %v8112, %v8108
        %v8297 = vpack.c.b16 %v8113, %v8109
        %v8298 = vpack.c.b16 %v8114, %v8110
        %v8299 = vpack.c.b16 %v8119, %v8115
        %v8300 = vpack.c.b16 %v8120, %v8116
        %v8301 = vpack.c.b16 %v8121, %v8117
        %v8302 = vpack.c.b16 %v8122, %v8118
        %v8303 = vpack.c.b16 %v8127, %v8123
        %v8304 = vpack.c.b16 %v8128, %v8124
        %v8305 = vpack.c.b16 %v8129, %v8125
        %v8306 = vpack.c.b16 %v8130, %v8126
        %v8307 = vpack.c.b16 %v8135, %v8131
        %v8308 = vpack.c.b16 %v8136, %v8132
        %v8309 = vpack.c.b16 %v8137, %v8133
        %v8310 = vpack.c.b16 %v8138, %v8134
        %v8311 = vpack.c.b16 %v8143, %v8139
        %v8312 = vpack.c.b16 %v8144, %v8140
        %v8313 = vpack.c.b16 %v8145, %v8141
        %v8314 = vpack.c.b16 %v8146, %v8142
        %v8315 = vpack.c.b16 %v8151, %v8147
        %v8316 = vpack.c.b16 %v8152, %v8148
        %v8317 = vpack.c.b16 %v8153, %v8149
        %v8318 = vpack.c.b16 %v8154, %v8150
        %v8319 = vpack.c.b16 %v8159, %v8155
        %v8320 = vpack.c.b16 %v8160, %v8156
        %v8321 = vpack.c.b16 %v8161, %v8157
        %v8322 = vpack.c.b16 %v8162, %v8158
        %v8323 = vpack.c.b16 %v8167, %v8163
        %v8324 = vpack.c.b16 %v8168, %v8164
        %v8325 = vpack.c.b16 %v8169, %v8165
        %v8326 = vpack.c.b16 %v8170, %v8166
        %v8327 = vpack.c.b16 %v8175, %v8171
        %v8328 = vpack.c.b16 %v8176, %v8172
        %v8329 = vpack.c.b16 %v8177, %v8173
        %v8330 = vpack.c.b16 %v8178, %v8174
        %v8331 = vpack.c.b16 %v8183, %v8179
        %v8332 = vpack.c.b16 %v8184, %v8180
        %v8333 = vpack.c.b16 %v8185, %v8181
        %v8334 = vpack.c.b16 %v8186, %v8182
        %v8335 = vpack.c.b16 %v8191, %v8187
        %v8336 = vpack.c.b16 %v8192, %v8188
        %v8337 = vpack.c.b16 %v8193, %v8189
        %v8338 = vpack.c.b16 %v8194, %v8190
        %v8339 = vpack.c.b16 %v8199, %v8195
        %v8340 = vpack.c.b16 %v8200, %v8196
        %v8341 = vpack.c.b16 %v8201, %v8197
        %v8342 = vpack.c.b16 %v8202, %v8198
        %v8343 = vpack.c.b16 %v8207, %v8203
        %v8344 = vpack.c.b16 %v8208, %v8204
        %v8345 = vpack.c.b16 %v8209, %v8205
        %v8346 = vpack.c.b16 %v8210, %v8206
        %v8347 = vpack.c.b16 %v8215, %v8211
        %v8348 = vpack.c.b16 %v8216, %v8212
        %v8349 = vpack.c.b16 %v8217, %v8213
        %v8350 = vpack.c.b16 %v8218, %v8214
        %v8351 = vpack.c.b16 %v8223, %v8219
        %v8352 = vpack.c.b16 %v8224, %v8220
        %v8353 = vpack.c.b16 %v8225, %v8221
        %v8354 = vpack.c.b16 %v8226, %v8222
        %8483 = vmatprep.subr.bf16.mxu0 %v8256
        %8484 = vmatpush1.bf16.msra.mxu0 %v8255
        %8485 = vmatprep.subr.bf16.mxu0 %v8252
        %8486 = vmatpush1.bf16.msra.mxu0 %v8251
        %8487 = vmatprep.subr.bf16.mxu0 %v8248
        %8488 = vmatpush1.bf16.msra.mxu0 %v8247
        %8489 = vmatprep.subr.bf16.mxu0 %v8244
        %8490 = vmatpush1.bf16.msra.mxu0 %v8243
        %8491 = vmatprep.subr.bf16.mxu0 %v8240
        %8492 = vmatpush1.bf16.msra.mxu0 %v8239
        %8493 = vmatprep.subr.bf16.mxu0 %v8236
        %8494 = vmatpush1.bf16.msra.mxu0 %v8235
        %8495 = vmatprep.subr.bf16.mxu0 %v8232
        %8496 = vmatpush1.bf16.msra.mxu0 %v8231
        %8497 = vmatprep.subr.bf16.mxu0 %v8228
        %8498 = vmatpush1.bf16.msra.mxu0 %v8227
        %8499 = vmatprep.subr.bf16.mxu0 %v8288
        %8500 = vmatpush2.bf16.msra.mxu0 %v8287
        %8501 = vmatprep.subr.bf16.mxu0 %v8284
        %8502 = vmatpush2.bf16.msra.mxu0 %v8283
        %8503 = vmatprep.subr.bf16.mxu0 %v8280
        %8504 = vmatpush2.bf16.msra.mxu0 %v8279
        %8505 = vmatprep.subr.bf16.mxu0 %v8276
        %8506 = vmatpush2.bf16.msra.mxu0 %v8275
        %8507 = vmatprep.subr.bf16.mxu0 %v8272
        %8508 = vmatpush2.bf16.msra.mxu0 %v8271
        %8509 = vmatprep.subr.bf16.mxu0 %v8268
        %8510 = vmatpush2.bf16.msra.mxu0 %v8267
        %8511 = vmatprep.subr.bf16.mxu0 %v8264
        %8512 = vmatpush2.bf16.msra.mxu0 %v8263
        %8513 = vmatprep.subr.bf16.mxu0 %v8260
        %8514 = vmatpush2.bf16.msra.mxu0 %v8259
        %8515 = vmatprep.mubr.bf16.mxu0 %v6920
        %8516 = vmatmul.mubr.bf16.gmra.mxu0 %v6919
        %v8517 = vpop.f32.mrf.mxu0
        %v8518 = vadd.f32 %v7826, %v8517
        %v8519 = vpop.f32.mrf.mxu0
        %v8520 = vadd.f32 %v7830, %v8519
        %v8521 = vpop.f32.mrf.mxu0
        %v8522 = vadd.f32 %v7826, %v8521
        %v8523 = vpop.f32.mrf.mxu0
        %v8524 = vadd.f32 %v7830, %v8523
        %8525 = vmatprep.mubr.bf16.mxu0 %v6924
        %8526 = vmatmul.mubr.bf16.gmra.mxu0 %v6923
        %v8527 = vpop.f32.mrf.mxu0
        %v8528 = vadd.f32 %v7826, %v8527
        %v8529 = vpop.f32.mrf.mxu0
        %v8530 = vadd.f32 %v7830, %v8529
        %v8531 = vpop.f32.mrf.mxu0
        %v8532 = vadd.f32 %v7826, %v8531
        %v8533 = vpop.f32.mrf.mxu0
        %v8534 = vadd.f32 %v7830, %v8533
        %8535 = vmatprep.mubr.bf16.mxu0 %v6928
        %8536 = vmatmul.mubr.bf16.gmra.mxu0 %v6927
        %v8537 = vpop.f32.mrf.mxu0
        %v8538 = vadd.f32 %v7826, %v8537
        %v8539 = vpop.f32.mrf.mxu0
        %v8540 = vadd.f32 %v7830, %v8539
        %v8541 = vpop.f32.mrf.mxu0
        %v8542 = vadd.f32 %v7826, %v8541
        %v8543 = vpop.f32.mrf.mxu0
        %v8544 = vadd.f32 %v7830, %v8543
        %8545 = vmatprep.mubr.bf16.mxu0 %v6932
        %8546 = vmatmul.mubr.bf16.gmra.mxu0 %v6931
        %v8547 = vpop.f32.mrf.mxu0
        %v8548 = vadd.f32 %v7826, %v8547
        %v8549 = vpop.f32.mrf.mxu0
        %v8550 = vadd.f32 %v7830, %v8549
        %v8551 = vpop.f32.mrf.mxu0
        %v8552 = vadd.f32 %v7826, %v8551
        %v8553 = vpop.f32.mrf.mxu0
        %v8554 = vadd.f32 %v7830, %v8553
        %8555 = vmatprep.mubr.bf16.mxu0 %v6936
        %8556 = vmatmul.mubr.bf16.gmra.mxu0 %v6935
        %v8557 = vpop.f32.mrf.mxu0
        %v8558 = vadd.f32 %v7826, %v8557
        %v8559 = vpop.f32.mrf.mxu0
        %v8560 = vadd.f32 %v7830, %v8559
        %v8561 = vpop.f32.mrf.mxu0
        %v8562 = vadd.f32 %v7826, %v8561
        %v8563 = vpop.f32.mrf.mxu0
        %v8564 = vadd.f32 %v7830, %v8563
        %8565 = vmatprep.mubr.bf16.mxu0 %v6940
        %8566 = vmatmul.mubr.bf16.gmra.mxu0 %v6939
        %v8567 = vpop.f32.mrf.mxu0
        %v8568 = vadd.f32 %v7826, %v8567
        %v8569 = vpop.f32.mrf.mxu0
        %v8570 = vadd.f32 %v7830, %v8569
        %v8571 = vpop.f32.mrf.mxu0
        %v8572 = vadd.f32 %v7826, %v8571
        %v8573 = vpop.f32.mrf.mxu0
        %v8574 = vadd.f32 %v7830, %v8573
        %8575 = vmatprep.mubr.bf16.mxu0 %v6944
        %8576 = vmatmul.mubr.bf16.gmra.mxu0 %v6943
        %v8577 = vpop.f32.mrf.mxu0
        %v8578 = vadd.f32 %v7826, %v8577
        %v8579 = vpop.f32.mrf.mxu0
        %v8580 = vadd.f32 %v7830, %v8579
        %v8581 = vpop.f32.mrf.mxu0
        %v8582 = vadd.f32 %v7826, %v8581
        %v8583 = vpop.f32.mrf.mxu0
        %v8584 = vadd.f32 %v7830, %v8583
        %8585 = vmatprep.mubr.bf16.mxu0 %v6948
        %8586 = vmatmul.mubr.bf16.gmra.mxu0 %v6947
        %v8587 = vpop.f32.mrf.mxu0
        %v8588 = vadd.f32 %v7826, %v8587
        %v8589 = vpop.f32.mrf.mxu0
        %v8590 = vadd.f32 %v7830, %v8589
        %v8591 = vpop.f32.mrf.mxu0
        %v8592 = vadd.f32 %v7826, %v8591
        %v8593 = vpop.f32.mrf.mxu0
        %v8594 = vadd.f32 %v7830, %v8593
        %8595 = vdwg.mxu0
        %8596 = vmatprep.subr.bf16.mxu0 %v8320
        %8597 = vmatpush1.bf16.msra.mxu0 %v8319
        %8598 = vmatprep.subr.bf16.mxu0 %v8316
        %8599 = vmatpush1.bf16.msra.mxu0 %v8315
        %8600 = vmatprep.subr.bf16.mxu0 %v8312
        %8601 = vmatpush1.bf16.msra.mxu0 %v8311
        %8602 = vmatprep.subr.bf16.mxu0 %v8308
        %8603 = vmatpush1.bf16.msra.mxu0 %v8307
        %8604 = vmatprep.subr.bf16.mxu0 %v8304
        %8605 = vmatpush1.bf16.msra.mxu0 %v8303
        %8606 = vmatprep.subr.bf16.mxu0 %v8300
        %8607 = vmatpush1.bf16.msra.mxu0 %v8299
        %8608 = vmatprep.subr.bf16.mxu0 %v8296
        %8609 = vmatpush1.bf16.msra.mxu0 %v8295
        %8610 = vmatprep.subr.bf16.mxu0 %v8292
        %8611 = vmatpush1.bf16.msra.mxu0 %v8291
        %8612 = vmatprep.subr.bf16.mxu0 %v8352
        %8613 = vmatpush2.bf16.msra.mxu0 %v8351
        %8614 = vmatprep.subr.bf16.mxu0 %v8348
        %8615 = vmatpush2.bf16.msra.mxu0 %v8347
        %8616 = vmatprep.subr.bf16.mxu0 %v8344
        %8617 = vmatpush2.bf16.msra.mxu0 %v8343
        %8618 = vmatprep.subr.bf16.mxu0 %v8340
        %8619 = vmatpush2.bf16.msra.mxu0 %v8339
        %8620 = vmatprep.subr.bf16.mxu0 %v8336
        %8621 = vmatpush2.bf16.msra.mxu0 %v8335
        %8622 = vmatprep.subr.bf16.mxu0 %v8332
        %8623 = vmatpush2.bf16.msra.mxu0 %v8331
        %8624 = vmatprep.subr.bf16.mxu0 %v8328
        %8625 = vmatpush2.bf16.msra.mxu0 %v8327
        %8626 = vmatprep.subr.bf16.mxu0 %v8324
        %8627 = vmatpush2.bf16.msra.mxu0 %v8323
        %8628 = vmatprep.mubr.bf16.mxu0 %v6922
        %8629 = vmatmul.mubr.bf16.gmra.mxu0 %v6921
        %v8630 = vpop.f32.mrf.mxu0
        %v8631 = vadd.f32 %v8518, %v8630
        %v8632 = vpop.f32.mrf.mxu0
        %v8633 = vadd.f32 %v8520, %v8632
        %v8634 = vpop.f32.mrf.mxu0
        %v8635 = vadd.f32 %v8522, %v8634
        %v8636 = vpop.f32.mrf.mxu0
        %v8637 = vadd.f32 %v8524, %v8636
        %8638 = vmatprep.mubr.bf16.mxu0 %v6926
        %8639 = vmatmul.mubr.bf16.gmra.mxu0 %v6925
        %v8640 = vpop.f32.mrf.mxu0
        %v8641 = vadd.f32 %v8528, %v8640
        %v8642 = vpop.f32.mrf.mxu0
        %v8643 = vadd.f32 %v8530, %v8642
        %v8644 = vpop.f32.mrf.mxu0
        %v8645 = vadd.f32 %v8532, %v8644
        %v8646 = vpop.f32.mrf.mxu0
        %v8647 = vadd.f32 %v8534, %v8646
        %8648 = vmatprep.mubr.bf16.mxu0 %v6930
        %8649 = vmatmul.mubr.bf16.gmra.mxu0 %v6929
        %v8650 = vpop.f32.mrf.mxu0
        %v8651 = vadd.f32 %v8538, %v8650
        %v8652 = vpop.f32.mrf.mxu0
        %v8653 = vadd.f32 %v8540, %v8652
        %v8654 = vpop.f32.mrf.mxu0
        %v8655 = vadd.f32 %v8542, %v8654
        %v8656 = vpop.f32.mrf.mxu0
        %v8657 = vadd.f32 %v8544, %v8656
        %8658 = vmatprep.mubr.bf16.mxu0 %v6934
        %8659 = vmatmul.mubr.bf16.gmra.mxu0 %v6933
        %v8660 = vpop.f32.mrf.mxu0
        %v8661 = vadd.f32 %v8548, %v8660
        %v8662 = vpop.f32.mrf.mxu0
        %v8663 = vadd.f32 %v8550, %v8662
        %v8664 = vpop.f32.mrf.mxu0
        %v8665 = vadd.f32 %v8552, %v8664
        %v8666 = vpop.f32.mrf.mxu0
        %v8667 = vadd.f32 %v8554, %v8666
        %8668 = vmatprep.mubr.bf16.mxu0 %v6938
        %8669 = vmatmul.mubr.bf16.gmra.mxu0 %v6937
        %v8670 = vpop.f32.mrf.mxu0
        %v8671 = vadd.f32 %v8558, %v8670
        %v8672 = vpop.f32.mrf.mxu0
        %v8673 = vadd.f32 %v8560, %v8672
        %v8674 = vpop.f32.mrf.mxu0
        %v8675 = vadd.f32 %v8562, %v8674
        %v8676 = vpop.f32.mrf.mxu0
        %v8677 = vadd.f32 %v8564, %v8676
        %8678 = vmatprep.mubr.bf16.mxu0 %v6942
        %8679 = vmatmul.mubr.bf16.gmra.mxu0 %v6941
        %v8680 = vpop.f32.mrf.mxu0
        %v8681 = vadd.f32 %v8568, %v8680
        %v8682 = vpop.f32.mrf.mxu0
        %v8683 = vadd.f32 %v8570, %v8682
        %v8684 = vpop.f32.mrf.mxu0
        %v8685 = vadd.f32 %v8572, %v8684
        %v8686 = vpop.f32.mrf.mxu0
        %v8687 = vadd.f32 %v8574, %v8686
        %8688 = vmatprep.mubr.bf16.mxu0 %v6946
        %8689 = vmatmul.mubr.bf16.gmra.mxu0 %v6945
        %v8690 = vpop.f32.mrf.mxu0
        %v8691 = vadd.f32 %v8578, %v8690
        %v8692 = vpop.f32.mrf.mxu0
        %v8693 = vadd.f32 %v8580, %v8692
        %v8694 = vpop.f32.mrf.mxu0
        %v8695 = vadd.f32 %v8582, %v8694
        %v8696 = vpop.f32.mrf.mxu0
        %v8697 = vadd.f32 %v8584, %v8696
        %8698 = vmatprep.mubr.bf16.mxu0 %v6950
        %8699 = vmatmul.mubr.bf16.gmra.mxu0 %v6949
        %v8700 = vpop.f32.mrf.mxu0
        %v8701 = vadd.f32 %v8588, %v8700
        %v8702 = vpop.f32.mrf.mxu0
        %v8703 = vadd.f32 %v8590, %v8702
        %v8704 = vpop.f32.mrf.mxu0
        %v8705 = vadd.f32 %v8592, %v8704
        %v8706 = vpop.f32.mrf.mxu0
        %v8707 = vadd.f32 %v8594, %v8706
        %8708 = vdwg.mxu0
        %8709 = vmatprep.subr.bf16.mxu0 %v8258
        %8710 = vmatpush1.bf16.msra.mxu0 %v8257
        %8711 = vmatprep.subr.bf16.mxu0 %v8254
        %8712 = vmatpush1.bf16.msra.mxu0 %v8253
        %8713 = vmatprep.subr.bf16.mxu0 %v8250
        %8714 = vmatpush1.bf16.msra.mxu0 %v8249
        %8715 = vmatprep.subr.bf16.mxu0 %v8246
        %8716 = vmatpush1.bf16.msra.mxu0 %v8245
        %8717 = vmatprep.subr.bf16.mxu0 %v8242
        %8718 = vmatpush1.bf16.msra.mxu0 %v8241
        %8719 = vmatprep.subr.bf16.mxu0 %v8238
        %8720 = vmatpush1.bf16.msra.mxu0 %v8237
        %8721 = vmatprep.subr.bf16.mxu0 %v8234
        %8722 = vmatpush1.bf16.msra.mxu0 %v8233
        %8723 = vmatprep.subr.bf16.mxu0 %v8230
        %8724 = vmatpush1.bf16.msra.mxu0 %v8229
        %8725 = vmatprep.subr.bf16.mxu0 %v8290
        %8726 = vmatpush2.bf16.msra.mxu0 %v8289
        %8727 = vmatprep.subr.bf16.mxu0 %v8286
        %8728 = vmatpush2.bf16.msra.mxu0 %v8285
        %8729 = vmatprep.subr.bf16.mxu0 %v8282
        %8730 = vmatpush2.bf16.msra.mxu0 %v8281
        %8731 = vmatprep.subr.bf16.mxu0 %v8278
        %8732 = vmatpush2.bf16.msra.mxu0 %v8277
        %8733 = vmatprep.subr.bf16.mxu0 %v8274
        %8734 = vmatpush2.bf16.msra.mxu0 %v8273
        %8735 = vmatprep.subr.bf16.mxu0 %v8270
        %8736 = vmatpush2.bf16.msra.mxu0 %v8269
        %8737 = vmatprep.subr.bf16.mxu0 %v8266
        %8738 = vmatpush2.bf16.msra.mxu0 %v8265
        %8739 = vmatprep.subr.bf16.mxu0 %v8262
        %8740 = vmatpush2.bf16.msra.mxu0 %v8261
        %8741 = vmatprep.mubr.bf16.mxu0 %v6920
        %8742 = vmatmul.mubr.bf16.gmra.mxu0 %v6919
        %v8743 = vpop.f32.mrf.mxu0
        %v8744 = vadd.f32 %v7834, %v8743
        %v8745 = vpop.f32.mrf.mxu0
        %v8746 = vadd.f32 %v7838, %v8745
        %v8747 = vpop.f32.mrf.mxu0
        %v8748 = vadd.f32 %v7834, %v8747
        %v8749 = vpop.f32.mrf.mxu0
        %v8750 = vadd.f32 %v7838, %v8749
        %8751 = vmatprep.mubr.bf16.mxu0 %v6924
        %8752 = vmatmul.mubr.bf16.gmra.mxu0 %v6923
        %v8753 = vpop.f32.mrf.mxu0
        %v8754 = vadd.f32 %v7834, %v8753
        %v8755 = vpop.f32.mrf.mxu0
        %v8756 = vadd.f32 %v7838, %v8755
        %v8757 = vpop.f32.mrf.mxu0
        %v8758 = vadd.f32 %v7834, %v8757
        %v8759 = vpop.f32.mrf.mxu0
        %v8760 = vadd.f32 %v7838, %v8759
        %8761 = vmatprep.mubr.bf16.mxu0 %v6928
        %8762 = vmatmul.mubr.bf16.gmra.mxu0 %v6927
        %v8763 = vpop.f32.mrf.mxu0
        %v8764 = vadd.f32 %v7834, %v8763
        %v8765 = vpop.f32.mrf.mxu0
        %v8766 = vadd.f32 %v7838, %v8765
        %v8767 = vpop.f32.mrf.mxu0
        %v8768 = vadd.f32 %v7834, %v8767
        %v8769 = vpop.f32.mrf.mxu0
        %v8770 = vadd.f32 %v7838, %v8769
        %8771 = vmatprep.mubr.bf16.mxu0 %v6932
        %8772 = vmatmul.mubr.bf16.gmra.mxu0 %v6931
        %v8773 = vpop.f32.mrf.mxu0
        %v8774 = vadd.f32 %v7834, %v8773
        %v8775 = vpop.f32.mrf.mxu0
        %v8776 = vadd.f32 %v7838, %v8775
        %v8777 = vpop.f32.mrf.mxu0
        %v8778 = vadd.f32 %v7834, %v8777
        %v8779 = vpop.f32.mrf.mxu0
        %v8780 = vadd.f32 %v7838, %v8779
        %8781 = vmatprep.mubr.bf16.mxu0 %v6936
        %8782 = vmatmul.mubr.bf16.gmra.mxu0 %v6935
        %v8783 = vpop.f32.mrf.mxu0
        %v8784 = vadd.f32 %v7834, %v8783
        %v8785 = vpop.f32.mrf.mxu0
        %v8786 = vadd.f32 %v7838, %v8785
        %v8787 = vpop.f32.mrf.mxu0
        %v8788 = vadd.f32 %v7834, %v8787
        %v8789 = vpop.f32.mrf.mxu0
        %v8790 = vadd.f32 %v7838, %v8789
        %8791 = vmatprep.mubr.bf16.mxu0 %v6940
        %8792 = vmatmul.mubr.bf16.gmra.mxu0 %v6939
        %v8793 = vpop.f32.mrf.mxu0
        %v8794 = vadd.f32 %v7834, %v8793
        %v8795 = vpop.f32.mrf.mxu0
        %v8796 = vadd.f32 %v7838, %v8795
        %v8797 = vpop.f32.mrf.mxu0
        %v8798 = vadd.f32 %v7834, %v8797
        %v8799 = vpop.f32.mrf.mxu0
        %v8800 = vadd.f32 %v7838, %v8799
        %8801 = vmatprep.mubr.bf16.mxu0 %v6944
        %8802 = vmatmul.mubr.bf16.gmra.mxu0 %v6943
        %v8803 = vpop.f32.mrf.mxu0
        %v8804 = vadd.f32 %v7834, %v8803
        %v8805 = vpop.f32.mrf.mxu0
        %v8806 = vadd.f32 %v7838, %v8805
        %v8807 = vpop.f32.mrf.mxu0
        %v8808 = vadd.f32 %v7834, %v8807
        %v8809 = vpop.f32.mrf.mxu0
        %v8810 = vadd.f32 %v7838, %v8809
        %8811 = vmatprep.mubr.bf16.mxu0 %v6948
        %8812 = vmatmul.mubr.bf16.gmra.mxu0 %v6947
        %v8813 = vpop.f32.mrf.mxu0
        %v8814 = vadd.f32 %v7834, %v8813
        %v8815 = vpop.f32.mrf.mxu0
        %v8816 = vadd.f32 %v7838, %v8815
        %v8817 = vpop.f32.mrf.mxu0
        %v8818 = vadd.f32 %v7834, %v8817
        %v8819 = vpop.f32.mrf.mxu0
        %v8820 = vadd.f32 %v7838, %v8819
        %8821 = vdwg.mxu0
        %8822 = vmatprep.subr.bf16.mxu0 %v8322
        %8823 = vmatpush1.bf16.msra.mxu0 %v8321
        %8824 = vmatprep.subr.bf16.mxu0 %v8318
        %8825 = vmatpush1.bf16.msra.mxu0 %v8317
        %8826 = vmatprep.subr.bf16.mxu0 %v8314
        %8827 = vmatpush1.bf16.msra.mxu0 %v8313
        %8828 = vmatprep.subr.bf16.mxu0 %v8310
        %8829 = vmatpush1.bf16.msra.mxu0 %v8309
        %8830 = vmatprep.subr.bf16.mxu0 %v8306
        %8831 = vmatpush1.bf16.msra.mxu0 %v8305
        %8832 = vmatprep.subr.bf16.mxu0 %v8302
        %8833 = vmatpush1.bf16.msra.mxu0 %v8301
        %8834 = vmatprep.subr.bf16.mxu0 %v8298
        %8835 = vmatpush1.bf16.msra.mxu0 %v8297
        %8836 = vmatprep.subr.bf16.mxu0 %v8294
        %8837 = vmatpush1.bf16.msra.mxu0 %v8293
        %8838 = vmatprep.subr.bf16.mxu0 %v8354
        %8839 = vmatpush2.bf16.msra.mxu0 %v8353
        %8840 = vmatprep.subr.bf16.mxu0 %v8350
        %8841 = vmatpush2.bf16.msra.mxu0 %v8349
        %8842 = vmatprep.subr.bf16.mxu0 %v8346
        %8843 = vmatpush2.bf16.msra.mxu0 %v8345
        %8844 = vmatprep.subr.bf16.mxu0 %v8342
        %8845 = vmatpush2.bf16.msra.mxu0 %v8341
        %8846 = vmatprep.subr.bf16.mxu0 %v8338
        %8847 = vmatpush2.bf16.msra.mxu0 %v8337
        %8848 = vmatprep.subr.bf16.mxu0 %v8334
        %8849 = vmatpush2.bf16.msra.mxu0 %v8333
        %8850 = vmatprep.subr.bf16.mxu0 %v8330
        %8851 = vmatpush2.bf16.msra.mxu0 %v8329
        %8852 = vmatprep.subr.bf16.mxu0 %v8326
        %8853 = vmatpush2.bf16.msra.mxu0 %v8325
        %8854 = vmatprep.mubr.bf16.mxu0 %v6922
        %8855 = vmatmul.mubr.bf16.gmra.mxu0 %v6921
        %v8856 = vpop.f32.mrf.mxu0
        %v8857 = vadd.f32 %v8744, %v8856
        %v8858 = vpop.f32.mrf.mxu0
        %v8859 = vadd.f32 %v8746, %v8858
        %v8860 = vpop.f32.mrf.mxu0
        %v8861 = vadd.f32 %v8748, %v8860
        %v8862 = vpop.f32.mrf.mxu0
        %v8863 = vadd.f32 %v8750, %v8862
        %8864 = vmatprep.mubr.bf16.mxu0 %v6926
        %8865 = vmatmul.mubr.bf16.gmra.mxu0 %v6925
        %v8866 = vpop.f32.mrf.mxu0
        %v8867 = vadd.f32 %v8754, %v8866
        %v8868 = vpop.f32.mrf.mxu0
        %v8869 = vadd.f32 %v8756, %v8868
        %v8870 = vpop.f32.mrf.mxu0
        %v8871 = vadd.f32 %v8758, %v8870
        %v8872 = vpop.f32.mrf.mxu0
        %v8873 = vadd.f32 %v8760, %v8872
        %8874 = vmatprep.mubr.bf16.mxu0 %v6930
        %8875 = vmatmul.mubr.bf16.gmra.mxu0 %v6929
        %v8876 = vpop.f32.mrf.mxu0
        %v8877 = vadd.f32 %v8764, %v8876
        %v8878 = vpop.f32.mrf.mxu0
        %v8879 = vadd.f32 %v8766, %v8878
        %v8880 = vpop.f32.mrf.mxu0
        %v8881 = vadd.f32 %v8768, %v8880
        %v8882 = vpop.f32.mrf.mxu0
        %v8883 = vadd.f32 %v8770, %v8882
        %8884 = vmatprep.mubr.bf16.mxu0 %v6934
        %8885 = vmatmul.mubr.bf16.gmra.mxu0 %v6933
        %v8886 = vpop.f32.mrf.mxu0
        %v8887 = vadd.f32 %v8774, %v8886
        %v8888 = vpop.f32.mrf.mxu0
        %v8889 = vadd.f32 %v8776, %v8888
        %v8890 = vpop.f32.mrf.mxu0
        %v8891 = vadd.f32 %v8778, %v8890
        %v8892 = vpop.f32.mrf.mxu0
        %v8893 = vadd.f32 %v8780, %v8892
        %8894 = vmatprep.mubr.bf16.mxu0 %v6938
        %8895 = vmatmul.mubr.bf16.gmra.mxu0 %v6937
        %v8896 = vpop.f32.mrf.mxu0
        %v8897 = vadd.f32 %v8784, %v8896
        %v8898 = vpop.f32.mrf.mxu0
        %v8899 = vadd.f32 %v8786, %v8898
        %v8900 = vpop.f32.mrf.mxu0
        %v8901 = vadd.f32 %v8788, %v8900
        %v8902 = vpop.f32.mrf.mxu0
        %v8903 = vadd.f32 %v8790, %v8902
        %8904 = vmatprep.mubr.bf16.mxu0 %v6942
        %8905 = vmatmul.mubr.bf16.gmra.mxu0 %v6941
        %v8906 = vpop.f32.mrf.mxu0
        %v8907 = vadd.f32 %v8794, %v8906
        %v8908 = vpop.f32.mrf.mxu0
        %v8909 = vadd.f32 %v8796, %v8908
        %v8910 = vpop.f32.mrf.mxu0
        %v8911 = vadd.f32 %v8798, %v8910
        %v8912 = vpop.f32.mrf.mxu0
        %v8913 = vadd.f32 %v8800, %v8912
        %8914 = vmatprep.mubr.bf16.mxu0 %v6946
        %8915 = vmatmul.mubr.bf16.gmra.mxu0 %v6945
        %v8916 = vpop.f32.mrf.mxu0
        %v8917 = vadd.f32 %v8804, %v8916
        %v8918 = vpop.f32.mrf.mxu0
        %v8919 = vadd.f32 %v8806, %v8918
        %v8920 = vpop.f32.mrf.mxu0
        %v8921 = vadd.f32 %v8808, %v8920
        %v8922 = vpop.f32.mrf.mxu0
        %v8923 = vadd.f32 %v8810, %v8922
        %8924 = vmatprep.mubr.bf16.mxu0 %v6950
        %8925 = vmatmul.mubr.bf16.gmra.mxu0 %v6949
        %v8926 = vpop.f32.mrf.mxu0
        %v8927 = vadd.f32 %v8814, %v8926
        %v8928 = vpop.f32.mrf.mxu0
        %v8929 = vadd.f32 %v8816, %v8928
        %v8930 = vpop.f32.mrf.mxu0
        %v8931 = vadd.f32 %v8818, %v8930
        %v8932 = vpop.f32.mrf.mxu0
        %v8933 = vadd.f32 %v8820, %v8932
        %8934 = vdwg.mxu0
        %v8935 = vmul.f32 %v8631, 0.5
        %v8936 = vmul.f32 %v8633, 0.5
        %v8937 = vmul.f32 %v8857, 0.5
        %v8938 = vmul.f32 %v8859, 0.5
        %v8939 = vmul.f32 %v8635, 0.5
        %v8940 = vmul.f32 %v8637, 0.5
        %v8941 = vmul.f32 %v8861, 0.5
        %v8942 = vmul.f32 %v8863, 0.5
        %v8943 = vmul.f32 %v8641, 0.5
        %v8944 = vmul.f32 %v8643, 0.5
        %v8945 = vmul.f32 %v8867, 0.5
        %v8946 = vmul.f32 %v8869, 0.5
        %v8947 = vmul.f32 %v8645, 0.5
        %v8948 = vmul.f32 %v8647, 0.5
        %v8949 = vmul.f32 %v8871, 0.5
        %v8950 = vmul.f32 %v8873, 0.5
        %v8951 = vmul.f32 %v8651, 0.5
        %v8952 = vmul.f32 %v8653, 0.5
        %v8953 = vmul.f32 %v8877, 0.5
        %v8954 = vmul.f32 %v8879, 0.5
        %v8955 = vmul.f32 %v8655, 0.5
        %v8956 = vmul.f32 %v8657, 0.5
        %v8957 = vmul.f32 %v8881, 0.5
        %v8958 = vmul.f32 %v8883, 0.5
        %v8959 = vmul.f32 %v8661, 0.5
        %v8960 = vmul.f32 %v8663, 0.5
        %v8961 = vmul.f32 %v8887, 0.5
        %v8962 = vmul.f32 %v8889, 0.5
        %v8963 = vmul.f32 %v8665, 0.5
        %v8964 = vmul.f32 %v8667, 0.5
        %v8965 = vmul.f32 %v8891, 0.5
        %v8966 = vmul.f32 %v8893, 0.5
        %v8967 = vmul.f32 %v8671, 0.5
        %v8968 = vmul.f32 %v8673, 0.5
        %v8969 = vmul.f32 %v8897, 0.5
        %v8970 = vmul.f32 %v8899, 0.5
        %v8971 = vmul.f32 %v8675, 0.5
        %v8972 = vmul.f32 %v8677, 0.5
        %v8973 = vmul.f32 %v8901, 0.5
        %v8974 = vmul.f32 %v8903, 0.5
        %v8975 = vmul.f32 %v8681, 0.5
        %v8976 = vmul.f32 %v8683, 0.5
        %v8977 = vmul.f32 %v8907, 0.5
        %v8978 = vmul.f32 %v8909, 0.5
        %v8979 = vmul.f32 %v8685, 0.5
        %v8980 = vmul.f32 %v8687, 0.5
        %v8981 = vmul.f32 %v8911, 0.5
        %v8982 = vmul.f32 %v8913, 0.5
        %v8983 = vmul.f32 %v8691, 0.5
        %v8984 = vmul.f32 %v8693, 0.5
        %v8985 = vmul.f32 %v8917, 0.5
        %v8986 = vmul.f32 %v8919, 0.5
        %v8987 = vmul.f32 %v8695, 0.5
        %v8988 = vmul.f32 %v8697, 0.5
        %v8989 = vmul.f32 %v8921, 0.5
        %v8990 = vmul.f32 %v8923, 0.5
        %v8991 = vmul.f32 %v8701, 0.5
        %v8992 = vmul.f32 %v8703, 0.5
        %v8993 = vmul.f32 %v8927, 0.5
        %v8994 = vmul.f32 %v8929, 0.5
        %v8995 = vmul.f32 %v8705, 0.5
        %v8996 = vmul.f32 %v8707, 0.5
        %v8997 = vmul.f32 %v8931, 0.5
        %v8998 = vmul.f32 %v8933, 0.5
        %v8999 = vtanh.pop %v8935
        %v9000 = vtanh.pop %v8936
        %v9001 = vtanh.pop %v8937
        %v9002 = vtanh.pop %v8938
        %v9003 = vtanh.pop %v8939
        %v9004 = vtanh.pop %v8940
        %v9005 = vtanh.pop %v8941
        %v9006 = vtanh.pop %v8942
        %v9007 = vtanh.pop %v8943
        %v9008 = vtanh.pop %v8944
        %v9009 = vtanh.pop %v8945
        %v9010 = vtanh.pop %v8946
        %v9011 = vtanh.pop %v8947
        %v9012 = vtanh.pop %v8948
        %v9013 = vtanh.pop %v8949
        %v9014 = vtanh.pop %v8950
        %v9015 = vtanh.pop %v8951
        %v9016 = vtanh.pop %v8952
        %v9017 = vtanh.pop %v8953
        %v9018 = vtanh.pop %v8954
        %v9019 = vtanh.pop %v8955
        %v9020 = vtanh.pop %v8956
        %v9021 = vtanh.pop %v8957
        %v9022 = vtanh.pop %v8958
        %v9023 = vtanh.pop %v8959
        %v9024 = vtanh.pop %v8960
        %v9025 = vtanh.pop %v8961
        %v9026 = vtanh.pop %v8962
        %v9027 = vtanh.pop %v8963
        %v9028 = vtanh.pop %v8964
        %v9029 = vtanh.pop %v8965
        %v9030 = vtanh.pop %v8966
        %v9031 = vtanh.pop %v8967
        %v9032 = vtanh.pop %v8968
        %v9033 = vtanh.pop %v8969
        %v9034 = vtanh.pop %v8970
        %v9035 = vtanh.pop %v8971
        %v9036 = vtanh.pop %v8972
        %v9037 = vtanh.pop %v8973
        %v9038 = vtanh.pop %v8974
        %v9039 = vtanh.pop %v8975
        %v9040 = vtanh.pop %v8976
        %v9041 = vtanh.pop %v8977
        %v9042 = vtanh.pop %v8978
        %v9043 = vtanh.pop %v8979
        %v9044 = vtanh.pop %v8980
        %v9045 = vtanh.pop %v8981
        %v9046 = vtanh.pop %v8982
        %v9047 = vtanh.pop %v8983
        %v9048 = vtanh.pop %v8984
        %v9049 = vtanh.pop %v8985
        %v9050 = vtanh.pop %v8986
        %v9051 = vtanh.pop %v8987
        %v9052 = vtanh.pop %v8988
        %v9053 = vtanh.pop %v8989
        %v9054 = vtanh.pop %v8990
        %v9055 = vtanh.pop %v8991
        %v9056 = vtanh.pop %v8992
        %v9057 = vtanh.pop %v8993
        %v9058 = vtanh.pop %v8994
        %v9059 = vtanh.pop %v8995
        %v9060 = vtanh.pop %v8996
        %v9061 = vtanh.pop %v8997
        %v9062 = vtanh.pop %v8998
        %v9063 = vmul.f32 %v8999, 0.5
        %v9064 = vmul.f32 %v9000, 0.5
        %v9065 = vmul.f32 %v9001, 0.5
        %v9066 = vmul.f32 %v9002, 0.5
        %v9067 = vmul.f32 %v9003, 0.5
        %v9068 = vmul.f32 %v9004, 0.5
        %v9069 = vmul.f32 %v9005, 0.5
        %v9070 = vmul.f32 %v9006, 0.5
        %v9071 = vmul.f32 %v9007, 0.5
        %v9072 = vmul.f32 %v9008, 0.5
        %v9073 = vmul.f32 %v9009, 0.5
        %v9074 = vmul.f32 %v9010, 0.5
        %v9075 = vmul.f32 %v9011, 0.5
        %v9076 = vmul.f32 %v9012, 0.5
        %v9077 = vmul.f32 %v9013, 0.5
        %v9078 = vmul.f32 %v9014, 0.5
        %v9079 = vmul.f32 %v9015, 0.5
        %v9080 = vmul.f32 %v9016, 0.5
        %v9081 = vmul.f32 %v9017, 0.5
        %v9082 = vmul.f32 %v9018, 0.5
        %v9083 = vmul.f32 %v9019, 0.5
        %v9084 = vmul.f32 %v9020, 0.5
        %v9085 = vmul.f32 %v9021, 0.5
        %v9086 = vmul.f32 %v9022, 0.5
        %v9087 = vmul.f32 %v9023, 0.5
        %v9088 = vmul.f32 %v9024, 0.5
        %v9089 = vmul.f32 %v9025, 0.5
        %v9090 = vmul.f32 %v9026, 0.5
        %v9091 = vmul.f32 %v9027, 0.5
        %v9092 = vmul.f32 %v9028, 0.5
        %v9093 = vmul.f32 %v9029, 0.5
        %v9094 = vmul.f32 %v9030, 0.5
        %v9095 = vmul.f32 %v9031, 0.5
        %v9096 = vmul.f32 %v9032, 0.5
        %v9097 = vmul.f32 %v9033, 0.5
        %v9098 = vmul.f32 %v9034, 0.5
        %v9099 = vmul.f32 %v9035, 0.5
        %v9100 = vmul.f32 %v9036, 0.5
        %v9101 = vmul.f32 %v9037, 0.5
        %v9102 = vmul.f32 %v9038, 0.5
        %v9103 = vmul.f32 %v9039, 0.5
        %v9104 = vmul.f32 %v9040, 0.5
        %v9105 = vmul.f32 %v9041, 0.5
        %v9106 = vmul.f32 %v9042, 0.5
        %v9107 = vmul.f32 %v9043, 0.5
        %v9108 = vmul.f32 %v9044, 0.5
        %v9109 = vmul.f32 %v9045, 0.5
        %v9110 = vmul.f32 %v9046, 0.5
        %v9111 = vmul.f32 %v9047, 0.5
        %v9112 = vmul.f32 %v9048, 0.5
        %v9113 = vmul.f32 %v9049, 0.5
        %v9114 = vmul.f32 %v9050, 0.5
        %v9115 = vmul.f32 %v9051, 0.5
        %v9116 = vmul.f32 %v9052, 0.5
        %v9117 = vmul.f32 %v9053, 0.5
        %v9118 = vmul.f32 %v9054, 0.5
        %v9119 = vmul.f32 %v9055, 0.5
        %v9120 = vmul.f32 %v9056, 0.5
        %v9121 = vmul.f32 %v9057, 0.5
        %v9122 = vmul.f32 %v9058, 0.5
        %v9123 = vmul.f32 %v9059, 0.5
        %v9124 = vmul.f32 %v9060, 0.5
        %v9125 = vmul.f32 %v9061, 0.5
        %v9126 = vmul.f32 %v9062, 0.5
        %v9127 = vadd.f32 %v9063, 0.5
        %v9128 = vadd.f32 %v9064, 0.5
        %v9129 = vadd.f32 %v9065, 0.5
        %v9130 = vadd.f32 %v9066, 0.5
        %v9131 = vadd.f32 %v9067, 0.5
        %v9132 = vadd.f32 %v9068, 0.5
        %v9133 = vadd.f32 %v9069, 0.5
        %v9134 = vadd.f32 %v9070, 0.5
        %v9135 = vadd.f32 %v9071, 0.5
        %v9136 = vadd.f32 %v9072, 0.5
        %v9137 = vadd.f32 %v9073, 0.5
        %v9138 = vadd.f32 %v9074, 0.5
        %v9139 = vadd.f32 %v9075, 0.5
        %v9140 = vadd.f32 %v9076, 0.5
        %v9141 = vadd.f32 %v9077, 0.5
        %v9142 = vadd.f32 %v9078, 0.5
        %v9143 = vadd.f32 %v9079, 0.5
        %v9144 = vadd.f32 %v9080, 0.5
        %v9145 = vadd.f32 %v9081, 0.5
        %v9146 = vadd.f32 %v9082, 0.5
        %v9147 = vadd.f32 %v9083, 0.5
        %v9148 = vadd.f32 %v9084, 0.5
        %v9149 = vadd.f32 %v9085, 0.5
        %v9150 = vadd.f32 %v9086, 0.5
        %v9151 = vadd.f32 %v9087, 0.5
        %v9152 = vadd.f32 %v9088, 0.5
        %v9153 = vadd.f32 %v9089, 0.5
        %v9154 = vadd.f32 %v9090, 0.5
        %v9155 = vadd.f32 %v9091, 0.5
        %v9156 = vadd.f32 %v9092, 0.5
        %v9157 = vadd.f32 %v9093, 0.5
        %v9158 = vadd.f32 %v9094, 0.5
        %v9159 = vadd.f32 %v9095, 0.5
        %v9160 = vadd.f32 %v9096, 0.5
        %v9161 = vadd.f32 %v9097, 0.5
        %v9162 = vadd.f32 %v9098, 0.5
        %v9163 = vadd.f32 %v9099, 0.5
        %v9164 = vadd.f32 %v9100, 0.5
        %v9165 = vadd.f32 %v9101, 0.5
        %v9166 = vadd.f32 %v9102, 0.5
        %v9167 = vadd.f32 %v9103, 0.5
        %v9168 = vadd.f32 %v9104, 0.5
        %v9169 = vadd.f32 %v9105, 0.5
        %v9170 = vadd.f32 %v9106, 0.5
        %v9171 = vadd.f32 %v9107, 0.5
        %v9172 = vadd.f32 %v9108, 0.5
        %v9173 = vadd.f32 %v9109, 0.5
        %v9174 = vadd.f32 %v9110, 0.5
        %v9175 = vadd.f32 %v9111, 0.5
        %v9176 = vadd.f32 %v9112, 0.5
        %v9177 = vadd.f32 %v9113, 0.5
        %v9178 = vadd.f32 %v9114, 0.5
        %v9179 = vadd.f32 %v9115, 0.5
        %v9180 = vadd.f32 %v9116, 0.5
        %v9181 = vadd.f32 %v9117, 0.5
        %v9182 = vadd.f32 %v9118, 0.5
        %v9183 = vadd.f32 %v9119, 0.5
        %v9184 = vadd.f32 %v9120, 0.5
        %v9185 = vadd.f32 %v9121, 0.5
        %v9186 = vadd.f32 %v9122, 0.5
        %v9187 = vadd.f32 %v9123, 0.5
        %v9188 = vadd.f32 %v9124, 0.5
        %v9189 = vadd.f32 %v9125, 0.5
        %v9190 = vadd.f32 %v9126, 0.5
        %v9191 = vpack.c.bf16 %v9131, %v9127
        %v9192 = vpack.c.bf16 %v9132, %v9128
        %v9193 = vpack.c.bf16 %v9133, %v9129
        %v9194 = vpack.c.bf16 %v9134, %v9130
        %v9195 = vpack.c.bf16 %v9139, %v9135
        %v9196 = vpack.c.bf16 %v9140, %v9136
        %v9197 = vpack.c.bf16 %v9141, %v9137
        %v9198 = vpack.c.bf16 %v9142, %v9138
        %v9199 = vpack.c.bf16 %v9147, %v9143
        %v9200 = vpack.c.bf16 %v9148, %v9144
        %v9201 = vpack.c.bf16 %v9149, %v9145
        %v9202 = vpack.c.bf16 %v9150, %v9146
        %v9203 = vpack.c.bf16 %v9155, %v9151
        %v9204 = vpack.c.bf16 %v9156, %v9152
        %v9205 = vpack.c.bf16 %v9157, %v9153
        %v9206 = vpack.c.bf16 %v9158, %v9154
        %v9207 = vpack.c.bf16 %v9163, %v9159
        %v9208 = vpack.c.bf16 %v9164, %v9160
        %v9209 = vpack.c.bf16 %v9165, %v9161
        %v9210 = vpack.c.bf16 %v9166, %v9162
        %v9211 = vpack.c.bf16 %v9171, %v9167
        %v9212 = vpack.c.bf16 %v9172, %v9168
        %v9213 = vpack.c.bf16 %v9173, %v9169
        %v9214 = vpack.c.bf16 %v9174, %v9170
        %v9215 = vpack.c.bf16 %v9179, %v9175
        %v9216 = vpack.c.bf16 %v9180, %v9176
        %v9217 = vpack.c.bf16 %v9181, %v9177
        %v9218 = vpack.c.bf16 %v9182, %v9178
        %v9219 = vpack.c.bf16 %v9187, %v9183
        %v9220 = vpack.c.bf16 %v9188, %v9184
        %v9221 = vpack.c.bf16 %v9189, %v9185
        %v9222 = vpack.c.bf16 %v9190, %v9186
        %9223 = vmatprep.subr.bf16.mxu0 %v8256
        %9224 = vmatpush1.bf16.msra.mxu0 %v8255
        %9225 = vmatprep.subr.bf16.mxu0 %v8252
        %9226 = vmatpush1.bf16.msra.mxu0 %v8251
        %9227 = vmatprep.subr.bf16.mxu0 %v8248
        %9228 = vmatpush1.bf16.msra.mxu0 %v8247
        %9229 = vmatprep.subr.bf16.mxu0 %v8244
        %9230 = vmatpush1.bf16.msra.mxu0 %v8243
        %9231 = vmatprep.subr.bf16.mxu0 %v8240
        %9232 = vmatpush1.bf16.msra.mxu0 %v8239
        %9233 = vmatprep.subr.bf16.mxu0 %v8236
        %9234 = vmatpush1.bf16.msra.mxu0 %v8235
        %9235 = vmatprep.subr.bf16.mxu0 %v8232
        %9236 = vmatpush1.bf16.msra.mxu0 %v8231
        %9237 = vmatprep.subr.bf16.mxu0 %v8228
        %9238 = vmatpush1.bf16.msra.mxu0 %v8227
        %9239 = vmatprep.subr.bf16.mxu0 %v8288
        %9240 = vmatpush2.bf16.msra.mxu0 %v8287
        %9241 = vmatprep.subr.bf16.mxu0 %v8284
        %9242 = vmatpush2.bf16.msra.mxu0 %v8283
        %9243 = vmatprep.subr.bf16.mxu0 %v8280
        %9244 = vmatpush2.bf16.msra.mxu0 %v8279
        %9245 = vmatprep.subr.bf16.mxu0 %v8276
        %9246 = vmatpush2.bf16.msra.mxu0 %v8275
        %9247 = vmatprep.subr.bf16.mxu0 %v8272
        %9248 = vmatpush2.bf16.msra.mxu0 %v8271
        %9249 = vmatprep.subr.bf16.mxu0 %v8268
        %9250 = vmatpush2.bf16.msra.mxu0 %v8267
        %9251 = vmatprep.subr.bf16.mxu0 %v8264
        %9252 = vmatpush2.bf16.msra.mxu0 %v8263
        %9253 = vmatprep.subr.bf16.mxu0 %v8260
        %9254 = vmatpush2.bf16.msra.mxu0 %v8259
        %9255 = vmatprep.mubr.bf16.mxu0 %v7660
        %9256 = vmatmul.mubr.bf16.gmra.mxu0 %v7659
        %v9257 = vpop.f32.mrf.mxu0
        %v9258 = vadd.f32 %v7826, %v9257
        %v9259 = vpop.f32.mrf.mxu0
        %v9260 = vadd.f32 %v7830, %v9259
        %v9261 = vpop.f32.mrf.mxu0
        %v9262 = vadd.f32 %v7826, %v9261
        %v9263 = vpop.f32.mrf.mxu0
        %v9264 = vadd.f32 %v7830, %v9263
        %9265 = vmatprep.mubr.bf16.mxu0 %v7664
        %9266 = vmatmul.mubr.bf16.gmra.mxu0 %v7663
        %v9267 = vpop.f32.mrf.mxu0
        %v9268 = vadd.f32 %v7826, %v9267
        %v9269 = vpop.f32.mrf.mxu0
        %v9270 = vadd.f32 %v7830, %v9269
        %v9271 = vpop.f32.mrf.mxu0
        %v9272 = vadd.f32 %v7826, %v9271
        %v9273 = vpop.f32.mrf.mxu0
        %v9274 = vadd.f32 %v7830, %v9273
        %9275 = vmatprep.mubr.bf16.mxu0 %v7668
        %9276 = vmatmul.mubr.bf16.gmra.mxu0 %v7667
        %v9277 = vpop.f32.mrf.mxu0
        %v9278 = vadd.f32 %v7826, %v9277
        %v9279 = vpop.f32.mrf.mxu0
        %v9280 = vadd.f32 %v7830, %v9279
        %v9281 = vpop.f32.mrf.mxu0
        %v9282 = vadd.f32 %v7826, %v9281
        %v9283 = vpop.f32.mrf.mxu0
        %v9284 = vadd.f32 %v7830, %v9283
        %9285 = vmatprep.mubr.bf16.mxu0 %v7672
        %9286 = vmatmul.mubr.bf16.gmra.mxu0 %v7671
        %v9287 = vpop.f32.mrf.mxu0
        %v9288 = vadd.f32 %v7826, %v9287
        %v9289 = vpop.f32.mrf.mxu0
        %v9290 = vadd.f32 %v7830, %v9289
        %v9291 = vpop.f32.mrf.mxu0
        %v9292 = vadd.f32 %v7826, %v9291
        %v9293 = vpop.f32.mrf.mxu0
        %v9294 = vadd.f32 %v7830, %v9293
        %9295 = vmatprep.mubr.bf16.mxu0 %v7676
        %9296 = vmatmul.mubr.bf16.gmra.mxu0 %v7675
        %v9297 = vpop.f32.mrf.mxu0
        %v9298 = vadd.f32 %v7826, %v9297
        %v9299 = vpop.f32.mrf.mxu0
        %v9300 = vadd.f32 %v7830, %v9299
        %v9301 = vpop.f32.mrf.mxu0
        %v9302 = vadd.f32 %v7826, %v9301
        %v9303 = vpop.f32.mrf.mxu0
        %v9304 = vadd.f32 %v7830, %v9303
        %9305 = vmatprep.mubr.bf16.mxu0 %v7680
        %9306 = vmatmul.mubr.bf16.gmra.mxu0 %v7679
        %v9307 = vpop.f32.mrf.mxu0
        %v9308 = vadd.f32 %v7826, %v9307
        %v9309 = vpop.f32.mrf.mxu0
        %v9310 = vadd.f32 %v7830, %v9309
        %v9311 = vpop.f32.mrf.mxu0
        %v9312 = vadd.f32 %v7826, %v9311
        %v9313 = vpop.f32.mrf.mxu0
        %v9314 = vadd.f32 %v7830, %v9313
        %9315 = vmatprep.mubr.bf16.mxu0 %v7684
        %9316 = vmatmul.mubr.bf16.gmra.mxu0 %v7683
        %v9317 = vpop.f32.mrf.mxu0
        %v9318 = vadd.f32 %v7826, %v9317
        %v9319 = vpop.f32.mrf.mxu0
        %v9320 = vadd.f32 %v7830, %v9319
        %v9321 = vpop.f32.mrf.mxu0
        %v9322 = vadd.f32 %v7826, %v9321
        %v9323 = vpop.f32.mrf.mxu0
        %v9324 = vadd.f32 %v7830, %v9323
        %9325 = vmatprep.mubr.bf16.mxu0 %v7688
        %9326 = vmatmul.mubr.bf16.gmra.mxu0 %v7687
        %v9327 = vpop.f32.mrf.mxu0
        %v9328 = vadd.f32 %v7826, %v9327
        %v9329 = vpop.f32.mrf.mxu0
        %v9330 = vadd.f32 %v7830, %v9329
        %v9331 = vpop.f32.mrf.mxu0
        %v9332 = vadd.f32 %v7826, %v9331
        %v9333 = vpop.f32.mrf.mxu0
        %v9334 = vadd.f32 %v7830, %v9333
        %9335 = vdwg.mxu0
        %9336 = vmatprep.subr.bf16.mxu0 %v8320
        %9337 = vmatpush1.bf16.msra.mxu0 %v8319
        %9338 = vmatprep.subr.bf16.mxu0 %v8316
        %9339 = vmatpush1.bf16.msra.mxu0 %v8315
        %9340 = vmatprep.subr.bf16.mxu0 %v8312
        %9341 = vmatpush1.bf16.msra.mxu0 %v8311
        %9342 = vmatprep.subr.bf16.mxu0 %v8308
        %9343 = vmatpush1.bf16.msra.mxu0 %v8307
        %9344 = vmatprep.subr.bf16.mxu0 %v8304
        %9345 = vmatpush1.bf16.msra.mxu0 %v8303
        %9346 = vmatprep.subr.bf16.mxu0 %v8300
        %9347 = vmatpush1.bf16.msra.mxu0 %v8299
        %9348 = vmatprep.subr.bf16.mxu0 %v8296
        %9349 = vmatpush1.bf16.msra.mxu0 %v8295
        %9350 = vmatprep.subr.bf16.mxu0 %v8292
        %9351 = vmatpush1.bf16.msra.mxu0 %v8291
        %9352 = vmatprep.subr.bf16.mxu0 %v8352
        %9353 = vmatpush2.bf16.msra.mxu0 %v8351
        %9354 = vmatprep.subr.bf16.mxu0 %v8348
        %9355 = vmatpush2.bf16.msra.mxu0 %v8347
        %9356 = vmatprep.subr.bf16.mxu0 %v8344
        %9357 = vmatpush2.bf16.msra.mxu0 %v8343
        %9358 = vmatprep.subr.bf16.mxu0 %v8340
        %9359 = vmatpush2.bf16.msra.mxu0 %v8339
        %9360 = vmatprep.subr.bf16.mxu0 %v8336
        %9361 = vmatpush2.bf16.msra.mxu0 %v8335
        %9362 = vmatprep.subr.bf16.mxu0 %v8332
        %9363 = vmatpush2.bf16.msra.mxu0 %v8331
        %9364 = vmatprep.subr.bf16.mxu0 %v8328
        %9365 = vmatpush2.bf16.msra.mxu0 %v8327
        %9366 = vmatprep.subr.bf16.mxu0 %v8324
        %9367 = vmatpush2.bf16.msra.mxu0 %v8323
        %9368 = vmatprep.mubr.bf16.mxu0 %v7662
        %9369 = vmatmul.mubr.bf16.gmra.mxu0 %v7661
        %v9370 = vpop.f32.mrf.mxu0
        %v9371 = vadd.f32 %v9258, %v9370
        %v9372 = vpop.f32.mrf.mxu0
        %v9373 = vadd.f32 %v9260, %v9372
        %v9374 = vpop.f32.mrf.mxu0
        %v9375 = vadd.f32 %v9262, %v9374
        %v9376 = vpop.f32.mrf.mxu0
        %v9377 = vadd.f32 %v9264, %v9376
        %9378 = vmatprep.mubr.bf16.mxu0 %v7666
        %9379 = vmatmul.mubr.bf16.gmra.mxu0 %v7665
        %v9380 = vpop.f32.mrf.mxu0
        %v9381 = vadd.f32 %v9268, %v9380
        %v9382 = vpop.f32.mrf.mxu0
        %v9383 = vadd.f32 %v9270, %v9382
        %v9384 = vpop.f32.mrf.mxu0
        %v9385 = vadd.f32 %v9272, %v9384
        %v9386 = vpop.f32.mrf.mxu0
        %v9387 = vadd.f32 %v9274, %v9386
        %9388 = vmatprep.mubr.bf16.mxu0 %v7670
        %9389 = vmatmul.mubr.bf16.gmra.mxu0 %v7669
        %v9390 = vpop.f32.mrf.mxu0
        %v9391 = vadd.f32 %v9278, %v9390
        %v9392 = vpop.f32.mrf.mxu0
        %v9393 = vadd.f32 %v9280, %v9392
        %v9394 = vpop.f32.mrf.mxu0
        %v9395 = vadd.f32 %v9282, %v9394
        %v9396 = vpop.f32.mrf.mxu0
        %v9397 = vadd.f32 %v9284, %v9396
        %9398 = vmatprep.mubr.bf16.mxu0 %v7674
        %9399 = vmatmul.mubr.bf16.gmra.mxu0 %v7673
        %v9400 = vpop.f32.mrf.mxu0
        %v9401 = vadd.f32 %v9288, %v9400
        %v9402 = vpop.f32.mrf.mxu0
        %v9403 = vadd.f32 %v9290, %v9402
        %v9404 = vpop.f32.mrf.mxu0
        %v9405 = vadd.f32 %v9292, %v9404
        %v9406 = vpop.f32.mrf.mxu0
        %v9407 = vadd.f32 %v9294, %v9406
        %9408 = vmatprep.mubr.bf16.mxu0 %v7678
        %9409 = vmatmul.mubr.bf16.gmra.mxu0 %v7677
        %v9410 = vpop.f32.mrf.mxu0
        %v9411 = vadd.f32 %v9298, %v9410
        %v9412 = vpop.f32.mrf.mxu0
        %v9413 = vadd.f32 %v9300, %v9412
        %v9414 = vpop.f32.mrf.mxu0
        %v9415 = vadd.f32 %v9302, %v9414
        %v9416 = vpop.f32.mrf.mxu0
        %v9417 = vadd.f32 %v9304, %v9416
        %9418 = vmatprep.mubr.bf16.mxu0 %v7682
        %9419 = vmatmul.mubr.bf16.gmra.mxu0 %v7681
        %v9420 = vpop.f32.mrf.mxu0
        %v9421 = vadd.f32 %v9308, %v9420
        %v9422 = vpop.f32.mrf.mxu0
        %v9423 = vadd.f32 %v9310, %v9422
        %v9424 = vpop.f32.mrf.mxu0
        %v9425 = vadd.f32 %v9312, %v9424
        %v9426 = vpop.f32.mrf.mxu0
        %v9427 = vadd.f32 %v9314, %v9426
        %9428 = vmatprep.mubr.bf16.mxu0 %v7686
        %9429 = vmatmul.mubr.bf16.gmra.mxu0 %v7685
        %v9430 = vpop.f32.mrf.mxu0
        %v9431 = vadd.f32 %v9318, %v9430
        %v9432 = vpop.f32.mrf.mxu0
        %v9433 = vadd.f32 %v9320, %v9432
        %v9434 = vpop.f32.mrf.mxu0
        %v9435 = vadd.f32 %v9322, %v9434
        %v9436 = vpop.f32.mrf.mxu0
        %v9437 = vadd.f32 %v9324, %v9436
        %9438 = vmatprep.mubr.bf16.mxu0 %v7690
        %9439 = vmatmul.mubr.bf16.gmra.mxu0 %v7689
        %v9440 = vpop.f32.mrf.mxu0
        %v9441 = vadd.f32 %v9328, %v9440
        %v9442 = vpop.f32.mrf.mxu0
        %v9443 = vadd.f32 %v9330, %v9442
        %v9444 = vpop.f32.mrf.mxu0
        %v9445 = vadd.f32 %v9332, %v9444
        %v9446 = vpop.f32.mrf.mxu0
        %v9447 = vadd.f32 %v9334, %v9446
        %9448 = vdwg.mxu0
        %9449 = vmatprep.subr.bf16.mxu0 %v8258
        %9450 = vmatpush1.bf16.msra.mxu0 %v8257
        %9451 = vmatprep.subr.bf16.mxu0 %v8254
        %9452 = vmatpush1.bf16.msra.mxu0 %v8253
        %9453 = vmatprep.subr.bf16.mxu0 %v8250
        %9454 = vmatpush1.bf16.msra.mxu0 %v8249
        %9455 = vmatprep.subr.bf16.mxu0 %v8246
        %9456 = vmatpush1.bf16.msra.mxu0 %v8245
        %9457 = vmatprep.subr.bf16.mxu0 %v8242
        %9458 = vmatpush1.bf16.msra.mxu0 %v8241
        %9459 = vmatprep.subr.bf16.mxu0 %v8238
        %9460 = vmatpush1.bf16.msra.mxu0 %v8237
        %9461 = vmatprep.subr.bf16.mxu0 %v8234
        %9462 = vmatpush1.bf16.msra.mxu0 %v8233
        %9463 = vmatprep.subr.bf16.mxu0 %v8230
        %9464 = vmatpush1.bf16.msra.mxu0 %v8229
        %9465 = vmatprep.subr.bf16.mxu0 %v8290
        %9466 = vmatpush2.bf16.msra.mxu0 %v8289
        %9467 = vmatprep.subr.bf16.mxu0 %v8286
        %9468 = vmatpush2.bf16.msra.mxu0 %v8285
        %9469 = vmatprep.subr.bf16.mxu0 %v8282
        %9470 = vmatpush2.bf16.msra.mxu0 %v8281
        %9471 = vmatprep.subr.bf16.mxu0 %v8278
        %9472 = vmatpush2.bf16.msra.mxu0 %v8277
        %9473 = vmatprep.subr.bf16.mxu0 %v8274
        %9474 = vmatpush2.bf16.msra.mxu0 %v8273
        %9475 = vmatprep.subr.bf16.mxu0 %v8270
        %9476 = vmatpush2.bf16.msra.mxu0 %v8269
        %9477 = vmatprep.subr.bf16.mxu0 %v8266
        %9478 = vmatpush2.bf16.msra.mxu0 %v8265
        %9479 = vmatprep.subr.bf16.mxu0 %v8262
        %9480 = vmatpush2.bf16.msra.mxu0 %v8261
        %9481 = vmatprep.mubr.bf16.mxu0 %v7660
        %9482 = vmatmul.mubr.bf16.gmra.mxu0 %v7659
        %v9483 = vpop.f32.mrf.mxu0
        %v9484 = vadd.f32 %v7834, %v9483
        %v9485 = vpop.f32.mrf.mxu0
        %v9486 = vadd.f32 %v7838, %v9485
        %v9487 = vpop.f32.mrf.mxu0
        %v9488 = vadd.f32 %v7834, %v9487
        %v9489 = vpop.f32.mrf.mxu0
        %v9490 = vadd.f32 %v7838, %v9489
        %9491 = vmatprep.mubr.bf16.mxu0 %v7664
        %9492 = vmatmul.mubr.bf16.gmra.mxu0 %v7663
        %v9493 = vpop.f32.mrf.mxu0
        %v9494 = vadd.f32 %v7834, %v9493
        %v9495 = vpop.f32.mrf.mxu0
        %v9496 = vadd.f32 %v7838, %v9495
        %v9497 = vpop.f32.mrf.mxu0
        %v9498 = vadd.f32 %v7834, %v9497
        %v9499 = vpop.f32.mrf.mxu0
        %v9500 = vadd.f32 %v7838, %v9499
        %9501 = vmatprep.mubr.bf16.mxu0 %v7668
        %9502 = vmatmul.mubr.bf16.gmra.mxu0 %v7667
        %v9503 = vpop.f32.mrf.mxu0
        %v9504 = vadd.f32 %v7834, %v9503
        %v9505 = vpop.f32.mrf.mxu0
        %v9506 = vadd.f32 %v7838, %v9505
        %v9507 = vpop.f32.mrf.mxu0
        %v9508 = vadd.f32 %v7834, %v9507
        %v9509 = vpop.f32.mrf.mxu0
        %v9510 = vadd.f32 %v7838, %v9509
        %9511 = vmatprep.mubr.bf16.mxu0 %v7672
        %9512 = vmatmul.mubr.bf16.gmra.mxu0 %v7671
        %v9513 = vpop.f32.mrf.mxu0
        %v9514 = vadd.f32 %v7834, %v9513
        %v9515 = vpop.f32.mrf.mxu0
        %v9516 = vadd.f32 %v7838, %v9515
        %v9517 = vpop.f32.mrf.mxu0
        %v9518 = vadd.f32 %v7834, %v9517
        %v9519 = vpop.f32.mrf.mxu0
        %v9520 = vadd.f32 %v7838, %v9519
        %9521 = vmatprep.mubr.bf16.mxu0 %v7676
        %9522 = vmatmul.mubr.bf16.gmra.mxu0 %v7675
        %v9523 = vpop.f32.mrf.mxu0
        %v9524 = vadd.f32 %v7834, %v9523
        %v9525 = vpop.f32.mrf.mxu0
        %v9526 = vadd.f32 %v7838, %v9525
        %v9527 = vpop.f32.mrf.mxu0
        %v9528 = vadd.f32 %v7834, %v9527
        %v9529 = vpop.f32.mrf.mxu0
        %v9530 = vadd.f32 %v7838, %v9529
        %9531 = vmatprep.mubr.bf16.mxu0 %v7680
        %9532 = vmatmul.mubr.bf16.gmra.mxu0 %v7679
        %v9533 = vpop.f32.mrf.mxu0
        %v9534 = vadd.f32 %v7834, %v9533
        %v9535 = vpop.f32.mrf.mxu0
        %v9536 = vadd.f32 %v7838, %v9535
        %v9537 = vpop.f32.mrf.mxu0
        %v9538 = vadd.f32 %v7834, %v9537
        %v9539 = vpop.f32.mrf.mxu0
        %v9540 = vadd.f32 %v7838, %v9539
        %9541 = vmatprep.mubr.bf16.mxu0 %v7684
        %9542 = vmatmul.mubr.bf16.gmra.mxu0 %v7683
        %v9543 = vpop.f32.mrf.mxu0
        %v9544 = vadd.f32 %v7834, %v9543
        %v9545 = vpop.f32.mrf.mxu0
        %v9546 = vadd.f32 %v7838, %v9545
        %v9547 = vpop.f32.mrf.mxu0
        %v9548 = vadd.f32 %v7834, %v9547
        %v9549 = vpop.f32.mrf.mxu0
        %v9550 = vadd.f32 %v7838, %v9549
        %9551 = vmatprep.mubr.bf16.mxu0 %v7688
        %9552 = vmatmul.mubr.bf16.gmra.mxu0 %v7687
        %v9553 = vpop.f32.mrf.mxu0
        %v9554 = vadd.f32 %v7834, %v9553
        %v9555 = vpop.f32.mrf.mxu0
        %v9556 = vadd.f32 %v7838, %v9555
        %v9557 = vpop.f32.mrf.mxu0
        %v9558 = vadd.f32 %v7834, %v9557
        %v9559 = vpop.f32.mrf.mxu0
        %v9560 = vadd.f32 %v7838, %v9559
        %9561 = vdwg.mxu0
        %9562 = vmatprep.subr.bf16.mxu0 %v8322
        %9563 = vmatpush1.bf16.msra.mxu0 %v8321
        %9564 = vmatprep.subr.bf16.mxu0 %v8318
        %9565 = vmatpush1.bf16.msra.mxu0 %v8317
        %9566 = vmatprep.subr.bf16.mxu0 %v8314
        %9567 = vmatpush1.bf16.msra.mxu0 %v8313
        %9568 = vmatprep.subr.bf16.mxu0 %v8310
        %9569 = vmatpush1.bf16.msra.mxu0 %v8309
        %9570 = vmatprep.subr.bf16.mxu0 %v8306
        %9571 = vmatpush1.bf16.msra.mxu0 %v8305
        %9572 = vmatprep.subr.bf16.mxu0 %v8302
        %9573 = vmatpush1.bf16.msra.mxu0 %v8301
        %9574 = vmatprep.subr.bf16.mxu0 %v8298
        %9575 = vmatpush1.bf16.msra.mxu0 %v8297
        %9576 = vmatprep.subr.bf16.mxu0 %v8294
        %9577 = vmatpush1.bf16.msra.mxu0 %v8293
        %9578 = vmatprep.subr.bf16.mxu0 %v8354
        %9579 = vmatpush2.bf16.msra.mxu0 %v8353
        %9580 = vmatprep.subr.bf16.mxu0 %v8350
        %9581 = vmatpush2.bf16.msra.mxu0 %v8349
        %9582 = vmatprep.subr.bf16.mxu0 %v8346
        %9583 = vmatpush2.bf16.msra.mxu0 %v8345
        %9584 = vmatprep.subr.bf16.mxu0 %v8342
        %9585 = vmatpush2.bf16.msra.mxu0 %v8341
        %9586 = vmatprep.subr.bf16.mxu0 %v8338
        %9587 = vmatpush2.bf16.msra.mxu0 %v8337
        %9588 = vmatprep.subr.bf16.mxu0 %v8334
        %9589 = vmatpush2.bf16.msra.mxu0 %v8333
        %9590 = vmatprep.subr.bf16.mxu0 %v8330
        %9591 = vmatpush2.bf16.msra.mxu0 %v8329
        %9592 = vmatprep.subr.bf16.mxu0 %v8326
        %9593 = vmatpush2.bf16.msra.mxu0 %v8325
        %9594 = vmatprep.mubr.bf16.mxu0 %v7662
        %9595 = vmatmul.mubr.bf16.gmra.mxu0 %v7661
        %v9596 = vpop.f32.mrf.mxu0
        %v9597 = vadd.f32 %v9484, %v9596
        %v9598 = vpop.f32.mrf.mxu0
        %v9599 = vadd.f32 %v9486, %v9598
        %v9600 = vpop.f32.mrf.mxu0
        %v9601 = vadd.f32 %v9488, %v9600
        %v9602 = vpop.f32.mrf.mxu0
        %v9603 = vadd.f32 %v9490, %v9602
        %9604 = vmatprep.mubr.bf16.mxu0 %v7666
        %9605 = vmatmul.mubr.bf16.gmra.mxu0 %v7665
        %v9606 = vpop.f32.mrf.mxu0
        %v9607 = vadd.f32 %v9494, %v9606
        %v9608 = vpop.f32.mrf.mxu0
        %v9609 = vadd.f32 %v9496, %v9608
        %v9610 = vpop.f32.mrf.mxu0
        %v9611 = vadd.f32 %v9498, %v9610
        %v9612 = vpop.f32.mrf.mxu0
        %v9613 = vadd.f32 %v9500, %v9612
        %9614 = vmatprep.mubr.bf16.mxu0 %v7670
        %9615 = vmatmul.mubr.bf16.gmra.mxu0 %v7669
        %v9616 = vpop.f32.mrf.mxu0
        %v9617 = vadd.f32 %v9504, %v9616
        %v9618 = vpop.f32.mrf.mxu0
        %v9619 = vadd.f32 %v9506, %v9618
        %v9620 = vpop.f32.mrf.mxu0
        %v9621 = vadd.f32 %v9508, %v9620
        %v9622 = vpop.f32.mrf.mxu0
        %v9623 = vadd.f32 %v9510, %v9622
        %9624 = vmatprep.mubr.bf16.mxu0 %v7674
        %9625 = vmatmul.mubr.bf16.gmra.mxu0 %v7673
        %v9626 = vpop.f32.mrf.mxu0
        %v9627 = vadd.f32 %v9514, %v9626
        %v9628 = vpop.f32.mrf.mxu0
        %v9629 = vadd.f32 %v9516, %v9628
        %v9630 = vpop.f32.mrf.mxu0
        %v9631 = vadd.f32 %v9518, %v9630
        %v9632 = vpop.f32.mrf.mxu0
        %v9633 = vadd.f32 %v9520, %v9632
        %9634 = vmatprep.mubr.bf16.mxu0 %v7678
        %9635 = vmatmul.mubr.bf16.gmra.mxu0 %v7677
        %v9636 = vpop.f32.mrf.mxu0
        %v9637 = vadd.f32 %v9524, %v9636
        %v9638 = vpop.f32.mrf.mxu0
        %v9639 = vadd.f32 %v9526, %v9638
        %v9640 = vpop.f32.mrf.mxu0
        %v9641 = vadd.f32 %v9528, %v9640
        %v9642 = vpop.f32.mrf.mxu0
        %v9643 = vadd.f32 %v9530, %v9642
        %9644 = vmatprep.mubr.bf16.mxu0 %v7682
        %9645 = vmatmul.mubr.bf16.gmra.mxu0 %v7681
        %v9646 = vpop.f32.mrf.mxu0
        %v9647 = vadd.f32 %v9534, %v9646
        %v9648 = vpop.f32.mrf.mxu0
        %v9649 = vadd.f32 %v9536, %v9648
        %v9650 = vpop.f32.mrf.mxu0
        %v9651 = vadd.f32 %v9538, %v9650
        %v9652 = vpop.f32.mrf.mxu0
        %v9653 = vadd.f32 %v9540, %v9652
        %9654 = vmatprep.mubr.bf16.mxu0 %v7686
        %9655 = vmatmul.mubr.bf16.gmra.mxu0 %v7685
        %v9656 = vpop.f32.mrf.mxu0
        %v9657 = vadd.f32 %v9544, %v9656
        %v9658 = vpop.f32.mrf.mxu0
        %v9659 = vadd.f32 %v9546, %v9658
        %v9660 = vpop.f32.mrf.mxu0
        %v9661 = vadd.f32 %v9548, %v9660
        %v9662 = vpop.f32.mrf.mxu0
        %v9663 = vadd.f32 %v9550, %v9662
        %9664 = vmatprep.mubr.bf16.mxu0 %v7690
        %9665 = vmatmul.mubr.bf16.gmra.mxu0 %v7689
        %v9666 = vpop.f32.mrf.mxu0
        %v9667 = vadd.f32 %v9554, %v9666
        %v9668 = vpop.f32.mrf.mxu0
        %v9669 = vadd.f32 %v9556, %v9668
        %v9670 = vpop.f32.mrf.mxu0
        %v9671 = vadd.f32 %v9558, %v9670
        %v9672 = vpop.f32.mrf.mxu0
        %v9673 = vadd.f32 %v9560, %v9672
        %9674 = vdwg.mxu0
        %v9675 = vmul.f32 %v9371, 0.5
        %v9676 = vmul.f32 %v9373, 0.5
        %v9677 = vmul.f32 %v9597, 0.5
        %v9678 = vmul.f32 %v9599, 0.5
        %v9679 = vmul.f32 %v9375, 0.5
        %v9680 = vmul.f32 %v9377, 0.5
        %v9681 = vmul.f32 %v9601, 0.5
        %v9682 = vmul.f32 %v9603, 0.5
        %v9683 = vmul.f32 %v9381, 0.5
        %v9684 = vmul.f32 %v9383, 0.5
        %v9685 = vmul.f32 %v9607, 0.5
        %v9686 = vmul.f32 %v9609, 0.5
        %v9687 = vmul.f32 %v9385, 0.5
        %v9688 = vmul.f32 %v9387, 0.5
        %v9689 = vmul.f32 %v9611, 0.5
        %v9690 = vmul.f32 %v9613, 0.5
        %v9691 = vmul.f32 %v9391, 0.5
        %v9692 = vmul.f32 %v9393, 0.5
        %v9693 = vmul.f32 %v9617, 0.5
        %v9694 = vmul.f32 %v9619, 0.5
        %v9695 = vmul.f32 %v9395, 0.5
        %v9696 = vmul.f32 %v9397, 0.5
        %v9697 = vmul.f32 %v9621, 0.5
        %v9698 = vmul.f32 %v9623, 0.5
        %v9699 = vmul.f32 %v9401, 0.5
        %v9700 = vmul.f32 %v9403, 0.5
        %v9701 = vmul.f32 %v9627, 0.5
        %v9702 = vmul.f32 %v9629, 0.5
        %v9703 = vmul.f32 %v9405, 0.5
        %v9704 = vmul.f32 %v9407, 0.5
        %v9705 = vmul.f32 %v9631, 0.5
        %v9706 = vmul.f32 %v9633, 0.5
        %v9707 = vmul.f32 %v9411, 0.5
        %v9708 = vmul.f32 %v9413, 0.5
        %v9709 = vmul.f32 %v9637, 0.5
        %v9710 = vmul.f32 %v9639, 0.5
        %v9711 = vmul.f32 %v9415, 0.5
        %v9712 = vmul.f32 %v9417, 0.5
        %v9713 = vmul.f32 %v9641, 0.5
        %v9714 = vmul.f32 %v9643, 0.5
        %v9715 = vmul.f32 %v9421, 0.5
        %v9716 = vmul.f32 %v9423, 0.5
        %v9717 = vmul.f32 %v9647, 0.5
        %v9718 = vmul.f32 %v9649, 0.5
        %v9719 = vmul.f32 %v9425, 0.5
        %v9720 = vmul.f32 %v9427, 0.5
        %v9721 = vmul.f32 %v9651, 0.5
        %v9722 = vmul.f32 %v9653, 0.5
        %v9723 = vmul.f32 %v9431, 0.5
        %v9724 = vmul.f32 %v9433, 0.5
        %v9725 = vmul.f32 %v9657, 0.5
        %v9726 = vmul.f32 %v9659, 0.5
        %v9727 = vmul.f32 %v9435, 0.5
        %v9728 = vmul.f32 %v9437, 0.5
        %v9729 = vmul.f32 %v9661, 0.5
        %v9730 = vmul.f32 %v9663, 0.5
        %v9731 = vmul.f32 %v9441, 0.5
        %v9732 = vmul.f32 %v9443, 0.5
        %v9733 = vmul.f32 %v9667, 0.5
        %v9734 = vmul.f32 %v9669, 0.5
        %v9735 = vmul.f32 %v9445, 0.5
        %v9736 = vmul.f32 %v9447, 0.5
        %v9737 = vmul.f32 %v9671, 0.5
        %v9738 = vmul.f32 %v9673, 0.5
        %v9739 = vtanh.pop %v9675
        %v9740 = vtanh.pop %v9676
        %v9741 = vtanh.pop %v9677
        %v9742 = vtanh.pop %v9678
        %v9743 = vtanh.pop %v9679
        %v9744 = vtanh.pop %v9680
        %v9745 = vtanh.pop %v9681
        %v9746 = vtanh.pop %v9682
        %v9747 = vtanh.pop %v9683
        %v9748 = vtanh.pop %v9684
        %v9749 = vtanh.pop %v9685
        %v9750 = vtanh.pop %v9686
        %v9751 = vtanh.pop %v9687
        %v9752 = vtanh.pop %v9688
        %v9753 = vtanh.pop %v9689
        %v9754 = vtanh.pop %v9690
        %v9755 = vtanh.pop %v9691
        %v9756 = vtanh.pop %v9692
        %v9757 = vtanh.pop %v9693
        %v9758 = vtanh.pop %v9694
        %v9759 = vtanh.pop %v9695
        %v9760 = vtanh.pop %v9696
        %v9761 = vtanh.pop %v9697
        %v9762 = vtanh.pop %v9698
        %v9763 = vtanh.pop %v9699
        %v9764 = vtanh.pop %v9700
        %v9765 = vtanh.pop %v9701
        %v9766 = vtanh.pop %v9702
        %v9767 = vtanh.pop %v9703
        %v9768 = vtanh.pop %v9704
        %v9769 = vtanh.pop %v9705
        %v9770 = vtanh.pop %v9706
        %v9771 = vtanh.pop %v9707
        %v9772 = vtanh.pop %v9708
        %v9773 = vtanh.pop %v9709
        %v9774 = vtanh.pop %v9710
        %v9775 = vtanh.pop %v9711
        %v9776 = vtanh.pop %v9712
        %v9777 = vtanh.pop %v9713
        %v9778 = vtanh.pop %v9714
        %v9779 = vtanh.pop %v9715
        %v9780 = vtanh.pop %v9716
        %v9781 = vtanh.pop %v9717
        %v9782 = vtanh.pop %v9718
        %v9783 = vtanh.pop %v9719
        %v9784 = vtanh.pop %v9720
        %v9785 = vtanh.pop %v9721
        %v9786 = vtanh.pop %v9722
        %v9787 = vtanh.pop %v9723
        %v9788 = vtanh.pop %v9724
        %v9789 = vtanh.pop %v9725
        %v9790 = vtanh.pop %v9726
        %v9791 = vtanh.pop %v9727
        %v9792 = vtanh.pop %v9728
        %v9793 = vtanh.pop %v9729
        %v9794 = vtanh.pop %v9730
        %v9795 = vtanh.pop %v9731
        %v9796 = vtanh.pop %v9732
        %v9797 = vtanh.pop %v9733
        %v9798 = vtanh.pop %v9734
        %v9799 = vtanh.pop %v9735
        %v9800 = vtanh.pop %v9736
        %v9801 = vtanh.pop %v9737
        %v9802 = vtanh.pop %v9738
        %v9803 = vmul.f32 %v9739, 0.5
        %v9804 = vmul.f32 %v9740, 0.5
        %v9805 = vmul.f32 %v9741, 0.5
        %v9806 = vmul.f32 %v9742, 0.5
        %v9807 = vmul.f32 %v9743, 0.5
        %v9808 = vmul.f32 %v9744, 0.5
        %v9809 = vmul.f32 %v9745, 0.5
        %v9810 = vmul.f32 %v9746, 0.5
        %v9811 = vmul.f32 %v9747, 0.5
        %v9812 = vmul.f32 %v9748, 0.5
        %v9813 = vmul.f32 %v9749, 0.5
        %v9814 = vmul.f32 %v9750, 0.5
        %v9815 = vmul.f32 %v9751, 0.5
        %v9816 = vmul.f32 %v9752, 0.5
        %v9817 = vmul.f32 %v9753, 0.5
        %v9818 = vmul.f32 %v9754, 0.5
        %v9819 = vmul.f32 %v9755, 0.5
        %v9820 = vmul.f32 %v9756, 0.5
        %v9821 = vmul.f32 %v9757, 0.5
        %v9822 = vmul.f32 %v9758, 0.5
        %v9823 = vmul.f32 %v9759, 0.5
        %v9824 = vmul.f32 %v9760, 0.5
        %v9825 = vmul.f32 %v9761, 0.5
        %v9826 = vmul.f32 %v9762, 0.5
        %v9827 = vmul.f32 %v9763, 0.5
        %v9828 = vmul.f32 %v9764, 0.5
        %v9829 = vmul.f32 %v9765, 0.5
        %v9830 = vmul.f32 %v9766, 0.5
        %v9831 = vmul.f32 %v9767, 0.5
        %v9832 = vmul.f32 %v9768, 0.5
        %v9833 = vmul.f32 %v9769, 0.5
        %v9834 = vmul.f32 %v9770, 0.5
        %v9835 = vmul.f32 %v9771, 0.5
        %v9836 = vmul.f32 %v9772, 0.5
        %v9837 = vmul.f32 %v9773, 0.5
        %v9838 = vmul.f32 %v9774, 0.5
        %v9839 = vmul.f32 %v9775, 0.5
        %v9840 = vmul.f32 %v9776, 0.5
        %v9841 = vmul.f32 %v9777, 0.5
        %v9842 = vmul.f32 %v9778, 0.5
        %v9843 = vmul.f32 %v9779, 0.5
        %v9844 = vmul.f32 %v9780, 0.5
        %v9845 = vmul.f32 %v9781, 0.5
        %v9846 = vmul.f32 %v9782, 0.5
        %v9847 = vmul.f32 %v9783, 0.5
        %v9848 = vmul.f32 %v9784, 0.5
        %v9849 = vmul.f32 %v9785, 0.5
        %v9850 = vmul.f32 %v9786, 0.5
        %v9851 = vmul.f32 %v9787, 0.5
        %v9852 = vmul.f32 %v9788, 0.5
        %v9853 = vmul.f32 %v9789, 0.5
        %v9854 = vmul.f32 %v9790, 0.5
        %v9855 = vmul.f32 %v9791, 0.5
        %v9856 = vmul.f32 %v9792, 0.5
        %v9857 = vmul.f32 %v9793, 0.5
        %v9858 = vmul.f32 %v9794, 0.5
        %v9859 = vmul.f32 %v9795, 0.5
        %v9860 = vmul.f32 %v9796, 0.5
        %v9861 = vmul.f32 %v9797, 0.5
        %v9862 = vmul.f32 %v9798, 0.5
        %v9863 = vmul.f32 %v9799, 0.5
        %v9864 = vmul.f32 %v9800, 0.5
        %v9865 = vmul.f32 %v9801, 0.5
        %v9866 = vmul.f32 %v9802, 0.5
        %v9867 = vadd.f32 %v9803, 0.5
        %v9868 = vadd.f32 %v9804, 0.5
        %v9869 = vadd.f32 %v9805, 0.5
        %v9870 = vadd.f32 %v9806, 0.5
        %v9871 = vadd.f32 %v9807, 0.5
        %v9872 = vadd.f32 %v9808, 0.5
        %v9873 = vadd.f32 %v9809, 0.5
        %v9874 = vadd.f32 %v9810, 0.5
        %v9875 = vadd.f32 %v9811, 0.5
        %v9876 = vadd.f32 %v9812, 0.5
        %v9877 = vadd.f32 %v9813, 0.5
        %v9878 = vadd.f32 %v9814, 0.5
        %v9879 = vadd.f32 %v9815, 0.5
        %v9880 = vadd.f32 %v9816, 0.5
        %v9881 = vadd.f32 %v9817, 0.5
        %v9882 = vadd.f32 %v9818, 0.5
        %v9883 = vadd.f32 %v9819, 0.5
        %v9884 = vadd.f32 %v9820, 0.5
        %v9885 = vadd.f32 %v9821, 0.5
        %v9886 = vadd.f32 %v9822, 0.5
        %v9887 = vadd.f32 %v9823, 0.5
        %v9888 = vadd.f32 %v9824, 0.5
        %v9889 = vadd.f32 %v9825, 0.5
        %v9890 = vadd.f32 %v9826, 0.5
        %v9891 = vadd.f32 %v9827, 0.5
        %v9892 = vadd.f32 %v9828, 0.5
        %v9893 = vadd.f32 %v9829, 0.5
        %v9894 = vadd.f32 %v9830, 0.5
        %v9895 = vadd.f32 %v9831, 0.5
        %v9896 = vadd.f32 %v9832, 0.5
        %v9897 = vadd.f32 %v9833, 0.5
        %v9898 = vadd.f32 %v9834, 0.5
        %v9899 = vadd.f32 %v9835, 0.5
        %v9900 = vadd.f32 %v9836, 0.5
        %v9901 = vadd.f32 %v9837, 0.5
        %v9902 = vadd.f32 %v9838, 0.5
        %v9903 = vadd.f32 %v9839, 0.5
        %v9904 = vadd.f32 %v9840, 0.5
        %v9905 = vadd.f32 %v9841, 0.5
        %v9906 = vadd.f32 %v9842, 0.5
        %v9907 = vadd.f32 %v9843, 0.5
        %v9908 = vadd.f32 %v9844, 0.5
        %v9909 = vadd.f32 %v9845, 0.5
        %v9910 = vadd.f32 %v9846, 0.5
        %v9911 = vadd.f32 %v9847, 0.5
        %v9912 = vadd.f32 %v9848, 0.5
        %v9913 = vadd.f32 %v9849, 0.5
        %v9914 = vadd.f32 %v9850, 0.5
        %v9915 = vadd.f32 %v9851, 0.5
        %v9916 = vadd.f32 %v9852, 0.5
        %v9917 = vadd.f32 %v9853, 0.5
        %v9918 = vadd.f32 %v9854, 0.5
        %v9919 = vadd.f32 %v9855, 0.5
        %v9920 = vadd.f32 %v9856, 0.5
        %v9921 = vadd.f32 %v9857, 0.5
        %v9922 = vadd.f32 %v9858, 0.5
        %v9923 = vadd.f32 %v9859, 0.5
        %v9924 = vadd.f32 %v9860, 0.5
        %v9925 = vadd.f32 %v9861, 0.5
        %v9926 = vadd.f32 %v9862, 0.5
        %v9927 = vadd.f32 %v9863, 0.5
        %v9928 = vadd.f32 %v9864, 0.5
        %v9929 = vadd.f32 %v9865, 0.5
        %v9930 = vadd.f32 %v9866, 0.5
        %v9931 = vpack.c.bf16 %v9871, %v9867
        %v9932 = vpack.c.bf16 %v9872, %v9868
        %v9933 = vpack.c.bf16 %v9873, %v9869
        %v9934 = vpack.c.bf16 %v9874, %v9870
        %v9935 = vpack.c.bf16 %v9879, %v9875
        %v9936 = vpack.c.bf16 %v9880, %v9876
        %v9937 = vpack.c.bf16 %v9881, %v9877
        %v9938 = vpack.c.bf16 %v9882, %v9878
        %v9939 = vpack.c.bf16 %v9887, %v9883
        %v9940 = vpack.c.bf16 %v9888, %v9884
        %v9941 = vpack.c.bf16 %v9889, %v9885
        %v9942 = vpack.c.bf16 %v9890, %v9886
        %v9943 = vpack.c.bf16 %v9895, %v9891
        %v9944 = vpack.c.bf16 %v9896, %v9892
        %v9945 = vpack.c.bf16 %v9897, %v9893
        %v9946 = vpack.c.bf16 %v9898, %v9894
        %v9947 = vpack.c.bf16 %v9903, %v9899
        %v9948 = vpack.c.bf16 %v9904, %v9900
        %v9949 = vpack.c.bf16 %v9905, %v9901
        %v9950 = vpack.c.bf16 %v9906, %v9902
        %v9951 = vpack.c.bf16 %v9911, %v9907
        %v9952 = vpack.c.bf16 %v9912, %v9908
        %v9953 = vpack.c.bf16 %v9913, %v9909
        %v9954 = vpack.c.bf16 %v9914, %v9910
        %v9955 = vpack.c.bf16 %v9919, %v9915
        %v9956 = vpack.c.bf16 %v9920, %v9916
        %v9957 = vpack.c.bf16 %v9921, %v9917
        %v9958 = vpack.c.bf16 %v9922, %v9918
        %v9959 = vpack.c.bf16 %v9927, %v9923
        %v9960 = vpack.c.bf16 %v9928, %v9924
        %v9961 = vpack.c.bf16 %v9929, %v9925
        %v9962 = vpack.c.bf16 %v9930, %v9926
        %s9963 = smul.u32 %s5417, 1
        %s9964 = sshll.u32 %s9963, 4
        %9965 = dma.done %s390, %s9964
        %v9966 = vld [vmem:[#allocation7] sm:$0xf]
        %v9967 = vld [vmem:[#allocation7 + $0x4] sm:$0xf]
        %v9968 = vld [vmem:[#allocation7 + $0x8] sm:$0xf]
        %v9969 = vld [vmem:[#allocation7 + $0xc] sm:$0xf]
        %v9970 = vld [vmem:[#allocation7 + $0x10] sm:$0xf]
        %v9971 = vld [vmem:[#allocation7 + $0x14] sm:$0xf]
        %v9972 = vld [vmem:[#allocation7 + $0x18] sm:$0xf]
        %v9973 = vld [vmem:[#allocation7 + $0x1c] sm:$0xf]
        %v9974 = vld [vmem:[#allocation7 + $0x20] sm:$0xf]
        %v9975 = vld [vmem:[#allocation7 + $0x24] sm:$0xf]
        %v9976 = vld [vmem:[#allocation7 + $0x28] sm:$0xf]
        %v9977 = vld [vmem:[#allocation7 + $0x2c] sm:$0xf]
        %v9978 = vld [vmem:[#allocation7 + $0x30] sm:$0xf]
        %v9979 = vld [vmem:[#allocation7 + $0x34] sm:$0xf]
        %v9980 = vld [vmem:[#allocation7 + $0x38] sm:$0xf]
        %v9981 = vld [vmem:[#allocation7 + $0x3c] sm:$0xf]
        %v9982 = vld [vmem:[#allocation7 + $0x40] sm:$0xf]
        %v9983 = vld [vmem:[#allocation7 + $0x44] sm:$0xf]
        %v9984 = vld [vmem:[#allocation7 + $0x48] sm:$0xf]
        %v9985 = vld [vmem:[#allocation7 + $0x4c] sm:$0xf]
        %v9986 = vld [vmem:[#allocation7 + $0x50] sm:$0xf]
        %v9987 = vld [vmem:[#allocation7 + $0x54] sm:$0xf]
        %v9988 = vld [vmem:[#allocation7 + $0x58] sm:$0xf]
        %v9989 = vld [vmem:[#allocation7 + $0x5c] sm:$0xf]
        %v9990 = vld [vmem:[#allocation7 + $0x60] sm:$0xf]
        %v9991 = vld [vmem:[#allocation7 + $0x64] sm:$0xf]
        %v9992 = vld [vmem:[#allocation7 + $0x68] sm:$0xf]
        %v9993 = vld [vmem:[#allocation7 + $0x6c] sm:$0xf]
        %v9994 = vld [vmem:[#allocation7 + $0x70] sm:$0xf]
        %v9995 = vld [vmem:[#allocation7 + $0x74] sm:$0xf]
        %v9996 = vld [vmem:[#allocation7 + $0x78] sm:$0xf]
        %v9997 = vld [vmem:[#allocation7 + $0x7c] sm:$0xf]
        %v9998 = vld [vmem:[#allocation7 + $0x80] sm:$0xf]
        %v9999 = vld [vmem:[#allocation7 + $0x84] sm:$0xf]
        %v10000 = vld [vmem:[#allocation7 + $0x88] sm:$0xf]
        %v10001 = vld [vmem:[#allocation7 + $0x8c] sm:$0xf]
        %v10002 = vld [vmem:[#allocation7 + $0x90] sm:$0xf]
        %v10003 = vld [vmem:[#allocation7 + $0x94] sm:$0xf]
        %v10004 = vld [vmem:[#allocation7 + $0x98] sm:$0xf]
        %v10005 = vld [vmem:[#allocation7 + $0x9c] sm:$0xf]
        %v10006 = vld [vmem:[#allocation7 + $0xa0] sm:$0xf]
        %v10007 = vld [vmem:[#allocation7 + $0xa4] sm:$0xf]
        %v10008 = vld [vmem:[#allocation7 + $0xa8] sm:$0xf]
        %v10009 = vld [vmem:[#allocation7 + $0xac] sm:$0xf]
        %v10010 = vld [vmem:[#allocation7 + $0xb0] sm:$0xf]
        %v10011 = vld [vmem:[#allocation7 + $0xb4] sm:$0xf]
        %v10012 = vld [vmem:[#allocation7 + $0xb8] sm:$0xf]
        %v10013 = vld [vmem:[#allocation7 + $0xbc] sm:$0xf]
        %v10014 = vld [vmem:[#allocation7 + $0xc0] sm:$0xf]
        %v10015 = vld [vmem:[#allocation7 + $0xc4] sm:$0xf]
        %v10016 = vld [vmem:[#allocation7 + $0xc8] sm:$0xf]
        %v10017 = vld [vmem:[#allocation7 + $0xcc] sm:$0xf]
        %v10018 = vld [vmem:[#allocation7 + $0xd0] sm:$0xf]
        %v10019 = vld [vmem:[#allocation7 + $0xd4] sm:$0xf]
        %v10020 = vld [vmem:[#allocation7 + $0xd8] sm:$0xf]
        %v10021 = vld [vmem:[#allocation7 + $0xdc] sm:$0xf]
        %v10022 = vld [vmem:[#allocation7 + $0xe0] sm:$0xf]
        %v10023 = vld [vmem:[#allocation7 + $0xe4] sm:$0xf]
        %v10024 = vld [vmem:[#allocation7 + $0xe8] sm:$0xf]
        %v10025 = vld [vmem:[#allocation7 + $0xec] sm:$0xf]
        %v10026 = vld [vmem:[#allocation7 + $0xf0] sm:$0xf]
        %v10027 = vld [vmem:[#allocation7 + $0xf4] sm:$0xf]
        %v10028 = vld [vmem:[#allocation7 + $0xf8] sm:$0xf]
        %v10029 = vld [vmem:[#allocation7 + $0xfc] sm:$0xf]
        %v10030 = vld [vmem:[%s12] sm:$0x1]
        %v10032 = vlaneseq
        %v10033 = vshrl.u32 %v10032, 7
        %v10034 = vsub.s32 0, %v10033
        %v10035 = vrot.slane %v10030, %v10034
        %v10101 = vunpack.c.l.b16 %v9966
        %v10102 = vunpack.c.l.b16 %v9967
        %v10103 = vunpack.c.l.b16 %v9968
        %v10104 = vunpack.c.l.b16 %v9969
        %v10105 = vunpack.c.l.b16 %v9970
        %v10106 = vunpack.c.l.b16 %v9971
        %v10107 = vunpack.c.l.b16 %v9972
        %v10108 = vunpack.c.l.b16 %v9973
        %v10109 = vunpack.c.l.b16 %v9974
        %v10110 = vunpack.c.l.b16 %v9975
        %v10111 = vunpack.c.l.b16 %v9976
        %v10112 = vunpack.c.l.b16 %v9977
        %v10113 = vunpack.c.l.b16 %v9978
        %v10114 = vunpack.c.l.b16 %v9979
        %v10115 = vunpack.c.l.b16 %v9980
        %v10116 = vunpack.c.l.b16 %v9981
        %v10117 = vunpack.c.l.b16 %v9982
        %v10118 = vunpack.c.l.b16 %v9983
        %v10119 = vunpack.c.l.b16 %v9984
        %v10120 = vunpack.c.l.b16 %v9985
        %v10121 = vunpack.c.l.b16 %v9986
        %v10122 = vunpack.c.l.b16 %v9987
        %v10123 = vunpack.c.l.b16 %v9988
        %v10124 = vunpack.c.l.b16 %v9989
        %v10125 = vunpack.c.l.b16 %v9990
        %v10126 = vunpack.c.l.b16 %v9991
        %v10127 = vunpack.c.l.b16 %v9992
        %v10128 = vunpack.c.l.b16 %v9993
        %v10129 = vunpack.c.l.b16 %v9994
        %v10130 = vunpack.c.l.b16 %v9995
        %v10131 = vunpack.c.l.b16 %v9996
        %v10132 = vunpack.c.l.b16 %v9997
        %v10133 = vunpack.c.l.b16 %v9998
        %v10134 = vunpack.c.l.b16 %v9999
        %v10135 = vunpack.c.l.b16 %v10000
        %v10136 = vunpack.c.l.b16 %v10001
        %v10137 = vunpack.c.l.b16 %v10002
        %v10138 = vunpack.c.l.b16 %v10003
        %v10139 = vunpack.c.l.b16 %v10004
        %v10140 = vunpack.c.l.b16 %v10005
        %v10141 = vunpack.c.l.b16 %v10006
        %v10142 = vunpack.c.l.b16 %v10007
        %v10143 = vunpack.c.l.b16 %v10008
        %v10144 = vunpack.c.l.b16 %v10009
        %v10145 = vunpack.c.l.b16 %v10010
        %v10146 = vunpack.c.l.b16 %v10011
        %v10147 = vunpack.c.l.b16 %v10012
        %v10148 = vunpack.c.l.b16 %v10013
        %v10149 = vunpack.c.l.b16 %v10014
        %v10150 = vunpack.c.l.b16 %v10015
        %v10151 = vunpack.c.l.b16 %v10016
        %v10152 = vunpack.c.l.b16 %v10017
        %v10153 = vunpack.c.l.b16 %v10018
        %v10154 = vunpack.c.l.b16 %v10019
        %v10155 = vunpack.c.l.b16 %v10020
        %v10156 = vunpack.c.l.b16 %v10021
        %v10157 = vunpack.c.l.b16 %v10022
        %v10158 = vunpack.c.l.b16 %v10023
        %v10159 = vunpack.c.l.b16 %v10024
        %v10160 = vunpack.c.l.b16 %v10025
        %v10161 = vunpack.c.l.b16 %v10026
        %v10162 = vunpack.c.l.b16 %v10027
        %v10163 = vunpack.c.l.b16 %v10028
        %v10164 = vunpack.c.l.b16 %v10029
        %v10165 = vpack.c.b16 %v10102, %v10101
        %v10166 = vpack.c.b16 %v10104, %v10103
        %v10167 = vpack.c.b16 %v10106, %v10105
        %v10168 = vpack.c.b16 %v10108, %v10107
        %v10169 = vpack.c.b16 %v10110, %v10109
        %v10170 = vpack.c.b16 %v10112, %v10111
        %v10171 = vpack.c.b16 %v10114, %v10113
        %v10172 = vpack.c.b16 %v10116, %v10115
        %v10173 = vpack.c.b16 %v10118, %v10117
        %v10174 = vpack.c.b16 %v10120, %v10119
        %v10175 = vpack.c.b16 %v10122, %v10121
        %v10176 = vpack.c.b16 %v10124, %v10123
        %v10177 = vpack.c.b16 %v10126, %v10125
        %v10178 = vpack.c.b16 %v10128, %v10127
        %v10179 = vpack.c.b16 %v10130, %v10129
        %v10180 = vpack.c.b16 %v10132, %v10131
        %v10181 = vpack.c.b16 %v10134, %v10133
        %v10182 = vpack.c.b16 %v10136, %v10135
        %v10183 = vpack.c.b16 %v10138, %v10137
        %v10184 = vpack.c.b16 %v10140, %v10139
        %v10185 = vpack.c.b16 %v10142, %v10141
        %v10186 = vpack.c.b16 %v10144, %v10143
        %v10187 = vpack.c.b16 %v10146, %v10145
        %v10188 = vpack.c.b16 %v10148, %v10147
        %v10189 = vpack.c.b16 %v10150, %v10149
        %v10190 = vpack.c.b16 %v10152, %v10151
        %v10191 = vpack.c.b16 %v10154, %v10153
        %v10192 = vpack.c.b16 %v10156, %v10155
        %v10193 = vpack.c.b16 %v10158, %v10157
        %v10194 = vpack.c.b16 %v10160, %v10159
        %v10195 = vpack.c.b16 %v10162, %v10161
        %v10196 = vpack.c.b16 %v10164, %v10163
        %10229 = vmatprep.subr.bf16.mxu0 0
        %10230 = vmatpush1.bf16.msra.mxu0 %v10172
        %10231 = vmatprep.subr.bf16.mxu0 0
        %10232 = vmatpush1.bf16.msra.mxu0 %v10171
        %10233 = vmatprep.subr.bf16.mxu0 0
        %10234 = vmatpush1.bf16.msra.mxu0 %v10170
        %10235 = vmatprep.subr.bf16.mxu0 0
        %10236 = vmatpush1.bf16.msra.mxu0 %v10169
        %10237 = vmatprep.subr.bf16.mxu0 0
        %10238 = vmatpush1.bf16.msra.mxu0 %v10168
        %10239 = vmatprep.subr.bf16.mxu0 0
        %10240 = vmatpush1.bf16.msra.mxu0 %v10167
        %10241 = vmatprep.subr.bf16.mxu0 0
        %10242 = vmatpush1.bf16.msra.mxu0 %v10166
        %10243 = vmatprep.subr.bf16.mxu0 0
        %10244 = vmatpush1.bf16.msra.mxu0 %v10165
        %10245 = vmatprep.subr.bf16.mxu0 0
        %10246 = vmatpush2.bf16.msra.mxu0 %v10180
        %10247 = vmatprep.subr.bf16.mxu0 0
        %10248 = vmatpush2.bf16.msra.mxu0 %v10179
        %10249 = vmatprep.subr.bf16.mxu0 0
        %10250 = vmatpush2.bf16.msra.mxu0 %v10178
        %10251 = vmatprep.subr.bf16.mxu0 0
        %10252 = vmatpush2.bf16.msra.mxu0 %v10177
        %10253 = vmatprep.subr.bf16.mxu0 0
        %10254 = vmatpush2.bf16.msra.mxu0 %v10176
        %10255 = vmatprep.subr.bf16.mxu0 0
        %10256 = vmatpush2.bf16.msra.mxu0 %v10175
        %10257 = vmatprep.subr.bf16.mxu0 0
        %10258 = vmatpush2.bf16.msra.mxu0 %v10174
        %10259 = vmatprep.subr.bf16.mxu0 0
        %10260 = vmatpush2.bf16.msra.mxu0 %v10173
        %10261 = vmatprep.mubr.bf16.mxu0 %v9192
        %10262 = vmatmul.mubr.bf16.gmra.mxu0 %v9191
        %v10263 = vpop.f32.mrf.mxu0
        %v10264 = vadd.f32 %v10035, %v10263
        %v10265 = vpop.f32.mrf.mxu0
        %v10266 = vpop.f32.mrf.mxu0
        %v10267 = vadd.f32 %v10035, %v10266
        %v10268 = vpop.f32.mrf.mxu0
        %10269 = vmatprep.mubr.bf16.mxu0 %v9196
        %10270 = vmatmul.mubr.bf16.gmra.mxu0 %v9195
        %v10271 = vpop.f32.mrf.mxu0
        %v10272 = vadd.f32 %v10035, %v10271
        %v10273 = vpop.f32.mrf.mxu0
        %v10274 = vpop.f32.mrf.mxu0
        %v10275 = vadd.f32 %v10035, %v10274
        %v10276 = vpop.f32.mrf.mxu0
        %10277 = vmatprep.mubr.bf16.mxu0 %v9200
        %10278 = vmatmul.mubr.bf16.gmra.mxu0 %v9199
        %v10279 = vpop.f32.mrf.mxu0
        %v10280 = vadd.f32 %v10035, %v10279
        %v10281 = vpop.f32.mrf.mxu0
        %v10282 = vpop.f32.mrf.mxu0
        %v10283 = vadd.f32 %v10035, %v10282
        %v10284 = vpop.f32.mrf.mxu0
        %10285 = vmatprep.mubr.bf16.mxu0 %v9204
        %10286 = vmatmul.mubr.bf16.gmra.mxu0 %v9203
        %v10287 = vpop.f32.mrf.mxu0
        %v10288 = vadd.f32 %v10035, %v10287
        %v10289 = vpop.f32.mrf.mxu0
        %v10290 = vpop.f32.mrf.mxu0
        %v10291 = vadd.f32 %v10035, %v10290
        %v10292 = vpop.f32.mrf.mxu0
        %10293 = vmatprep.mubr.bf16.mxu0 %v9208
        %10294 = vmatmul.mubr.bf16.gmra.mxu0 %v9207
        %v10295 = vpop.f32.mrf.mxu0
        %v10296 = vadd.f32 %v10035, %v10295
        %v10297 = vpop.f32.mrf.mxu0
        %v10298 = vpop.f32.mrf.mxu0
        %v10299 = vadd.f32 %v10035, %v10298
        %v10300 = vpop.f32.mrf.mxu0
        %10301 = vmatprep.mubr.bf16.mxu0 %v9212
        %10302 = vmatmul.mubr.bf16.gmra.mxu0 %v9211
        %v10303 = vpop.f32.mrf.mxu0
        %v10304 = vadd.f32 %v10035, %v10303
        %v10305 = vpop.f32.mrf.mxu0
        %v10306 = vpop.f32.mrf.mxu0
        %v10307 = vadd.f32 %v10035, %v10306
        %v10308 = vpop.f32.mrf.mxu0
        %10309 = vmatprep.mubr.bf16.mxu0 %v9216
        %10310 = vmatmul.mubr.bf16.gmra.mxu0 %v9215
        %v10311 = vpop.f32.mrf.mxu0
        %v10312 = vadd.f32 %v10035, %v10311
        %v10313 = vpop.f32.mrf.mxu0
        %v10314 = vpop.f32.mrf.mxu0
        %v10315 = vadd.f32 %v10035, %v10314
        %v10316 = vpop.f32.mrf.mxu0
        %10317 = vmatprep.mubr.bf16.mxu0 %v9220
        %10318 = vmatmul.mubr.bf16.gmra.mxu0 %v9219
        %v10319 = vpop.f32.mrf.mxu0
        %v10320 = vadd.f32 %v10035, %v10319
        %v10321 = vpop.f32.mrf.mxu0
        %v10322 = vpop.f32.mrf.mxu0
        %v10323 = vadd.f32 %v10035, %v10322
        %v10324 = vpop.f32.mrf.mxu0
        %10325 = vdwg.mxu0
        %10326 = vmatprep.subr.bf16.mxu0 0
        %10327 = vmatpush1.bf16.msra.mxu0 %v10188
        %10328 = vmatprep.subr.bf16.mxu0 0
        %10329 = vmatpush1.bf16.msra.mxu0 %v10187
        %10330 = vmatprep.subr.bf16.mxu0 0
        %10331 = vmatpush1.bf16.msra.mxu0 %v10186
        %10332 = vmatprep.subr.bf16.mxu0 0
        %10333 = vmatpush1.bf16.msra.mxu0 %v10185
        %10334 = vmatprep.subr.bf16.mxu0 0
        %10335 = vmatpush1.bf16.msra.mxu0 %v10184
        %10336 = vmatprep.subr.bf16.mxu0 0
        %10337 = vmatpush1.bf16.msra.mxu0 %v10183
        %10338 = vmatprep.subr.bf16.mxu0 0
        %10339 = vmatpush1.bf16.msra.mxu0 %v10182
        %10340 = vmatprep.subr.bf16.mxu0 0
        %10341 = vmatpush1.bf16.msra.mxu0 %v10181
        %10342 = vmatprep.subr.bf16.mxu0 0
        %10343 = vmatpush2.bf16.msra.mxu0 %v10196
        %10344 = vmatprep.subr.bf16.mxu0 0
        %10345 = vmatpush2.bf16.msra.mxu0 %v10195
        %10346 = vmatprep.subr.bf16.mxu0 0
        %10347 = vmatpush2.bf16.msra.mxu0 %v10194
        %10348 = vmatprep.subr.bf16.mxu0 0
        %10349 = vmatpush2.bf16.msra.mxu0 %v10193
        %10350 = vmatprep.subr.bf16.mxu0 0
        %10351 = vmatpush2.bf16.msra.mxu0 %v10192
        %10352 = vmatprep.subr.bf16.mxu0 0
        %10353 = vmatpush2.bf16.msra.mxu0 %v10191
        %10354 = vmatprep.subr.bf16.mxu0 0
        %10355 = vmatpush2.bf16.msra.mxu0 %v10190
        %10356 = vmatprep.subr.bf16.mxu0 0
        %10357 = vmatpush2.bf16.msra.mxu0 %v10189
        %10358 = vmatprep.mubr.bf16.mxu0 %v9194
        %10359 = vmatmul.mubr.bf16.gmra.mxu0 %v9193
        %v10360 = vpop.f32.mrf.mxu0
        %v10361 = vadd.f32 %v10264, %v10360
        %v10362 = vpop.f32.mrf.mxu0
        %v10363 = vpop.f32.mrf.mxu0
        %v10364 = vadd.f32 %v10267, %v10363
        %v10365 = vpop.f32.mrf.mxu0
        %10366 = vmatprep.mubr.bf16.mxu0 %v9198
        %10367 = vmatmul.mubr.bf16.gmra.mxu0 %v9197
        %v10368 = vpop.f32.mrf.mxu0
        %v10369 = vadd.f32 %v10272, %v10368
        %v10370 = vpop.f32.mrf.mxu0
        %v10371 = vpop.f32.mrf.mxu0
        %v10372 = vadd.f32 %v10275, %v10371
        %v10373 = vpop.f32.mrf.mxu0
        %10374 = vmatprep.mubr.bf16.mxu0 %v9202
        %10375 = vmatmul.mubr.bf16.gmra.mxu0 %v9201
        %v10376 = vpop.f32.mrf.mxu0
        %v10377 = vadd.f32 %v10280, %v10376
        %v10378 = vpop.f32.mrf.mxu0
        %v10379 = vpop.f32.mrf.mxu0
        %v10380 = vadd.f32 %v10283, %v10379
        %v10381 = vpop.f32.mrf.mxu0
        %10382 = vmatprep.mubr.bf16.mxu0 %v9206
        %10383 = vmatmul.mubr.bf16.gmra.mxu0 %v9205
        %v10384 = vpop.f32.mrf.mxu0
        %v10385 = vadd.f32 %v10288, %v10384
        %v10386 = vpop.f32.mrf.mxu0
        %v10387 = vpop.f32.mrf.mxu0
        %v10388 = vadd.f32 %v10291, %v10387
        %v10389 = vpop.f32.mrf.mxu0
        %10390 = vmatprep.mubr.bf16.mxu0 %v9210
        %10391 = vmatmul.mubr.bf16.gmra.mxu0 %v9209
        %v10392 = vpop.f32.mrf.mxu0
        %v10393 = vadd.f32 %v10296, %v10392
        %v10394 = vpop.f32.mrf.mxu0
        %v10395 = vpop.f32.mrf.mxu0
        %v10396 = vadd.f32 %v10299, %v10395
        %v10397 = vpop.f32.mrf.mxu0
        %10398 = vmatprep.mubr.bf16.mxu0 %v9214
        %10399 = vmatmul.mubr.bf16.gmra.mxu0 %v9213
        %v10400 = vpop.f32.mrf.mxu0
        %v10401 = vadd.f32 %v10304, %v10400
        %v10402 = vpop.f32.mrf.mxu0
        %v10403 = vpop.f32.mrf.mxu0
        %v10404 = vadd.f32 %v10307, %v10403
        %v10405 = vpop.f32.mrf.mxu0
        %10406 = vmatprep.mubr.bf16.mxu0 %v9218
        %10407 = vmatmul.mubr.bf16.gmra.mxu0 %v9217
        %v10408 = vpop.f32.mrf.mxu0
        %v10409 = vadd.f32 %v10312, %v10408
        %v10410 = vpop.f32.mrf.mxu0
        %v10411 = vpop.f32.mrf.mxu0
        %v10412 = vadd.f32 %v10315, %v10411
        %v10413 = vpop.f32.mrf.mxu0
        %10414 = vmatprep.mubr.bf16.mxu0 %v9222
        %10415 = vmatmul.mubr.bf16.gmra.mxu0 %v9221
        %v10416 = vpop.f32.mrf.mxu0
        %v10417 = vadd.f32 %v10320, %v10416
        %v10418 = vpop.f32.mrf.mxu0
        %v10419 = vpop.f32.mrf.mxu0
        %v10420 = vadd.f32 %v10323, %v10419
        %v10421 = vpop.f32.mrf.mxu0
        %10422 = vdwg.mxu0
        %v10423 = vmul.f32 %v10361, 0.5
        %v10424 = vmul.f32 %v10364, 0.5
        %v10425 = vmul.f32 %v10369, 0.5
        %v10426 = vmul.f32 %v10372, 0.5
        %v10427 = vmul.f32 %v10377, 0.5
        %v10428 = vmul.f32 %v10380, 0.5
        %v10429 = vmul.f32 %v10385, 0.5
        %v10430 = vmul.f32 %v10388, 0.5
        %v10431 = vmul.f32 %v10393, 0.5
        %v10432 = vmul.f32 %v10396, 0.5
        %v10433 = vmul.f32 %v10401, 0.5
        %v10434 = vmul.f32 %v10404, 0.5
        %v10435 = vmul.f32 %v10409, 0.5
        %v10436 = vmul.f32 %v10412, 0.5
        %v10437 = vmul.f32 %v10417, 0.5
        %v10438 = vmul.f32 %v10420, 0.5
        %v10439 = vtanh.pop %v10423
        %v10440 = vtanh.pop %v10424
        %v10441 = vtanh.pop %v10425
        %v10442 = vtanh.pop %v10426
        %v10443 = vtanh.pop %v10427
        %v10444 = vtanh.pop %v10428
        %v10445 = vtanh.pop %v10429
        %v10446 = vtanh.pop %v10430
        %v10447 = vtanh.pop %v10431
        %v10448 = vtanh.pop %v10432
        %v10449 = vtanh.pop %v10433
        %v10450 = vtanh.pop %v10434
        %v10451 = vtanh.pop %v10435
        %v10452 = vtanh.pop %v10436
        %v10453 = vtanh.pop %v10437
        %v10454 = vtanh.pop %v10438
        %v10455 = vmul.f32 %v10439, 0.5
        %v10456 = vmul.f32 %v10440, 0.5
        %v10457 = vmul.f32 %v10441, 0.5
        %v10458 = vmul.f32 %v10442, 0.5
        %v10459 = vmul.f32 %v10443, 0.5
        %v10460 = vmul.f32 %v10444, 0.5
        %v10461 = vmul.f32 %v10445, 0.5
        %v10462 = vmul.f32 %v10446, 0.5
        %v10463 = vmul.f32 %v10447, 0.5
        %v10464 = vmul.f32 %v10448, 0.5
        %v10465 = vmul.f32 %v10449, 0.5
        %v10466 = vmul.f32 %v10450, 0.5
        %v10467 = vmul.f32 %v10451, 0.5
        %v10468 = vmul.f32 %v10452, 0.5
        %v10469 = vmul.f32 %v10453, 0.5
        %v10470 = vmul.f32 %v10454, 0.5
        %v10471 = vadd.f32 %v10455, 0.5
        %v10472 = vadd.f32 %v10456, 0.5
        %v10473 = vadd.f32 %v10457, 0.5
        %v10474 = vadd.f32 %v10458, 0.5
        %v10475 = vadd.f32 %v10459, 0.5
        %v10476 = vadd.f32 %v10460, 0.5
        %v10477 = vadd.f32 %v10461, 0.5
        %v10478 = vadd.f32 %v10462, 0.5
        %v10479 = vadd.f32 %v10463, 0.5
        %v10480 = vadd.f32 %v10464, 0.5
        %v10481 = vadd.f32 %v10465, 0.5
        %v10482 = vadd.f32 %v10466, 0.5
        %v10483 = vadd.f32 %v10467, 0.5
        %v10484 = vadd.f32 %v10468, 0.5
        %v10485 = vadd.f32 %v10469, 0.5
        %v10486 = vadd.f32 %v10470, 0.5
        %10487 = vmatprep.subr.bf16.mxu0 0
        %10488 = vmatpush1.bf16.msra.mxu0 %v10172
        %10489 = vmatprep.subr.bf16.mxu0 0
        %10490 = vmatpush1.bf16.msra.mxu0 %v10171
        %10491 = vmatprep.subr.bf16.mxu0 0
        %10492 = vmatpush1.bf16.msra.mxu0 %v10170
        %10493 = vmatprep.subr.bf16.mxu0 0
        %10494 = vmatpush1.bf16.msra.mxu0 %v10169
        %10495 = vmatprep.subr.bf16.mxu0 0
        %10496 = vmatpush1.bf16.msra.mxu0 %v10168
        %10497 = vmatprep.subr.bf16.mxu0 0
        %10498 = vmatpush1.bf16.msra.mxu0 %v10167
        %10499 = vmatprep.subr.bf16.mxu0 0
        %10500 = vmatpush1.bf16.msra.mxu0 %v10166
        %10501 = vmatprep.subr.bf16.mxu0 0
        %10502 = vmatpush1.bf16.msra.mxu0 %v10165
        %10503 = vmatprep.subr.bf16.mxu0 0
        %10504 = vmatpush2.bf16.msra.mxu0 %v10180
        %10505 = vmatprep.subr.bf16.mxu0 0
        %10506 = vmatpush2.bf16.msra.mxu0 %v10179
        %10507 = vmatprep.subr.bf16.mxu0 0
        %10508 = vmatpush2.bf16.msra.mxu0 %v10178
        %10509 = vmatprep.subr.bf16.mxu0 0
        %10510 = vmatpush2.bf16.msra.mxu0 %v10177
        %10511 = vmatprep.subr.bf16.mxu0 0
        %10512 = vmatpush2.bf16.msra.mxu0 %v10176
        %10513 = vmatprep.subr.bf16.mxu0 0
        %10514 = vmatpush2.bf16.msra.mxu0 %v10175
        %10515 = vmatprep.subr.bf16.mxu0 0
        %10516 = vmatpush2.bf16.msra.mxu0 %v10174
        %10517 = vmatprep.subr.bf16.mxu0 0
        %10518 = vmatpush2.bf16.msra.mxu0 %v10173
        %10519 = vmatprep.mubr.bf16.mxu0 %v9932
        %10520 = vmatmul.mubr.bf16.gmra.mxu0 %v9931
        %v10521 = vpop.f32.mrf.mxu0
        %v10522 = vadd.f32 %v10035, %v10521
        %v10523 = vpop.f32.mrf.mxu0
        %v10524 = vpop.f32.mrf.mxu0
        %v10525 = vadd.f32 %v10035, %v10524
        %v10526 = vpop.f32.mrf.mxu0
        %10527 = vmatprep.mubr.bf16.mxu0 %v9936
        %10528 = vmatmul.mubr.bf16.gmra.mxu0 %v9935
        %v10529 = vpop.f32.mrf.mxu0
        %v10530 = vadd.f32 %v10035, %v10529
        %v10531 = vpop.f32.mrf.mxu0
        %v10532 = vpop.f32.mrf.mxu0
        %v10533 = vadd.f32 %v10035, %v10532
        %v10534 = vpop.f32.mrf.mxu0
        %10535 = vmatprep.mubr.bf16.mxu0 %v9940
        %10536 = vmatmul.mubr.bf16.gmra.mxu0 %v9939
        %v10537 = vpop.f32.mrf.mxu0
        %v10538 = vadd.f32 %v10035, %v10537
        %v10539 = vpop.f32.mrf.mxu0
        %v10540 = vpop.f32.mrf.mxu0
        %v10541 = vadd.f32 %v10035, %v10540
        %v10542 = vpop.f32.mrf.mxu0
        %10543 = vmatprep.mubr.bf16.mxu0 %v9944
        %10544 = vmatmul.mubr.bf16.gmra.mxu0 %v9943
        %v10545 = vpop.f32.mrf.mxu0
        %v10546 = vadd.f32 %v10035, %v10545
        %v10547 = vpop.f32.mrf.mxu0
        %v10548 = vpop.f32.mrf.mxu0
        %v10549 = vadd.f32 %v10035, %v10548
        %v10550 = vpop.f32.mrf.mxu0
        %10551 = vmatprep.mubr.bf16.mxu0 %v9948
        %10552 = vmatmul.mubr.bf16.gmra.mxu0 %v9947
        %v10553 = vpop.f32.mrf.mxu0
        %v10554 = vadd.f32 %v10035, %v10553
        %v10555 = vpop.f32.mrf.mxu0
        %v10556 = vpop.f32.mrf.mxu0
        %v10557 = vadd.f32 %v10035, %v10556
        %v10558 = vpop.f32.mrf.mxu0
        %10559 = vmatprep.mubr.bf16.mxu0 %v9952
        %10560 = vmatmul.mubr.bf16.gmra.mxu0 %v9951
        %v10561 = vpop.f32.mrf.mxu0
        %v10562 = vadd.f32 %v10035, %v10561
        %v10563 = vpop.f32.mrf.mxu0
        %v10564 = vpop.f32.mrf.mxu0
        %v10565 = vadd.f32 %v10035, %v10564
        %v10566 = vpop.f32.mrf.mxu0
        %10567 = vmatprep.mubr.bf16.mxu0 %v9956
        %10568 = vmatmul.mubr.bf16.gmra.mxu0 %v9955
        %v10569 = vpop.f32.mrf.mxu0
        %v10570 = vadd.f32 %v10035, %v10569
        %v10571 = vpop.f32.mrf.mxu0
        %v10572 = vpop.f32.mrf.mxu0
        %v10573 = vadd.f32 %v10035, %v10572
        %v10574 = vpop.f32.mrf.mxu0
        %10575 = vmatprep.mubr.bf16.mxu0 %v9960
        %10576 = vmatmul.mubr.bf16.gmra.mxu0 %v9959
        %v10577 = vpop.f32.mrf.mxu0
        %v10578 = vadd.f32 %v10035, %v10577
        %v10579 = vpop.f32.mrf.mxu0
        %v10580 = vpop.f32.mrf.mxu0
        %v10581 = vadd.f32 %v10035, %v10580
        %v10582 = vpop.f32.mrf.mxu0
        %10583 = vdwg.mxu0
        %10584 = vmatprep.subr.bf16.mxu0 0
        %10585 = vmatpush1.bf16.msra.mxu0 %v10188
        %10586 = vmatprep.subr.bf16.mxu0 0
        %10587 = vmatpush1.bf16.msra.mxu0 %v10187
        %10588 = vmatprep.subr.bf16.mxu0 0
        %10589 = vmatpush1.bf16.msra.mxu0 %v10186
        %10590 = vmatprep.subr.bf16.mxu0 0
        %10591 = vmatpush1.bf16.msra.mxu0 %v10185
        %10592 = vmatprep.subr.bf16.mxu0 0
        %10593 = vmatpush1.bf16.msra.mxu0 %v10184
        %10594 = vmatprep.subr.bf16.mxu0 0
        %10595 = vmatpush1.bf16.msra.mxu0 %v10183
        %10596 = vmatprep.subr.bf16.mxu0 0
        %10597 = vmatpush1.bf16.msra.mxu0 %v10182
        %10598 = vmatprep.subr.bf16.mxu0 0
        %10599 = vmatpush1.bf16.msra.mxu0 %v10181
        %10600 = vmatprep.subr.bf16.mxu0 0
        %10601 = vmatpush2.bf16.msra.mxu0 %v10196
        %10602 = vmatprep.subr.bf16.mxu0 0
        %10603 = vmatpush2.bf16.msra.mxu0 %v10195
        %10604 = vmatprep.subr.bf16.mxu0 0
        %10605 = vmatpush2.bf16.msra.mxu0 %v10194
        %10606 = vmatprep.subr.bf16.mxu0 0
        %10607 = vmatpush2.bf16.msra.mxu0 %v10193
        %10608 = vmatprep.subr.bf16.mxu0 0
        %10609 = vmatpush2.bf16.msra.mxu0 %v10192
        %10610 = vmatprep.subr.bf16.mxu0 0
        %10611 = vmatpush2.bf16.msra.mxu0 %v10191
        %10612 = vmatprep.subr.bf16.mxu0 0
        %10613 = vmatpush2.bf16.msra.mxu0 %v10190
        %10614 = vmatprep.subr.bf16.mxu0 0
        %10615 = vmatpush2.bf16.msra.mxu0 %v10189
        %10616 = vmatprep.mubr.bf16.mxu0 %v9934
        %10617 = vmatmul.mubr.bf16.gmra.mxu0 %v9933
        %v10618 = vpop.f32.mrf.mxu0
        %v10619 = vadd.f32 %v10522, %v10618
        %v10620 = vpop.f32.mrf.mxu0
        %v10621 = vpop.f32.mrf.mxu0
        %v10622 = vadd.f32 %v10525, %v10621
        %v10623 = vpop.f32.mrf.mxu0
        %10624 = vmatprep.mubr.bf16.mxu0 %v9938
        %10625 = vmatmul.mubr.bf16.gmra.mxu0 %v9937
        %v10626 = vpop.f32.mrf.mxu0
        %v10627 = vadd.f32 %v10530, %v10626
        %v10628 = vpop.f32.mrf.mxu0
        %v10629 = vpop.f32.mrf.mxu0
        %v10630 = vadd.f32 %v10533, %v10629
        %v10631 = vpop.f32.mrf.mxu0
        %10632 = vmatprep.mubr.bf16.mxu0 %v9942
        %10633 = vmatmul.mubr.bf16.gmra.mxu0 %v9941
        %v10634 = vpop.f32.mrf.mxu0
        %v10635 = vadd.f32 %v10538, %v10634
        %v10636 = vpop.f32.mrf.mxu0
        %v10637 = vpop.f32.mrf.mxu0
        %v10638 = vadd.f32 %v10541, %v10637
        %v10639 = vpop.f32.mrf.mxu0
        %10640 = vmatprep.mubr.bf16.mxu0 %v9946
        %10641 = vmatmul.mubr.bf16.gmra.mxu0 %v9945
        %v10642 = vpop.f32.mrf.mxu0
        %v10643 = vadd.f32 %v10546, %v10642
        %v10644 = vpop.f32.mrf.mxu0
        %v10645 = vpop.f32.mrf.mxu0
        %v10646 = vadd.f32 %v10549, %v10645
        %v10647 = vpop.f32.mrf.mxu0
        %10648 = vmatprep.mubr.bf16.mxu0 %v9950
        %10649 = vmatmul.mubr.bf16.gmra.mxu0 %v9949
        %v10650 = vpop.f32.mrf.mxu0
        %v10651 = vadd.f32 %v10554, %v10650
        %v10652 = vpop.f32.mrf.mxu0
        %v10653 = vpop.f32.mrf.mxu0
        %v10654 = vadd.f32 %v10557, %v10653
        %v10655 = vpop.f32.mrf.mxu0
        %10656 = vmatprep.mubr.bf16.mxu0 %v9954
        %10657 = vmatmul.mubr.bf16.gmra.mxu0 %v9953
        %v10658 = vpop.f32.mrf.mxu0
        %v10659 = vadd.f32 %v10562, %v10658
        %v10660 = vpop.f32.mrf.mxu0
        %v10661 = vpop.f32.mrf.mxu0
        %v10662 = vadd.f32 %v10565, %v10661
        %v10663 = vpop.f32.mrf.mxu0
        %10664 = vmatprep.mubr.bf16.mxu0 %v9958
        %10665 = vmatmul.mubr.bf16.gmra.mxu0 %v9957
        %v10666 = vpop.f32.mrf.mxu0
        %v10667 = vadd.f32 %v10570, %v10666
        %v10668 = vpop.f32.mrf.mxu0
        %v10669 = vpop.f32.mrf.mxu0
        %v10670 = vadd.f32 %v10573, %v10669
        %v10671 = vpop.f32.mrf.mxu0
        %10672 = vmatprep.mubr.bf16.mxu0 %v9962
        %10673 = vmatmul.mubr.bf16.gmra.mxu0 %v9961
        %v10674 = vpop.f32.mrf.mxu0
        %v10675 = vadd.f32 %v10578, %v10674
        %v10676 = vpop.f32.mrf.mxu0
        %v10677 = vpop.f32.mrf.mxu0
        %v10678 = vadd.f32 %v10581, %v10677
        %v10679 = vpop.f32.mrf.mxu0
        %10680 = vdwg.mxu0
        %v10681 = vmul.f32 %v10619, 0.5
        %v10682 = vmul.f32 %v10622, 0.5
        %v10683 = vmul.f32 %v10627, 0.5
        %v10684 = vmul.f32 %v10630, 0.5
        %v10685 = vmul.f32 %v10635, 0.5
        %v10686 = vmul.f32 %v10638, 0.5
        %v10687 = vmul.f32 %v10643, 0.5
        %v10688 = vmul.f32 %v10646, 0.5
        %v10689 = vmul.f32 %v10651, 0.5
        %v10690 = vmul.f32 %v10654, 0.5
        %v10691 = vmul.f32 %v10659, 0.5
        %v10692 = vmul.f32 %v10662, 0.5
        %v10693 = vmul.f32 %v10667, 0.5
        %v10694 = vmul.f32 %v10670, 0.5
        %v10695 = vmul.f32 %v10675, 0.5
        %v10696 = vmul.f32 %v10678, 0.5
        %v10697 = vtanh.pop %v10681
        %v10698 = vtanh.pop %v10682
        %v10699 = vtanh.pop %v10683
        %v10700 = vtanh.pop %v10684
        %v10701 = vtanh.pop %v10685
        %v10702 = vtanh.pop %v10686
        %v10703 = vtanh.pop %v10687
        %v10704 = vtanh.pop %v10688
        %v10705 = vtanh.pop %v10689
        %v10706 = vtanh.pop %v10690
        %v10707 = vtanh.pop %v10691
        %v10708 = vtanh.pop %v10692
        %v10709 = vtanh.pop %v10693
        %v10710 = vtanh.pop %v10694
        %v10711 = vtanh.pop %v10695
        %v10712 = vtanh.pop %v10696
        %v10713 = vmul.f32 %v10697, 0.5
        %v10714 = vmul.f32 %v10698, 0.5
        %v10715 = vmul.f32 %v10699, 0.5
        %v10716 = vmul.f32 %v10700, 0.5
        %v10717 = vmul.f32 %v10701, 0.5
        %v10718 = vmul.f32 %v10702, 0.5
        %v10719 = vmul.f32 %v10703, 0.5
        %v10720 = vmul.f32 %v10704, 0.5
        %v10721 = vmul.f32 %v10705, 0.5
        %v10722 = vmul.f32 %v10706, 0.5
        %v10723 = vmul.f32 %v10707, 0.5
        %v10724 = vmul.f32 %v10708, 0.5
        %v10725 = vmul.f32 %v10709, 0.5
        %v10726 = vmul.f32 %v10710, 0.5
        %v10727 = vmul.f32 %v10711, 0.5
        %v10728 = vmul.f32 %v10712, 0.5
        %v10729 = vadd.f32 %v10713, 0.5
        %v10730 = vadd.f32 %v10714, 0.5
        %v10731 = vadd.f32 %v10715, 0.5
        %v10732 = vadd.f32 %v10716, 0.5
        %v10733 = vadd.f32 %v10717, 0.5
        %v10734 = vadd.f32 %v10718, 0.5
        %v10735 = vadd.f32 %v10719, 0.5
        %v10736 = vadd.f32 %v10720, 0.5
        %v10737 = vadd.f32 %v10721, 0.5
        %v10738 = vadd.f32 %v10722, 0.5
        %v10739 = vadd.f32 %v10723, 0.5
        %v10740 = vadd.f32 %v10724, 0.5
        %v10741 = vadd.f32 %v10725, 0.5
        %v10742 = vadd.f32 %v10726, 0.5
        %v10743 = vadd.f32 %v10727, 0.5
        %v10744 = vadd.f32 %v10728, 0.5
        %10745 = vst [vmem:[%s327] sm:$0xff] %v10471
        %10746 = vst [vmem:[%s327 + $0x8] sm:$0xff] %v10472
        %10747 = vst [vmem:[%s327 + $0x10] sm:$0xff] %v10473
        %10748 = vst [vmem:[%s327 + $0x18] sm:$0xff] %v10474
        %10749 = vst [vmem:[%s327 + $0x20] sm:$0xff] %v10475
        %10750 = vst [vmem:[%s327 + $0x28] sm:$0xff] %v10476
        %10751 = vst [vmem:[%s327 + $0x30] sm:$0xff] %v10477
        %10752 = vst [vmem:[%s327 + $0x38] sm:$0xff] %v10478
        %10753 = vst [vmem:[%s327 + $0x40] sm:$0xff] %v10479
        %10754 = vst [vmem:[%s327 + $0x48] sm:$0xff] %v10480
        %10755 = vst [vmem:[%s327 + $0x50] sm:$0xff] %v10481
        %10756 = vst [vmem:[%s327 + $0x58] sm:$0xff] %v10482
        %10757 = vst [vmem:[%s327 + $0x60] sm:$0xff] %v10483
        %10758 = vst [vmem:[%s327 + $0x68] sm:$0xff] %v10484
        %10759 = vst [vmem:[%s327 + $0x70] sm:$0xff] %v10485
        %10760 = vst [vmem:[%s327 + $0x78] sm:$0xff] %v10486
        %10761 = vst [vmem:[%s327 + $0x80] sm:$0xff] %v10729
        %10762 = vst [vmem:[%s327 + $0x88] sm:$0xff] %v10730
        %10763 = vst [vmem:[%s327 + $0x90] sm:$0xff] %v10731
        %10764 = vst [vmem:[%s327 + $0x98] sm:$0xff] %v10732
        %10765 = vst [vmem:[%s327 + $0xa0] sm:$0xff] %v10733
        %10766 = vst [vmem:[%s327 + $0xa8] sm:$0xff] %v10734
        %10767 = vst [vmem:[%s327 + $0xb0] sm:$0xff] %v10735
        %10768 = vst [vmem:[%s327 + $0xb8] sm:$0xff] %v10736
        %10769 = vst [vmem:[%s327 + $0xc0] sm:$0xff] %v10737
        %10770 = vst [vmem:[%s327 + $0xc8] sm:$0xff] %v10738
        %10771 = vst [vmem:[%s327 + $0xd0] sm:$0xff] %v10739
        %10772 = vst [vmem:[%s327 + $0xd8] sm:$0xff] %v10740
        %10773 = vst [vmem:[%s327 + $0xe0] sm:$0xff] %v10741
        %10774 = vst [vmem:[%s327 + $0xe8] sm:$0xff] %v10742
        %10775 = vst [vmem:[%s327 + $0xf0] sm:$0xff] %v10743
        %10776 = vst [vmem:[%s327 + $0xf8] sm:$0xff] %v10744
        %s10777 = sand.u32 %s191, 1
        %s10778 = scalar_lea.sflag [#allocation11], %s10777
        %s10779 = sand.u32 %s191, 1
        %s10780 = smul.addr %s10779, 256
        %s10781 = scalar_lea.vmem [#allocation15], %s10780
        // Predicated region
        $region85: #{tpu_custom_call.1} parent=47 // pred_check
          %p10782 = pneg %p201
        $region86: #{tpu_custom_call.1} parent=47 // pred_check_branch
          %10784 = sbr.rel (%p10782) target = $region88
        $region87: #{tpu_custom_call.1} parent=47 // pred_region
          %s10785 = smul.u32 32, %s31
          %s10787 = ssub.s32 4096, 4096
          %10788 = vsyncadd %s10778, %s10787
          %s10789 = smul.addr %s10785, 128
          %s10790 = scalar_lea.hbm %s13, %s10789
          %s10791 = sshll.u32 %s10781, 4
          %s10792 = int_to_ptr.vmem [resolvable:$true] %s10791
          %10797 = dma.vmem_to_hbm [thread:$0]  %s10792, 4096, %s10790, %s10778, 128, 128, 8
        $region88: #{tpu_custom_call.1} parent=47 // pred_fallthru
          _
      $region48: #{tpu_custom_call.1} parent=5 // pred_fallthru
        _
      %p10798 = scmp.le.s32.totalorder 2, %s26
      // Predicated region
      $region89: #{tpu_custom_call.1} parent=5 // pred_check
        %p10799 = pneg %p10798
      $region90: #{tpu_custom_call.1} parent=5 // pred_check_branch
        %10801 = sbr.rel (%p10799) target = $region92
      $region91: #{tpu_custom_call.1} parent=5 // pred_region
        %s10802 = ssub.s32 %s26, 2
        // Predicated region
        $region93: #{tpu_custom_call.1} parent=91 // pred_check
          %p10803 = pneg %p207
        $region94: #{tpu_custom_call.1} parent=91 // pred_check_branch
          %10805 = sbr.rel (%p10803) target = $region96
        $region95: #{tpu_custom_call.1} parent=91 // pred_region
          %s10806 = sand.u32 %s192, 1
          %s10807 = scalar_lea.sflag [#allocation11], %s10806
          %s10808 = sand.u32 %s192, 1
          %s10809 = smul.addr %s10808, 256
          %s10810 = scalar_lea.vmem [#allocation15], %s10809
          %10811 = dma.done %s10807, 4096
        $region96: #{tpu_custom_call.1} parent=91 // pred_fallthru
          _
      $region92: #{tpu_custom_call.1} parent=5 // pred_fallthru
        _
    $region6: #{tpu_custom_call.1} parent=1 // loop_footer
      %s30 = sadd.s32 1, %s26
    $region7: #{tpu_custom_call.1} parent=1 // loop_footer_branch
      %25 = sbr.rel target = $region3
    $region8: #{tpu_custom_call.1} parent=1 // loop_exit
      _
    %10812 = vsyncpa [#allocation10], 1
    %s10813 = scalar_lea.sflag [#allocation10], 1
    %10814 = vsyncpa %s10813, 1
    %10815 = vsyncpa [#allocation13], 1
    %10816 = vsyncpa [#allocation11], 1
    %s10817 = scalar_lea.sflag [#allocation11], 1
    %10818 = vsyncpa %s10817, 1
  %10819 = vsyncmov [#allocation8]
  %s10820 = vpop.sfrf %10819
  %p10821 = scmp.eq.s32.totalorder %s10820, 0
  %p10822 = pneg %p10821
  %10824 = shalt.err (%p10822)
  %s10825 = scalar_lea.sflag [#allocation8], 1
  %10826 = vsyncmov %s10825
  %s10827 = vpop.sfrf %10826
  %p10828 = scmp.eq.s32.totalorder %s10827, 0
  %p10829 = pneg %p10828
  %10831 = shalt.err (%p10829)
  %s10832 = scalar_lea.sflag [#allocation8], 2
  %10833 = vsyncmov %s10832
  %s10834 = vpop.sfrf %10833
  %p10835 = scmp.eq.s32.totalorder %s10834, 0
  %p10836 = pneg %p10835
  %10838 = shalt.err (%p10836)
  %s10839 = scalar_lea.sflag [#allocation8], 3
  %10840 = vsyncmov %s10839
  %s10841 = vpop.sfrf %10840
  %p10842 = scmp.eq.s32.totalorder %s10841, 0
  %p10843 = pneg %p10842
  %10845 = shalt.err (%p10843)
  %s10846 = scalar_lea.sflag [#allocation8], 4
  %10847 = vsyncmov %s10846
  %s10848 = vpop.sfrf %10847
  %p10849 = scmp.eq.s32.totalorder %s10848, 0
  %p10850 = pneg %p10849
  %10852 = shalt.err (%p10850)
  %s10853 = scalar_lea.sflag [#allocation8], 5
  %10854 = vsyncmov %s10853
  %s10855 = vpop.sfrf %10854
  %p10856 = scmp.eq.s32.totalorder %s10855, 0
  %p10857 = pneg %p10856
  %10859 = shalt.err (%p10857)

</llo_original>
